<compile_context>
chip_gen: v5e
topology: v5e:2x2
jax: 0.10.0
libtpu: 0.0.40
codegen_flags: <defaults>
</compile_context>

<pallas_src>
import functools
import math

import jax
import jax.numpy as jnp
from jax import lax
from jax.experimental import pallas as pl
from jax.experimental.pallas import tpu as pltpu

EPS = 1e-5       # PyTorch GroupNorm default eps
GROUPS = 32      # nn.GroupNorm(32, channels)
LANE = 128


def _round_up(x, m):
    return (x + m - 1) // m * m


def _resblock_kernel(H, W, has_skip, *refs):
    if has_skip:
        (x_ref, temb_ref,
         gn1_g_ref, gn1_b_ref, gmat1_ref, w1_ref, b1_ref,
         gn2_g_ref, gn2_b_ref, gmat2_ref, w2_ref, b2_ref,
         wskip_ref, out_ref, slab_ref) = refs
    else:
        (x_ref, temb_ref,
         gn1_g_ref, gn1_b_ref, gmat1_ref, w1_ref, b1_ref,
         gn2_g_ref, gn2_b_ref, gmat2_ref, w2_ref, b2_ref,
         out_ref, slab_ref) = refs
        wskip_ref = None

    HW = H * W
    Cp = x_ref.shape[2]          # channel width, zero-padded to 128 lanes

    x = x_ref[0]                 # (HW, Cp) f32
    temb = temb_ref[0]           # (1, Cp)  f32

    # Column-border masks (horizontal taps read x-1 / x+1 with zero padding).
    col = lax.broadcasted_iota(jnp.int32, (HW, 1), 0) % W
    mask_l = (col >= 1).astype(jnp.float32)        # left tap needs x-1 >= 0
    mask_r = (col <= W - 2).astype(jnp.float32)    # right tap needs x+1 <  W

    def swish(v):
        return v * jax.nn.sigmoid(v)

    def group_norm(h, gmat_ref, g_ref, b_ref):
        # Centered two-pass statistics.  gmat is a (Cp, Cp)
        # "same-group / (group_size * HW)" matrix, so one tiny matmul both
        # reduces within a group and broadcasts the statistic to its channels.
        # Padded lanes rely on gamma/beta/gmat being zero-padded: they stay
        # exactly 0 and contribute nothing to the conv matmuls downstream.
        s = jnp.sum(h, axis=0, keepdims=True)                          # (1, Cp)
        mean = jnp.dot(s, gmat_ref[...], preferred_element_type=jnp.float32)
        d = h - mean
        ssq = jnp.sum(d * d, axis=0, keepdims=True)
        var = jnp.dot(ssq, gmat_ref[...], preferred_element_type=jnp.float32)
        inv = lax.rsqrt(var + EPS)
        return d * inv * g_ref[...] + b_ref[...]

    def conv3x3(h, w_ref, b_ref):
        # 3x3 conv, padding 1, decomposed as:
        #   slab = [h(x-1)*mask_l | h | h(x+1)*mask_r]          (HW, 3*Cp) bf16
        #   s_ky = slab @ W_ky                                   (HW, Cp)  f32
        #   y    = s_1 + shift_down_W(s_0) + shift_up_W(s_2) + bias
        # The +-1 column shift uses pltpu.roll (XLU, wraparound rows are killed
        # by the column masks); the +-W row shift is applied to the matmul
        # OUTPUTS as sublane-aligned value slices, so no row-band zeroing and
        # no misaligned stores are needed.
        c0 = (mask_l * pltpu.roll(h, shift=1, axis=0)).astype(jnp.bfloat16)
        c2 = (mask_r * pltpu.roll(h, shift=HW - 1, axis=0)).astype(jnp.bfloat16)
        slab_ref[:, 0 * Cp:1 * Cp] = c0
        slab_ref[:, 1 * Cp:2 * Cp] = h.astype(jnp.bfloat16)
        slab_ref[:, 2 * Cp:3 * Cp] = c2
        slab = slab_ref[...]
        s0 = jnp.dot(slab, w_ref[0], preferred_element_type=jnp.float32)
        s1 = jnp.dot(slab, w_ref[1], preferred_element_type=jnp.float32)
        s2 = jnp.dot(slab, w_ref[2], preferred_element_type=jnp.float32)
        zrow = jnp.zeros((W, Cp), jnp.float32)
        y = s1 + b_ref[...]
        y = y + jnp.concatenate([zrow, s0[:HW - W, :]], axis=0)   # ky = 0 taps
        y = y + jnp.concatenate([s2[W:, :], zrow], axis=0)        # ky = 2 taps
        return y

    # h = conv1(act1(norm1(x)))
    h = swish(group_norm(x, gmat1_ref, gn1_g_ref, gn1_b_ref))
    h = conv3x3(h, w1_ref, b1_ref)

    # h = h + time(t)[:, :, None, None]   (time MLP hoisted to the wrapper)
    h = h + temb

    # h = conv2(drop(act2(norm2(h))))     dropout p=0 -> identity
    h = swish(group_norm(h, gmat2_ref, gn2_g_ref, gn2_b_ref))
    h = conv3x3(h, w2_ref, b2_ref)

    if has_skip:
        # 1x1 conv skip (Cin != Cout)
        xs = jnp.dot(x.astype(jnp.bfloat16), wskip_ref[...],
                     preferred_element_type=jnp.float32)
        out_ref[0] = h + xs
    else:
        out_ref[0] = h + x           # exact f32 residual, no bf16 rounding


def _group_matrix(channels, cp, hw):
    cs = channels // GROUPS
    gid = jnp.arange(channels) // cs
    same = (gid[:, None] == gid[None, :]).astype(jnp.float32) / float(cs * hw)
    return jnp.pad(same, ((0, cp - channels), (0, cp - channels)))


def _pad_last(a, cp):
    return jnp.pad(a, [(0, 0)] * (a.ndim - 1) + [(0, cp - a.shape[-1])])


def resblock_forward(params, x_nchw, t):
    """ResBlock forward.  x: (N, Cin, H, W) NCHW, t: (N, time_dim)."""
    N, Cin, H, W = x_nchw.shape
    HW = H * W
    Cout = params["w1"].shape[-1]
    assert Cin % GROUPS == 0 and Cout % GROUPS == 0
    assert W >= 2
    # W (and HW) being multiples of 8 keeps every slice / store sublane
    # aligned; other sizes remain correct but fall into masked-store codegen.
    Cp = _round_up(max(Cin, Cout), LANE)      # lane-dense padded channel width

    has_skip = params.get("wskip") is not None

    # ---- XLA-side prep: layout, channel padding, time-embedding MLP --------
    x = jnp.transpose(x_nchw.astype(jnp.float32),
                      (0, 2, 3, 1)).reshape(N, HW, Cin)
    x_p = _pad_last(x, Cp)

    ta = t.astype(jnp.float32)
    ta = ta * jax.nn.sigmoid(ta)                      # Swish
    temb = ta @ params["tw"] + params["tb"]           # (N, Cout), f32
    temb_p = _pad_last(temb, Cp).reshape(N, 1, Cp)

    gmat1 = _group_matrix(Cin, Cp, HW)
    gmat2 = _group_matrix(Cout, Cp, HW)

    def pad_w9(w9):
        # (9, Ci, Co), k = ky*3+kx  ->  (3, 3*Cp, Cp) bf16, index [ky, kx*Cp+ci, co]
        ci, co = w9.shape[1], w9.shape[2]
        wp = jnp.pad(w9, ((0, 0), (0, Cp - ci), (0, Cp - co)))
        return wp.reshape(3, 3 * Cp, Cp).astype(jnp.bfloat16)

    w1f = pad_w9(params["w1"])
    w2f = pad_w9(params["w2"])

    gn1_g = _pad_last(params["gn1_g"], Cp)
    gn1_b = _pad_last(params["gn1_b"], Cp)
    gn2_g = _pad_last(params["gn2_g"], Cp)
    gn2_b = _pad_last(params["gn2_b"], Cp)
    b1 = _pad_last(params["b1"], Cp)
    b2 = _pad_last(params["b2"], Cp)

    def full_spec(shape):
        nd = len(shape)
        return pl.BlockSpec(shape, lambda n, _nd=nd: (0,) * _nd)

    in_specs = [
        pl.BlockSpec((1, HW, Cp), lambda n: (n, 0, 0)),     # x (per sample)
        pl.BlockSpec((1, 1, Cp), lambda n: (n, 0, 0)),      # temb (per sample)
        full_spec((1, Cp)), full_spec((1, Cp)), full_spec((Cp, Cp)),    # gn1
        full_spec((3, 3 * Cp, Cp)), full_spec((1, Cp)),                 # w1, b1
        full_spec((1, Cp)), full_spec((1, Cp)), full_spec((Cp, Cp)),    # gn2
        full_spec((3, 3 * Cp, Cp)), full_spec((1, Cp)),                 # w2, b2
    ]
    args = [x_p, temb_p,
            gn1_g, gn1_b, gmat1, w1f, b1,
            gn2_g, gn2_b, gmat2, w2f, b2]
    if has_skip:
        wskip = jnp.pad(params["wskip"],
                        ((0, Cp - Cin), (0, Cp - Cout))).astype(jnp.bfloat16)
        in_specs.append(full_spec((Cp, Cp)))
        args.append(wskip)
    # TODO(synk): single-buffer the grid-invariant operands with
    # pipeline_mode=pl.Buffered(1) once verified on the deployed jax version
    # (saves <1 MiB of VMEM at these shapes).

    # ---- generation-aware VMEM budget (v7x has 64 MiB/TC vs 128 MiB) -------
    try:
        vmem_cap = int(getattr(pltpu.get_tpu_info(), "vmem_capacity_bytes",
                               64 * 1024 * 1024))
    except Exception:
        vmem_cap = 64 * 1024 * 1024
    block_bytes = 2 * 2 * (HW * Cp * 4)                    # x + out, 2 buffers
    invariant_bytes = 2 * (2 * (3 * 3 * Cp * Cp * 2)       # conv weight slabs
                           + 2 * Cp * Cp * 4               # gmat1, gmat2
                           + (Cp * Cp * 2 if has_skip else 0)
                           + 6 * Cp * 4)                   # gains/biases/temb
    scratch_bytes = HW * 3 * Cp * 2                        # bf16 column slab
    transient_bytes = 8 * HW * Cp * 4                      # live f32 values
    working = block_bytes + invariant_bytes + scratch_bytes + transient_bytes
    vmem_limit = int(min(int(0.85 * vmem_cap),
                         max(24 * 1024 * 1024, 8 * 1024 * 1024 + 2 * working)))

    cost = pl.CostEstimate(
        flops=int(N * (2 * 2 * HW * (3 * Cp) * (3 * Cp)
                       + (2 * HW * Cp * Cp if has_skip else 0))),
        transcendentals=int(N * HW * Cp * 2),
        bytes_accessed=int(N * HW * Cp * 8 + 2 * 9 * Cp * Cp * 2
                           + 2 * Cp * Cp * 4
                           + (Cp * Cp * 2 if has_skip else 0)),
    )

    # TODO(synk): for v7x (2 TensorCores, 64 MiB VMEM) at >=32x32 resolution,
    # add a second "parallel" grid axis over HW row-blocks (W-row halo per
    # block + two-phase GroupNorm reduction) so both cores stay busy and
    # per-step VMEM stays bounded.
    # TODO(synk): when real channels < 128, pack the three dx-taps densely
    # along lanes (static XLU lane-rolls) to cut padded-K MXU work on v6e/v7x.
    out = pl.pallas_call(
        functools.partial(_resblock_kernel, H, W, has_skip),
        out_shape=jax.ShapeDtypeStruct((N, HW, Cp), jnp.float32),
        grid_spec=pltpu.PrefetchScalarGridSpec(
            num_scalar_prefetch=0,
            grid=(N,),
            in_specs=in_specs,
            out_specs=pl.BlockSpec((1, HW, Cp), lambda n: (n, 0, 0)),
            scratch_shapes=[pltpu.VMEM((HW, 3 * Cp), jnp.bfloat16)],
        ),
        compiler_params=pltpu.CompilerParams(
            dimension_semantics=("parallel",),
            vmem_limit_bytes=vmem_limit),
        cost_estimate=cost,
    )(*args)

    out = out[:, :, :Cout].reshape(N, H, W, Cout)
    return jnp.transpose(out, (0, 3, 1, 2))            # back to NCHW


def init_params(key, in_channels, out_channels, time_dim):
    # Deterministic re-implementation of scaling_init (uniform) + zero biases.
    def scaling_uniform(k, shape, fan_in, fan_out, scale=1.0):
        s = scale / ((fan_in + fan_out) / 2.0)
        bound = math.sqrt(3.0 * s)
        return jax.random.uniform(k, shape, jnp.float32, -bound, bound)

    k1, k2, k3, k4 = jax.random.split(key, 4)
    return {
        "gn1_g": jnp.ones((1, in_channels), jnp.float32),
        "gn1_b": jnp.zeros((1, in_channels), jnp.float32),
        # conv1 weight stored as (9, Cin, Cout), k = ky*3+kx
        "w1": scaling_uniform(k1, (9, in_channels, out_channels),
                              in_channels * 9, out_channels * 9, 1.0),
        "b1": jnp.zeros((1, out_channels), jnp.float32),
        # time linear stored as (time_dim, Cout)
        "tw": scaling_uniform(k2, (time_dim, out_channels),
                              time_dim, out_channels, 1.0),
        "tb": jnp.zeros((1, out_channels), jnp.float32),
        "gn2_g": jnp.ones((1, out_channels), jnp.float32),
        "gn2_b": jnp.zeros((1, out_channels), jnp.float32),
        "w2": scaling_uniform(k3, (9, out_channels, out_channels),
                              out_channels * 9, out_channels * 9, 1e-10),
        "b2": jnp.zeros((1, out_channels), jnp.float32),
        # 1x1 skip conv (no bias), stored as (Cin, Cout)
        "wskip": scaling_uniform(k4, (in_channels, out_channels),
                                 in_channels, out_channels, 1.0),
    }


def resblock_reference(params, x, t):
    # Pure-JAX (XLA, f32) reference of the same forward pass, for validation.
    def swish(v):
        return v * jax.nn.sigmoid(v)

    def group_norm(h, gamma, beta):
        N, C, H, W = h.shape
        cs = C // GROUPS
        hr = h.reshape(N, GROUPS, cs, H, W)
        mean = hr.mean(axis=(2, 3, 4), keepdims=True)
        var = hr.var(axis=(2, 3, 4), keepdims=True)
        hn = ((hr - mean) / jnp.sqrt(var + EPS)).reshape(N, C, H, W)
        return hn * gamma.reshape(1, C, 1, 1) + beta.reshape(1, C, 1, 1)

    def conv3(h, w9, b):
        Ci, Co = w9.shape[1], w9.shape[2]
        w = jnp.transpose(w9.reshape(3, 3, Ci, Co), (3, 2, 0, 1))
        y = lax.conv_general_dilated(h, w, (1, 1), ((1, 1), (1, 1)),
                                     dimension_numbers=("NCHW", "OIHW", "NCHW"))
        return y + b.reshape(1, Co, 1, 1)

    h = swish(group_norm(x, params["gn1_g"][0], params["gn1_b"][0]))
    h = conv3(h, params["w1"], params["b1"][0])
    temb = swish(t) @ params["tw"] + params["tb"][0]
    h = h + temb[:, :, None, None]
    h = swish(group_norm(h, params["gn2_g"][0], params["gn2_b"][0]))
    h = conv3(h, params["w2"], params["b2"][0])
    if params.get("wskip") is not None:
        wsk = jnp.transpose(params["wskip"], (1, 0))[:, :, None, None]
        x = lax.conv_general_dilated(x, wsk, (1, 1), ((0, 0), (0, 0)),
                                     dimension_numbers=("NCHW", "OIHW", "NCHW"))
    return h + x


if __name__ == "__main__":
    # First ResBlock of UNet(channels=32): Cin=32 -> Cout=64, time_dim=128.
    N, Cin, Cout, H, W, Td = 2, 32, 64, 16, 16, 128
    key = jax.random.PRNGKey(0)
    kp, kx, kt, kw = jax.random.split(key, 4)
    params = init_params(kp, Cin, Cout, Td)
    # The module's default conv2 init (scale=1e-10) makes that branch vanish
    # numerically; use a non-degenerate weight so the test actually exercises
    # the second conv path (forward-pass semantics are unchanged).
    params["w2"] = 0.05 * jax.random.normal(kw, (9, Cout, Cout), jnp.float32)

    x = jax.random.normal(kx, (N, Cin, H, W), jnp.float32)
    t = jax.random.normal(kt, (N, Td), jnp.float32)

    out = jax.block_until_ready(resblock_forward(params, x, t))
    ref = resblock_reference(params, x, t)

    assert out.shape == (N, Cout, H, W)
    diff = out - ref
    max_err = float(jnp.max(jnp.abs(diff)))
    rel_l2 = float(jnp.linalg.norm(diff) / (jnp.linalg.norm(ref) + 1e-12))
    # Tolerances account for bf16 matmul operands (f32 accumulation).
    assert max_err < 5e-2 and rel_l2 < 1e-2, (
        f"max abs err {max_err:.4g}, rel l2 err {rel_l2:.4g}")
    print("KERNEL_OK")
</pallas_src>

<mosaic_0001>
module attributes {stable_mosaic.version = 11 : i64} {
  func.func @_resblock_kernel(%arg0: i32, %arg1: memref<1x256x128xf32, #tpu.memory_space<vmem>>, %arg2: memref<1x1x128xf32, #tpu.memory_space<vmem>>, %arg3: memref<1x128xf32, #tpu.memory_space<vmem>>, %arg4: memref<1x128xf32, #tpu.memory_space<vmem>>, %arg5: memref<128x128xf32, #tpu.memory_space<vmem>>, %arg6: memref<3x384x128xbf16, #tpu.memory_space<vmem>>, %arg7: memref<1x128xf32, #tpu.memory_space<vmem>>, %arg8: memref<1x128xf32, #tpu.memory_space<vmem>>, %arg9: memref<1x128xf32, #tpu.memory_space<vmem>>, %arg10: memref<128x128xf32, #tpu.memory_space<vmem>>, %arg11: memref<3x384x128xbf16, #tpu.memory_space<vmem>>, %arg12: memref<1x128xf32, #tpu.memory_space<vmem>>, %arg13: memref<128x128xbf16, #tpu.memory_space<vmem>>, %arg14: memref<1x256x128xf32, #tpu.memory_space<vmem>>, %arg15: memref<256x384xbf16, #tpu.memory_space<vmem>>) attributes {dimension_semantics = [#tpu.dimension_semantics<parallel>], iteration_bounds = array<i64: 2>, scalar_prefetch = 0 : i64, scratch_operands = 1 : i64, tpu.core_type = #tpu.core_type<tc>, window_params = [{transform_indices = @transform_0, window_bounds = array<i64: 1, 256, 128>}, {transform_indices = @transform_1, window_bounds = array<i64: 1, 1, 128>}, {pipeline_mode = #tpu.pipeline_mode<synchronous>, transform_indices = @transform_2, window_bounds = array<i64: 1, 128>}, {pipeline_mode = #tpu.pipeline_mode<synchronous>, transform_indices = @transform_3, window_bounds = array<i64: 1, 128>}, {pipeline_mode = #tpu.pipeline_mode<synchronous>, transform_indices = @transform_4, window_bounds = array<i64: 128, 128>}, {pipeline_mode = #tpu.pipeline_mode<synchronous>, transform_indices = @transform_5, window_bounds = array<i64: 3, 384, 128>}, {pipeline_mode = #tpu.pipeline_mode<synchronous>, transform_indices = @transform_6, window_bounds = array<i64: 1, 128>}, {pipeline_mode = #tpu.pipeline_mode<synchronous>, transform_indices = @transform_7, window_bounds = array<i64: 1, 128>}, {pipeline_mode = #tpu.pipeline_mode<synchronous>, transform_indices = @transform_8, window_bounds = array<i64: 1, 128>}, {pipeline_mode = #tpu.pipeline_mode<synchronous>, transform_indices = @transform_9, window_bounds = array<i64: 128, 128>}, {pipeline_mode = #tpu.pipeline_mode<synchronous>, transform_indices = @transform_10, window_bounds = array<i64: 3, 384, 128>}, {pipeline_mode = #tpu.pipeline_mode<synchronous>, transform_indices = @transform_11, window_bounds = array<i64: 1, 128>}, {pipeline_mode = #tpu.pipeline_mode<synchronous>, transform_indices = @transform_12, window_bounds = array<i64: 128, 128>}, {transform_indices = @transform_13, window_bounds = array<i64: 1, 256, 128>}]} {
    %c0 = arith.constant 0 : index
    %c0_0 = arith.constant 0 : index
    %c0_1 = arith.constant 0 : index
    %0 = vector.load %arg1[%c0, %c0_0, %c0_1] : memref<1x256x128xf32, #tpu.memory_space<vmem>>, vector<1x256x128xf32>
    %1 = vector.shape_cast %0 : vector<1x256x128xf32> to vector<256x128xf32>
    %c0_2 = arith.constant 0 : index
    %c0_3 = arith.constant 0 : index
    %c0_4 = arith.constant 0 : index
    %2 = vector.load %arg2[%c0_2, %c0_3, %c0_4] : memref<1x1x128xf32, #tpu.memory_space<vmem>>, vector<1x1x128xf32>
    %3 = vector.shape_cast %2 : vector<1x1x128xf32> to vector<1x128xf32>
    %4 = tpu.iota {dimensions = array<i32: 0>} : vector<256x1xi32>
    %c16_i32 = arith.constant 16 : i32
    %c0_i32 = arith.constant 0 : i32
    %5 = arith.cmpi eq, %c16_i32, %c0_i32 : i32
    %c1_i32 = arith.constant 1 : i32
    %6 = arith.select %5, %c1_i32, %c16_i32 : i32
    %7 = vector.broadcast %6 : i32 to vector<256x1xi32>
    %8 = arith.remsi %4, %7 : vector<256x1xi32>
    %c0_i32_5 = arith.constant 0 : i32
    %9 = vector.broadcast %c0_i32_5 : i32 to vector<256x1xi32>
    %10 = arith.cmpi ne, %8, %9 : vector<256x1xi32>
    %c0_i32_6 = arith.constant 0 : i32
    %11 = vector.broadcast %c0_i32_6 : i32 to vector<256x1xi32>
    %12 = arith.cmpi slt, %8, %11 : vector<256x1xi32>
    %c0_i32_7 = arith.constant 0 : i32
    %13 = arith.cmpi slt, %6, %c0_i32_7 : i32
    %14 = vector.broadcast %13 : i1 to vector<256x1xi1>
    %15 = vector.broadcast %14 : vector<256x1xi1> to vector<256x1xi1>
    %16 = arith.xori %12, %15 : vector<256x1xi1>
    %17 = arith.andi %16, %10 : vector<256x1xi1>
    %18 = vector.broadcast %6 : i32 to vector<256x1xi32>
    %19 = arith.addi %8, %18 : vector<256x1xi32>
    %20 = arith.select %17, %19, %8 : vector<256x1xi1>, vector<256x1xi32>
    %c1_i32_8 = arith.constant 1 : i32
    %21 = vector.broadcast %c1_i32_8 : i32 to vector<256x1xi32>
    %22 = arith.cmpi sge, %20, %21 : vector<256x1xi32>
    %23 = arith.extui %22 : vector<256x1xi1> to vector<256x1xi32>
    %24 = arith.sitofp %23 : vector<256x1xi32> to vector<256x1xf32>
    %c14_i32 = arith.constant 14 : i32
    %25 = vector.broadcast %c14_i32 : i32 to vector<256x1xi32>
    %26 = arith.cmpi sle, %20, %25 : vector<256x1xi32>
    %27 = arith.extui %26 : vector<256x1xi1> to vector<256x1xi32>
    %28 = arith.sitofp %27 : vector<256x1xi32> to vector<256x1xf32>
    %cst = arith.constant dense<0.000000e+00> : vector<128xf32>
    %29 = vector.multi_reduction <add>, %1, %cst [0] : vector<256x128xf32> to vector<128xf32>
    %30 = vector.shape_cast %29 : vector<128xf32> to vector<1x128xf32>
    %c0_9 = arith.constant 0 : index
    %c0_10 = arith.constant 0 : index
    %31 = vector.load %arg5[%c0_9, %c0_10] : memref<128x128xf32, #tpu.memory_space<vmem>>, vector<128x128xf32>
    %cst_11 = arith.constant dense<0.000000e+00> : vector<1x128xf32>
    %32 = tpu.matmul %30, %31, %cst_11 {dimension_numbers = #tpu.dot_dimension_numbers<[1], [0], [0], [1], [0, 0, 1, 1], [], []>} : vector<1x128xf32>, vector<128x128xf32>, vector<1x128xf32> -> vector<1x128xf32>
    %33 = vector.broadcast %32 : vector<1x128xf32> to vector<256x128xf32>
    %34 = arith.subf %1, %33 : vector<256x128xf32>
    %35 = arith.mulf %34, %34 : vector<256x128xf32>
    %cst_12 = arith.constant dense<0.000000e+00> : vector<128xf32>
    %36 = vector.multi_reduction <add>, %35, %cst_12 [0] : vector<256x128xf32> to vector<128xf32>
    %37 = vector.shape_cast %36 : vector<128xf32> to vector<1x128xf32>
    %c0_13 = arith.constant 0 : index
    %c0_14 = arith.constant 0 : index
    %38 = vector.load %arg5[%c0_13, %c0_14] : memref<128x128xf32, #tpu.memory_space<vmem>>, vector<128x128xf32>
    %cst_15 = arith.constant dense<0.000000e+00> : vector<1x128xf32>
    %39 = tpu.matmul %37, %38, %cst_15 {dimension_numbers = #tpu.dot_dimension_numbers<[1], [0], [0], [1], [0, 0, 1, 1], [], []>} : vector<1x128xf32>, vector<128x128xf32>, vector<1x128xf32> -> vector<1x128xf32>
    %cst_16 = arith.constant 9.99999974E-6 : f32
    %40 = vector.broadcast %cst_16 : f32 to vector<1x128xf32>
    %41 = arith.addf %39, %40 : vector<1x128xf32>
    %42 = math.rsqrt %41 : vector<1x128xf32>
    %43 = vector.broadcast %42 : vector<1x128xf32> to vector<256x128xf32>
    %44 = arith.mulf %34, %43 : vector<256x128xf32>
    %c0_17 = arith.constant 0 : index
    %c0_18 = arith.constant 0 : index
    %45 = vector.load %arg3[%c0_17, %c0_18] : memref<1x128xf32, #tpu.memory_space<vmem>>, vector<1x128xf32>
    %46 = vector.broadcast %45 : vector<1x128xf32> to vector<256x128xf32>
    %47 = arith.mulf %44, %46 : vector<256x128xf32>
    %c0_19 = arith.constant 0 : index
    %c0_20 = arith.constant 0 : index
    %48 = vector.load %arg4[%c0_19, %c0_20] : memref<1x128xf32, #tpu.memory_space<vmem>>, vector<1x128xf32>
    %49 = vector.broadcast %48 : vector<1x128xf32> to vector<256x128xf32>
    %50 = arith.addf %47, %49 : vector<256x128xf32>
    %51 = arith.negf %50 : vector<256x128xf32>
    %52 = math.exp %51 : vector<256x128xf32>
    %cst_21 = arith.constant 1.000000e+00 : f32
    %53 = vector.broadcast %cst_21 : f32 to vector<256x128xf32>
    %54 = arith.addf %53, %52 : vector<256x128xf32>
    %55 = arith.divf %53, %54 : vector<256x128xf32>
    %56 = arith.mulf %50, %55 : vector<256x128xf32>
    %c1_i32_22 = arith.constant 1 : i32
    %57 = tpu.dynamic_rotate %56 by %c1_i32_22 dim 0 : vector<256x128xf32>, i32 -> vector<256x128xf32>
    %58 = vector.broadcast %24 : vector<256x1xf32> to vector<256x128xf32>
    %59 = arith.mulf %58, %57 : vector<256x128xf32>
    %60 = arith.truncf %59 : vector<256x128xf32> to vector<256x128xbf16>
    %c255_i32 = arith.constant 255 : i32
    %61 = tpu.dynamic_rotate %56 by %c255_i32 dim 0 : vector<256x128xf32>, i32 -> vector<256x128xf32>
    %62 = vector.broadcast %28 : vector<256x1xf32> to vector<256x128xf32>
    %63 = arith.mulf %62, %61 : vector<256x128xf32>
    %64 = arith.truncf %63 : vector<256x128xf32> to vector<256x128xbf16>
    %c0_23 = arith.constant 0 : index
    %c0_24 = arith.constant 0 : index
    %65 = vector.load %arg15[%c0_23, %c0_24] : memref<256x384xbf16, #tpu.memory_space<vmem>>, vector<256x128xbf16>
    tpu.vector_store %arg15[%c0_23, %c0_24], %60 {strides = array<i32>} : memref<256x384xbf16, #tpu.memory_space<vmem>>, vector<256x128xbf16>,
    %66 = arith.truncf %56 : vector<256x128xf32> to vector<256x128xbf16>
    %c0_25 = arith.constant 0 : index
    %c128 = arith.constant 128 : index
    %67 = vector.load %arg15[%c0_25, %c128] : memref<256x384xbf16, #tpu.memory_space<vmem>>, vector<256x128xbf16>
    tpu.vector_store %arg15[%c0_25, %c128], %66 {strides = array<i32>} : memref<256x384xbf16, #tpu.memory_space<vmem>>, vector<256x128xbf16>,
    %c0_26 = arith.constant 0 : index
    %c256 = arith.constant 256 : index
    %68 = vector.load %arg15[%c0_26, %c256] : memref<256x384xbf16, #tpu.memory_space<vmem>>, vector<256x128xbf16>
    tpu.vector_store %arg15[%c0_26, %c256], %64 {strides = array<i32>} : memref<256x384xbf16, #tpu.memory_space<vmem>>, vector<256x128xbf16>,
    %c0_27 = arith.constant 0 : index
    %c0_28 = arith.constant 0 : index
    %69 = vector.load %arg15[%c0_27, %c0_28] : memref<256x384xbf16, #tpu.memory_space<vmem>>, vector<256x384xbf16>
    %c0_29 = arith.constant 0 : index
    %c0_30 = arith.constant 0 : index
    %c0_31 = arith.constant 0 : index
    %70 = vector.load %arg6[%c0_29, %c0_30, %c0_31] : memref<3x384x128xbf16, #tpu.memory_space<vmem>>, vector<1x384x128xbf16>
    %71 = vector.shape_cast %70 : vector<1x384x128xbf16> to vector<384x128xbf16>
    %cst_32 = arith.constant dense<0.000000e+00> : vector<256x128xf32>
    %72 = tpu.matmul %69, %71, %cst_32 {dimension_numbers = #tpu.dot_dimension_numbers<[1], [0], [0], [1], [0, 0, 1, 1], [], []>} : vector<256x384xbf16>, vector<384x128xbf16>, vector<256x128xf32> -> vector<256x128xf32>
    %c1 = arith.constant 1 : index
    %c0_33 = arith.constant 0 : index
    %c0_34 = arith.constant 0 : index
    %73 = vector.load %arg6[%c1, %c0_33, %c0_34] : memref<3x384x128xbf16, #tpu.memory_space<vmem>>, vector<1x384x128xbf16>
    %74 = vector.shape_cast %73 : vector<1x384x128xbf16> to vector<384x128xbf16>
    %cst_35 = arith.constant dense<0.000000e+00> : vector<256x128xf32>
    %75 = tpu.matmul %69, %74, %cst_35 {dimension_numbers = #tpu.dot_dimension_numbers<[1], [0], [0], [1], [0, 0, 1, 1], [], []>} : vector<256x384xbf16>, vector<384x128xbf16>, vector<256x128xf32> -> vector<256x128xf32>
    %c2 = arith.constant 2 : index
    %c0_36 = arith.constant 0 : index
    %c0_37 = arith.constant 0 : index
    %76 = vector.load %arg6[%c2, %c0_36, %c0_37] : memref<3x384x128xbf16, #tpu.memory_space<vmem>>, vector<1x384x128xbf16>
    %77 = vector.shape_cast %76 : vector<1x384x128xbf16> to vector<384x128xbf16>
    %cst_38 = arith.constant dense<0.000000e+00> : vector<256x128xf32>
    %78 = tpu.matmul %69, %77, %cst_38 {dimension_numbers = #tpu.dot_dimension_numbers<[1], [0], [0], [1], [0, 0, 1, 1], [], []>} : vector<256x384xbf16>, vector<384x128xbf16>, vector<256x128xf32> -> vector<256x128xf32>
    %cst_39 = arith.constant 0.000000e+00 : f32
    %79 = vector.broadcast %cst_39 : f32 to vector<16x128xf32>
    %c0_40 = arith.constant 0 : index
    %c0_41 = arith.constant 0 : index
    %80 = vector.load %arg7[%c0_40, %c0_41] : memref<1x128xf32, #tpu.memory_space<vmem>>, vector<1x128xf32>
    %81 = vector.broadcast %80 : vector<1x128xf32> to vector<256x128xf32>
    %82 = arith.addf %75, %81 : vector<256x128xf32>
    %83 = vector.extract_strided_slice %72 {offsets = [0, 0], sizes = [240, 128], strides = [1, 1]} : vector<256x128xf32> to vector<240x128xf32>
    %84 = tpu.concatenate %79, %83 in 0 : vector<16x128xf32>, vector<240x128xf32> -> vector<256x128xf32>
    %85 = arith.addf %82, %84 : vector<256x128xf32>
    %86 = vector.extract_strided_slice %78 {offsets = [16, 0], sizes = [240, 128], strides = [1, 1]} : vector<256x128xf32> to vector<240x128xf32>
    %87 = tpu.concatenate %86, %79 in 0 : vector<240x128xf32>, vector<16x128xf32> -> vector<256x128xf32>
    %88 = arith.addf %85, %87 : vector<256x128xf32>
    %89 = vector.broadcast %3 : vector<1x128xf32> to vector<256x128xf32>
    %90 = arith.addf %88, %89 : vector<256x128xf32>
    %cst_42 = arith.constant dense<0.000000e+00> : vector<128xf32>
    %91 = vector.multi_reduction <add>, %90, %cst_42 [0] : vector<256x128xf32> to vector<128xf32>
    %92 = vector.shape_cast %91 : vector<128xf32> to vector<1x128xf32>
    %c0_43 = arith.constant 0 : index
    %c0_44 = arith.constant 0 : index
    %93 = vector.load %arg10[%c0_43, %c0_44] : memref<128x128xf32, #tpu.memory_space<vmem>>, vector<128x128xf32>
    %cst_45 = arith.constant dense<0.000000e+00> : vector<1x128xf32>
    %94 = tpu.matmul %92, %93, %cst_45 {dimension_numbers = #tpu.dot_dimension_numbers<[1], [0], [0], [1], [0, 0, 1, 1], [], []>} : vector<1x128xf32>, vector<128x128xf32>, vector<1x128xf32> -> vector<1x128xf32>
    %95 = vector.broadcast %94 : vector<1x128xf32> to vector<256x128xf32>
    %96 = arith.subf %90, %95 : vector<256x128xf32>
    %97 = arith.mulf %96, %96 : vector<256x128xf32>
    %cst_46 = arith.constant dense<0.000000e+00> : vector<128xf32>
    %98 = vector.multi_reduction <add>, %97, %cst_46 [0] : vector<256x128xf32> to vector<128xf32>
    %99 = vector.shape_cast %98 : vector<128xf32> to vector<1x128xf32>
    %c0_47 = arith.constant 0 : index
    %c0_48 = arith.constant 0 : index
    %100 = vector.load %arg10[%c0_47, %c0_48] : memref<128x128xf32, #tpu.memory_space<vmem>>, vector<128x128xf32>
    %cst_49 = arith.constant dense<0.000000e+00> : vector<1x128xf32>
    %101 = tpu.matmul %99, %100, %cst_49 {dimension_numbers = #tpu.dot_dimension_numbers<[1], [0], [0], [1], [0, 0, 1, 1], [], []>} : vector<1x128xf32>, vector<128x128xf32>, vector<1x128xf32> -> vector<1x128xf32>
    %cst_50 = arith.constant 9.99999974E-6 : f32
    %102 = vector.broadcast %cst_50 : f32 to vector<1x128xf32>
    %103 = arith.addf %101, %102 : vector<1x128xf32>
    %104 = math.rsqrt %103 : vector<1x128xf32>
    %105 = vector.broadcast %104 : vector<1x128xf32> to vector<256x128xf32>
    %106 = arith.mulf %96, %105 : vector<256x128xf32>
    %c0_51 = arith.constant 0 : index
    %c0_52 = arith.constant 0 : index
    %107 = vector.load %arg8[%c0_51, %c0_52] : memref<1x128xf32, #tpu.memory_space<vmem>>, vector<1x128xf32>
    %108 = vector.broadcast %107 : vector<1x128xf32> to vector<256x128xf32>
    %109 = arith.mulf %106, %108 : vector<256x128xf32>
    %c0_53 = arith.constant 0 : index
    %c0_54 = arith.constant 0 : index
    %110 = vector.load %arg9[%c0_53, %c0_54] : memref<1x128xf32, #tpu.memory_space<vmem>>, vector<1x128xf32>
    %111 = vector.broadcast %110 : vector<1x128xf32> to vector<256x128xf32>
    %112 = arith.addf %109, %111 : vector<256x128xf32>
    %113 = arith.negf %112 : vector<256x128xf32>
    %114 = math.exp %113 : vector<256x128xf32>
    %cst_55 = arith.constant 1.000000e+00 : f32
    %115 = vector.broadcast %cst_55 : f32 to vector<256x128xf32>
    %116 = arith.addf %115, %114 : vector<256x128xf32>
    %117 = arith.divf %115, %116 : vector<256x128xf32>
    %118 = arith.mulf %112, %117 : vector<256x128xf32>
    %c1_i32_56 = arith.constant 1 : i32
    %119 = tpu.dynamic_rotate %118 by %c1_i32_56 dim 0 : vector<256x128xf32>, i32 -> vector<256x128xf32>
    %120 = vector.broadcast %24 : vector<256x1xf32> to vector<256x128xf32>
    %121 = arith.mulf %120, %119 : vector<256x128xf32>
    %122 = arith.truncf %121 : vector<256x128xf32> to vector<256x128xbf16>
    %c255_i32_57 = arith.constant 255 : i32
    %123 = tpu.dynamic_rotate %118 by %c255_i32_57 dim 0 : vector<256x128xf32>, i32 -> vector<256x128xf32>
    %124 = vector.broadcast %28 : vector<256x1xf32> to vector<256x128xf32>
    %125 = arith.mulf %124, %123 : vector<256x128xf32>
    %126 = arith.truncf %125 : vector<256x128xf32> to vector<256x128xbf16>
    %c0_58 = arith.constant 0 : index
    %c0_59 = arith.constant 0 : index
    %127 = vector.load %arg15[%c0_58, %c0_59] : memref<256x384xbf16, #tpu.memory_space<vmem>>, vector<256x128xbf16>
    tpu.vector_store %arg15[%c0_58, %c0_59], %122 {strides = array<i32>} : memref<256x384xbf16, #tpu.memory_space<vmem>>, vector<256x128xbf16>,
    %128 = arith.truncf %118 : vector<256x128xf32> to vector<256x128xbf16>
    %c0_60 = arith.constant 0 : index
    %c128_61 = arith.constant 128 : index
    %129 = vector.load %arg15[%c0_60, %c128_61] : memref<256x384xbf16, #tpu.memory_space<vmem>>, vector<256x128xbf16>
    tpu.vector_store %arg15[%c0_60, %c128_61], %128 {strides = array<i32>} : memref<256x384xbf16, #tpu.memory_space<vmem>>, vector<256x128xbf16>,
    %c0_62 = arith.constant 0 : index
    %c256_63 = arith.constant 256 : index
    %130 = vector.load %arg15[%c0_62, %c256_63] : memref<256x384xbf16, #tpu.memory_space<vmem>>, vector<256x128xbf16>
    tpu.vector_store %arg15[%c0_62, %c256_63], %126 {strides = array<i32>} : memref<256x384xbf16, #tpu.memory_space<vmem>>, vector<256x128xbf16>,
    %c0_64 = arith.constant 0 : index
    %c0_65 = arith.constant 0 : index
    %131 = vector.load %arg15[%c0_64, %c0_65] : memref<256x384xbf16, #tpu.memory_space<vmem>>, vector<256x384xbf16>
    %c0_66 = arith.constant 0 : index
    %c0_67 = arith.constant 0 : index
    %c0_68 = arith.constant 0 : index
    %132 = vector.load %arg11[%c0_66, %c0_67, %c0_68] : memref<3x384x128xbf16, #tpu.memory_space<vmem>>, vector<1x384x128xbf16>
    %133 = vector.shape_cast %132 : vector<1x384x128xbf16> to vector<384x128xbf16>
    %cst_69 = arith.constant dense<0.000000e+00> : vector<256x128xf32>
    %134 = tpu.matmul %131, %133, %cst_69 {dimension_numbers = #tpu.dot_dimension_numbers<[1], [0], [0], [1], [0, 0, 1, 1], [], []>} : vector<256x384xbf16>, vector<384x128xbf16>, vector<256x128xf32> -> vector<256x128xf32>
    %c1_70 = arith.constant 1 : index
    %c0_71 = arith.constant 0 : index
    %c0_72 = arith.constant 0 : index
    %135 = vector.load %arg11[%c1_70, %c0_71, %c0_72] : memref<3x384x128xbf16, #tpu.memory_space<vmem>>, vector<1x384x128xbf16>
    %136 = vector.shape_cast %135 : vector<1x384x128xbf16> to vector<384x128xbf16>
    %cst_73 = arith.constant dense<0.000000e+00> : vector<256x128xf32>
    %137 = tpu.matmul %131, %136, %cst_73 {dimension_numbers = #tpu.dot_dimension_numbers<[1], [0], [0], [1], [0, 0, 1, 1], [], []>} : vector<256x384xbf16>, vector<384x128xbf16>, vector<256x128xf32> -> vector<256x128xf32>
    %c2_74 = arith.constant 2 : index
    %c0_75 = arith.constant 0 : index
    %c0_76 = arith.constant 0 : index
    %138 = vector.load %arg11[%c2_74, %c0_75, %c0_76] : memref<3x384x128xbf16, #tpu.memory_space<vmem>>, vector<1x384x128xbf16>
    %139 = vector.shape_cast %138 : vector<1x384x128xbf16> to vector<384x128xbf16>
    %cst_77 = arith.constant dense<0.000000e+00> : vector<256x128xf32>
    %140 = tpu.matmul %131, %139, %cst_77 {dimension_numbers = #tpu.dot_dimension_numbers<[1], [0], [0], [1], [0, 0, 1, 1], [], []>} : vector<256x384xbf16>, vector<384x128xbf16>, vector<256x128xf32> -> vector<256x128xf32>
    %cst_78 = arith.constant 0.000000e+00 : f32
    %141 = vector.broadcast %cst_78 : f32 to vector<16x128xf32>
    %c0_79 = arith.constant 0 : index
    %c0_80 = arith.constant 0 : index
    %142 = vector.load %arg12[%c0_79, %c0_80] : memref<1x128xf32, #tpu.memory_space<vmem>>, vector<1x128xf32>
    %143 = vector.broadcast %142 : vector<1x128xf32> to vector<256x128xf32>
    %144 = arith.addf %137, %143 : vector<256x128xf32>
    %145 = vector.extract_strided_slice %134 {offsets = [0, 0], sizes = [240, 128], strides = [1, 1]} : vector<256x128xf32> to vector<240x128xf32>
    %146 = tpu.concatenate %141, %145 in 0 : vector<16x128xf32>, vector<240x128xf32> -> vector<256x128xf32>
    %147 = arith.addf %144, %146 : vector<256x128xf32>
    %148 = vector.extract_strided_slice %140 {offsets = [16, 0], sizes = [240, 128], strides = [1, 1]} : vector<256x128xf32> to vector<240x128xf32>
    %149 = tpu.concatenate %148, %141 in 0 : vector<240x128xf32>, vector<16x128xf32> -> vector<256x128xf32>
    %150 = arith.addf %147, %149 : vector<256x128xf32>
    %151 = arith.truncf %1 : vector<256x128xf32> to vector<256x128xbf16>
    %c0_81 = arith.constant 0 : index
    %c0_82 = arith.constant 0 : index
    %152 = vector.load %arg13[%c0_81, %c0_82] : memref<128x128xbf16, #tpu.memory_space<vmem>>, vector<128x128xbf16>
    %cst_83 = arith.constant dense<0.000000e+00> : vector<256x128xf32>
    %153 = tpu.matmul %151, %152, %cst_83 {dimension_numbers = #tpu.dot_dimension_numbers<[1], [0], [0], [1], [0, 0, 1, 1], [], []>} : vector<256x128xbf16>, vector<128x128xbf16>, vector<256x128xf32> -> vector<256x128xf32>
    %154 = arith.addf %150, %153 : vector<256x128xf32>
    %c0_84 = arith.constant 0 : index
    %c0_85 = arith.constant 0 : index
    %c0_86 = arith.constant 0 : index
    %155 = vector.load %arg14[%c0_84, %c0_85, %c0_86] : memref<1x256x128xf32, #tpu.memory_space<vmem>>, vector<1x256x128xf32>
    %156 = vector.shape_cast %155 : vector<1x256x128xf32> to vector<256x128xf32>
    %157 = vector.shape_cast %154 : vector<256x128xf32> to vector<1x256x128xf32>
    tpu.vector_store %arg14[%c0_84, %c0_85, %c0_86], %157 {strides = array<i32>} : memref<1x256x128xf32, #tpu.memory_space<vmem>>, vector<1x256x128xf32>,
    return
  }
  func.func @transform_0(%arg0: i32) -> (i32, i32, i32) {
    %c0_i32 = arith.constant 0 : i32
    %c0_i32_0 = arith.constant 0 : i32
    %c0_i32_1 = arith.constant 0 : i32
    return %arg0, %c0_i32, %c0_i32_0 : i32, i32, i32
  }
  func.func @transform_1(%arg0: i32) -> (i32, i32, i32) {
    %c0_i32 = arith.constant 0 : i32
    %c0_i32_0 = arith.constant 0 : i32
    %c0_i32_1 = arith.constant 0 : i32
    return %arg0, %c0_i32, %c0_i32_0 : i32, i32, i32
  }
  func.func @transform_2(%arg0: i32) -> (i32, i32) {
    %c0_i32 = arith.constant 0 : i32
    %c0_i32_0 = arith.constant 0 : i32
    %c0_i32_1 = arith.constant 0 : i32
    return %c0_i32, %c0_i32_0 : i32, i32
  }
  func.func @transform_3(%arg0: i32) -> (i32, i32) {
    %c0_i32 = arith.constant 0 : i32
    %c0_i32_0 = arith.constant 0 : i32
    %c0_i32_1 = arith.constant 0 : i32
    return %c0_i32, %c0_i32_0 : i32, i32
  }
  func.func @transform_4(%arg0: i32) -> (i32, i32) {
    %c0_i32 = arith.constant 0 : i32
    %c0_i32_0 = arith.constant 0 : i32
    %c0_i32_1 = arith.constant 0 : i32
    return %c0_i32, %c0_i32_0 : i32, i32
  }
  func.func @transform_5(%arg0: i32) -> (i32, i32, i32) {
    %c0_i32 = arith.constant 0 : i32
    %c0_i32_0 = arith.constant 0 : i32
    %c0_i32_1 = arith.constant 0 : i32
    %c0_i32_2 = arith.constant 0 : i32
    return %c0_i32, %c0_i32_0, %c0_i32_1 : i32, i32, i32
  }
  func.func @transform_6(%arg0: i32) -> (i32, i32) {
    %c0_i32 = arith.constant 0 : i32
    %c0_i32_0 = arith.constant 0 : i32
    %c0_i32_1 = arith.constant 0 : i32
    return %c0_i32, %c0_i32_0 : i32, i32
  }
  func.func @transform_7(%arg0: i32) -> (i32, i32) {
    %c0_i32 = arith.constant 0 : i32
    %c0_i32_0 = arith.constant 0 : i32
    %c0_i32_1 = arith.constant 0 : i32
    return %c0_i32, %c0_i32_0 : i32, i32
  }
  func.func @transform_8(%arg0: i32) -> (i32, i32) {
    %c0_i32 = arith.constant 0 : i32
    %c0_i32_0 = arith.constant 0 : i32
    %c0_i32_1 = arith.constant 0 : i32
    return %c0_i32, %c0_i32_0 : i32, i32
  }
  func.func @transform_9(%arg0: i32) -> (i32, i32) {
    %c0_i32 = arith.constant 0 : i32
    %c0_i32_0 = arith.constant 0 : i32
    %c0_i32_1 = arith.constant 0 : i32
    return %c0_i32, %c0_i32_0 : i32, i32
  }
  func.func @transform_10(%arg0: i32) -> (i32, i32, i32) {
    %c0_i32 = arith.constant 0 : i32
    %c0_i32_0 = arith.constant 0 : i32
    %c0_i32_1 = arith.constant 0 : i32
    %c0_i32_2 = arith.constant 0 : i32
    return %c0_i32, %c0_i32_0, %c0_i32_1 : i32, i32, i32
  }
  func.func @transform_11(%arg0: i32) -> (i32, i32) {
    %c0_i32 = arith.constant 0 : i32
    %c0_i32_0 = arith.constant 0 : i32
    %c0_i32_1 = arith.constant 0 : i32
    return %c0_i32, %c0_i32_0 : i32, i32
  }
  func.func @transform_12(%arg0: i32) -> (i32, i32) {
    %c0_i32 = arith.constant 0 : i32
    %c0_i32_0 = arith.constant 0 : i32
    %c0_i32_1 = arith.constant 0 : i32
    return %c0_i32, %c0_i32_0 : i32, i32
  }
  func.func @transform_13(%arg0: i32) -> (i32, i32, i32) {
    %c0_i32 = arith.constant 0 : i32
    %c0_i32_0 = arith.constant 0 : i32
    %c0_i32_1 = arith.constant 0 : i32
    return %arg0, %c0_i32, %c0_i32_0 : i32, i32, i32
  }
}

</mosaic_0001>

<llo_original>
// kernel: tpu_custom_call.1
$region0: #{tpu_custom_call.1}
  #allocation0 [shape = 'u32[]', space=smem, size = 0x4, offset = 0x4, fixed_abs, tag = 'smem constant byte address 0x4 - core index']
  #allocation1 [shape = 'u32[72,128]{1,0:T(1,128)}', space=vmem, size = 0x9000, scoped, tag = 'internal scratch']
  #allocation2 [shape = 'bf16[256,384]{1,0:T(8,128)(2,1)}', space=vmem, size = 0x30000, scoped, tag = 'scratch operand']
  %s0 = inlined_call_operand.hbm [shape: f32[2,256,128], index: 0, kind: input, shape index: {}]
  %s1 = inlined_call_operand.hbm [shape: f32[2,1,128], index: 1, kind: input, shape index: {}]
  %s2 = inlined_call_operand.vmem [shape: f32[1,128], index: 2, kind: input, shape index: {}]
  %s3 = inlined_call_operand.vmem [shape: f32[1,128], index: 3, kind: input, shape index: {}]
  %s4 = inlined_call_operand.hbm [shape: f32[128,128], index: 4, kind: input, shape index: {}]
  %s5 = inlined_call_operand.hbm [shape: bf16[3,384,128], index: 5, kind: input, shape index: {}]
  %s6 = inlined_call_operand.vmem [shape: f32[1,128], index: 6, kind: input, shape index: {}]
  %s7 = inlined_call_operand.vmem [shape: f32[1,128], index: 7, kind: input, shape index: {}]
  %s8 = inlined_call_operand.vmem [shape: f32[1,128], index: 8, kind: input, shape index: {}]
  %s9 = inlined_call_operand.hbm [shape: f32[128,128], index: 9, kind: input, shape index: {}]
  %s10 = inlined_call_operand.hbm [shape: bf16[3,384,128], index: 10, kind: input, shape index: {}]
  %s11 = inlined_call_operand.vmem [shape: f32[1,128], index: 11, kind: input, shape index: {}]
  %s12 = inlined_call_operand.hbm [shape: bf16[128,128], index: 12, kind: input, shape index: {}]
  %s13 = inlined_call_operand.hbm [shape: f32[2,256,128], index: 13, kind: output, shape index: {}]
  %s14 = sld [smem:[#allocation0]]
  $region113: #{tpu_custom_call.1} parent=0
    _
  %s16 = ssub.s32 1, %s14
  %s17 = scalar_select 0, %s16, %s14
  $region1: #{tpu_custom_call.1} parent=0
    #allocation3 [shape = 'u8[262144]{0}', space=vmem, size = 0x40000, scoped, tag = 'input window, operand 0']
    #allocation4 [shape = 's32[2]{0}', space=sflag, size = 0x8, scoped, tag = 'scoped memory for tpu_custom_call.1']
    #allocation5 [shape = 's32[2]{0}', space=sflag, size = 0x8, scoped, tag = 'scoped memory for tpu_custom_call.1']
    #allocation6 [shape = 'u8[1024]{0}', space=vmem, size = 0x400, scoped, tag = 'input window, operand 1']
    #allocation7 [shape = 's32[2]{0}', space=sflag, size = 0x8, scoped, tag = 'scoped memory for tpu_custom_call.1']
    #allocation8 [shape = 'u8[65536]{0}', space=vmem, size = 0x10000, scoped, tag = 'input window, operand 4, single buffered']
    #allocation9 [shape = 'u8[294912]{0}', space=vmem, size = 0x48000, scoped, tag = 'input window, operand 5, single buffered']
    #allocation10 [shape = 's32[1]{0}', space=sflag, size = 0x4, scoped, tag = 'scoped memory for tpu_custom_call.1']
    #allocation11 [shape = 'u8[65536]{0}', space=vmem, size = 0x10000, scoped, tag = 'input window, operand 9, single buffered']
    #allocation12 [shape = 'u8[294912]{0}', space=vmem, size = 0x48000, scoped, tag = 'input window, operand 10, single buffered']
    #allocation13 [shape = 's32[1]{0}', space=sflag, size = 0x4, scoped, tag = 'scoped memory for tpu_custom_call.1']
    #allocation14 [shape = 'u8[32768]{0}', space=vmem, size = 0x8000, scoped, tag = 'input window, operand 12, single buffered']
    #allocation15 [shape = 'u8[262144]{0}', space=vmem, size = 0x40000, scoped, tag = 'output window, operand 0']
    %18 = vsyncpa [#allocation4], 0
    %s19 = scalar_lea.sflag [#allocation4], 1
    %20 = vsyncpa %s19, 0
    %21 = vsyncpa [#allocation7], 0
    %s22 = scalar_lea.sflag [#allocation7], 1
    %23 = vsyncpa %s22, 0
    %24 = vsyncpa [#allocation10], 0
    %25 = vsyncpa [#allocation13], 0
    %26 = vsyncpa [#allocation5], 0
    %s27 = scalar_lea.sflag [#allocation5], 1
    %28 = vsyncpa %s27, 0
    loop: start=0, step=1, limit=4
    $region2: #{tpu_custom_call.1} parent=1 // loop_pre_header
      _
    $region3: #{tpu_custom_call.1} parent=1 // loop_header
      %s30 = sphi 0, %s34
      %p31 = scmp.ge.s32.totalorder %s30, 4
      %s40 = sphi 0, %s42
      %s43 = sphi 0, %s40
      %s44 = sphi 0, %s43
      %s60 = sphi 0, %s44
      %s66 = sphi 0, %s68
      %s69 = sphi 0, %s66
      %s70 = sphi 0, %s69
      %s86 = sphi 0, %s70
      %s90 = sphi 0, %s90
      %s92 = sphi 0, %s90
      %s93 = sphi 0, %s92
      %s107 = sphi 0, %s93
      %s111 = sphi 0, %s111
      %s113 = sphi 0, %s111
      %s114 = sphi 0, %s113
      %s128 = sphi 0, %s114
      %s132 = sphi 0, %s132
      %s134 = sphi 0, %s132
      %s135 = sphi 0, %s134
      %s149 = sphi 0, %s135
      %s153 = sphi 0, %s153
      %s155 = sphi 0, %s153
      %s156 = sphi 0, %s155
      %s170 = sphi 0, %s156
      %s174 = sphi 0, %s174
      %s176 = sphi 0, %s174
      %s177 = sphi 0, %s176
      %s191 = sphi 0, %s177
      %s195 = sphi 0, %s195
      %s197 = sphi 0, %s195
      %s198 = sphi 0, %s197
      %s212 = sphi 0, %s198
      %s216 = sphi 0, %s216
      %s218 = sphi 0, %s216
      %s219 = sphi 0, %s218
      %s233 = sphi 0, %s219
      %s237 = sphi 0, %s237
      %s239 = sphi 0, %s237
      %s240 = sphi 0, %s239
      %s254 = sphi 0, %s240
      %s258 = sphi 0, %s258
      %s260 = sphi 0, %s258
      %s261 = sphi 0, %s260
      %s275 = sphi 0, %s261
      %s279 = sphi 0, %s279
      %s281 = sphi 0, %s279
      %s282 = sphi 0, %s281
      %s296 = sphi 0, %s282
      %s300 = sphi 0, %s300
      %s302 = sphi 0, %s300
      %s303 = sphi 0, %s302
      %s317 = sphi 0, %s303
      %s323 = sphi 0, %s325
      %s326 = sphi 0, %s323
      %s327 = sphi 0, %s326
      %s343 = sphi 0, %s327
    $region4: #{tpu_custom_call.1} parent=1 // loop_header_branch
      %33 = sbr.rel (%p31) target = $region8
    $region5: #{tpu_custom_call.1} parent=1 // loop_body
      %s35 = ssub.s32 %s30, 1
      %s36 = ssub.s32 %s30, 2
      %s37 = sadd.s32 %s30, 1
      %s38 = ssub.s32 %s30, %s37
      %p39 = scmp.eq.s32.totalorder %s38, 0
      %s41 = sadd.s32 %s40, 1
      %s42 = scalar_select %p39, %s40, %s41
      %p45 = pneg %p39
      %p46 = scmp.eq.s32.totalorder %s30, 1
      %p47 = por %p45, %p46
      %p48 = scmp.ne.s32.totalorder %s40, %s43
      %p49 = scmp.eq.s32.totalorder %s30, 0
      %p50 = por %p48, %p49
      %p51 = scmp.ne.s32.totalorder %s40, %s43
      %p52 = scmp.eq.s32.totalorder %s35, 1
      %p53 = por %p51, %p52
      %p54 = scmp.ne.s32.totalorder %s43, %s44
      %p55 = scmp.eq.s32.totalorder %s35, 0
      %p56 = por %p54, %p55
      %p57 = scmp.ne.s32.totalorder %s43, %s44
      %p58 = scmp.eq.s32.totalorder %s36, 1
      %p59 = por %p57, %p58
      %p61 = scmp.ne.s32.totalorder %s44, %s60
      %p62 = scmp.eq.s32.totalorder %s36, 0
      %p63 = por %p61, %p62
      %s64 = ssub.s32 %s30, %s37
      %p65 = scmp.eq.s32.totalorder %s64, 0
      %s67 = sadd.s32 %s66, 1
      %s68 = scalar_select %p65, %s66, %s67
      %p71 = pneg %p65
      %p72 = scmp.eq.s32.totalorder %s30, 1
      %p73 = por %p71, %p72
      %p74 = scmp.ne.s32.totalorder %s66, %s69
      %p75 = scmp.eq.s32.totalorder %s30, 0
      %p76 = por %p74, %p75
      %p77 = scmp.ne.s32.totalorder %s66, %s69
      %p78 = scmp.eq.s32.totalorder %s35, 1
      %p79 = por %p77, %p78
      %p80 = scmp.ne.s32.totalorder %s69, %s70
      %p81 = scmp.eq.s32.totalorder %s35, 0
      %p82 = por %p80, %p81
      %p83 = scmp.ne.s32.totalorder %s69, %s70
      %p84 = scmp.eq.s32.totalorder %s36, 1
      %p85 = por %p83, %p84
      %p87 = scmp.ne.s32.totalorder %s70, %s86
      %p88 = scmp.eq.s32.totalorder %s36, 0
      %p89 = por %p87, %p88
      %s91 = sadd.s32 %s90, 1
      %p94 = scmp.eq.s32.totalorder %s30, 1
      %p95 = scmp.ne.s32.totalorder %s90, %s92
      %p96 = scmp.eq.s32.totalorder %s30, 0
      %p97 = por %p95, %p96
      %p98 = scmp.ne.s32.totalorder %s90, %s92
      %p99 = scmp.eq.s32.totalorder %s35, 1
      %p100 = por %p98, %p99
      %p101 = scmp.ne.s32.totalorder %s92, %s93
      %p102 = scmp.eq.s32.totalorder %s35, 0
      %p103 = por %p101, %p102
      %p104 = scmp.ne.s32.totalorder %s92, %s93
      %p105 = scmp.eq.s32.totalorder %s36, 1
      %p106 = por %p104, %p105
      %p108 = scmp.ne.s32.totalorder %s93, %s107
      %p109 = scmp.eq.s32.totalorder %s36, 0
      %p110 = por %p108, %p109
      %s112 = sadd.s32 %s111, 1
      %p115 = scmp.eq.s32.totalorder %s30, 1
      %p116 = scmp.ne.s32.totalorder %s111, %s113
      %p117 = scmp.eq.s32.totalorder %s30, 0
      %p118 = por %p116, %p117
      %p119 = scmp.ne.s32.totalorder %s111, %s113
      %p120 = scmp.eq.s32.totalorder %s35, 1
      %p121 = por %p119, %p120
      %p122 = scmp.ne.s32.totalorder %s113, %s114
      %p123 = scmp.eq.s32.totalorder %s35, 0
      %p124 = por %p122, %p123
      %p125 = scmp.ne.s32.totalorder %s113, %s114
      %p126 = scmp.eq.s32.totalorder %s36, 1
      %p127 = por %p125, %p126
      %p129 = scmp.ne.s32.totalorder %s114, %s128
      %p130 = scmp.eq.s32.totalorder %s36, 0
      %p131 = por %p129, %p130
      %s133 = sadd.s32 %s132, 1
      %p136 = scmp.eq.s32.totalorder %s30, 1
      %p137 = scmp.ne.s32.totalorder %s132, %s134
      %p138 = scmp.eq.s32.totalorder %s30, 0
      %p139 = por %p137, %p138
      %p140 = scmp.ne.s32.totalorder %s132, %s134
      %p141 = scmp.eq.s32.totalorder %s35, 1
      %p142 = por %p140, %p141
      %p143 = scmp.ne.s32.totalorder %s134, %s135
      %p144 = scmp.eq.s32.totalorder %s35, 0
      %p145 = por %p143, %p144
      %p146 = scmp.ne.s32.totalorder %s134, %s135
      %p147 = scmp.eq.s32.totalorder %s36, 1
      %p148 = por %p146, %p147
      %p150 = scmp.ne.s32.totalorder %s135, %s149
      %p151 = scmp.eq.s32.totalorder %s36, 0
      %p152 = por %p150, %p151
      %s154 = sadd.s32 %s153, 1
      %p157 = scmp.eq.s32.totalorder %s30, 1
      %p158 = scmp.ne.s32.totalorder %s153, %s155
      %p159 = scmp.eq.s32.totalorder %s30, 0
      %p160 = por %p158, %p159
      %p161 = scmp.ne.s32.totalorder %s153, %s155
      %p162 = scmp.eq.s32.totalorder %s35, 1
      %p163 = por %p161, %p162
      %p164 = scmp.ne.s32.totalorder %s155, %s156
      %p165 = scmp.eq.s32.totalorder %s35, 0
      %p166 = por %p164, %p165
      %p167 = scmp.ne.s32.totalorder %s155, %s156
      %p168 = scmp.eq.s32.totalorder %s36, 1
      %p169 = por %p167, %p168
      %p171 = scmp.ne.s32.totalorder %s156, %s170
      %p172 = scmp.eq.s32.totalorder %s36, 0
      %p173 = por %p171, %p172
      %s175 = sadd.s32 %s174, 1
      %p178 = scmp.eq.s32.totalorder %s30, 1
      %p179 = scmp.ne.s32.totalorder %s174, %s176
      %p180 = scmp.eq.s32.totalorder %s30, 0
      %p181 = por %p179, %p180
      %p182 = scmp.ne.s32.totalorder %s174, %s176
      %p183 = scmp.eq.s32.totalorder %s35, 1
      %p184 = por %p182, %p183
      %p185 = scmp.ne.s32.totalorder %s176, %s177
      %p186 = scmp.eq.s32.totalorder %s35, 0
      %p187 = por %p185, %p186
      %p188 = scmp.ne.s32.totalorder %s176, %s177
      %p189 = scmp.eq.s32.totalorder %s36, 1
      %p190 = por %p188, %p189
      %p192 = scmp.ne.s32.totalorder %s177, %s191
      %p193 = scmp.eq.s32.totalorder %s36, 0
      %p194 = por %p192, %p193
      %s196 = sadd.s32 %s195, 1
      %p199 = scmp.eq.s32.totalorder %s30, 1
      %p200 = scmp.ne.s32.totalorder %s195, %s197
      %p201 = scmp.eq.s32.totalorder %s30, 0
      %p202 = por %p200, %p201
      %p203 = scmp.ne.s32.totalorder %s195, %s197
      %p204 = scmp.eq.s32.totalorder %s35, 1
      %p205 = por %p203, %p204
      %p206 = scmp.ne.s32.totalorder %s197, %s198
      %p207 = scmp.eq.s32.totalorder %s35, 0
      %p208 = por %p206, %p207
      %p209 = scmp.ne.s32.totalorder %s197, %s198
      %p210 = scmp.eq.s32.totalorder %s36, 1
      %p211 = por %p209, %p210
      %p213 = scmp.ne.s32.totalorder %s198, %s212
      %p214 = scmp.eq.s32.totalorder %s36, 0
      %p215 = por %p213, %p214
      %s217 = sadd.s32 %s216, 1
      %p220 = scmp.eq.s32.totalorder %s30, 1
      %p221 = scmp.ne.s32.totalorder %s216, %s218
      %p222 = scmp.eq.s32.totalorder %s30, 0
      %p223 = por %p221, %p222
      %p224 = scmp.ne.s32.totalorder %s216, %s218
      %p225 = scmp.eq.s32.totalorder %s35, 1
      %p226 = por %p224, %p225
      %p227 = scmp.ne.s32.totalorder %s218, %s219
      %p228 = scmp.eq.s32.totalorder %s35, 0
      %p229 = por %p227, %p228
      %p230 = scmp.ne.s32.totalorder %s218, %s219
      %p231 = scmp.eq.s32.totalorder %s36, 1
      %p232 = por %p230, %p231
      %p234 = scmp.ne.s32.totalorder %s219, %s233
      %p235 = scmp.eq.s32.totalorder %s36, 0
      %p236 = por %p234, %p235
      %s238 = sadd.s32 %s237, 1
      %p241 = scmp.eq.s32.totalorder %s30, 1
      %p242 = scmp.ne.s32.totalorder %s237, %s239
      %p243 = scmp.eq.s32.totalorder %s30, 0
      %p244 = por %p242, %p243
      %p245 = scmp.ne.s32.totalorder %s237, %s239
      %p246 = scmp.eq.s32.totalorder %s35, 1
      %p247 = por %p245, %p246
      %p248 = scmp.ne.s32.totalorder %s239, %s240
      %p249 = scmp.eq.s32.totalorder %s35, 0
      %p250 = por %p248, %p249
      %p251 = scmp.ne.s32.totalorder %s239, %s240
      %p252 = scmp.eq.s32.totalorder %s36, 1
      %p253 = por %p251, %p252
      %p255 = scmp.ne.s32.totalorder %s240, %s254
      %p256 = scmp.eq.s32.totalorder %s36, 0
      %p257 = por %p255, %p256
      %s259 = sadd.s32 %s258, 1
      %p262 = scmp.eq.s32.totalorder %s30, 1
      %p263 = scmp.ne.s32.totalorder %s258, %s260
      %p264 = scmp.eq.s32.totalorder %s30, 0
      %p265 = por %p263, %p264
      %p266 = scmp.ne.s32.totalorder %s258, %s260
      %p267 = scmp.eq.s32.totalorder %s35, 1
      %p268 = por %p266, %p267
      %p269 = scmp.ne.s32.totalorder %s260, %s261
      %p270 = scmp.eq.s32.totalorder %s35, 0
      %p271 = por %p269, %p270
      %p272 = scmp.ne.s32.totalorder %s260, %s261
      %p273 = scmp.eq.s32.totalorder %s36, 1
      %p274 = por %p272, %p273
      %p276 = scmp.ne.s32.totalorder %s261, %s275
      %p277 = scmp.eq.s32.totalorder %s36, 0
      %p278 = por %p276, %p277
      %s280 = sadd.s32 %s279, 1
      %p283 = scmp.eq.s32.totalorder %s30, 1
      %p284 = scmp.ne.s32.totalorder %s279, %s281
      %p285 = scmp.eq.s32.totalorder %s30, 0
      %p286 = por %p284, %p285
      %p287 = scmp.ne.s32.totalorder %s279, %s281
      %p288 = scmp.eq.s32.totalorder %s35, 1
      %p289 = por %p287, %p288
      %p290 = scmp.ne.s32.totalorder %s281, %s282
      %p291 = scmp.eq.s32.totalorder %s35, 0
      %p292 = por %p290, %p291
      %p293 = scmp.ne.s32.totalorder %s281, %s282
      %p294 = scmp.eq.s32.totalorder %s36, 1
      %p295 = por %p293, %p294
      %p297 = scmp.ne.s32.totalorder %s282, %s296
      %p298 = scmp.eq.s32.totalorder %s36, 0
      %p299 = por %p297, %p298
      %s301 = sadd.s32 %s300, 1
      %p304 = scmp.eq.s32.totalorder %s30, 1
      %p305 = scmp.ne.s32.totalorder %s300, %s302
      %p306 = scmp.eq.s32.totalorder %s30, 0
      %p307 = por %p305, %p306
      %p308 = scmp.ne.s32.totalorder %s300, %s302
      %p309 = scmp.eq.s32.totalorder %s35, 1
      %p310 = por %p308, %p309
      %p311 = scmp.ne.s32.totalorder %s302, %s303
      %p312 = scmp.eq.s32.totalorder %s35, 0
      %p313 = por %p311, %p312
      %p314 = scmp.ne.s32.totalorder %s302, %s303
      %p315 = scmp.eq.s32.totalorder %s36, 1
      %p316 = por %p314, %p315
      %p318 = scmp.ne.s32.totalorder %s303, %s317
      %p319 = scmp.eq.s32.totalorder %s36, 0
      %p320 = por %p318, %p319
      %s321 = ssub.s32 %s30, %s37
      %p322 = scmp.eq.s32.totalorder %s321, 0
      %s324 = sadd.s32 %s323, 1
      %s325 = scalar_select %p322, %s323, %s324
      %p328 = pneg %p322
      %p329 = scmp.eq.s32.totalorder %s30, 1
      %p330 = por %p328, %p329
      %p331 = scmp.ne.s32.totalorder %s323, %s326
      %p332 = scmp.eq.s32.totalorder %s30, 0
      %p333 = por %p331, %p332
      %p334 = scmp.ne.s32.totalorder %s323, %s326
      %p335 = scmp.eq.s32.totalorder %s35, 1
      %p336 = por %p334, %p335
      %p337 = scmp.ne.s32.totalorder %s326, %s327
      %p338 = scmp.eq.s32.totalorder %s35, 0
      %p339 = por %p337, %p338
      %p340 = scmp.ne.s32.totalorder %s326, %s327
      %p341 = scmp.eq.s32.totalorder %s36, 1
      %p342 = por %p340, %p341
      %p344 = scmp.ne.s32.totalorder %s327, %s343
      %p345 = scmp.eq.s32.totalorder %s36, 0
      %p346 = por %p344, %p345
      %p347 = scmp.le.s32.totalorder 1, %s30
      %p348 = scmp.lt.s32.totalorder %s30, 3
      %p349 = pnand %p347, %p348
      %p350 = pneg %p349
      // Predicated region
      $region9: #{tpu_custom_call.1} parent=5 // pred_check
        _
      $region10: #{tpu_custom_call.1} parent=5 // pred_check_branch
        %352 = sbr.rel (%p349) target = $region12
      $region11: #{tpu_custom_call.1} parent=5 // pred_region
        %s353 = ssub.s32 %s30, 1
        // Predicated region
        $region13: #{tpu_custom_call.1} parent=11 // pred_check
          %p354 = pneg %p103
        $region14: #{tpu_custom_call.1} parent=11 // pred_check_branch
          %356 = sbr.rel (%p354) target = $region16
        $region15: #{tpu_custom_call.1} parent=11 // pred_region
          _
        $region16: #{tpu_custom_call.1} parent=11 // pred_fallthru
          _
        // Predicated region
        $region17: #{tpu_custom_call.1} parent=11 // pred_check
          %p357 = pneg %p124
        $region18: #{tpu_custom_call.1} parent=11 // pred_check_branch
          %359 = sbr.rel (%p357) target = $region20
        $region19: #{tpu_custom_call.1} parent=11 // pred_region
          _
        $region20: #{tpu_custom_call.1} parent=11 // pred_fallthru
          _
        // Predicated region
        $region21: #{tpu_custom_call.1} parent=11 // pred_check
          %p360 = pneg %p145
        $region22: #{tpu_custom_call.1} parent=11 // pred_check_branch
          %362 = sbr.rel (%p360) target = $region24
        $region23: #{tpu_custom_call.1} parent=11 // pred_region
          %364 = vsyncadd [#allocation7], 0
          %s365 = sshll.u32 %s4, 4
          %s366 = int_to_ptr.hbm [resolvable:$true] %s365
          %s367 = sshll.u32 [#allocation8], 4
          %s368 = int_to_ptr.vmem [resolvable:$true] %s367
          %373 = dma.hbm_to_vmem [thread:$0]  %s366, 2048, %s368, [#allocation7], 128, 128, 8
        $region24: #{tpu_custom_call.1} parent=11 // pred_fallthru
          _
        // Predicated region
        $region25: #{tpu_custom_call.1} parent=11 // pred_check
          %p374 = pneg %p166
        $region26: #{tpu_custom_call.1} parent=11 // pred_check_branch
          %376 = sbr.rel (%p374) target = $region28
        $region27: #{tpu_custom_call.1} parent=11 // pred_region
          %378 = vsyncadd [#allocation10], 0
          %s379 = sshll.u32 %s5, 4
          %s380 = int_to_ptr.hbm [resolvable:$true] %s379
          %s381 = sshll.u32 [#allocation9], 4
          %s382 = int_to_ptr.vmem [resolvable:$true] %s381
          %387 = dma.hbm_to_vmem [thread:$0]  %s380, 9216, %s382, [#allocation10], 64, 64, 4
        $region28: #{tpu_custom_call.1} parent=11 // pred_fallthru
          _
        // Predicated region
        $region29: #{tpu_custom_call.1} parent=11 // pred_check
          %p388 = pneg %p187
        $region30: #{tpu_custom_call.1} parent=11 // pred_check_branch
          %390 = sbr.rel (%p388) target = $region32
        $region31: #{tpu_custom_call.1} parent=11 // pred_region
          _
        $region32: #{tpu_custom_call.1} parent=11 // pred_fallthru
          _
        // Predicated region
        $region33: #{tpu_custom_call.1} parent=11 // pred_check
          %p391 = pneg %p208
        $region34: #{tpu_custom_call.1} parent=11 // pred_check_branch
          %393 = sbr.rel (%p391) target = $region36
        $region35: #{tpu_custom_call.1} parent=11 // pred_region
          _
        $region36: #{tpu_custom_call.1} parent=11 // pred_fallthru
          _
        // Predicated region
        $region37: #{tpu_custom_call.1} parent=11 // pred_check
          %p394 = pneg %p229
        $region38: #{tpu_custom_call.1} parent=11 // pred_check_branch
          %396 = sbr.rel (%p394) target = $region40
        $region39: #{tpu_custom_call.1} parent=11 // pred_region
          _
        $region40: #{tpu_custom_call.1} parent=11 // pred_fallthru
          _
        // Predicated region
        $region41: #{tpu_custom_call.1} parent=11 // pred_check
          %p397 = pneg %p250
        $region42: #{tpu_custom_call.1} parent=11 // pred_check_branch
          %399 = sbr.rel (%p397) target = $region44
        $region43: #{tpu_custom_call.1} parent=11 // pred_region
          %401 = vsyncadd [#allocation10], 0
          %s402 = sshll.u32 %s9, 4
          %s403 = int_to_ptr.hbm [resolvable:$true] %s402
          %s404 = sshll.u32 [#allocation11], 4
          %s405 = int_to_ptr.vmem [resolvable:$true] %s404
          %410 = dma.hbm_to_vmem [thread:$0]  %s403, 2048, %s405, [#allocation10], 128, 128, 8
        $region44: #{tpu_custom_call.1} parent=11 // pred_fallthru
          _
        // Predicated region
        $region45: #{tpu_custom_call.1} parent=11 // pred_check
          %p411 = pneg %p271
        $region46: #{tpu_custom_call.1} parent=11 // pred_check_branch
          %413 = sbr.rel (%p411) target = $region48
        $region47: #{tpu_custom_call.1} parent=11 // pred_region
          %415 = vsyncadd [#allocation13], 0
          %s416 = sshll.u32 %s10, 4
          %s417 = int_to_ptr.hbm [resolvable:$true] %s416
          %s418 = sshll.u32 [#allocation12], 4
          %s419 = int_to_ptr.vmem [resolvable:$true] %s418
          %424 = dma.hbm_to_vmem [thread:$0]  %s417, 9216, %s419, [#allocation13], 64, 64, 4
        $region48: #{tpu_custom_call.1} parent=11 // pred_fallthru
          _
        // Predicated region
        $region49: #{tpu_custom_call.1} parent=11 // pred_check
          %p425 = pneg %p292
        $region50: #{tpu_custom_call.1} parent=11 // pred_check_branch
          %427 = sbr.rel (%p425) target = $region52
        $region51: #{tpu_custom_call.1} parent=11 // pred_region
          _
        $region52: #{tpu_custom_call.1} parent=11 // pred_fallthru
          _
        // Predicated region
        $region53: #{tpu_custom_call.1} parent=11 // pred_check
          %p428 = pneg %p313
        $region54: #{tpu_custom_call.1} parent=11 // pred_check_branch
          %430 = sbr.rel (%p428) target = $region56
        $region55: #{tpu_custom_call.1} parent=11 // pred_region
          %432 = vsyncadd [#allocation13], 0
          %s433 = sshll.u32 %s12, 4
          %s434 = int_to_ptr.hbm [resolvable:$true] %s433
          %s435 = sshll.u32 [#allocation14], 4
          %s436 = int_to_ptr.vmem [resolvable:$true] %s435
          %441 = dma.hbm_to_vmem [thread:$0]  %s434, 1024, %s436, [#allocation13], 64, 64, 4
        $region56: #{tpu_custom_call.1} parent=11 // pred_fallthru
          _
      $region12: #{tpu_custom_call.1} parent=5 // pred_fallthru
        _
      %p442 = scmp.lt.s32.totalorder %s30, 2
      // Predicated region
      $region57: #{tpu_custom_call.1} parent=5 // pred_check
        %p443 = pneg %p442
      $region58: #{tpu_custom_call.1} parent=5 // pred_check_branch
        %445 = sbr.rel (%p443) target = $region60
      $region59: #{tpu_custom_call.1} parent=5 // pred_region
        // Predicated region
        $region61: #{tpu_custom_call.1} parent=59 // pred_check
          %p446 = pneg %p50
        $region62: #{tpu_custom_call.1} parent=59 // pred_check_branch
          %448 = sbr.rel (%p446) target = $region64
        $region63: #{tpu_custom_call.1} parent=59 // pred_region
          %s449 = sand.u32 %s40, 1
          %s450 = scalar_lea.sflag [#allocation4], %s449
          %s451 = sand.u32 %s40, 1
          %s452 = smul.addr %s451, 256
          %s453 = scalar_lea.vmem [#allocation3], %s452
          %455 = vsyncadd %s450, 0
          %s456 = smul.addr %s30, 32
          %s457 = smul.addr %s456, 8
          %s458 = scalar_lea.hbm %s0, %s457
          %s459 = sshll.u32 %s458, 4
          %s460 = int_to_ptr.hbm [resolvable:$true] %s459
          %s461 = sshll.u32 %s453, 4
          %s462 = int_to_ptr.vmem [resolvable:$true] %s461
          %467 = dma.hbm_to_vmem [thread:$0]  %s460, 4096, %s462, %s450, 128, 128, 8
        $region64: #{tpu_custom_call.1} parent=59 // pred_fallthru
          _
        // Predicated region
        $region65: #{tpu_custom_call.1} parent=59 // pred_check
          %p468 = pneg %p76
        $region66: #{tpu_custom_call.1} parent=59 // pred_check_branch
          %470 = sbr.rel (%p468) target = $region68
        $region67: #{tpu_custom_call.1} parent=59 // pred_region
          %s471 = sand.u32 %s30, 1
          %s472 = scalar_lea.sflag [#allocation7], %s471
          %s473 = sand.u32 %s66, 1
          %s474 = scalar_lea.vmem [#allocation6], %s473
          %476 = vsyncadd %s472, 0
          %s477 = scalar_lea.hbm %s1, %s30
          %s479 = sshll.u32 %s477, 4
          %s480 = int_to_ptr.hbm [resolvable:$true] %s479
          %s481 = sshll.u32 %s474, 4
          %s482 = int_to_ptr.vmem [resolvable:$true] %s481
          %484 = dma.hbm_to_vmem [thread:$0]  %s480, 16, %s482, %s472
        $region68: #{tpu_custom_call.1} parent=59 // pred_fallthru
          _
      $region60: #{tpu_custom_call.1} parent=5 // pred_fallthru
        _
      %p485 = scmp.le.s32.totalorder 1, %s30
      %p486 = scmp.lt.s32.totalorder %s30, 3
      %p487 = pnand %p485, %p486
      %p488 = pneg %p487
      // Predicated region
      $region69: #{tpu_custom_call.1} parent=5 // pred_check
        _
      $region70: #{tpu_custom_call.1} parent=5 // pred_check_branch
        %490 = sbr.rel (%p487) target = $region72
      $region71: #{tpu_custom_call.1} parent=5 // pred_region
        %s491 = ssub.s32 %s30, 1
        %s492 = sand.u32 %s43, 1
        %s493 = scalar_lea.sflag [#allocation4], %s492
        %s494 = sand.u32 %s43, 1
        %s495 = smul.addr %s494, 256
        %s496 = scalar_lea.vmem [#allocation3], %s495
        // Predicated region
        $region73: #{tpu_custom_call.1} parent=71 // pred_check
          %p497 = pneg %p56
        $region74: #{tpu_custom_call.1} parent=71 // pred_check_branch
          %499 = sbr.rel (%p497) target = $region76
        $region75: #{tpu_custom_call.1} parent=71 // pred_region
          %501 = dma.done %s493, 4096
        $region76: #{tpu_custom_call.1} parent=71 // pred_fallthru
          _
        %s502 = sand.u32 %s35, 1
        %s503 = scalar_lea.sflag [#allocation7], %s502
        %s504 = sand.u32 %s69, 1
        %s505 = scalar_lea.vmem [#allocation6], %s504
        // Predicated region
        $region77: #{tpu_custom_call.1} parent=71 // pred_check
          %p506 = pneg %p82
        $region78: #{tpu_custom_call.1} parent=71 // pred_check_branch
          %508 = sbr.rel (%p506) target = $region80
        $region79: #{tpu_custom_call.1} parent=71 // pred_region
          %510 = dma.done %s503, 16
        $region80: #{tpu_custom_call.1} parent=71 // pred_fallthru
          _
        // Predicated region
        $region81: #{tpu_custom_call.1} parent=71 // pred_check
          %p511 = pneg %p145
        $region82: #{tpu_custom_call.1} parent=71 // pred_check_branch
          %513 = sbr.rel (%p511) target = $region84
        $region83: #{tpu_custom_call.1} parent=71 // pred_region
          %515 = dma.done [#allocation7], 2048
        $region84: #{tpu_custom_call.1} parent=71 // pred_fallthru
          _
        // Predicated region
        $region85: #{tpu_custom_call.1} parent=71 // pred_check
          %p516 = pneg %p166
        $region86: #{tpu_custom_call.1} parent=71 // pred_check_branch
          %518 = sbr.rel (%p516) target = $region88
        $region87: #{tpu_custom_call.1} parent=71 // pred_region
          %520 = dma.done [#allocation10], 9216
        $region88: #{tpu_custom_call.1} parent=71 // pred_fallthru
          _
        // Predicated region
        $region89: #{tpu_custom_call.1} parent=71 // pred_check
          %p521 = pneg %p250
        $region90: #{tpu_custom_call.1} parent=71 // pred_check_branch
          %523 = sbr.rel (%p521) target = $region92
        $region91: #{tpu_custom_call.1} parent=71 // pred_region
          %525 = dma.done [#allocation10], 2048
        $region92: #{tpu_custom_call.1} parent=71 // pred_fallthru
          _
        // Predicated region
        $region93: #{tpu_custom_call.1} parent=71 // pred_check
          %p526 = pneg %p271
        $region94: #{tpu_custom_call.1} parent=71 // pred_check_branch
          %528 = sbr.rel (%p526) target = $region96
        $region95: #{tpu_custom_call.1} parent=71 // pred_region
          %530 = dma.done [#allocation13], 9216
        $region96: #{tpu_custom_call.1} parent=71 // pred_fallthru
          _
        // Predicated region
        $region97: #{tpu_custom_call.1} parent=71 // pred_check
          %p531 = pneg %p313
        $region98: #{tpu_custom_call.1} parent=71 // pred_check_branch
          %533 = sbr.rel (%p531) target = $region100
        $region99: #{tpu_custom_call.1} parent=71 // pred_region
          %535 = dma.done [#allocation13], 1024
        $region100: #{tpu_custom_call.1} parent=71 // pred_fallthru
          _
        %s536 = sand.u32 %s43, 1
        %s537 = scalar_lea.sflag [#allocation4], %s536
        %s538 = sand.u32 %s43, 1
        %s539 = smul.addr %s538, 256
        %s540 = scalar_lea.vmem [#allocation3], %s539
        %p541 = pneg %p56
        %p542 = pneg %p53
        %s543 = sand.u32 %s35, 1
        %s544 = scalar_lea.sflag [#allocation7], %s543
        %s545 = sand.u32 %s69, 1
        %s546 = scalar_lea.vmem [#allocation6], %s545
        %p547 = pneg %p82
        %p548 = pneg %p79
        %p549 = pneg %p103
        %p550 = pneg %p100
        %p551 = pneg %p124
        %p552 = pneg %p121
        %p553 = pneg %p145
        %p554 = pneg %p142
        %p555 = pneg %p166
        %p556 = pneg %p163
        %p557 = pneg %p187
        %p558 = pneg %p184
        %p559 = pneg %p208
        %p560 = pneg %p205
        %p561 = pneg %p229
        %p562 = pneg %p226
        %p563 = pneg %p250
        %p564 = pneg %p247
        %p565 = pneg %p271
        %p566 = pneg %p268
        %p567 = pneg %p292
        %p568 = pneg %p289
        %p569 = pneg %p313
        %p570 = pneg %p310
        %p571 = pneg %p339
        %p572 = pneg %p336
        %s573 = sand.u32 %s326, 1
        %s574 = scalar_lea.sflag [#allocation5], %s573
        %s575 = sand.u32 %s326, 1
        %s576 = smul.addr %s575, 256
        %s577 = scalar_lea.vmem [#allocation15], %s576
        %v578 = vld [vmem:[%s496] sm:$0xff]
        %v579 = vld [vmem:[%s496 + $0x8] sm:$0xff]
        %v580 = vld [vmem:[%s496 + $0x10] sm:$0xff]
        %v581 = vld [vmem:[%s496 + $0x18] sm:$0xff]
        %v582 = vld [vmem:[%s496 + $0x20] sm:$0xff]
        %v583 = vld [vmem:[%s496 + $0x28] sm:$0xff]
        %v584 = vld [vmem:[%s496 + $0x30] sm:$0xff]
        %v585 = vld [vmem:[%s496 + $0x38] sm:$0xff]
        %v586 = vld [vmem:[%s496 + $0x40] sm:$0xff]
        %v587 = vld [vmem:[%s496 + $0x48] sm:$0xff]
        %v588 = vld [vmem:[%s496 + $0x50] sm:$0xff]
        %v589 = vld [vmem:[%s496 + $0x58] sm:$0xff]
        %v590 = vld [vmem:[%s496 + $0x60] sm:$0xff]
        %v591 = vld [vmem:[%s496 + $0x68] sm:$0xff]
        %v592 = vld [vmem:[%s496 + $0x70] sm:$0xff]
        %v593 = vld [vmem:[%s496 + $0x78] sm:$0xff]
        %v594 = vld [vmem:[%s496 + $0x80] sm:$0xff]
        %v595 = vld [vmem:[%s496 + $0x88] sm:$0xff]
        %v596 = vld [vmem:[%s496 + $0x90] sm:$0xff]
        %v597 = vld [vmem:[%s496 + $0x98] sm:$0xff]
        %v598 = vld [vmem:[%s496 + $0xa0] sm:$0xff]
        %v599 = vld [vmem:[%s496 + $0xa8] sm:$0xff]
        %v600 = vld [vmem:[%s496 + $0xb0] sm:$0xff]
        %v601 = vld [vmem:[%s496 + $0xb8] sm:$0xff]
        %v602 = vld [vmem:[%s496 + $0xc0] sm:$0xff]
        %v603 = vld [vmem:[%s496 + $0xc8] sm:$0xff]
        %v604 = vld [vmem:[%s496 + $0xd0] sm:$0xff]
        %v605 = vld [vmem:[%s496 + $0xd8] sm:$0xff]
        %v606 = vld [vmem:[%s496 + $0xe0] sm:$0xff]
        %v607 = vld [vmem:[%s496 + $0xe8] sm:$0xff]
        %v608 = vld [vmem:[%s496 + $0xf0] sm:$0xff]
        %v609 = vld [vmem:[%s496 + $0xf8] sm:$0xff]
        %v610 = vld [vmem:[%s505] sm:$0x1]
        %v611 = vlaneseq
        %v612 = vshrl.u32 %v611, 7
        %v613 = vadd.s32 %v612, 8
        %v614 = vadd.s32 %v612, 16
        %v615 = vadd.s32 %v612, 24
        %v616 = vadd.s32 %v612, 32
        %v617 = vadd.s32 %v612, 40
        %v618 = vadd.s32 %v612, 48
        %v619 = vadd.s32 %v612, 56
        %v620 = vadd.s32 %v612, 64
        %v621 = vadd.s32 %v612, 72
        %v622 = vadd.s32 %v612, 80
        %v623 = vadd.s32 %v612, 88
        %v624 = vadd.s32 %v612, 96
        %v625 = vadd.s32 %v612, 104
        %v626 = vadd.s32 %v612, 112
        %v627 = vadd.s32 %v612, 120
        %v628 = vadd.s32 %v612, 128
        %v629 = vadd.s32 %v612, 136
        %v630 = vadd.s32 %v612, 144
        %v631 = vadd.s32 %v612, 152
        %v632 = vadd.s32 %v612, 160
        %v633 = vadd.s32 %v612, 168
        %v634 = vadd.s32 %v612, 176
        %v635 = vadd.s32 %v612, 184
        %v636 = vadd.s32 %v612, 192
        %v637 = vadd.s32 %v612, 200
        %v638 = vadd.s32 %v612, 208
        %v639 = vadd.s32 %v612, 216
        %v640 = vadd.s32 %v612, 224
        %v641 = vadd.s32 %v612, 232
        %v642 = vadd.s32 %v612, 240
        %v643 = vadd.s32 %v612, 248
        %vm644 = vcmp.lt.s32.totalorder %v612, 0
        %v645 = vsub.s32 0, %v612
        %v646 = vsel %vm644, %v645, %v612
        %v647 = vshrl.u32 %v646, 4
        %v648 = vand.u32 %v646, 15
        %v649 = vsub.s32 0, %v648
        %v650 = vsel %vm644, %v649, %v648
        %vm651 = vcmp.lt.s32.totalorder %v613, 0
        %v652 = vsub.s32 0, %v613
        %v653 = vsel %vm651, %v652, %v613
        %v654 = vshrl.u32 %v653, 4
        %v655 = vand.u32 %v653, 15
        %v656 = vsub.s32 0, %v655
        %v657 = vsel %vm651, %v656, %v655
        %vm658 = vcmp.lt.s32.totalorder %v614, 0
        %v659 = vsub.s32 0, %v614
        %v660 = vsel %vm658, %v659, %v614
        %v661 = vshrl.u32 %v660, 4
        %v662 = vand.u32 %v660, 15
        %v663 = vsub.s32 0, %v662
        %v664 = vsel %vm658, %v663, %v662
        %vm665 = vcmp.lt.s32.totalorder %v615, 0
        %v666 = vsub.s32 0, %v615
        %v667 = vsel %vm665, %v666, %v615
        %v668 = vshrl.u32 %v667, 4
        %v669 = vand.u32 %v667, 15
        %v670 = vsub.s32 0, %v669
        %v671 = vsel %vm665, %v670, %v669
        %vm672 = vcmp.lt.s32.totalorder %v616, 0
        %v673 = vsub.s32 0, %v616
        %v674 = vsel %vm672, %v673, %v616
        %v675 = vshrl.u32 %v674, 4
        %v676 = vand.u32 %v674, 15
        %v677 = vsub.s32 0, %v676
        %v678 = vsel %vm672, %v677, %v676
        %vm679 = vcmp.lt.s32.totalorder %v617, 0
        %v680 = vsub.s32 0, %v617
        %v681 = vsel %vm679, %v680, %v617
        %v682 = vshrl.u32 %v681, 4
        %v683 = vand.u32 %v681, 15
        %v684 = vsub.s32 0, %v683
        %v685 = vsel %vm679, %v684, %v683
        %vm686 = vcmp.lt.s32.totalorder %v618, 0
        %v687 = vsub.s32 0, %v618
        %v688 = vsel %vm686, %v687, %v618
        %v689 = vshrl.u32 %v688, 4
        %v690 = vand.u32 %v688, 15
        %v691 = vsub.s32 0, %v690
        %v692 = vsel %vm686, %v691, %v690
        %vm693 = vcmp.lt.s32.totalorder %v619, 0
        %v694 = vsub.s32 0, %v619
        %v695 = vsel %vm693, %v694, %v619
        %v696 = vshrl.u32 %v695, 4
        %v697 = vand.u32 %v695, 15
        %v698 = vsub.s32 0, %v697
        %v699 = vsel %vm693, %v698, %v697
        %vm700 = vcmp.lt.s32.totalorder %v620, 0
        %v701 = vsub.s32 0, %v620
        %v702 = vsel %vm700, %v701, %v620
        %v703 = vshrl.u32 %v702, 4
        %v704 = vand.u32 %v702, 15
        %v705 = vsub.s32 0, %v704
        %v706 = vsel %vm700, %v705, %v704
        %vm707 = vcmp.lt.s32.totalorder %v621, 0
        %v708 = vsub.s32 0, %v621
        %v709 = vsel %vm707, %v708, %v621
        %v710 = vshrl.u32 %v709, 4
        %v711 = vand.u32 %v709, 15
        %v712 = vsub.s32 0, %v711
        %v713 = vsel %vm707, %v712, %v711
        %vm714 = vcmp.lt.s32.totalorder %v622, 0
        %v715 = vsub.s32 0, %v622
        %v716 = vsel %vm714, %v715, %v622
        %v717 = vshrl.u32 %v716, 4
        %v718 = vand.u32 %v716, 15
        %v719 = vsub.s32 0, %v718
        %v720 = vsel %vm714, %v719, %v718
        %vm721 = vcmp.lt.s32.totalorder %v623, 0
        %v722 = vsub.s32 0, %v623
        %v723 = vsel %vm721, %v722, %v623
        %v724 = vshrl.u32 %v723, 4
        %v725 = vand.u32 %v723, 15
        %v726 = vsub.s32 0, %v725
        %v727 = vsel %vm721, %v726, %v725
        %vm728 = vcmp.lt.s32.totalorder %v624, 0
        %v729 = vsub.s32 0, %v624
        %v730 = vsel %vm728, %v729, %v624
        %v731 = vshrl.u32 %v730, 4
        %v732 = vand.u32 %v730, 15
        %v733 = vsub.s32 0, %v732
        %v734 = vsel %vm728, %v733, %v732
        %vm735 = vcmp.lt.s32.totalorder %v625, 0
        %v736 = vsub.s32 0, %v625
        %v737 = vsel %vm735, %v736, %v625
        %v738 = vshrl.u32 %v737, 4
        %v739 = vand.u32 %v737, 15
        %v740 = vsub.s32 0, %v739
        %v741 = vsel %vm735, %v740, %v739
        %vm742 = vcmp.lt.s32.totalorder %v626, 0
        %v743 = vsub.s32 0, %v626
        %v744 = vsel %vm742, %v743, %v626
        %v745 = vshrl.u32 %v744, 4
        %v746 = vand.u32 %v744, 15
        %v747 = vsub.s32 0, %v746
        %v748 = vsel %vm742, %v747, %v746
        %vm749 = vcmp.lt.s32.totalorder %v627, 0
        %v750 = vsub.s32 0, %v627
        %v751 = vsel %vm749, %v750, %v627
        %v752 = vshrl.u32 %v751, 4
        %v753 = vand.u32 %v751, 15
        %v754 = vsub.s32 0, %v753
        %v755 = vsel %vm749, %v754, %v753
        %vm756 = vcmp.lt.s32.totalorder %v628, 0
        %v757 = vsub.s32 0, %v628
        %v758 = vsel %vm756, %v757, %v628
        %v759 = vshrl.u32 %v758, 4
        %v760 = vand.u32 %v758, 15
        %v761 = vsub.s32 0, %v760
        %v762 = vsel %vm756, %v761, %v760
        %vm763 = vcmp.lt.s32.totalorder %v629, 0
        %v764 = vsub.s32 0, %v629
        %v765 = vsel %vm763, %v764, %v629
        %v766 = vshrl.u32 %v765, 4
        %v767 = vand.u32 %v765, 15
        %v768 = vsub.s32 0, %v767
        %v769 = vsel %vm763, %v768, %v767
        %vm770 = vcmp.lt.s32.totalorder %v630, 0
        %v771 = vsub.s32 0, %v630
        %v772 = vsel %vm770, %v771, %v630
        %v773 = vshrl.u32 %v772, 4
        %v774 = vand.u32 %v772, 15
        %v775 = vsub.s32 0, %v774
        %v776 = vsel %vm770, %v775, %v774
        %vm777 = vcmp.lt.s32.totalorder %v631, 0
        %v778 = vsub.s32 0, %v631
        %v779 = vsel %vm777, %v778, %v631
        %v780 = vshrl.u32 %v779, 4
        %v781 = vand.u32 %v779, 15
        %v782 = vsub.s32 0, %v781
        %v783 = vsel %vm777, %v782, %v781
        %vm784 = vcmp.lt.s32.totalorder %v632, 0
        %v785 = vsub.s32 0, %v632
        %v786 = vsel %vm784, %v785, %v632
        %v787 = vshrl.u32 %v786, 4
        %v788 = vand.u32 %v786, 15
        %v789 = vsub.s32 0, %v788
        %v790 = vsel %vm784, %v789, %v788
        %vm791 = vcmp.lt.s32.totalorder %v633, 0
        %v792 = vsub.s32 0, %v633
        %v793 = vsel %vm791, %v792, %v633
        %v794 = vshrl.u32 %v793, 4
        %v795 = vand.u32 %v793, 15
        %v796 = vsub.s32 0, %v795
        %v797 = vsel %vm791, %v796, %v795
        %vm798 = vcmp.lt.s32.totalorder %v634, 0
        %v799 = vsub.s32 0, %v634
        %v800 = vsel %vm798, %v799, %v634
        %v801 = vshrl.u32 %v800, 4
        %v802 = vand.u32 %v800, 15
        %v803 = vsub.s32 0, %v802
        %v804 = vsel %vm798, %v803, %v802
        %vm805 = vcmp.lt.s32.totalorder %v635, 0
        %v806 = vsub.s32 0, %v635
        %v807 = vsel %vm805, %v806, %v635
        %v808 = vshrl.u32 %v807, 4
        %v809 = vand.u32 %v807, 15
        %v810 = vsub.s32 0, %v809
        %v811 = vsel %vm805, %v810, %v809
        %vm812 = vcmp.lt.s32.totalorder %v636, 0
        %v813 = vsub.s32 0, %v636
        %v814 = vsel %vm812, %v813, %v636
        %v815 = vshrl.u32 %v814, 4
        %v816 = vand.u32 %v814, 15
        %v817 = vsub.s32 0, %v816
        %v818 = vsel %vm812, %v817, %v816
        %vm819 = vcmp.lt.s32.totalorder %v637, 0
        %v820 = vsub.s32 0, %v637
        %v821 = vsel %vm819, %v820, %v637
        %v822 = vshrl.u32 %v821, 4
        %v823 = vand.u32 %v821, 15
        %v824 = vsub.s32 0, %v823
        %v825 = vsel %vm819, %v824, %v823
        %vm826 = vcmp.lt.s32.totalorder %v638, 0
        %v827 = vsub.s32 0, %v638
        %v828 = vsel %vm826, %v827, %v638
        %v829 = vshrl.u32 %v828, 4
        %v830 = vand.u32 %v828, 15
        %v831 = vsub.s32 0, %v830
        %v832 = vsel %vm826, %v831, %v830
        %vm833 = vcmp.lt.s32.totalorder %v639, 0
        %v834 = vsub.s32 0, %v639
        %v835 = vsel %vm833, %v834, %v639
        %v836 = vshrl.u32 %v835, 4
        %v837 = vand.u32 %v835, 15
        %v838 = vsub.s32 0, %v837
        %v839 = vsel %vm833, %v838, %v837
        %vm840 = vcmp.lt.s32.totalorder %v640, 0
        %v841 = vsub.s32 0, %v640
        %v842 = vsel %vm840, %v841, %v640
        %v843 = vshrl.u32 %v842, 4
        %v844 = vand.u32 %v842, 15
        %v845 = vsub.s32 0, %v844
        %v846 = vsel %vm840, %v845, %v844
        %vm847 = vcmp.lt.s32.totalorder %v641, 0
        %v848 = vsub.s32 0, %v641
        %v849 = vsel %vm847, %v848, %v641
        %v850 = vshrl.u32 %v849, 4
        %v851 = vand.u32 %v849, 15
        %v852 = vsub.s32 0, %v851
        %v853 = vsel %vm847, %v852, %v851
        %vm854 = vcmp.lt.s32.totalorder %v642, 0
        %v855 = vsub.s32 0, %v642
        %v856 = vsel %vm854, %v855, %v642
        %v857 = vshrl.u32 %v856, 4
        %v858 = vand.u32 %v856, 15
        %v859 = vsub.s32 0, %v858
        %v860 = vsel %vm854, %v859, %v858
        %vm861 = vcmp.lt.s32.totalorder %v643, 0
        %v862 = vsub.s32 0, %v643
        %v863 = vsel %vm861, %v862, %v643
        %v864 = vshrl.u32 %v863, 4
        %v865 = vand.u32 %v863, 15
        %v866 = vsub.s32 0, %v865
        %v867 = vsel %vm861, %v866, %v865
        %vm868 = vcmp.ne.s32.totalorder %v650, 0
        %vm869 = vcmp.ne.s32.totalorder %v657, 0
        %vm870 = vcmp.ne.s32.totalorder %v664, 0
        %vm871 = vcmp.ne.s32.totalorder %v671, 0
        %vm872 = vcmp.ne.s32.totalorder %v678, 0
        %vm873 = vcmp.ne.s32.totalorder %v685, 0
        %vm874 = vcmp.ne.s32.totalorder %v692, 0
        %vm875 = vcmp.ne.s32.totalorder %v699, 0
        %vm876 = vcmp.ne.s32.totalorder %v706, 0
        %vm877 = vcmp.ne.s32.totalorder %v713, 0
        %vm878 = vcmp.ne.s32.totalorder %v720, 0
        %vm879 = vcmp.ne.s32.totalorder %v727, 0
        %vm880 = vcmp.ne.s32.totalorder %v734, 0
        %vm881 = vcmp.ne.s32.totalorder %v741, 0
        %vm882 = vcmp.ne.s32.totalorder %v748, 0
        %vm883 = vcmp.ne.s32.totalorder %v755, 0
        %vm884 = vcmp.ne.s32.totalorder %v762, 0
        %vm885 = vcmp.ne.s32.totalorder %v769, 0
        %vm886 = vcmp.ne.s32.totalorder %v776, 0
        %vm887 = vcmp.ne.s32.totalorder %v783, 0
        %vm888 = vcmp.ne.s32.totalorder %v790, 0
        %vm889 = vcmp.ne.s32.totalorder %v797, 0
        %vm890 = vcmp.ne.s32.totalorder %v804, 0
        %vm891 = vcmp.ne.s32.totalorder %v811, 0
        %vm892 = vcmp.ne.s32.totalorder %v818, 0
        %vm893 = vcmp.ne.s32.totalorder %v825, 0
        %vm894 = vcmp.ne.s32.totalorder %v832, 0
        %vm895 = vcmp.ne.s32.totalorder %v839, 0
        %vm896 = vcmp.ne.s32.totalorder %v846, 0
        %vm897 = vcmp.ne.s32.totalorder %v853, 0
        %vm898 = vcmp.ne.s32.totalorder %v860, 0
        %vm899 = vcmp.ne.s32.totalorder %v867, 0
        %vm900 = vcmp.lt.s32.totalorder %v650, 0
        %vm901 = vcmp.lt.s32.totalorder %v657, 0
        %vm902 = vcmp.lt.s32.totalorder %v664, 0
        %vm903 = vcmp.lt.s32.totalorder %v671, 0
        %vm904 = vcmp.lt.s32.totalorder %v678, 0
        %vm905 = vcmp.lt.s32.totalorder %v685, 0
        %vm906 = vcmp.lt.s32.totalorder %v692, 0
        %vm907 = vcmp.lt.s32.totalorder %v699, 0
        %vm908 = vcmp.lt.s32.totalorder %v706, 0
        %vm909 = vcmp.lt.s32.totalorder %v713, 0
        %vm910 = vcmp.lt.s32.totalorder %v720, 0
        %vm911 = vcmp.lt.s32.totalorder %v727, 0
        %vm912 = vcmp.lt.s32.totalorder %v734, 0
        %vm913 = vcmp.lt.s32.totalorder %v741, 0
        %vm914 = vcmp.lt.s32.totalorder %v748, 0
        %vm915 = vcmp.lt.s32.totalorder %v755, 0
        %vm916 = vcmp.lt.s32.totalorder %v762, 0
        %vm917 = vcmp.lt.s32.totalorder %v769, 0
        %vm918 = vcmp.lt.s32.totalorder %v776, 0
        %vm919 = vcmp.lt.s32.totalorder %v783, 0
        %vm920 = vcmp.lt.s32.totalorder %v790, 0
        %vm921 = vcmp.lt.s32.totalorder %v797, 0
        %vm922 = vcmp.lt.s32.totalorder %v804, 0
        %vm923 = vcmp.lt.s32.totalorder %v811, 0
        %vm924 = vcmp.lt.s32.totalorder %v818, 0
        %vm925 = vcmp.lt.s32.totalorder %v825, 0
        %vm926 = vcmp.lt.s32.totalorder %v832, 0
        %vm927 = vcmp.lt.s32.totalorder %v839, 0
        %vm928 = vcmp.lt.s32.totalorder %v846, 0
        %vm929 = vcmp.lt.s32.totalorder %v853, 0
        %vm930 = vcmp.lt.s32.totalorder %v860, 0
        %vm931 = vcmp.lt.s32.totalorder %v867, 0
        %vm932 = vmand %vm900, %vm868
        %vm933 = vmand %vm901, %vm869
        %vm934 = vmand %vm902, %vm870
        %vm935 = vmand %vm903, %vm871
        %vm936 = vmand %vm904, %vm872
        %vm937 = vmand %vm905, %vm873
        %vm938 = vmand %vm906, %vm874
        %vm939 = vmand %vm907, %vm875
        %vm940 = vmand %vm908, %vm876
        %vm941 = vmand %vm909, %vm877
        %vm942 = vmand %vm910, %vm878
        %vm943 = vmand %vm911, %vm879
        %vm944 = vmand %vm912, %vm880
        %vm945 = vmand %vm913, %vm881
        %vm946 = vmand %vm914, %vm882
        %vm947 = vmand %vm915, %vm883
        %vm948 = vmand %vm916, %vm884
        %vm949 = vmand %vm917, %vm885
        %vm950 = vmand %vm918, %vm886
        %vm951 = vmand %vm919, %vm887
        %vm952 = vmand %vm920, %vm888
        %vm953 = vmand %vm921, %vm889
        %vm954 = vmand %vm922, %vm890
        %vm955 = vmand %vm923, %vm891
        %vm956 = vmand %vm924, %vm892
        %vm957 = vmand %vm925, %vm893
        %vm958 = vmand %vm926, %vm894
        %vm959 = vmand %vm927, %vm895
        %vm960 = vmand %vm928, %vm896
        %vm961 = vmand %vm929, %vm897
        %vm962 = vmand %vm930, %vm898
        %vm963 = vmand %vm931, %vm899
        %v964 = vadd.s32 %v650, 16
        %v965 = vadd.s32 %v657, 16
        %v966 = vadd.s32 %v664, 16
        %v967 = vadd.s32 %v671, 16
        %v968 = vadd.s32 %v678, 16
        %v969 = vadd.s32 %v685, 16
        %v970 = vadd.s32 %v692, 16
        %v971 = vadd.s32 %v699, 16
        %v972 = vadd.s32 %v706, 16
        %v973 = vadd.s32 %v713, 16
        %v974 = vadd.s32 %v720, 16
        %v975 = vadd.s32 %v727, 16
        %v976 = vadd.s32 %v734, 16
        %v977 = vadd.s32 %v741, 16
        %v978 = vadd.s32 %v748, 16
        %v979 = vadd.s32 %v755, 16
        %v980 = vadd.s32 %v762, 16
        %v981 = vadd.s32 %v769, 16
        %v982 = vadd.s32 %v776, 16
        %v983 = vadd.s32 %v783, 16
        %v984 = vadd.s32 %v790, 16
        %v985 = vadd.s32 %v797, 16
        %v986 = vadd.s32 %v804, 16
        %v987 = vadd.s32 %v811, 16
        %v988 = vadd.s32 %v818, 16
        %v989 = vadd.s32 %v825, 16
        %v990 = vadd.s32 %v832, 16
        %v991 = vadd.s32 %v839, 16
        %v992 = vadd.s32 %v846, 16
        %v993 = vadd.s32 %v853, 16
        %v994 = vadd.s32 %v860, 16
        %v995 = vadd.s32 %v867, 16
        %v996 = vsel %vm932, %v964, %v650
        %v997 = vsel %vm933, %v965, %v657
        %v998 = vsel %vm934, %v966, %v664
        %v999 = vsel %vm935, %v967, %v671
        %v1000 = vsel %vm936, %v968, %v678
        %v1001 = vsel %vm937, %v969, %v685
        %v1002 = vsel %vm938, %v970, %v692
        %v1003 = vsel %vm939, %v971, %v699
        %v1004 = vsel %vm940, %v972, %v706
        %v1005 = vsel %vm941, %v973, %v713
        %v1006 = vsel %vm942, %v974, %v720
        %v1007 = vsel %vm943, %v975, %v727
        %v1008 = vsel %vm944, %v976, %v734
        %v1009 = vsel %vm945, %v977, %v741
        %v1010 = vsel %vm946, %v978, %v748
        %v1011 = vsel %vm947, %v979, %v755
        %v1012 = vsel %vm948, %v980, %v762
        %v1013 = vsel %vm949, %v981, %v769
        %v1014 = vsel %vm950, %v982, %v776
        %v1015 = vsel %vm951, %v983, %v783
        %v1016 = vsel %vm952, %v984, %v790
        %v1017 = vsel %vm953, %v985, %v797
        %v1018 = vsel %vm954, %v986, %v804
        %v1019 = vsel %vm955, %v987, %v811
        %v1020 = vsel %vm956, %v988, %v818
        %v1021 = vsel %vm957, %v989, %v825
        %v1022 = vsel %vm958, %v990, %v832
        %v1023 = vsel %vm959, %v991, %v839
        %v1024 = vsel %vm960, %v992, %v846
        %v1025 = vsel %vm961, %v993, %v853
        %v1026 = vsel %vm962, %v994, %v860
        %v1027 = vsel %vm963, %v995, %v867
        %vm1028 = vcmp.ge.s32.totalorder %v996, 1
        %vm1029 = vcmp.ge.s32.totalorder %v997, 1
        %vm1030 = vcmp.ge.s32.totalorder %v998, 1
        %vm1031 = vcmp.ge.s32.totalorder %v999, 1
        %vm1032 = vcmp.ge.s32.totalorder %v1000, 1
        %vm1033 = vcmp.ge.s32.totalorder %v1001, 1
        %vm1034 = vcmp.ge.s32.totalorder %v1002, 1
        %vm1035 = vcmp.ge.s32.totalorder %v1003, 1
        %vm1036 = vcmp.ge.s32.totalorder %v1004, 1
        %vm1037 = vcmp.ge.s32.totalorder %v1005, 1
        %vm1038 = vcmp.ge.s32.totalorder %v1006, 1
        %vm1039 = vcmp.ge.s32.totalorder %v1007, 1
        %vm1040 = vcmp.ge.s32.totalorder %v1008, 1
        %vm1041 = vcmp.ge.s32.totalorder %v1009, 1
        %vm1042 = vcmp.ge.s32.totalorder %v1010, 1
        %vm1043 = vcmp.ge.s32.totalorder %v1011, 1
        %vm1044 = vcmp.ge.s32.totalorder %v1012, 1
        %vm1045 = vcmp.ge.s32.totalorder %v1013, 1
        %vm1046 = vcmp.ge.s32.totalorder %v1014, 1
        %vm1047 = vcmp.ge.s32.totalorder %v1015, 1
        %vm1048 = vcmp.ge.s32.totalorder %v1016, 1
        %vm1049 = vcmp.ge.s32.totalorder %v1017, 1
        %vm1050 = vcmp.ge.s32.totalorder %v1018, 1
        %vm1051 = vcmp.ge.s32.totalorder %v1019, 1
        %vm1052 = vcmp.ge.s32.totalorder %v1020, 1
        %vm1053 = vcmp.ge.s32.totalorder %v1021, 1
        %vm1054 = vcmp.ge.s32.totalorder %v1022, 1
        %vm1055 = vcmp.ge.s32.totalorder %v1023, 1
        %vm1056 = vcmp.ge.s32.totalorder %v1024, 1
        %vm1057 = vcmp.ge.s32.totalorder %v1025, 1
        %vm1058 = vcmp.ge.s32.totalorder %v1026, 1
        %vm1059 = vcmp.ge.s32.totalorder %v1027, 1
        %v1060 = vsel %vm1028, 1, 0
        %v1061 = vsel %vm1029, 1, 0
        %v1062 = vsel %vm1030, 1, 0
        %v1063 = vsel %vm1031, 1, 0
        %v1064 = vsel %vm1032, 1, 0
        %v1065 = vsel %vm1033, 1, 0
        %v1066 = vsel %vm1034, 1, 0
        %v1067 = vsel %vm1035, 1, 0
        %v1068 = vsel %vm1036, 1, 0
        %v1069 = vsel %vm1037, 1, 0
        %v1070 = vsel %vm1038, 1, 0
        %v1071 = vsel %vm1039, 1, 0
        %v1072 = vsel %vm1040, 1, 0
        %v1073 = vsel %vm1041, 1, 0
        %v1074 = vsel %vm1042, 1, 0
        %v1075 = vsel %vm1043, 1, 0
        %v1076 = vsel %vm1044, 1, 0
        %v1077 = vsel %vm1045, 1, 0
        %v1078 = vsel %vm1046, 1, 0
        %v1079 = vsel %vm1047, 1, 0
        %v1080 = vsel %vm1048, 1, 0
        %v1081 = vsel %vm1049, 1, 0
        %v1082 = vsel %vm1050, 1, 0
        %v1083 = vsel %vm1051, 1, 0
        %v1084 = vsel %vm1052, 1, 0
        %v1085 = vsel %vm1053, 1, 0
        %v1086 = vsel %vm1054, 1, 0
        %v1087 = vsel %vm1055, 1, 0
        %v1088 = vsel %vm1056, 1, 0
        %v1089 = vsel %vm1057, 1, 0
        %v1090 = vsel %vm1058, 1, 0
        %v1091 = vsel %vm1059, 1, 0
        %v1092 = vcvt.s32.f32 %v1060
        %v1093 = vcvt.s32.f32 %v1061
        %v1094 = vcvt.s32.f32 %v1062
        %v1095 = vcvt.s32.f32 %v1063
        %v1096 = vcvt.s32.f32 %v1064
        %v1097 = vcvt.s32.f32 %v1065
        %v1098 = vcvt.s32.f32 %v1066
        %v1099 = vcvt.s32.f32 %v1067
        %v1100 = vcvt.s32.f32 %v1068
        %v1101 = vcvt.s32.f32 %v1069
        %v1102 = vcvt.s32.f32 %v1070
        %v1103 = vcvt.s32.f32 %v1071
        %v1104 = vcvt.s32.f32 %v1072
        %v1105 = vcvt.s32.f32 %v1073
        %v1106 = vcvt.s32.f32 %v1074
        %v1107 = vcvt.s32.f32 %v1075
        %v1108 = vcvt.s32.f32 %v1076
        %v1109 = vcvt.s32.f32 %v1077
        %v1110 = vcvt.s32.f32 %v1078
        %v1111 = vcvt.s32.f32 %v1079
        %v1112 = vcvt.s32.f32 %v1080
        %v1113 = vcvt.s32.f32 %v1081
        %v1114 = vcvt.s32.f32 %v1082
        %v1115 = vcvt.s32.f32 %v1083
        %v1116 = vcvt.s32.f32 %v1084
        %v1117 = vcvt.s32.f32 %v1085
        %v1118 = vcvt.s32.f32 %v1086
        %v1119 = vcvt.s32.f32 %v1087
        %v1120 = vcvt.s32.f32 %v1088
        %v1121 = vcvt.s32.f32 %v1089
        %v1122 = vcvt.s32.f32 %v1090
        %v1123 = vcvt.s32.f32 %v1091
        %vm1124 = vcmp.le.s32.totalorder %v996, 14
        %vm1125 = vcmp.le.s32.totalorder %v997, 14
        %vm1126 = vcmp.le.s32.totalorder %v998, 14
        %vm1127 = vcmp.le.s32.totalorder %v999, 14
        %vm1128 = vcmp.le.s32.totalorder %v1000, 14
        %vm1129 = vcmp.le.s32.totalorder %v1001, 14
        %vm1130 = vcmp.le.s32.totalorder %v1002, 14
        %vm1131 = vcmp.le.s32.totalorder %v1003, 14
        %vm1132 = vcmp.le.s32.totalorder %v1004, 14
        %vm1133 = vcmp.le.s32.totalorder %v1005, 14
        %vm1134 = vcmp.le.s32.totalorder %v1006, 14
        %vm1135 = vcmp.le.s32.totalorder %v1007, 14
        %vm1136 = vcmp.le.s32.totalorder %v1008, 14
        %vm1137 = vcmp.le.s32.totalorder %v1009, 14
        %vm1138 = vcmp.le.s32.totalorder %v1010, 14
        %vm1139 = vcmp.le.s32.totalorder %v1011, 14
        %vm1140 = vcmp.le.s32.totalorder %v1012, 14
        %vm1141 = vcmp.le.s32.totalorder %v1013, 14
        %vm1142 = vcmp.le.s32.totalorder %v1014, 14
        %vm1143 = vcmp.le.s32.totalorder %v1015, 14
        %vm1144 = vcmp.le.s32.totalorder %v1016, 14
        %vm1145 = vcmp.le.s32.totalorder %v1017, 14
        %vm1146 = vcmp.le.s32.totalorder %v1018, 14
        %vm1147 = vcmp.le.s32.totalorder %v1019, 14
        %vm1148 = vcmp.le.s32.totalorder %v1020, 14
        %vm1149 = vcmp.le.s32.totalorder %v1021, 14
        %vm1150 = vcmp.le.s32.totalorder %v1022, 14
        %vm1151 = vcmp.le.s32.totalorder %v1023, 14
        %vm1152 = vcmp.le.s32.totalorder %v1024, 14
        %vm1153 = vcmp.le.s32.totalorder %v1025, 14
        %vm1154 = vcmp.le.s32.totalorder %v1026, 14
        %vm1155 = vcmp.le.s32.totalorder %v1027, 14
        %v1156 = vsel %vm1124, 1, 0
        %v1157 = vsel %vm1125, 1, 0
        %v1158 = vsel %vm1126, 1, 0
        %v1159 = vsel %vm1127, 1, 0
        %v1160 = vsel %vm1128, 1, 0
        %v1161 = vsel %vm1129, 1, 0
        %v1162 = vsel %vm1130, 1, 0
        %v1163 = vsel %vm1131, 1, 0
        %v1164 = vsel %vm1132, 1, 0
        %v1165 = vsel %vm1133, 1, 0
        %v1166 = vsel %vm1134, 1, 0
        %v1167 = vsel %vm1135, 1, 0
        %v1168 = vsel %vm1136, 1, 0
        %v1169 = vsel %vm1137, 1, 0
        %v1170 = vsel %vm1138, 1, 0
        %v1171 = vsel %vm1139, 1, 0
        %v1172 = vsel %vm1140, 1, 0
        %v1173 = vsel %vm1141, 1, 0
        %v1174 = vsel %vm1142, 1, 0
        %v1175 = vsel %vm1143, 1, 0
        %v1176 = vsel %vm1144, 1, 0
        %v1177 = vsel %vm1145, 1, 0
        %v1178 = vsel %vm1146, 1, 0
        %v1179 = vsel %vm1147, 1, 0
        %v1180 = vsel %vm1148, 1, 0
        %v1181 = vsel %vm1149, 1, 0
        %v1182 = vsel %vm1150, 1, 0
        %v1183 = vsel %vm1151, 1, 0
        %v1184 = vsel %vm1152, 1, 0
        %v1185 = vsel %vm1153, 1, 0
        %v1186 = vsel %vm1154, 1, 0
        %v1187 = vsel %vm1155, 1, 0
        %v1188 = vcvt.s32.f32 %v1156
        %v1189 = vcvt.s32.f32 %v1157
        %v1190 = vcvt.s32.f32 %v1158
        %v1191 = vcvt.s32.f32 %v1159
        %v1192 = vcvt.s32.f32 %v1160
        %v1193 = vcvt.s32.f32 %v1161
        %v1194 = vcvt.s32.f32 %v1162
        %v1195 = vcvt.s32.f32 %v1163
        %v1196 = vcvt.s32.f32 %v1164
        %v1197 = vcvt.s32.f32 %v1165
        %v1198 = vcvt.s32.f32 %v1166
        %v1199 = vcvt.s32.f32 %v1167
        %v1200 = vcvt.s32.f32 %v1168
        %v1201 = vcvt.s32.f32 %v1169
        %v1202 = vcvt.s32.f32 %v1170
        %v1203 = vcvt.s32.f32 %v1171
        %v1204 = vcvt.s32.f32 %v1172
        %v1205 = vcvt.s32.f32 %v1173
        %v1206 = vcvt.s32.f32 %v1174
        %v1207 = vcvt.s32.f32 %v1175
        %v1208 = vcvt.s32.f32 %v1176
        %v1209 = vcvt.s32.f32 %v1177
        %v1210 = vcvt.s32.f32 %v1178
        %v1211 = vcvt.s32.f32 %v1179
        %v1212 = vcvt.s32.f32 %v1180
        %v1213 = vcvt.s32.f32 %v1181
        %v1214 = vcvt.s32.f32 %v1182
        %v1215 = vcvt.s32.f32 %v1183
        %v1216 = vcvt.s32.f32 %v1184
        %v1217 = vcvt.s32.f32 %v1185
        %v1218 = vcvt.s32.f32 %v1186
        %v1219 = vcvt.s32.f32 %v1187
        %v1220 = vadd.f32 %v578, %v579
        %v1221 = vadd.f32 %v1220, %v580
        %v1222 = vadd.f32 %v1221, %v581
        %v1223 = vadd.f32 %v1222, %v582
        %v1224 = vadd.f32 %v1223, %v583
        %v1225 = vadd.f32 %v1224, %v584
        %v1226 = vadd.f32 %v1225, %v585
        %v1227 = vadd.f32 %v1226, %v586
        %v1228 = vadd.f32 %v1227, %v587
        %v1229 = vadd.f32 %v1228, %v588
        %v1230 = vadd.f32 %v1229, %v589
        %v1231 = vadd.f32 %v1230, %v590
        %v1232 = vadd.f32 %v1231, %v591
        %v1233 = vadd.f32 %v1232, %v592
        %v1234 = vadd.f32 %v1233, %v593
        %v1235 = vadd.f32 %v1234, %v594
        %v1236 = vadd.f32 %v1235, %v595
        %v1237 = vadd.f32 %v1236, %v596
        %v1238 = vadd.f32 %v1237, %v597
        %v1239 = vadd.f32 %v1238, %v598
        %v1240 = vadd.f32 %v1239, %v599
        %v1241 = vadd.f32 %v1240, %v600
        %v1242 = vadd.f32 %v1241, %v601
        %v1243 = vadd.f32 %v1242, %v602
        %v1244 = vadd.f32 %v1243, %v603
        %v1245 = vadd.f32 %v1244, %v604
        %v1246 = vadd.f32 %v1245, %v605
        %v1247 = vadd.f32 %v1246, %v606
        %v1248 = vadd.f32 %v1247, %v607
        %v1249 = vadd.f32 %v1248, %v608
        %v1250 = vadd.f32 %v1249, %v609
        %v1251 = vrot.slane %v1250, 4
        %v1252 = vadd.f32 %v1250, %v1251
        %v1253 = vrot.slane %v1252, 2
        %v1254 = vadd.f32 %v1252, %v1253
        %v1255 = vrot.slane %v1254, 1
        %v1256 = vadd.f32 %v1254, %v1255
        %v1257 = vld [vmem:[#allocation8] sm:$0xff]
        %v1258 = vld [vmem:[#allocation8 + $0x8] sm:$0xff]
        %v1259 = vld [vmem:[#allocation8 + $0x10] sm:$0xff]
        %v1260 = vld [vmem:[#allocation8 + $0x18] sm:$0xff]
        %v1261 = vld [vmem:[#allocation8 + $0x20] sm:$0xff]
        %v1262 = vld [vmem:[#allocation8 + $0x28] sm:$0xff]
        %v1263 = vld [vmem:[#allocation8 + $0x30] sm:$0xff]
        %v1264 = vld [vmem:[#allocation8 + $0x38] sm:$0xff]
        %v1265 = vld [vmem:[#allocation8 + $0x40] sm:$0xff]
        %v1266 = vld [vmem:[#allocation8 + $0x48] sm:$0xff]
        %v1267 = vld [vmem:[#allocation8 + $0x50] sm:$0xff]
        %v1268 = vld [vmem:[#allocation8 + $0x58] sm:$0xff]
        %v1269 = vld [vmem:[#allocation8 + $0x60] sm:$0xff]
        %v1270 = vld [vmem:[#allocation8 + $0x68] sm:$0xff]
        %v1271 = vld [vmem:[#allocation8 + $0x70] sm:$0xff]
        %v1272 = vld [vmem:[#allocation8 + $0x78] sm:$0xff]
        %1273 = vmatpush.msra.mxu0 %v1272
        %1274 = vmatpush.msra.mxu0 %v1271
        %1275 = vmatpush.msra.mxu0 %v1270
        %1276 = vmatpush.msra.mxu0 %v1269
        %1277 = vmatpush.msra.mxu0 %v1268
        %1278 = vmatpush.msra.mxu0 %v1267
        %1279 = vmatpush.msra.mxu0 %v1266
        %1280 = vmatpush.msra.mxu0 %v1265
        %1281 = vmatpush.msra.mxu0 %v1264
        %1282 = vmatpush.msra.mxu0 %v1263
        %1283 = vmatpush.msra.mxu0 %v1262
        %1284 = vmatpush.msra.mxu0 %v1261
        %1285 = vmatpush.msra.mxu0 %v1260
        %1286 = vmatpush.msra.mxu0 %v1259
        %1287 = vmatpush.msra.mxu0 %v1258
        %1288 = vmatpush.msra.mxu0 %v1257
        %1289 = vmatmul.f32.gmra.mxu0 %v1256
        %v1290 = vpop.f32.mrf.mxu0
        %v1291 = vadd.f32 0.0, %v1290
        %1292 = vdwg.mxu0
        %v1293 = vperm.slane %v1291, 0
        %v1294 = vsub.f32 %v578, %v1293
        %v1295 = vsub.f32 %v579, %v1293
        %v1296 = vsub.f32 %v580, %v1293
        %v1297 = vsub.f32 %v581, %v1293
        %v1298 = vsub.f32 %v582, %v1293
        %v1299 = vsub.f32 %v583, %v1293
        %v1300 = vsub.f32 %v584, %v1293
        %v1301 = vsub.f32 %v585, %v1293
        %v1302 = vsub.f32 %v586, %v1293
        %v1303 = vsub.f32 %v587, %v1293
        %v1304 = vsub.f32 %v588, %v1293
        %v1305 = vsub.f32 %v589, %v1293
        %v1306 = vsub.f32 %v590, %v1293
        %v1307 = vsub.f32 %v591, %v1293
        %v1308 = vsub.f32 %v592, %v1293
        %v1309 = vsub.f32 %v593, %v1293
        %v1310 = vsub.f32 %v594, %v1293
        %v1311 = vsub.f32 %v595, %v1293
        %v1312 = vsub.f32 %v596, %v1293
        %v1313 = vsub.f32 %v597, %v1293
        %v1314 = vsub.f32 %v598, %v1293
        %v1315 = vsub.f32 %v599, %v1293
        %v1316 = vsub.f32 %v600, %v1293
        %v1317 = vsub.f32 %v601, %v1293
        %v1318 = vsub.f32 %v602, %v1293
        %v1319 = vsub.f32 %v603, %v1293
        %v1320 = vsub.f32 %v604, %v1293
        %v1321 = vsub.f32 %v605, %v1293
        %v1322 = vsub.f32 %v606, %v1293
        %v1323 = vsub.f32 %v607, %v1293
        %v1324 = vsub.f32 %v608, %v1293
        %v1325 = vsub.f32 %v609, %v1293
        %v1326 = vmul.f32 %v1294, %v1294
        %v1327 = vmul.f32 %v1295, %v1295
        %v1328 = vmul.f32 %v1296, %v1296
        %v1329 = vmul.f32 %v1297, %v1297
        %v1330 = vmul.f32 %v1298, %v1298
        %v1331 = vmul.f32 %v1299, %v1299
        %v1332 = vmul.f32 %v1300, %v1300
        %v1333 = vmul.f32 %v1301, %v1301
        %v1334 = vmul.f32 %v1302, %v1302
        %v1335 = vmul.f32 %v1303, %v1303
        %v1336 = vmul.f32 %v1304, %v1304
        %v1337 = vmul.f32 %v1305, %v1305
        %v1338 = vmul.f32 %v1306, %v1306
        %v1339 = vmul.f32 %v1307, %v1307
        %v1340 = vmul.f32 %v1308, %v1308
        %v1341 = vmul.f32 %v1309, %v1309
        %v1342 = vmul.f32 %v1310, %v1310
        %v1343 = vmul.f32 %v1311, %v1311
        %v1344 = vmul.f32 %v1312, %v1312
        %v1345 = vmul.f32 %v1313, %v1313
        %v1346 = vmul.f32 %v1314, %v1314
        %v1347 = vmul.f32 %v1315, %v1315
        %v1348 = vmul.f32 %v1316, %v1316
        %v1349 = vmul.f32 %v1317, %v1317
        %v1350 = vmul.f32 %v1318, %v1318
        %v1351 = vmul.f32 %v1319, %v1319
        %v1352 = vmul.f32 %v1320, %v1320
        %v1353 = vmul.f32 %v1321, %v1321
        %v1354 = vmul.f32 %v1322, %v1322
        %v1355 = vmul.f32 %v1323, %v1323
        %v1356 = vmul.f32 %v1324, %v1324
        %v1357 = vmul.f32 %v1325, %v1325
        %v1358 = vadd.f32 %v1326, %v1327
        %v1359 = vadd.f32 %v1358, %v1328
        %v1360 = vadd.f32 %v1359, %v1329
        %v1361 = vadd.f32 %v1360, %v1330
        %v1362 = vadd.f32 %v1361, %v1331
        %v1363 = vadd.f32 %v1362, %v1332
        %v1364 = vadd.f32 %v1363, %v1333
        %v1365 = vadd.f32 %v1364, %v1334
        %v1366 = vadd.f32 %v1365, %v1335
        %v1367 = vadd.f32 %v1366, %v1336
        %v1368 = vadd.f32 %v1367, %v1337
        %v1369 = vadd.f32 %v1368, %v1338
        %v1370 = vadd.f32 %v1369, %v1339
        %v1371 = vadd.f32 %v1370, %v1340
        %v1372 = vadd.f32 %v1371, %v1341
        %v1373 = vadd.f32 %v1372, %v1342
        %v1374 = vadd.f32 %v1373, %v1343
        %v1375 = vadd.f32 %v1374, %v1344
        %v1376 = vadd.f32 %v1375, %v1345
        %v1377 = vadd.f32 %v1376, %v1346
        %v1378 = vadd.f32 %v1377, %v1347
        %v1379 = vadd.f32 %v1378, %v1348
        %v1380 = vadd.f32 %v1379, %v1349
        %v1381 = vadd.f32 %v1380, %v1350
        %v1382 = vadd.f32 %v1381, %v1351
        %v1383 = vadd.f32 %v1382, %v1352
        %v1384 = vadd.f32 %v1383, %v1353
        %v1385 = vadd.f32 %v1384, %v1354
        %v1386 = vadd.f32 %v1385, %v1355
        %v1387 = vadd.f32 %v1386, %v1356
        %v1388 = vadd.f32 %v1387, %v1357
        %v1389 = vrot.slane %v1388, 4
        %v1390 = vadd.f32 %v1388, %v1389
        %v1391 = vrot.slane %v1390, 2
        %v1392 = vadd.f32 %v1390, %v1391
        %v1393 = vrot.slane %v1392, 1
        %v1394 = vadd.f32 %v1392, %v1393
        %1395 = vmatpush.msra.mxu0 %v1272
        %1396 = vmatpush.msra.mxu0 %v1271
        %1397 = vmatpush.msra.mxu0 %v1270
        %1398 = vmatpush.msra.mxu0 %v1269
        %1399 = vmatpush.msra.mxu0 %v1268
        %1400 = vmatpush.msra.mxu0 %v1267
        %1401 = vmatpush.msra.mxu0 %v1266
        %1402 = vmatpush.msra.mxu0 %v1265
        %1403 = vmatpush.msra.mxu0 %v1264
        %1404 = vmatpush.msra.mxu0 %v1263
        %1405 = vmatpush.msra.mxu0 %v1262
        %1406 = vmatpush.msra.mxu0 %v1261
        %1407 = vmatpush.msra.mxu0 %v1260
        %1408 = vmatpush.msra.mxu0 %v1259
        %1409 = vmatpush.msra.mxu0 %v1258
        %1410 = vmatpush.msra.mxu0 %v1257
        %1411 = vmatmul.f32.gmra.mxu0 %v1394
        %v1412 = vpop.f32.mrf.mxu0
        %v1413 = vadd.f32 1e-05, %v1412
        %1414 = vdwg.mxu0
        %v1415 = vrsqrt.pop %v1413
        %v1416 = vmul.f32 %v1415, %v1413
        %v1417 = vmul.f32 %v1416, %v1415
        %v1418 = vmul.f32 0.5, %v1417
        %v1419 = vsub.f32 1.5, %v1418
        %v1420 = vmul.f32 %v1415, %v1419
        %vm1421 = vweird.f32 %v1413
        %vm1422 = vweird.f32 %v1415
        %vm1423 = vmor %vm1421, %vm1422
        %v1424 = vsel %vm1423, %v1415, %v1420
        %v1425 = vperm.slane %v1424, 0
        %v1426 = vmul.f32 %v1294, %v1425
        %v1427 = vmul.f32 %v1295, %v1425
        %v1428 = vmul.f32 %v1296, %v1425
        %v1429 = vmul.f32 %v1297, %v1425
        %v1430 = vmul.f32 %v1298, %v1425
        %v1431 = vmul.f32 %v1299, %v1425
        %v1432 = vmul.f32 %v1300, %v1425
        %v1433 = vmul.f32 %v1301, %v1425
        %v1434 = vmul.f32 %v1302, %v1425
        %v1435 = vmul.f32 %v1303, %v1425
        %v1436 = vmul.f32 %v1304, %v1425
        %v1437 = vmul.f32 %v1305, %v1425
        %v1438 = vmul.f32 %v1306, %v1425
        %v1439 = vmul.f32 %v1307, %v1425
        %v1440 = vmul.f32 %v1308, %v1425
        %v1441 = vmul.f32 %v1309, %v1425
        %v1442 = vmul.f32 %v1310, %v1425
        %v1443 = vmul.f32 %v1311, %v1425
        %v1444 = vmul.f32 %v1312, %v1425
        %v1445 = vmul.f32 %v1313, %v1425
        %v1446 = vmul.f32 %v1314, %v1425
        %v1447 = vmul.f32 %v1315, %v1425
        %v1448 = vmul.f32 %v1316, %v1425
        %v1449 = vmul.f32 %v1317, %v1425
        %v1450 = vmul.f32 %v1318, %v1425
        %v1451 = vmul.f32 %v1319, %v1425
        %v1452 = vmul.f32 %v1320, %v1425
        %v1453 = vmul.f32 %v1321, %v1425
        %v1454 = vmul.f32 %v1322, %v1425
        %v1455 = vmul.f32 %v1323, %v1425
        %v1456 = vmul.f32 %v1324, %v1425
        %v1457 = vmul.f32 %v1325, %v1425
        %v1458 = vld [vmem:[%s2] sm:$0x1]
        %v1460 = vperm.slane %v1458, 0
        %v1462 = vmul.f32 %v1426, %v1460
        %v1463 = vmul.f32 %v1427, %v1460
        %v1464 = vmul.f32 %v1428, %v1460
        %v1465 = vmul.f32 %v1429, %v1460
        %v1466 = vmul.f32 %v1430, %v1460
        %v1467 = vmul.f32 %v1431, %v1460
        %v1468 = vmul.f32 %v1432, %v1460
        %v1469 = vmul.f32 %v1433, %v1460
        %v1470 = vmul.f32 %v1434, %v1460
        %v1471 = vmul.f32 %v1435, %v1460
        %v1472 = vmul.f32 %v1436, %v1460
        %v1473 = vmul.f32 %v1437, %v1460
        %v1474 = vmul.f32 %v1438, %v1460
        %v1475 = vmul.f32 %v1439, %v1460
        %v1476 = vmul.f32 %v1440, %v1460
        %v1477 = vmul.f32 %v1441, %v1460
        %v1478 = vmul.f32 %v1442, %v1460
        %v1479 = vmul.f32 %v1443, %v1460
        %v1480 = vmul.f32 %v1444, %v1460
        %v1481 = vmul.f32 %v1445, %v1460
        %v1482 = vmul.f32 %v1446, %v1460
        %v1483 = vmul.f32 %v1447, %v1460
        %v1484 = vmul.f32 %v1448, %v1460
        %v1485 = vmul.f32 %v1449, %v1460
        %v1486 = vmul.f32 %v1450, %v1460
        %v1487 = vmul.f32 %v1451, %v1460
        %v1488 = vmul.f32 %v1452, %v1460
        %v1489 = vmul.f32 %v1453, %v1460
        %v1490 = vmul.f32 %v1454, %v1460
        %v1491 = vmul.f32 %v1455, %v1460
        %v1492 = vmul.f32 %v1456, %v1460
        %v1493 = vmul.f32 %v1457, %v1460
        %v1494 = vld [vmem:[%s3] sm:$0x1]
        %v1496 = vperm.slane %v1494, 0
        %v1498 = vadd.f32 %v1462, %v1496
        %v1499 = vadd.f32 %v1463, %v1496
        %v1500 = vadd.f32 %v1464, %v1496
        %v1501 = vadd.f32 %v1465, %v1496
        %v1502 = vadd.f32 %v1466, %v1496
        %v1503 = vadd.f32 %v1467, %v1496
        %v1504 = vadd.f32 %v1468, %v1496
        %v1505 = vadd.f32 %v1469, %v1496
        %v1506 = vadd.f32 %v1470, %v1496
        %v1507 = vadd.f32 %v1471, %v1496
        %v1508 = vadd.f32 %v1472, %v1496
        %v1509 = vadd.f32 %v1473, %v1496
        %v1510 = vadd.f32 %v1474, %v1496
        %v1511 = vadd.f32 %v1475, %v1496
        %v1512 = vadd.f32 %v1476, %v1496
        %v1513 = vadd.f32 %v1477, %v1496
        %v1514 = vadd.f32 %v1478, %v1496
        %v1515 = vadd.f32 %v1479, %v1496
        %v1516 = vadd.f32 %v1480, %v1496
        %v1517 = vadd.f32 %v1481, %v1496
        %v1518 = vadd.f32 %v1482, %v1496
        %v1519 = vadd.f32 %v1483, %v1496
        %v1520 = vadd.f32 %v1484, %v1496
        %v1521 = vadd.f32 %v1485, %v1496
        %v1522 = vadd.f32 %v1486, %v1496
        %v1523 = vadd.f32 %v1487, %v1496
        %v1524 = vadd.f32 %v1488, %v1496
        %v1525 = vadd.f32 %v1489, %v1496
        %v1526 = vadd.f32 %v1490, %v1496
        %v1527 = vadd.f32 %v1491, %v1496
        %v1528 = vadd.f32 %v1492, %v1496
        %v1529 = vadd.f32 %v1493, %v1496
        %v1530 = vxor.u32 %v1498, 2147483648
        %v1531 = vxor.u32 %v1499, 2147483648
        %v1532 = vxor.u32 %v1500, 2147483648
        %v1533 = vxor.u32 %v1501, 2147483648
        %v1534 = vxor.u32 %v1502, 2147483648
        %v1535 = vxor.u32 %v1503, 2147483648
        %v1536 = vxor.u32 %v1504, 2147483648
        %v1537 = vxor.u32 %v1505, 2147483648
        %v1538 = vxor.u32 %v1506, 2147483648
        %v1539 = vxor.u32 %v1507, 2147483648
        %v1540 = vxor.u32 %v1508, 2147483648
        %v1541 = vxor.u32 %v1509, 2147483648
        %v1542 = vxor.u32 %v1510, 2147483648
        %v1543 = vxor.u32 %v1511, 2147483648
        %v1544 = vxor.u32 %v1512, 2147483648
        %v1545 = vxor.u32 %v1513, 2147483648
        %v1546 = vxor.u32 %v1514, 2147483648
        %v1547 = vxor.u32 %v1515, 2147483648
        %v1548 = vxor.u32 %v1516, 2147483648
        %v1549 = vxor.u32 %v1517, 2147483648
        %v1550 = vxor.u32 %v1518, 2147483648
        %v1551 = vxor.u32 %v1519, 2147483648
        %v1552 = vxor.u32 %v1520, 2147483648
        %v1553 = vxor.u32 %v1521, 2147483648
        %v1554 = vxor.u32 %v1522, 2147483648
        %v1555 = vxor.u32 %v1523, 2147483648
        %v1556 = vxor.u32 %v1524, 2147483648
        %v1557 = vxor.u32 %v1525, 2147483648
        %v1558 = vxor.u32 %v1526, 2147483648
        %v1559 = vxor.u32 %v1527, 2147483648
        %v1560 = vxor.u32 %v1528, 2147483648
        %v1561 = vxor.u32 %v1529, 2147483648
        %v1562 = vmul.f32 %v1530, 1.442695
        %v1563 = vpow.pop %v1562
        %v1564 = vmul.f32 %v1531, 1.442695
        %v1565 = vpow.pop %v1564
        %v1566 = vmul.f32 %v1532, 1.442695
        %v1567 = vpow.pop %v1566
        %v1568 = vmul.f32 %v1533, 1.442695
        %v1569 = vpow.pop %v1568
        %v1570 = vmul.f32 %v1534, 1.442695
        %v1571 = vpow.pop %v1570
        %v1572 = vmul.f32 %v1535, 1.442695
        %v1573 = vpow.pop %v1572
        %v1574 = vmul.f32 %v1536, 1.442695
        %v1575 = vpow.pop %v1574
        %v1576 = vmul.f32 %v1537, 1.442695
        %v1577 = vpow.pop %v1576
        %v1578 = vmul.f32 %v1538, 1.442695
        %v1579 = vpow.pop %v1578
        %v1580 = vmul.f32 %v1539, 1.442695
        %v1581 = vpow.pop %v1580
        %v1582 = vmul.f32 %v1540, 1.442695
        %v1583 = vpow.pop %v1582
        %v1584 = vmul.f32 %v1541, 1.442695
        %v1585 = vpow.pop %v1584
        %v1586 = vmul.f32 %v1542, 1.442695
        %v1587 = vpow.pop %v1586
        %v1588 = vmul.f32 %v1543, 1.442695
        %v1589 = vpow.pop %v1588
        %v1590 = vmul.f32 %v1544, 1.442695
        %v1591 = vpow.pop %v1590
        %v1592 = vmul.f32 %v1545, 1.442695
        %v1593 = vpow.pop %v1592
        %v1594 = vmul.f32 %v1546, 1.442695
        %v1595 = vpow.pop %v1594
        %v1596 = vmul.f32 %v1547, 1.442695
        %v1597 = vpow.pop %v1596
        %v1598 = vmul.f32 %v1548, 1.442695
        %v1599 = vpow.pop %v1598
        %v1600 = vmul.f32 %v1549, 1.442695
        %v1601 = vpow.pop %v1600
        %v1602 = vmul.f32 %v1550, 1.442695
        %v1603 = vpow.pop %v1602
        %v1604 = vmul.f32 %v1551, 1.442695
        %v1605 = vpow.pop %v1604
        %v1606 = vmul.f32 %v1552, 1.442695
        %v1607 = vpow.pop %v1606
        %v1608 = vmul.f32 %v1553, 1.442695
        %v1609 = vpow.pop %v1608
        %v1610 = vmul.f32 %v1554, 1.442695
        %v1611 = vpow.pop %v1610
        %v1612 = vmul.f32 %v1555, 1.442695
        %v1613 = vpow.pop %v1612
        %v1614 = vmul.f32 %v1556, 1.442695
        %v1615 = vpow.pop %v1614
        %v1616 = vmul.f32 %v1557, 1.442695
        %v1617 = vpow.pop %v1616
        %v1618 = vmul.f32 %v1558, 1.442695
        %v1619 = vpow.pop %v1618
        %v1620 = vmul.f32 %v1559, 1.442695
        %v1621 = vpow.pop %v1620
        %v1622 = vmul.f32 %v1560, 1.442695
        %v1623 = vpow.pop %v1622
        %v1624 = vmul.f32 %v1561, 1.442695
        %v1625 = vpow.pop %v1624
        %v1626 = vadd.f32 %v1563, 1.0
        %v1627 = vadd.f32 %v1565, 1.0
        %v1628 = vadd.f32 %v1567, 1.0
        %v1629 = vadd.f32 %v1569, 1.0
        %v1630 = vadd.f32 %v1571, 1.0
        %v1631 = vadd.f32 %v1573, 1.0
        %v1632 = vadd.f32 %v1575, 1.0
        %v1633 = vadd.f32 %v1577, 1.0
        %v1634 = vadd.f32 %v1579, 1.0
        %v1635 = vadd.f32 %v1581, 1.0
        %v1636 = vadd.f32 %v1583, 1.0
        %v1637 = vadd.f32 %v1585, 1.0
        %v1638 = vadd.f32 %v1587, 1.0
        %v1639 = vadd.f32 %v1589, 1.0
        %v1640 = vadd.f32 %v1591, 1.0
        %v1641 = vadd.f32 %v1593, 1.0
        %v1642 = vadd.f32 %v1595, 1.0
        %v1643 = vadd.f32 %v1597, 1.0
        %v1644 = vadd.f32 %v1599, 1.0
        %v1645 = vadd.f32 %v1601, 1.0
        %v1646 = vadd.f32 %v1603, 1.0
        %v1647 = vadd.f32 %v1605, 1.0
        %v1648 = vadd.f32 %v1607, 1.0
        %v1649 = vadd.f32 %v1609, 1.0
        %v1650 = vadd.f32 %v1611, 1.0
        %v1651 = vadd.f32 %v1613, 1.0
        %v1652 = vadd.f32 %v1615, 1.0
        %v1653 = vadd.f32 %v1617, 1.0
        %v1654 = vadd.f32 %v1619, 1.0
        %v1655 = vadd.f32 %v1621, 1.0
        %v1656 = vadd.f32 %v1623, 1.0
        %v1657 = vadd.f32 %v1625, 1.0
        %v1658 = vrcp.pop %v1626
        %v1659 = vmul.f32 %v1626, %v1658
        %v1660 = vsub.f32 1.0, %v1659
        %v1661 = vmul.f32 %v1658, %v1660
        %v1662 = vadd.f32 %v1658, %v1661
        %vm1663 = vweird.f32 %v1626
        %vm1664 = vweird.f32 %v1658
        %vm1665 = vmor %vm1663, %vm1664
        %v1666 = vsel %vm1665, %v1658, %v1662
        %v1667 = vand.u32 2147483647, %v1626
        %vm1668 = vcmp.eq.f32.partialorder %v1667, 8.507059e+37
        %v1669 = vand.u32 %v1626, 2147483648
        %v1670 = vor.u32 1.1754944e-38, %v1669
        %v1671 = vsel %vm1668, %v1670, %v1666
        %v1672 = vmul.f32 1.0, %v1671
        %v1673 = vrcp.pop %v1627
        %v1674 = vmul.f32 %v1627, %v1673
        %v1675 = vsub.f32 1.0, %v1674
        %v1676 = vmul.f32 %v1673, %v1675
        %v1677 = vadd.f32 %v1673, %v1676
        %vm1678 = vweird.f32 %v1627
        %vm1679 = vweird.f32 %v1673
        %vm1680 = vmor %vm1678, %vm1679
        %v1681 = vsel %vm1680, %v1673, %v1677
        %v1682 = vand.u32 2147483647, %v1627
        %vm1683 = vcmp.eq.f32.partialorder %v1682, 8.507059e+37
        %v1684 = vand.u32 %v1627, 2147483648
        %v1685 = vor.u32 1.1754944e-38, %v1684
        %v1686 = vsel %vm1683, %v1685, %v1681
        %v1687 = vmul.f32 1.0, %v1686
        %v1688 = vrcp.pop %v1628
        %v1689 = vmul.f32 %v1628, %v1688
        %v1690 = vsub.f32 1.0, %v1689
        %v1691 = vmul.f32 %v1688, %v1690
        %v1692 = vadd.f32 %v1688, %v1691
        %vm1693 = vweird.f32 %v1628
        %vm1694 = vweird.f32 %v1688
        %vm1695 = vmor %vm1693, %vm1694
        %v1696 = vsel %vm1695, %v1688, %v1692
        %v1697 = vand.u32 2147483647, %v1628
        %vm1698 = vcmp.eq.f32.partialorder %v1697, 8.507059e+37
        %v1699 = vand.u32 %v1628, 2147483648
        %v1700 = vor.u32 1.1754944e-38, %v1699
        %v1701 = vsel %vm1698, %v1700, %v1696
        %v1702 = vmul.f32 1.0, %v1701
        %v1703 = vrcp.pop %v1629
        %v1704 = vmul.f32 %v1629, %v1703
        %v1705 = vsub.f32 1.0, %v1704
        %v1706 = vmul.f32 %v1703, %v1705
        %v1707 = vadd.f32 %v1703, %v1706
        %vm1708 = vweird.f32 %v1629
        %vm1709 = vweird.f32 %v1703
        %vm1710 = vmor %vm1708, %vm1709
        %v1711 = vsel %vm1710, %v1703, %v1707
        %v1712 = vand.u32 2147483647, %v1629
        %vm1713 = vcmp.eq.f32.partialorder %v1712, 8.507059e+37
        %v1714 = vand.u32 %v1629, 2147483648
        %v1715 = vor.u32 1.1754944e-38, %v1714
        %v1716 = vsel %vm1713, %v1715, %v1711
        %v1717 = vmul.f32 1.0, %v1716
        %v1718 = vrcp.pop %v1630
        %v1719 = vmul.f32 %v1630, %v1718
        %v1720 = vsub.f32 1.0, %v1719
        %v1721 = vmul.f32 %v1718, %v1720
        %v1722 = vadd.f32 %v1718, %v1721
        %vm1723 = vweird.f32 %v1630
        %vm1724 = vweird.f32 %v1718
        %vm1725 = vmor %vm1723, %vm1724
        %v1726 = vsel %vm1725, %v1718, %v1722
        %v1727 = vand.u32 2147483647, %v1630
        %vm1728 = vcmp.eq.f32.partialorder %v1727, 8.507059e+37
        %v1729 = vand.u32 %v1630, 2147483648
        %v1730 = vor.u32 1.1754944e-38, %v1729
        %v1731 = vsel %vm1728, %v1730, %v1726
        %v1732 = vmul.f32 1.0, %v1731
        %v1733 = vrcp.pop %v1631
        %v1734 = vmul.f32 %v1631, %v1733
        %v1735 = vsub.f32 1.0, %v1734
        %v1736 = vmul.f32 %v1733, %v1735
        %v1737 = vadd.f32 %v1733, %v1736
        %vm1738 = vweird.f32 %v1631
        %vm1739 = vweird.f32 %v1733
        %vm1740 = vmor %vm1738, %vm1739
        %v1741 = vsel %vm1740, %v1733, %v1737
        %v1742 = vand.u32 2147483647, %v1631
        %vm1743 = vcmp.eq.f32.partialorder %v1742, 8.507059e+37
        %v1744 = vand.u32 %v1631, 2147483648
        %v1745 = vor.u32 1.1754944e-38, %v1744
        %v1746 = vsel %vm1743, %v1745, %v1741
        %v1747 = vmul.f32 1.0, %v1746
        %v1748 = vrcp.pop %v1632
        %v1749 = vmul.f32 %v1632, %v1748
        %v1750 = vsub.f32 1.0, %v1749
        %v1751 = vmul.f32 %v1748, %v1750
        %v1752 = vadd.f32 %v1748, %v1751
        %vm1753 = vweird.f32 %v1632
        %vm1754 = vweird.f32 %v1748
        %vm1755 = vmor %vm1753, %vm1754
        %v1756 = vsel %vm1755, %v1748, %v1752
        %v1757 = vand.u32 2147483647, %v1632
        %vm1758 = vcmp.eq.f32.partialorder %v1757, 8.507059e+37
        %v1759 = vand.u32 %v1632, 2147483648
        %v1760 = vor.u32 1.1754944e-38, %v1759
        %v1761 = vsel %vm1758, %v1760, %v1756
        %v1762 = vmul.f32 1.0, %v1761
        %v1763 = vrcp.pop %v1633
        %v1764 = vmul.f32 %v1633, %v1763
        %v1765 = vsub.f32 1.0, %v1764
        %v1766 = vmul.f32 %v1763, %v1765
        %v1767 = vadd.f32 %v1763, %v1766
        %vm1768 = vweird.f32 %v1633
        %vm1769 = vweird.f32 %v1763
        %vm1770 = vmor %vm1768, %vm1769
        %v1771 = vsel %vm1770, %v1763, %v1767
        %v1772 = vand.u32 2147483647, %v1633
        %vm1773 = vcmp.eq.f32.partialorder %v1772, 8.507059e+37
        %v1774 = vand.u32 %v1633, 2147483648
        %v1775 = vor.u32 1.1754944e-38, %v1774
        %v1776 = vsel %vm1773, %v1775, %v1771
        %v1777 = vmul.f32 1.0, %v1776
        %v1778 = vrcp.pop %v1634
        %v1779 = vmul.f32 %v1634, %v1778
        %v1780 = vsub.f32 1.0, %v1779
        %v1781 = vmul.f32 %v1778, %v1780
        %v1782 = vadd.f32 %v1778, %v1781
        %vm1783 = vweird.f32 %v1634
        %vm1784 = vweird.f32 %v1778
        %vm1785 = vmor %vm1783, %vm1784
        %v1786 = vsel %vm1785, %v1778, %v1782
        %v1787 = vand.u32 2147483647, %v1634
        %vm1788 = vcmp.eq.f32.partialorder %v1787, 8.507059e+37
        %v1789 = vand.u32 %v1634, 2147483648
        %v1790 = vor.u32 1.1754944e-38, %v1789
        %v1791 = vsel %vm1788, %v1790, %v1786
        %v1792 = vmul.f32 1.0, %v1791
        %v1793 = vrcp.pop %v1635
        %v1794 = vmul.f32 %v1635, %v1793
        %v1795 = vsub.f32 1.0, %v1794
        %v1796 = vmul.f32 %v1793, %v1795
        %v1797 = vadd.f32 %v1793, %v1796
        %vm1798 = vweird.f32 %v1635
        %vm1799 = vweird.f32 %v1793
        %vm1800 = vmor %vm1798, %vm1799
        %v1801 = vsel %vm1800, %v1793, %v1797
        %v1802 = vand.u32 2147483647, %v1635
        %vm1803 = vcmp.eq.f32.partialorder %v1802, 8.507059e+37
        %v1804 = vand.u32 %v1635, 2147483648
        %v1805 = vor.u32 1.1754944e-38, %v1804
        %v1806 = vsel %vm1803, %v1805, %v1801
        %v1807 = vmul.f32 1.0, %v1806
        %v1808 = vrcp.pop %v1636
        %v1809 = vmul.f32 %v1636, %v1808
        %v1810 = vsub.f32 1.0, %v1809
        %v1811 = vmul.f32 %v1808, %v1810
        %v1812 = vadd.f32 %v1808, %v1811
        %vm1813 = vweird.f32 %v1636
        %vm1814 = vweird.f32 %v1808
        %vm1815 = vmor %vm1813, %vm1814
        %v1816 = vsel %vm1815, %v1808, %v1812
        %v1817 = vand.u32 2147483647, %v1636
        %vm1818 = vcmp.eq.f32.partialorder %v1817, 8.507059e+37
        %v1819 = vand.u32 %v1636, 2147483648
        %v1820 = vor.u32 1.1754944e-38, %v1819
        %v1821 = vsel %vm1818, %v1820, %v1816
        %v1822 = vmul.f32 1.0, %v1821
        %v1823 = vrcp.pop %v1637
        %v1824 = vmul.f32 %v1637, %v1823
        %v1825 = vsub.f32 1.0, %v1824
        %v1826 = vmul.f32 %v1823, %v1825
        %v1827 = vadd.f32 %v1823, %v1826
        %vm1828 = vweird.f32 %v1637
        %vm1829 = vweird.f32 %v1823
        %vm1830 = vmor %vm1828, %vm1829
        %v1831 = vsel %vm1830, %v1823, %v1827
        %v1832 = vand.u32 2147483647, %v1637
        %vm1833 = vcmp.eq.f32.partialorder %v1832, 8.507059e+37
        %v1834 = vand.u32 %v1637, 2147483648
        %v1835 = vor.u32 1.1754944e-38, %v1834
        %v1836 = vsel %vm1833, %v1835, %v1831
        %v1837 = vmul.f32 1.0, %v1836
        %v1838 = vrcp.pop %v1638
        %v1839 = vmul.f32 %v1638, %v1838
        %v1840 = vsub.f32 1.0, %v1839
        %v1841 = vmul.f32 %v1838, %v1840
        %v1842 = vadd.f32 %v1838, %v1841
        %vm1843 = vweird.f32 %v1638
        %vm1844 = vweird.f32 %v1838
        %vm1845 = vmor %vm1843, %vm1844
        %v1846 = vsel %vm1845, %v1838, %v1842
        %v1847 = vand.u32 2147483647, %v1638
        %vm1848 = vcmp.eq.f32.partialorder %v1847, 8.507059e+37
        %v1849 = vand.u32 %v1638, 2147483648
        %v1850 = vor.u32 1.1754944e-38, %v1849
        %v1851 = vsel %vm1848, %v1850, %v1846
        %v1852 = vmul.f32 1.0, %v1851
        %v1853 = vrcp.pop %v1639
        %v1854 = vmul.f32 %v1639, %v1853
        %v1855 = vsub.f32 1.0, %v1854
        %v1856 = vmul.f32 %v1853, %v1855
        %v1857 = vadd.f32 %v1853, %v1856
        %vm1858 = vweird.f32 %v1639
        %vm1859 = vweird.f32 %v1853
        %vm1860 = vmor %vm1858, %vm1859
        %v1861 = vsel %vm1860, %v1853, %v1857
        %v1862 = vand.u32 2147483647, %v1639
        %vm1863 = vcmp.eq.f32.partialorder %v1862, 8.507059e+37
        %v1864 = vand.u32 %v1639, 2147483648
        %v1865 = vor.u32 1.1754944e-38, %v1864
        %v1866 = vsel %vm1863, %v1865, %v1861
        %v1867 = vmul.f32 1.0, %v1866
        %v1868 = vrcp.pop %v1640
        %v1869 = vmul.f32 %v1640, %v1868
        %v1870 = vsub.f32 1.0, %v1869
        %v1871 = vmul.f32 %v1868, %v1870
        %v1872 = vadd.f32 %v1868, %v1871
        %vm1873 = vweird.f32 %v1640
        %vm1874 = vweird.f32 %v1868
        %vm1875 = vmor %vm1873, %vm1874
        %v1876 = vsel %vm1875, %v1868, %v1872
        %v1877 = vand.u32 2147483647, %v1640
        %vm1878 = vcmp.eq.f32.partialorder %v1877, 8.507059e+37
        %v1879 = vand.u32 %v1640, 2147483648
        %v1880 = vor.u32 1.1754944e-38, %v1879
        %v1881 = vsel %vm1878, %v1880, %v1876
        %v1882 = vmul.f32 1.0, %v1881
        %v1883 = vrcp.pop %v1641
        %v1884 = vmul.f32 %v1641, %v1883
        %v1885 = vsub.f32 1.0, %v1884
        %v1886 = vmul.f32 %v1883, %v1885
        %v1887 = vadd.f32 %v1883, %v1886
        %vm1888 = vweird.f32 %v1641
        %vm1889 = vweird.f32 %v1883
        %vm1890 = vmor %vm1888, %vm1889
        %v1891 = vsel %vm1890, %v1883, %v1887
        %v1892 = vand.u32 2147483647, %v1641
        %vm1893 = vcmp.eq.f32.partialorder %v1892, 8.507059e+37
        %v1894 = vand.u32 %v1641, 2147483648
        %v1895 = vor.u32 1.1754944e-38, %v1894
        %v1896 = vsel %vm1893, %v1895, %v1891
        %v1897 = vmul.f32 1.0, %v1896
        %v1898 = vrcp.pop %v1642
        %v1899 = vmul.f32 %v1642, %v1898
        %v1900 = vsub.f32 1.0, %v1899
        %v1901 = vmul.f32 %v1898, %v1900
        %v1902 = vadd.f32 %v1898, %v1901
        %vm1903 = vweird.f32 %v1642
        %vm1904 = vweird.f32 %v1898
        %vm1905 = vmor %vm1903, %vm1904
        %v1906 = vsel %vm1905, %v1898, %v1902
        %v1907 = vand.u32 2147483647, %v1642
        %vm1908 = vcmp.eq.f32.partialorder %v1907, 8.507059e+37
        %v1909 = vand.u32 %v1642, 2147483648
        %v1910 = vor.u32 1.1754944e-38, %v1909
        %v1911 = vsel %vm1908, %v1910, %v1906
        %v1912 = vmul.f32 1.0, %v1911
        %v1913 = vrcp.pop %v1643
        %v1914 = vmul.f32 %v1643, %v1913
        %v1915 = vsub.f32 1.0, %v1914
        %v1916 = vmul.f32 %v1913, %v1915
        %v1917 = vadd.f32 %v1913, %v1916
        %vm1918 = vweird.f32 %v1643
        %vm1919 = vweird.f32 %v1913
        %vm1920 = vmor %vm1918, %vm1919
        %v1921 = vsel %vm1920, %v1913, %v1917
        %v1922 = vand.u32 2147483647, %v1643
        %vm1923 = vcmp.eq.f32.partialorder %v1922, 8.507059e+37
        %v1924 = vand.u32 %v1643, 2147483648
        %v1925 = vor.u32 1.1754944e-38, %v1924
        %v1926 = vsel %vm1923, %v1925, %v1921
        %v1927 = vmul.f32 1.0, %v1926
        %v1928 = vrcp.pop %v1644
        %v1929 = vmul.f32 %v1644, %v1928
        %v1930 = vsub.f32 1.0, %v1929
        %v1931 = vmul.f32 %v1928, %v1930
        %v1932 = vadd.f32 %v1928, %v1931
        %vm1933 = vweird.f32 %v1644
        %vm1934 = vweird.f32 %v1928
        %vm1935 = vmor %vm1933, %vm1934
        %v1936 = vsel %vm1935, %v1928, %v1932
        %v1937 = vand.u32 2147483647, %v1644
        %vm1938 = vcmp.eq.f32.partialorder %v1937, 8.507059e+37
        %v1939 = vand.u32 %v1644, 2147483648
        %v1940 = vor.u32 1.1754944e-38, %v1939
        %v1941 = vsel %vm1938, %v1940, %v1936
        %v1942 = vmul.f32 1.0, %v1941
        %v1943 = vrcp.pop %v1645
        %v1944 = vmul.f32 %v1645, %v1943
        %v1945 = vsub.f32 1.0, %v1944
        %v1946 = vmul.f32 %v1943, %v1945
        %v1947 = vadd.f32 %v1943, %v1946
        %vm1948 = vweird.f32 %v1645
        %vm1949 = vweird.f32 %v1943
        %vm1950 = vmor %vm1948, %vm1949
        %v1951 = vsel %vm1950, %v1943, %v1947
        %v1952 = vand.u32 2147483647, %v1645
        %vm1953 = vcmp.eq.f32.partialorder %v1952, 8.507059e+37
        %v1954 = vand.u32 %v1645, 2147483648
        %v1955 = vor.u32 1.1754944e-38, %v1954
        %v1956 = vsel %vm1953, %v1955, %v1951
        %v1957 = vmul.f32 1.0, %v1956
        %v1958 = vrcp.pop %v1646
        %v1959 = vmul.f32 %v1646, %v1958
        %v1960 = vsub.f32 1.0, %v1959
        %v1961 = vmul.f32 %v1958, %v1960
        %v1962 = vadd.f32 %v1958, %v1961
        %vm1963 = vweird.f32 %v1646
        %vm1964 = vweird.f32 %v1958
        %vm1965 = vmor %vm1963, %vm1964
        %v1966 = vsel %vm1965, %v1958, %v1962
        %v1967 = vand.u32 2147483647, %v1646
        %vm1968 = vcmp.eq.f32.partialorder %v1967, 8.507059e+37
        %v1969 = vand.u32 %v1646, 2147483648
        %v1970 = vor.u32 1.1754944e-38, %v1969
        %v1971 = vsel %vm1968, %v1970, %v1966
        %v1972 = vmul.f32 1.0, %v1971
        %v1973 = vrcp.pop %v1647
        %v1974 = vmul.f32 %v1647, %v1973
        %v1975 = vsub.f32 1.0, %v1974
        %v1976 = vmul.f32 %v1973, %v1975
        %v1977 = vadd.f32 %v1973, %v1976
        %vm1978 = vweird.f32 %v1647
        %vm1979 = vweird.f32 %v1973
        %vm1980 = vmor %vm1978, %vm1979
        %v1981 = vsel %vm1980, %v1973, %v1977
        %v1982 = vand.u32 2147483647, %v1647
        %vm1983 = vcmp.eq.f32.partialorder %v1982, 8.507059e+37
        %v1984 = vand.u32 %v1647, 2147483648
        %v1985 = vor.u32 1.1754944e-38, %v1984
        %v1986 = vsel %vm1983, %v1985, %v1981
        %v1987 = vmul.f32 1.0, %v1986
        %v1988 = vrcp.pop %v1648
        %v1989 = vmul.f32 %v1648, %v1988
        %v1990 = vsub.f32 1.0, %v1989
        %v1991 = vmul.f32 %v1988, %v1990
        %v1992 = vadd.f32 %v1988, %v1991
        %vm1993 = vweird.f32 %v1648
        %vm1994 = vweird.f32 %v1988
        %vm1995 = vmor %vm1993, %vm1994
        %v1996 = vsel %vm1995, %v1988, %v1992
        %v1997 = vand.u32 2147483647, %v1648
        %vm1998 = vcmp.eq.f32.partialorder %v1997, 8.507059e+37
        %v1999 = vand.u32 %v1648, 2147483648
        %v2000 = vor.u32 1.1754944e-38, %v1999
        %v2001 = vsel %vm1998, %v2000, %v1996
        %v2002 = vmul.f32 1.0, %v2001
        %v2003 = vrcp.pop %v1649
        %v2004 = vmul.f32 %v1649, %v2003
        %v2005 = vsub.f32 1.0, %v2004
        %v2006 = vmul.f32 %v2003, %v2005
        %v2007 = vadd.f32 %v2003, %v2006
        %vm2008 = vweird.f32 %v1649
        %vm2009 = vweird.f32 %v2003
        %vm2010 = vmor %vm2008, %vm2009
        %v2011 = vsel %vm2010, %v2003, %v2007
        %v2012 = vand.u32 2147483647, %v1649
        %vm2013 = vcmp.eq.f32.partialorder %v2012, 8.507059e+37
        %v2014 = vand.u32 %v1649, 2147483648
        %v2015 = vor.u32 1.1754944e-38, %v2014
        %v2016 = vsel %vm2013, %v2015, %v2011
        %v2017 = vmul.f32 1.0, %v2016
        %v2018 = vrcp.pop %v1650
        %v2019 = vmul.f32 %v1650, %v2018
        %v2020 = vsub.f32 1.0, %v2019
        %v2021 = vmul.f32 %v2018, %v2020
        %v2022 = vadd.f32 %v2018, %v2021
        %vm2023 = vweird.f32 %v1650
        %vm2024 = vweird.f32 %v2018
        %vm2025 = vmor %vm2023, %vm2024
        %v2026 = vsel %vm2025, %v2018, %v2022
        %v2027 = vand.u32 2147483647, %v1650
        %vm2028 = vcmp.eq.f32.partialorder %v2027, 8.507059e+37
        %v2029 = vand.u32 %v1650, 2147483648
        %v2030 = vor.u32 1.1754944e-38, %v2029
        %v2031 = vsel %vm2028, %v2030, %v2026
        %v2032 = vmul.f32 1.0, %v2031
        %v2033 = vrcp.pop %v1651
        %v2034 = vmul.f32 %v1651, %v2033
        %v2035 = vsub.f32 1.0, %v2034
        %v2036 = vmul.f32 %v2033, %v2035
        %v2037 = vadd.f32 %v2033, %v2036
        %vm2038 = vweird.f32 %v1651
        %vm2039 = vweird.f32 %v2033
        %vm2040 = vmor %vm2038, %vm2039
        %v2041 = vsel %vm2040, %v2033, %v2037
        %v2042 = vand.u32 2147483647, %v1651
        %vm2043 = vcmp.eq.f32.partialorder %v2042, 8.507059e+37
        %v2044 = vand.u32 %v1651, 2147483648
        %v2045 = vor.u32 1.1754944e-38, %v2044
        %v2046 = vsel %vm2043, %v2045, %v2041
        %v2047 = vmul.f32 1.0, %v2046
        %v2048 = vrcp.pop %v1652
        %v2049 = vmul.f32 %v1652, %v2048
        %v2050 = vsub.f32 1.0, %v2049
        %v2051 = vmul.f32 %v2048, %v2050
        %v2052 = vadd.f32 %v2048, %v2051
        %vm2053 = vweird.f32 %v1652
        %vm2054 = vweird.f32 %v2048
        %vm2055 = vmor %vm2053, %vm2054
        %v2056 = vsel %vm2055, %v2048, %v2052
        %v2057 = vand.u32 2147483647, %v1652
        %vm2058 = vcmp.eq.f32.partialorder %v2057, 8.507059e+37
        %v2059 = vand.u32 %v1652, 2147483648
        %v2060 = vor.u32 1.1754944e-38, %v2059
        %v2061 = vsel %vm2058, %v2060, %v2056
        %v2062 = vmul.f32 1.0, %v2061
        %v2063 = vrcp.pop %v1653
        %v2064 = vmul.f32 %v1653, %v2063
        %v2065 = vsub.f32 1.0, %v2064
        %v2066 = vmul.f32 %v2063, %v2065
        %v2067 = vadd.f32 %v2063, %v2066
        %vm2068 = vweird.f32 %v1653
        %vm2069 = vweird.f32 %v2063
        %vm2070 = vmor %vm2068, %vm2069
        %v2071 = vsel %vm2070, %v2063, %v2067
        %v2072 = vand.u32 2147483647, %v1653
        %vm2073 = vcmp.eq.f32.partialorder %v2072, 8.507059e+37
        %v2074 = vand.u32 %v1653, 2147483648
        %v2075 = vor.u32 1.1754944e-38, %v2074
        %v2076 = vsel %vm2073, %v2075, %v2071
        %v2077 = vmul.f32 1.0, %v2076
        %v2078 = vrcp.pop %v1654
        %v2079 = vmul.f32 %v1654, %v2078
        %v2080 = vsub.f32 1.0, %v2079
        %v2081 = vmul.f32 %v2078, %v2080
        %v2082 = vadd.f32 %v2078, %v2081
        %vm2083 = vweird.f32 %v1654
        %vm2084 = vweird.f32 %v2078
        %vm2085 = vmor %vm2083, %vm2084
        %v2086 = vsel %vm2085, %v2078, %v2082
        %v2087 = vand.u32 2147483647, %v1654
        %vm2088 = vcmp.eq.f32.partialorder %v2087, 8.507059e+37
        %v2089 = vand.u32 %v1654, 2147483648
        %v2090 = vor.u32 1.1754944e-38, %v2089
        %v2091 = vsel %vm2088, %v2090, %v2086
        %v2092 = vmul.f32 1.0, %v2091
        %v2093 = vrcp.pop %v1655
        %v2094 = vmul.f32 %v1655, %v2093
        %v2095 = vsub.f32 1.0, %v2094
        %v2096 = vmul.f32 %v2093, %v2095
        %v2097 = vadd.f32 %v2093, %v2096
        %vm2098 = vweird.f32 %v1655
        %vm2099 = vweird.f32 %v2093
        %vm2100 = vmor %vm2098, %vm2099
        %v2101 = vsel %vm2100, %v2093, %v2097
        %v2102 = vand.u32 2147483647, %v1655
        %vm2103 = vcmp.eq.f32.partialorder %v2102, 8.507059e+37
        %v2104 = vand.u32 %v1655, 2147483648
        %v2105 = vor.u32 1.1754944e-38, %v2104
        %v2106 = vsel %vm2103, %v2105, %v2101
        %v2107 = vmul.f32 1.0, %v2106
        %v2108 = vrcp.pop %v1656
        %v2109 = vmul.f32 %v1656, %v2108
        %v2110 = vsub.f32 1.0, %v2109
        %v2111 = vmul.f32 %v2108, %v2110
        %v2112 = vadd.f32 %v2108, %v2111
        %vm2113 = vweird.f32 %v1656
        %vm2114 = vweird.f32 %v2108
        %vm2115 = vmor %vm2113, %vm2114
        %v2116 = vsel %vm2115, %v2108, %v2112
        %v2117 = vand.u32 2147483647, %v1656
        %vm2118 = vcmp.eq.f32.partialorder %v2117, 8.507059e+37
        %v2119 = vand.u32 %v1656, 2147483648
        %v2120 = vor.u32 1.1754944e-38, %v2119
        %v2121 = vsel %vm2118, %v2120, %v2116
        %v2122 = vmul.f32 1.0, %v2121
        %v2123 = vrcp.pop %v1657
        %v2124 = vmul.f32 %v1657, %v2123
        %v2125 = vsub.f32 1.0, %v2124
        %v2126 = vmul.f32 %v2123, %v2125
        %v2127 = vadd.f32 %v2123, %v2126
        %vm2128 = vweird.f32 %v1657
        %vm2129 = vweird.f32 %v2123
        %vm2130 = vmor %vm2128, %vm2129
        %v2131 = vsel %vm2130, %v2123, %v2127
        %v2132 = vand.u32 2147483647, %v1657
        %vm2133 = vcmp.eq.f32.partialorder %v2132, 8.507059e+37
        %v2134 = vand.u32 %v1657, 2147483648
        %v2135 = vor.u32 1.1754944e-38, %v2134
        %v2136 = vsel %vm2133, %v2135, %v2131
        %v2137 = vmul.f32 1.0, %v2136
        %v2138 = vmul.f32 %v1498, %v1672
        %v2139 = vmul.f32 %v1499, %v1687
        %v2140 = vmul.f32 %v1500, %v1702
        %v2141 = vmul.f32 %v1501, %v1717
        %v2142 = vmul.f32 %v1502, %v1732
        %v2143 = vmul.f32 %v1503, %v1747
        %v2144 = vmul.f32 %v1504, %v1762
        %v2145 = vmul.f32 %v1505, %v1777
        %v2146 = vmul.f32 %v1506, %v1792
        %v2147 = vmul.f32 %v1507, %v1807
        %v2148 = vmul.f32 %v1508, %v1822
        %v2149 = vmul.f32 %v1509, %v1837
        %v2150 = vmul.f32 %v1510, %v1852
        %v2151 = vmul.f32 %v1511, %v1867
        %v2152 = vmul.f32 %v1512, %v1882
        %v2153 = vmul.f32 %v1513, %v1897
        %v2154 = vmul.f32 %v1514, %v1912
        %v2155 = vmul.f32 %v1515, %v1927
        %v2156 = vmul.f32 %v1516, %v1942
        %v2157 = vmul.f32 %v1517, %v1957
        %v2158 = vmul.f32 %v1518, %v1972
        %v2159 = vmul.f32 %v1519, %v1987
        %v2160 = vmul.f32 %v1520, %v2002
        %v2161 = vmul.f32 %v1521, %v2017
        %v2162 = vmul.f32 %v1522, %v2032
        %v2163 = vmul.f32 %v1523, %v2047
        %v2164 = vmul.f32 %v1524, %v2062
        %v2165 = vmul.f32 %v1525, %v2077
        %v2166 = vmul.f32 %v1526, %v2092
        %v2167 = vmul.f32 %v1527, %v2107
        %v2168 = vmul.f32 %v1528, %v2122
        %v2169 = vmul.f32 %v1529, %v2137
        %v2170 = vrot.slane %v2138, 7
        %v2171 = vrot.slane %v2139, 7
        %v2172 = vrot.slane %v2140, 7
        %v2173 = vrot.slane %v2141, 7
        %v2174 = vrot.slane %v2142, 7
        %v2175 = vrot.slane %v2143, 7
        %v2176 = vrot.slane %v2144, 7
        %v2177 = vrot.slane %v2145, 7
        %v2178 = vrot.slane %v2146, 7
        %v2179 = vrot.slane %v2147, 7
        %v2180 = vrot.slane %v2148, 7
        %v2181 = vrot.slane %v2149, 7
        %v2182 = vrot.slane %v2150, 7
        %v2183 = vrot.slane %v2151, 7
        %v2184 = vrot.slane %v2152, 7
        %v2185 = vrot.slane %v2153, 7
        %v2186 = vrot.slane %v2154, 7
        %v2187 = vrot.slane %v2155, 7
        %v2188 = vrot.slane %v2156, 7
        %v2189 = vrot.slane %v2157, 7
        %v2190 = vrot.slane %v2158, 7
        %v2191 = vrot.slane %v2159, 7
        %v2192 = vrot.slane %v2160, 7
        %v2193 = vrot.slane %v2161, 7
        %v2194 = vrot.slane %v2162, 7
        %v2195 = vrot.slane %v2163, 7
        %v2196 = vrot.slane %v2164, 7
        %v2197 = vrot.slane %v2165, 7
        %v2198 = vrot.slane %v2166, 7
        %v2199 = vrot.slane %v2167, 7
        %v2200 = vrot.slane %v2168, 7
        %v2201 = vrot.slane %v2169, 7
        %vm2202 = vcmp.lt.s32.totalorder %v612, 1
        %v2203 = vsel %vm2202, %v2200, %v2201
        %v2204 = vsel %vm2202, %v2199, %v2200
        %v2205 = vsel %vm2202, %v2198, %v2199
        %v2206 = vsel %vm2202, %v2197, %v2198
        %v2207 = vsel %vm2202, %v2196, %v2197
        %v2208 = vsel %vm2202, %v2195, %v2196
        %v2209 = vsel %vm2202, %v2194, %v2195
        %v2210 = vsel %vm2202, %v2193, %v2194
        %v2211 = vsel %vm2202, %v2192, %v2193
        %v2212 = vsel %vm2202, %v2191, %v2192
        %v2213 = vsel %vm2202, %v2190, %v2191
        %v2214 = vsel %vm2202, %v2189, %v2190
        %v2215 = vsel %vm2202, %v2188, %v2189
        %v2216 = vsel %vm2202, %v2187, %v2188
        %v2217 = vsel %vm2202, %v2186, %v2187
        %v2218 = vsel %vm2202, %v2185, %v2186
        %v2219 = vsel %vm2202, %v2184, %v2185
        %v2220 = vsel %vm2202, %v2183, %v2184
        %v2221 = vsel %vm2202, %v2182, %v2183
        %v2222 = vsel %vm2202, %v2181, %v2182
        %v2223 = vsel %vm2202, %v2180, %v2181
        %v2224 = vsel %vm2202, %v2179, %v2180
        %v2225 = vsel %vm2202, %v2178, %v2179
        %v2226 = vsel %vm2202, %v2177, %v2178
        %v2227 = vsel %vm2202, %v2176, %v2177
        %v2228 = vsel %vm2202, %v2175, %v2176
        %v2229 = vsel %vm2202, %v2174, %v2175
        %v2230 = vsel %vm2202, %v2173, %v2174
        %v2231 = vsel %vm2202, %v2172, %v2173
        %v2232 = vsel %vm2202, %v2171, %v2172
        %v2233 = vsel %vm2202, %v2170, %v2171
        %v2234 = vsel %vm2202, %v2201, %v2170
        %v2235 = vmul.f32 %v1092, %v2234
        %v2236 = vmul.f32 %v1093, %v2233
        %v2237 = vmul.f32 %v1094, %v2232
        %v2238 = vmul.f32 %v1095, %v2231
        %v2239 = vmul.f32 %v1096, %v2230
        %v2240 = vmul.f32 %v1097, %v2229
        %v2241 = vmul.f32 %v1098, %v2228
        %v2242 = vmul.f32 %v1099, %v2227
        %v2243 = vmul.f32 %v1100, %v2226
        %v2244 = vmul.f32 %v1101, %v2225
        %v2245 = vmul.f32 %v1102, %v2224
        %v2246 = vmul.f32 %v1103, %v2223
        %v2247 = vmul.f32 %v1104, %v2222
        %v2248 = vmul.f32 %v1105, %v2221
        %v2249 = vmul.f32 %v1106, %v2220
        %v2250 = vmul.f32 %v1107, %v2219
        %v2251 = vmul.f32 %v1108, %v2218
        %v2252 = vmul.f32 %v1109, %v2217
        %v2253 = vmul.f32 %v1110, %v2216
        %v2254 = vmul.f32 %v1111, %v2215
        %v2255 = vmul.f32 %v1112, %v2214
        %v2256 = vmul.f32 %v1113, %v2213
        %v2257 = vmul.f32 %v1114, %v2212
        %v2258 = vmul.f32 %v1115, %v2211
        %v2259 = vmul.f32 %v1116, %v2210
        %v2260 = vmul.f32 %v1117, %v2209
        %v2261 = vmul.f32 %v1118, %v2208
        %v2262 = vmul.f32 %v1119, %v2207
        %v2263 = vmul.f32 %v1120, %v2206
        %v2264 = vmul.f32 %v1121, %v2205
        %v2265 = vmul.f32 %v1122, %v2204
        %v2266 = vmul.f32 %v1123, %v2203
        %v2267 = vpack.c.bf16 %v2235, %v2235
        %v2268 = vpack.c.bf16 %v2236, %v2236
        %v2269 = vpack.c.bf16 %v2237, %v2237
        %v2270 = vpack.c.bf16 %v2238, %v2238
        %v2271 = vpack.c.bf16 %v2239, %v2239
        %v2272 = vpack.c.bf16 %v2240, %v2240
        %v2273 = vpack.c.bf16 %v2241, %v2241
        %v2274 = vpack.c.bf16 %v2242, %v2242
        %v2275 = vpack.c.bf16 %v2243, %v2243
        %v2276 = vpack.c.bf16 %v2244, %v2244
        %v2277 = vpack.c.bf16 %v2245, %v2245
        %v2278 = vpack.c.bf16 %v2246, %v2246
        %v2279 = vpack.c.bf16 %v2247, %v2247
        %v2280 = vpack.c.bf16 %v2248, %v2248
        %v2281 = vpack.c.bf16 %v2249, %v2249
        %v2282 = vpack.c.bf16 %v2250, %v2250
        %v2283 = vpack.c.bf16 %v2251, %v2251
        %v2284 = vpack.c.bf16 %v2252, %v2252
        %v2285 = vpack.c.bf16 %v2253, %v2253
        %v2286 = vpack.c.bf16 %v2254, %v2254
        %v2287 = vpack.c.bf16 %v2255, %v2255
        %v2288 = vpack.c.bf16 %v2256, %v2256
        %v2289 = vpack.c.bf16 %v2257, %v2257
        %v2290 = vpack.c.bf16 %v2258, %v2258
        %v2291 = vpack.c.bf16 %v2259, %v2259
        %v2292 = vpack.c.bf16 %v2260, %v2260
        %v2293 = vpack.c.bf16 %v2261, %v2261
        %v2294 = vpack.c.bf16 %v2262, %v2262
        %v2295 = vpack.c.bf16 %v2263, %v2263
        %v2296 = vpack.c.bf16 %v2264, %v2264
        %v2297 = vpack.c.bf16 %v2265, %v2265
        %v2298 = vpack.c.bf16 %v2266, %v2266
        %v2299 = vrot.slane %v2138, 1
        %v2300 = vrot.slane %v2139, 1
        %v2301 = vrot.slane %v2140, 1
        %v2302 = vrot.slane %v2141, 1
        %v2303 = vrot.slane %v2142, 1
        %v2304 = vrot.slane %v2143, 1
        %v2305 = vrot.slane %v2144, 1
        %v2306 = vrot.slane %v2145, 1
        %v2307 = vrot.slane %v2146, 1
        %v2308 = vrot.slane %v2147, 1
        %v2309 = vrot.slane %v2148, 1
        %v2310 = vrot.slane %v2149, 1
        %v2311 = vrot.slane %v2150, 1
        %v2312 = vrot.slane %v2151, 1
        %v2313 = vrot.slane %v2152, 1
        %v2314 = vrot.slane %v2153, 1
        %v2315 = vrot.slane %v2154, 1
        %v2316 = vrot.slane %v2155, 1
        %v2317 = vrot.slane %v2156, 1
        %v2318 = vrot.slane %v2157, 1
        %v2319 = vrot.slane %v2158, 1
        %v2320 = vrot.slane %v2159, 1
        %v2321 = vrot.slane %v2160, 1
        %v2322 = vrot.slane %v2161, 1
        %v2323 = vrot.slane %v2162, 1
        %v2324 = vrot.slane %v2163, 1
        %v2325 = vrot.slane %v2164, 1
        %v2326 = vrot.slane %v2165, 1
        %v2327 = vrot.slane %v2166, 1
        %v2328 = vrot.slane %v2167, 1
        %v2329 = vrot.slane %v2168, 1
        %v2330 = vrot.slane %v2169, 1
        %vm2331 = vcmp.lt.s32.totalorder %v612, 7
        %v2332 = vsel %vm2331, %v2329, %v2330
        %v2333 = vsel %vm2331, %v2328, %v2329
        %v2334 = vsel %vm2331, %v2327, %v2328
        %v2335 = vsel %vm2331, %v2326, %v2327
        %v2336 = vsel %vm2331, %v2325, %v2326
        %v2337 = vsel %vm2331, %v2324, %v2325
        %v2338 = vsel %vm2331, %v2323, %v2324
        %v2339 = vsel %vm2331, %v2322, %v2323
        %v2340 = vsel %vm2331, %v2321, %v2322
        %v2341 = vsel %vm2331, %v2320, %v2321
        %v2342 = vsel %vm2331, %v2319, %v2320
        %v2343 = vsel %vm2331, %v2318, %v2319
        %v2344 = vsel %vm2331, %v2317, %v2318
        %v2345 = vsel %vm2331, %v2316, %v2317
        %v2346 = vsel %vm2331, %v2315, %v2316
        %v2347 = vsel %vm2331, %v2314, %v2315
        %v2348 = vsel %vm2331, %v2313, %v2314
        %v2349 = vsel %vm2331, %v2312, %v2313
        %v2350 = vsel %vm2331, %v2311, %v2312
        %v2351 = vsel %vm2331, %v2310, %v2311
        %v2352 = vsel %vm2331, %v2309, %v2310
        %v2353 = vsel %vm2331, %v2308, %v2309
        %v2354 = vsel %vm2331, %v2307, %v2308
        %v2355 = vsel %vm2331, %v2306, %v2307
        %v2356 = vsel %vm2331, %v2305, %v2306
        %v2357 = vsel %vm2331, %v2304, %v2305
        %v2358 = vsel %vm2331, %v2303, %v2304
        %v2359 = vsel %vm2331, %v2302, %v2303
        %v2360 = vsel %vm2331, %v2301, %v2302
        %v2361 = vsel %vm2331, %v2300, %v2301
        %v2362 = vsel %vm2331, %v2299, %v2300
        %v2363 = vsel %vm2331, %v2330, %v2299
        %v2364 = vmul.f32 %v1188, %v2362
        %v2365 = vmul.f32 %v1189, %v2361
        %v2366 = vmul.f32 %v1190, %v2360
        %v2367 = vmul.f32 %v1191, %v2359
        %v2368 = vmul.f32 %v1192, %v2358
        %v2369 = vmul.f32 %v1193, %v2357
        %v2370 = vmul.f32 %v1194, %v2356
        %v2371 = vmul.f32 %v1195, %v2355
        %v2372 = vmul.f32 %v1196, %v2354
        %v2373 = vmul.f32 %v1197, %v2353
        %v2374 = vmul.f32 %v1198, %v2352
        %v2375 = vmul.f32 %v1199, %v2351
        %v2376 = vmul.f32 %v1200, %v2350
        %v2377 = vmul.f32 %v1201, %v2349
        %v2378 = vmul.f32 %v1202, %v2348
        %v2379 = vmul.f32 %v1203, %v2347
        %v2380 = vmul.f32 %v1204, %v2346
        %v2381 = vmul.f32 %v1205, %v2345
        %v2382 = vmul.f32 %v1206, %v2344
        %v2383 = vmul.f32 %v1207, %v2343
        %v2384 = vmul.f32 %v1208, %v2342
        %v2385 = vmul.f32 %v1209, %v2341
        %v2386 = vmul.f32 %v1210, %v2340
        %v2387 = vmul.f32 %v1211, %v2339
        %v2388 = vmul.f32 %v1212, %v2338
        %v2389 = vmul.f32 %v1213, %v2337
        %v2390 = vmul.f32 %v1214, %v2336
        %v2391 = vmul.f32 %v1215, %v2335
        %v2392 = vmul.f32 %v1216, %v2334
        %v2393 = vmul.f32 %v1217, %v2333
        %v2394 = vmul.f32 %v1218, %v2332
        %v2395 = vmul.f32 %v1219, %v2363
        %v2396 = vpack.c.bf16 %v2364, %v2364
        %v2397 = vpack.c.bf16 %v2365, %v2365
        %v2398 = vpack.c.bf16 %v2366, %v2366
        %v2399 = vpack.c.bf16 %v2367, %v2367
        %v2400 = vpack.c.bf16 %v2368, %v2368
        %v2401 = vpack.c.bf16 %v2369, %v2369
        %v2402 = vpack.c.bf16 %v2370, %v2370
        %v2403 = vpack.c.bf16 %v2371, %v2371
        %v2404 = vpack.c.bf16 %v2372, %v2372
        %v2405 = vpack.c.bf16 %v2373, %v2373
        %v2406 = vpack.c.bf16 %v2374, %v2374
        %v2407 = vpack.c.bf16 %v2375, %v2375
        %v2408 = vpack.c.bf16 %v2376, %v2376
        %v2409 = vpack.c.bf16 %v2377, %v2377
        %v2410 = vpack.c.bf16 %v2378, %v2378
        %v2411 = vpack.c.bf16 %v2379, %v2379
        %v2412 = vpack.c.bf16 %v2380, %v2380
        %v2413 = vpack.c.bf16 %v2381, %v2381
        %v2414 = vpack.c.bf16 %v2382, %v2382
        %v2415 = vpack.c.bf16 %v2383, %v2383
        %v2416 = vpack.c.bf16 %v2384, %v2384
        %v2417 = vpack.c.bf16 %v2385, %v2385
        %v2418 = vpack.c.bf16 %v2386, %v2386
        %v2419 = vpack.c.bf16 %v2387, %v2387
        %v2420 = vpack.c.bf16 %v2388, %v2388
        %v2421 = vpack.c.bf16 %v2389, %v2389
        %v2422 = vpack.c.bf16 %v2390, %v2390
        %v2423 = vpack.c.bf16 %v2391, %v2391
        %v2424 = vpack.c.bf16 %v2392, %v2392
        %v2425 = vpack.c.bf16 %v2393, %v2393
        %v2426 = vpack.c.bf16 %v2394, %v2394
        %v2427 = vpack.c.bf16 %v2395, %v2395
        %2428 = vst [vmem:[#allocation2] sm:$0xf] %v2267
        %2429 = vst [vmem:[#allocation2 + $0xc] sm:$0xf] %v2268
        %2430 = vst [vmem:[#allocation2 + $0x18] sm:$0xf] %v2269
        %2431 = vst [vmem:[#allocation2 + $0x24] sm:$0xf] %v2270
        %2432 = vst [vmem:[#allocation2 + $0x30] sm:$0xf] %v2271
        %2433 = vst [vmem:[#allocation2 + $0x3c] sm:$0xf] %v2272
        %2434 = vst [vmem:[#allocation2 + $0x48] sm:$0xf] %v2273
        %2435 = vst [vmem:[#allocation2 + $0x54] sm:$0xf] %v2274
        %2436 = vst [vmem:[#allocation2 + $0x60] sm:$0xf] %v2275
        %2437 = vst [vmem:[#allocation2 + $0x6c] sm:$0xf] %v2276
        %2438 = vst [vmem:[#allocation2 + $0x78] sm:$0xf] %v2277
        %2439 = vst [vmem:[#allocation2 + $0x84] sm:$0xf] %v2278
        %2440 = vst [vmem:[#allocation2 + $0x90] sm:$0xf] %v2279
        %2441 = vst [vmem:[#allocation2 + $0x9c] sm:$0xf] %v2280
        %2442 = vst [vmem:[#allocation2 + $0xa8] sm:$0xf] %v2281
        %2443 = vst [vmem:[#allocation2 + $0xb4] sm:$0xf] %v2282
        %2444 = vst [vmem:[#allocation2 + $0xc0] sm:$0xf] %v2283
        %2445 = vst [vmem:[#allocation2 + $0xcc] sm:$0xf] %v2284
        %2446 = vst [vmem:[#allocation2 + $0xd8] sm:$0xf] %v2285
        %2447 = vst [vmem:[#allocation2 + $0xe4] sm:$0xf] %v2286
        %2448 = vst [vmem:[#allocation2 + $0xf0] sm:$0xf] %v2287
        %2449 = vst [vmem:[#allocation2 + $0xfc] sm:$0xf] %v2288
        %2450 = vst [vmem:[#allocation2 + $0x108] sm:$0xf] %v2289
        %2451 = vst [vmem:[#allocation2 + $0x114] sm:$0xf] %v2290
        %2452 = vst [vmem:[#allocation2 + $0x120] sm:$0xf] %v2291
        %2453 = vst [vmem:[#allocation2 + $0x12c] sm:$0xf] %v2292
        %2454 = vst [vmem:[#allocation2 + $0x138] sm:$0xf] %v2293
        %2455 = vst [vmem:[#allocation2 + $0x144] sm:$0xf] %v2294
        %2456 = vst [vmem:[#allocation2 + $0x150] sm:$0xf] %v2295
        %2457 = vst [vmem:[#allocation2 + $0x15c] sm:$0xf] %v2296
        %2458 = vst [vmem:[#allocation2 + $0x168] sm:$0xf] %v2297
        %2459 = vst [vmem:[#allocation2 + $0x174] sm:$0xf] %v2298
        %v2460 = vpack.c.bf16 %v2138, %v2138
        %v2461 = vpack.c.bf16 %v2139, %v2139
        %v2462 = vpack.c.bf16 %v2140, %v2140
        %v2463 = vpack.c.bf16 %v2141, %v2141
        %v2464 = vpack.c.bf16 %v2142, %v2142
        %v2465 = vpack.c.bf16 %v2143, %v2143
        %v2466 = vpack.c.bf16 %v2144, %v2144
        %v2467 = vpack.c.bf16 %v2145, %v2145
        %v2468 = vpack.c.bf16 %v2146, %v2146
        %v2469 = vpack.c.bf16 %v2147, %v2147
        %v2470 = vpack.c.bf16 %v2148, %v2148
        %v2471 = vpack.c.bf16 %v2149, %v2149
        %v2472 = vpack.c.bf16 %v2150, %v2150
        %v2473 = vpack.c.bf16 %v2151, %v2151
        %v2474 = vpack.c.bf16 %v2152, %v2152
        %v2475 = vpack.c.bf16 %v2153, %v2153
        %v2476 = vpack.c.bf16 %v2154, %v2154
        %v2477 = vpack.c.bf16 %v2155, %v2155
        %v2478 = vpack.c.bf16 %v2156, %v2156
        %v2479 = vpack.c.bf16 %v2157, %v2157
        %v2480 = vpack.c.bf16 %v2158, %v2158
        %v2481 = vpack.c.bf16 %v2159, %v2159
        %v2482 = vpack.c.bf16 %v2160, %v2160
        %v2483 = vpack.c.bf16 %v2161, %v2161
        %v2484 = vpack.c.bf16 %v2162, %v2162
        %v2485 = vpack.c.bf16 %v2163, %v2163
        %v2486 = vpack.c.bf16 %v2164, %v2164
        %v2487 = vpack.c.bf16 %v2165, %v2165
        %v2488 = vpack.c.bf16 %v2166, %v2166
        %v2489 = vpack.c.bf16 %v2167, %v2167
        %v2490 = vpack.c.bf16 %v2168, %v2168
        %v2491 = vpack.c.bf16 %v2169, %v2169
        %2492 = vst [vmem:[#allocation2 + $0x4] sm:$0xf] %v2460
        %2493 = vst [vmem:[#allocation2 + $0x10] sm:$0xf] %v2461
        %2494 = vst [vmem:[#allocation2 + $0x1c] sm:$0xf] %v2462
        %2495 = vst [vmem:[#allocation2 + $0x28] sm:$0xf] %v2463
        %2496 = vst [vmem:[#allocation2 + $0x34] sm:$0xf] %v2464
        %2497 = vst [vmem:[#allocation2 + $0x40] sm:$0xf] %v2465
        %2498 = vst [vmem:[#allocation2 + $0x4c] sm:$0xf] %v2466
        %2499 = vst [vmem:[#allocation2 + $0x58] sm:$0xf] %v2467
        %2500 = vst [vmem:[#allocation2 + $0x64] sm:$0xf] %v2468
        %2501 = vst [vmem:[#allocation2 + $0x70] sm:$0xf] %v2469
        %2502 = vst [vmem:[#allocation2 + $0x7c] sm:$0xf] %v2470
        %2503 = vst [vmem:[#allocation2 + $0x88] sm:$0xf] %v2471
        %2504 = vst [vmem:[#allocation2 + $0x94] sm:$0xf] %v2472
        %2505 = vst [vmem:[#allocation2 + $0xa0] sm:$0xf] %v2473
        %2506 = vst [vmem:[#allocation2 + $0xac] sm:$0xf] %v2474
        %2507 = vst [vmem:[#allocation2 + $0xb8] sm:$0xf] %v2475
        %2508 = vst [vmem:[#allocation2 + $0xc4] sm:$0xf] %v2476
        %2509 = vst [vmem:[#allocation2 + $0xd0] sm:$0xf] %v2477
        %2510 = vst [vmem:[#allocation2 + $0xdc] sm:$0xf] %v2478
        %2511 = vst [vmem:[#allocation2 + $0xe8] sm:$0xf] %v2479
        %2512 = vst [vmem:[#allocation2 + $0xf4] sm:$0xf] %v2480
        %2513 = vst [vmem:[#allocation2 + $0x100] sm:$0xf] %v2481
        %2514 = vst [vmem:[#allocation2 + $0x10c] sm:$0xf] %v2482
        %2515 = vst [vmem:[#allocation2 + $0x118] sm:$0xf] %v2483
        %2516 = vst [vmem:[#allocation2 + $0x124] sm:$0xf] %v2484
        %2517 = vst [vmem:[#allocation2 + $0x130] sm:$0xf] %v2485
        %2518 = vst [vmem:[#allocation2 + $0x13c] sm:$0xf] %v2486
        %2519 = vst [vmem:[#allocation2 + $0x148] sm:$0xf] %v2487
        %2520 = vst [vmem:[#allocation2 + $0x154] sm:$0xf] %v2488
        %2521 = vst [vmem:[#allocation2 + $0x160] sm:$0xf] %v2489
        %2522 = vst [vmem:[#allocation2 + $0x16c] sm:$0xf] %v2490
        %2523 = vst [vmem:[#allocation2 + $0x178] sm:$0xf] %v2491
        %2524 = vst [vmem:[#allocation2 + $0x8] sm:$0xf] %v2396
        %2525 = vst [vmem:[#allocation2 + $0x14] sm:$0xf] %v2397
        %2526 = vst [vmem:[#allocation2 + $0x20] sm:$0xf] %v2398
        %2527 = vst [vmem:[#allocation2 + $0x2c] sm:$0xf] %v2399
        %2528 = vst [vmem:[#allocation2 + $0x38] sm:$0xf] %v2400
        %2529 = vst [vmem:[#allocation2 + $0x44] sm:$0xf] %v2401
        %2530 = vst [vmem:[#allocation2 + $0x50] sm:$0xf] %v2402
        %2531 = vst [vmem:[#allocation2 + $0x5c] sm:$0xf] %v2403
        %2532 = vst [vmem:[#allocation2 + $0x68] sm:$0xf] %v2404
        %2533 = vst [vmem:[#allocation2 + $0x74] sm:$0xf] %v2405
        %2534 = vst [vmem:[#allocation2 + $0x80] sm:$0xf] %v2406
        %2535 = vst [vmem:[#allocation2 + $0x8c] sm:$0xf] %v2407
        %2536 = vst [vmem:[#allocation2 + $0x98] sm:$0xf] %v2408
        %2537 = vst [vmem:[#allocation2 + $0xa4] sm:$0xf] %v2409
        %2538 = vst [vmem:[#allocation2 + $0xb0] sm:$0xf] %v2410
        %2539 = vst [vmem:[#allocation2 + $0xbc] sm:$0xf] %v2411
        %2540 = vst [vmem:[#allocation2 + $0xc8] sm:$0xf] %v2412
        %2541 = vst [vmem:[#allocation2 + $0xd4] sm:$0xf] %v2413
        %2542 = vst [vmem:[#allocation2 + $0xe0] sm:$0xf] %v2414
        %2543 = vst [vmem:[#allocation2 + $0xec] sm:$0xf] %v2415
        %2544 = vst [vmem:[#allocation2 + $0xf8] sm:$0xf] %v2416
        %2545 = vst [vmem:[#allocation2 + $0x104] sm:$0xf] %v2417
        %2546 = vst [vmem:[#allocation2 + $0x110] sm:$0xf] %v2418
        %2547 = vst [vmem:[#allocation2 + $0x11c] sm:$0xf] %v2419
        %2548 = vst [vmem:[#allocation2 + $0x128] sm:$0xf] %v2420
        %2549 = vst [vmem:[#allocation2 + $0x134] sm:$0xf] %v2421
        %2550 = vst [vmem:[#allocation2 + $0x140] sm:$0xf] %v2422
        %2551 = vst [vmem:[#allocation2 + $0x14c] sm:$0xf] %v2423
        %2552 = vst [vmem:[#allocation2 + $0x158] sm:$0xf] %v2424
        %2553 = vst [vmem:[#allocation2 + $0x164] sm:$0xf] %v2425
        %2554 = vst [vmem:[#allocation2 + $0x170] sm:$0xf] %v2426
        %2555 = vst [vmem:[#allocation2 + $0x17c] sm:$0xf] %v2427
        %v2556 = vld [vmem:[#allocation2] sm:$0xff]
        %v2557 = vld [vmem:[#allocation2 + $0x8] sm:$0xf]
        %v2558 = vld [vmem:[#allocation2 + $0xc] sm:$0xff]
        %v2559 = vld [vmem:[#allocation2 + $0x14] sm:$0xf]
        %v2560 = vld [vmem:[#allocation2 + $0x18] sm:$0xff]
        %v2561 = vld [vmem:[#allocation2 + $0x20] sm:$0xf]
        %v2562 = vld [vmem:[#allocation2 + $0x24] sm:$0xff]
        %v2563 = vld [vmem:[#allocation2 + $0x2c] sm:$0xf]
        %v2564 = vld [vmem:[#allocation2 + $0x30] sm:$0xff]
        %v2565 = vld [vmem:[#allocation2 + $0x38] sm:$0xf]
        %v2566 = vld [vmem:[#allocation2 + $0x3c] sm:$0xff]
        %v2567 = vld [vmem:[#allocation2 + $0x44] sm:$0xf]
        %v2568 = vld [vmem:[#allocation2 + $0x48] sm:$0xff]
        %v2569 = vld [vmem:[#allocation2 + $0x50] sm:$0xf]
        %v2570 = vld [vmem:[#allocation2 + $0x54] sm:$0xff]
        %v2571 = vld [vmem:[#allocation2 + $0x5c] sm:$0xf]
        %v2572 = vld [vmem:[#allocation2 + $0x60] sm:$0xff]
        %v2573 = vld [vmem:[#allocation2 + $0x68] sm:$0xf]
        %v2574 = vld [vmem:[#allocation2 + $0x6c] sm:$0xff]
        %v2575 = vld [vmem:[#allocation2 + $0x74] sm:$0xf]
        %v2576 = vld [vmem:[#allocation2 + $0x78] sm:$0xff]
        %v2577 = vld [vmem:[#allocation2 + $0x80] sm:$0xf]
        %v2578 = vld [vmem:[#allocation2 + $0x84] sm:$0xff]
        %v2579 = vld [vmem:[#allocation2 + $0x8c] sm:$0xf]
        %v2580 = vld [vmem:[#allocation2 + $0x90] sm:$0xff]
        %v2581 = vld [vmem:[#allocation2 + $0x98] sm:$0xf]
        %v2582 = vld [vmem:[#allocation2 + $0x9c] sm:$0xff]
        %v2583 = vld [vmem:[#allocation2 + $0xa4] sm:$0xf]
        %v2584 = vld [vmem:[#allocation2 + $0xa8] sm:$0xff]
        %v2585 = vld [vmem:[#allocation2 + $0xb0] sm:$0xf]
        %v2586 = vld [vmem:[#allocation2 + $0xb4] sm:$0xff]
        %v2587 = vld [vmem:[#allocation2 + $0xbc] sm:$0xf]
        %v2588 = vld [vmem:[#allocation2 + $0xc0] sm:$0xff]
        %v2589 = vld [vmem:[#allocation2 + $0xc8] sm:$0xf]
        %v2590 = vld [vmem:[#allocation2 + $0xcc] sm:$0xff]
        %v2591 = vld [vmem:[#allocation2 + $0xd4] sm:$0xf]
        %v2592 = vld [vmem:[#allocation2 + $0xd8] sm:$0xff]
        %v2593 = vld [vmem:[#allocation2 + $0xe0] sm:$0xf]
        %v2594 = vld [vmem:[#allocation2 + $0xe4] sm:$0xff]
        %v2595 = vld [vmem:[#allocation2 + $0xec] sm:$0xf]
        %v2596 = vld [vmem:[#allocation2 + $0xf0] sm:$0xff]
        %v2597 = vld [vmem:[#allocation2 + $0xf8] sm:$0xf]
        %v2598 = vld [vmem:[#allocation2 + $0xfc] sm:$0xff]
        %v2599 = vld [vmem:[#allocation2 + $0x104] sm:$0xf]
        %v2600 = vld [vmem:[#allocation2 + $0x108] sm:$0xff]
        %v2601 = vld [vmem:[#allocation2 + $0x110] sm:$0xf]
        %v2602 = vld [vmem:[#allocation2 + $0x114] sm:$0xff]
        %v2603 = vld [vmem:[#allocation2 + $0x11c] sm:$0xf]
        %v2604 = vld [vmem:[#allocation2 + $0x120] sm:$0xff]
        %v2605 = vld [vmem:[#allocation2 + $0x128] sm:$0xf]
        %v2606 = vld [vmem:[#allocation2 + $0x12c] sm:$0xff]
        %v2607 = vld [vmem:[#allocation2 + $0x134] sm:$0xf]
        %v2608 = vld [vmem:[#allocation2 + $0x138] sm:$0xff]
        %v2609 = vld [vmem:[#allocation2 + $0x140] sm:$0xf]
        %v2610 = vld [vmem:[#allocation2 + $0x144] sm:$0xff]
        %v2611 = vld [vmem:[#allocation2 + $0x14c] sm:$0xf]
        %v2612 = vld [vmem:[#allocation2 + $0x150] sm:$0xff]
        %v2613 = vld [vmem:[#allocation2 + $0x158] sm:$0xf]
        %v2614 = vld [vmem:[#allocation2 + $0x15c] sm:$0xff]
        %v2615 = vld [vmem:[#allocation2 + $0x164] sm:$0xf]
        %v2616 = vld [vmem:[#allocation2 + $0x168] sm:$0xff]
        %v2617 = vld [vmem:[#allocation2 + $0x170] sm:$0xf]
        %v2618 = vld [vmem:[#allocation2 + $0x174] sm:$0xff]
        %v2619 = vld [vmem:[#allocation2 + $0x17c] sm:$0xf]
        %v2620 = vld [vmem:[#allocation9] sm:$0xf]
        %v2621 = vld [vmem:[#allocation9 + $0x4] sm:$0xf]
        %v2622 = vld [vmem:[#allocation9 + $0x8] sm:$0xf]
        %v2623 = vld [vmem:[#allocation9 + $0xc] sm:$0xf]
        %v2624 = vld [vmem:[#allocation9 + $0x10] sm:$0xf]
        %v2625 = vld [vmem:[#allocation9 + $0x14] sm:$0xf]
        %v2626 = vld [vmem:[#allocation9 + $0x18] sm:$0xf]
        %v2627 = vld [vmem:[#allocation9 + $0x1c] sm:$0xf]
        %v2628 = vld [vmem:[#allocation9 + $0x20] sm:$0xf]
        %v2629 = vld [vmem:[#allocation9 + $0x24] sm:$0xf]
        %v2630 = vld [vmem:[#allocation9 + $0x28] sm:$0xf]
        %v2631 = vld [vmem:[#allocation9 + $0x2c] sm:$0xf]
        %v2632 = vld [vmem:[#allocation9 + $0x30] sm:$0xf]
        %v2633 = vld [vmem:[#allocation9 + $0x34] sm:$0xf]
        %v2634 = vld [vmem:[#allocation9 + $0x38] sm:$0xf]
        %v2635 = vld [vmem:[#allocation9 + $0x3c] sm:$0xf]
        %v2636 = vld [vmem:[#allocation9 + $0x40] sm:$0xf]
        %v2637 = vld [vmem:[#allocation9 + $0x44] sm:$0xf]
        %v2638 = vld [vmem:[#allocation9 + $0x48] sm:$0xf]
        %v2639 = vld [vmem:[#allocation9 + $0x4c] sm:$0xf]
        %v2640 = vld [vmem:[#allocation9 + $0x50] sm:$0xf]
        %v2641 = vld [vmem:[#allocation9 + $0x54] sm:$0xf]
        %v2642 = vld [vmem:[#allocation9 + $0x58] sm:$0xf]
        %v2643 = vld [vmem:[#allocation9 + $0x5c] sm:$0xf]
        %v2644 = vld [vmem:[#allocation9 + $0x60] sm:$0xf]
        %v2645 = vld [vmem:[#allocation9 + $0x64] sm:$0xf]
        %v2646 = vld [vmem:[#allocation9 + $0x68] sm:$0xf]
        %v2647 = vld [vmem:[#allocation9 + $0x6c] sm:$0xf]
        %v2648 = vld [vmem:[#allocation9 + $0x70] sm:$0xf]
        %v2649 = vld [vmem:[#allocation9 + $0x74] sm:$0xf]
        %v2650 = vld [vmem:[#allocation9 + $0x78] sm:$0xf]
        %v2651 = vld [vmem:[#allocation9 + $0x7c] sm:$0xf]
        %v2652 = vld [vmem:[#allocation9 + $0x80] sm:$0xf]
        %v2653 = vld [vmem:[#allocation9 + $0x84] sm:$0xf]
        %v2654 = vld [vmem:[#allocation9 + $0x88] sm:$0xf]
        %v2655 = vld [vmem:[#allocation9 + $0x8c] sm:$0xf]
        %v2656 = vld [vmem:[#allocation9 + $0x90] sm:$0xf]
        %v2657 = vld [vmem:[#allocation9 + $0x94] sm:$0xf]
        %v2658 = vld [vmem:[#allocation9 + $0x98] sm:$0xf]
        %v2659 = vld [vmem:[#allocation9 + $0x9c] sm:$0xf]
        %v2660 = vld [vmem:[#allocation9 + $0xa0] sm:$0xf]
        %v2661 = vld [vmem:[#allocation9 + $0xa4] sm:$0xf]
        %v2662 = vld [vmem:[#allocation9 + $0xa8] sm:$0xf]
        %v2663 = vld [vmem:[#allocation9 + $0xac] sm:$0xf]
        %v2664 = vld [vmem:[#allocation9 + $0xb0] sm:$0xf]
        %v2665 = vld [vmem:[#allocation9 + $0xb4] sm:$0xf]
        %v2666 = vld [vmem:[#allocation9 + $0xb8] sm:$0xf]
        %v2667 = vld [vmem:[#allocation9 + $0xbc] sm:$0xf]
        %v2732 = vunpack.c.l.b16 %v2556
        %v2733 = vunpack.c.h.b16 %v2556
        %v2734 = vunpack.c.l.b16 %v2557
        %v2735 = vunpack.c.l.b16 %v2558
        %v2736 = vunpack.c.h.b16 %v2558
        %v2737 = vunpack.c.l.b16 %v2559
        %v2738 = vunpack.c.l.b16 %v2560
        %v2739 = vunpack.c.h.b16 %v2560
        %v2740 = vunpack.c.l.b16 %v2561
        %v2741 = vunpack.c.l.b16 %v2562
        %v2742 = vunpack.c.h.b16 %v2562
        %v2743 = vunpack.c.l.b16 %v2563
        %v2744 = vunpack.c.l.b16 %v2564
        %v2745 = vunpack.c.h.b16 %v2564
        %v2746 = vunpack.c.l.b16 %v2565
        %v2747 = vunpack.c.l.b16 %v2566
        %v2748 = vunpack.c.h.b16 %v2566
        %v2749 = vunpack.c.l.b16 %v2567
        %v2750 = vunpack.c.l.b16 %v2568
        %v2751 = vunpack.c.h.b16 %v2568
        %v2752 = vunpack.c.l.b16 %v2569
        %v2753 = vunpack.c.l.b16 %v2570
        %v2754 = vunpack.c.h.b16 %v2570
        %v2755 = vunpack.c.l.b16 %v2571
        %v2756 = vunpack.c.l.b16 %v2572
        %v2757 = vunpack.c.h.b16 %v2572
        %v2758 = vunpack.c.l.b16 %v2573
        %v2759 = vunpack.c.l.b16 %v2574
        %v2760 = vunpack.c.h.b16 %v2574
        %v2761 = vunpack.c.l.b16 %v2575
        %v2762 = vunpack.c.l.b16 %v2576
        %v2763 = vunpack.c.h.b16 %v2576
        %v2764 = vunpack.c.l.b16 %v2577
        %v2765 = vunpack.c.l.b16 %v2578
        %v2766 = vunpack.c.h.b16 %v2578
        %v2767 = vunpack.c.l.b16 %v2579
        %v2768 = vunpack.c.l.b16 %v2580
        %v2769 = vunpack.c.h.b16 %v2580
        %v2770 = vunpack.c.l.b16 %v2581
        %v2771 = vunpack.c.l.b16 %v2582
        %v2772 = vunpack.c.h.b16 %v2582
        %v2773 = vunpack.c.l.b16 %v2583
        %v2774 = vunpack.c.l.b16 %v2584
        %v2775 = vunpack.c.h.b16 %v2584
        %v2776 = vunpack.c.l.b16 %v2585
        %v2777 = vunpack.c.l.b16 %v2586
        %v2778 = vunpack.c.h.b16 %v2586
        %v2779 = vunpack.c.l.b16 %v2587
        %v2780 = vunpack.c.l.b16 %v2588
        %v2781 = vunpack.c.h.b16 %v2588
        %v2782 = vunpack.c.l.b16 %v2589
        %v2783 = vunpack.c.l.b16 %v2590
        %v2784 = vunpack.c.h.b16 %v2590
        %v2785 = vunpack.c.l.b16 %v2591
        %v2786 = vunpack.c.l.b16 %v2592
        %v2787 = vunpack.c.h.b16 %v2592
        %v2788 = vunpack.c.l.b16 %v2593
        %v2789 = vunpack.c.l.b16 %v2594
        %v2790 = vunpack.c.h.b16 %v2594
        %v2791 = vunpack.c.l.b16 %v2595
        %v2792 = vunpack.c.l.b16 %v2596
        %v2793 = vunpack.c.h.b16 %v2596
        %v2794 = vunpack.c.l.b16 %v2597
        %v2795 = vunpack.c.l.b16 %v2598
        %v2796 = vunpack.c.h.b16 %v2598
        %v2797 = vunpack.c.l.b16 %v2599
        %v2798 = vunpack.c.l.b16 %v2600
        %v2799 = vunpack.c.h.b16 %v2600
        %v2800 = vunpack.c.l.b16 %v2601
        %v2801 = vunpack.c.l.b16 %v2602
        %v2802 = vunpack.c.h.b16 %v2602
        %v2803 = vunpack.c.l.b16 %v2603
        %v2804 = vunpack.c.l.b16 %v2604
        %v2805 = vunpack.c.h.b16 %v2604
        %v2806 = vunpack.c.l.b16 %v2605
        %v2807 = vunpack.c.l.b16 %v2606
        %v2808 = vunpack.c.h.b16 %v2606
        %v2809 = vunpack.c.l.b16 %v2607
        %v2810 = vunpack.c.l.b16 %v2608
        %v2811 = vunpack.c.h.b16 %v2608
        %v2812 = vunpack.c.l.b16 %v2609
        %v2813 = vunpack.c.l.b16 %v2610
        %v2814 = vunpack.c.h.b16 %v2610
        %v2815 = vunpack.c.l.b16 %v2611
        %v2816 = vunpack.c.l.b16 %v2612
        %v2817 = vunpack.c.h.b16 %v2612
        %v2818 = vunpack.c.l.b16 %v2613
        %v2819 = vunpack.c.l.b16 %v2614
        %v2820 = vunpack.c.h.b16 %v2614
        %v2821 = vunpack.c.l.b16 %v2615
        %v2822 = vunpack.c.l.b16 %v2616
        %v2823 = vunpack.c.h.b16 %v2616
        %v2824 = vunpack.c.l.b16 %v2617
        %v2825 = vunpack.c.l.b16 %v2618
        %v2826 = vunpack.c.h.b16 %v2618
        %v2827 = vunpack.c.l.b16 %v2619
        %v2828 = vpack.c.b16 %v2735, %v2732
        %v2829 = vpack.c.b16 %v2736, %v2733
        %v2830 = vpack.c.b16 %v2737, %v2734
        %v2831 = vpack.c.b16 %v2741, %v2738
        %v2832 = vpack.c.b16 %v2742, %v2739
        %v2833 = vpack.c.b16 %v2743, %v2740
        %v2834 = vpack.c.b16 %v2747, %v2744
        %v2835 = vpack.c.b16 %v2748, %v2745
        %v2836 = vpack.c.b16 %v2749, %v2746
        %v2837 = vpack.c.b16 %v2753, %v2750
        %v2838 = vpack.c.b16 %v2754, %v2751
        %v2839 = vpack.c.b16 %v2755, %v2752
        %v2840 = vpack.c.b16 %v2759, %v2756
        %v2841 = vpack.c.b16 %v2760, %v2757
        %v2842 = vpack.c.b16 %v2761, %v2758
        %v2843 = vpack.c.b16 %v2765, %v2762
        %v2844 = vpack.c.b16 %v2766, %v2763
        %v2845 = vpack.c.b16 %v2767, %v2764
        %v2846 = vpack.c.b16 %v2771, %v2768
        %v2847 = vpack.c.b16 %v2772, %v2769
        %v2848 = vpack.c.b16 %v2773, %v2770
        %v2849 = vpack.c.b16 %v2777, %v2774
        %v2850 = vpack.c.b16 %v2778, %v2775
        %v2851 = vpack.c.b16 %v2779, %v2776
        %v2852 = vpack.c.b16 %v2783, %v2780
        %v2853 = vpack.c.b16 %v2784, %v2781
        %v2854 = vpack.c.b16 %v2785, %v2782
        %v2855 = vpack.c.b16 %v2789, %v2786
        %v2856 = vpack.c.b16 %v2790, %v2787
        %v2857 = vpack.c.b16 %v2791, %v2788
        %v2858 = vpack.c.b16 %v2795, %v2792
        %v2859 = vpack.c.b16 %v2796, %v2793
        %v2860 = vpack.c.b16 %v2797, %v2794
        %v2861 = vpack.c.b16 %v2801, %v2798
        %v2862 = vpack.c.b16 %v2802, %v2799
        %v2863 = vpack.c.b16 %v2803, %v2800
        %v2864 = vpack.c.b16 %v2807, %v2804
        %v2865 = vpack.c.b16 %v2808, %v2805
        %v2866 = vpack.c.b16 %v2809, %v2806
        %v2867 = vpack.c.b16 %v2813, %v2810
        %v2868 = vpack.c.b16 %v2814, %v2811
        %v2869 = vpack.c.b16 %v2815, %v2812
        %v2870 = vpack.c.b16 %v2819, %v2816
        %v2871 = vpack.c.b16 %v2820, %v2817
        %v2872 = vpack.c.b16 %v2821, %v2818
        %v2873 = vpack.c.b16 %v2825, %v2822
        %v2874 = vpack.c.b16 %v2826, %v2823
        %v2875 = vpack.c.b16 %v2827, %v2824
        %v2972 = vunpack.c.l.b16 %v2620
        %v2973 = vunpack.c.l.b16 %v2621
        %v2974 = vunpack.c.l.b16 %v2622
        %v2975 = vunpack.c.l.b16 %v2623
        %v2976 = vunpack.c.l.b16 %v2624
        %v2977 = vunpack.c.l.b16 %v2625
        %v2978 = vunpack.c.l.b16 %v2626
        %v2979 = vunpack.c.l.b16 %v2627
        %v2980 = vunpack.c.l.b16 %v2628
        %v2981 = vunpack.c.l.b16 %v2629
        %v2982 = vunpack.c.l.b16 %v2630
        %v2983 = vunpack.c.l.b16 %v2631
        %v2984 = vunpack.c.l.b16 %v2632
        %v2985 = vunpack.c.l.b16 %v2633
        %v2986 = vunpack.c.l.b16 %v2634
        %v2987 = vunpack.c.l.b16 %v2635
        %v2988 = vunpack.c.l.b16 %v2636
        %v2989 = vunpack.c.l.b16 %v2637
        %v2990 = vunpack.c.l.b16 %v2638
        %v2991 = vunpack.c.l.b16 %v2639
        %v2992 = vunpack.c.l.b16 %v2640
        %v2993 = vunpack.c.l.b16 %v2641
        %v2994 = vunpack.c.l.b16 %v2642
        %v2995 = vunpack.c.l.b16 %v2643
        %v2996 = vunpack.c.l.b16 %v2644
        %v2997 = vunpack.c.l.b16 %v2645
        %v2998 = vunpack.c.l.b16 %v2646
        %v2999 = vunpack.c.l.b16 %v2647
        %v3000 = vunpack.c.l.b16 %v2648
        %v3001 = vunpack.c.l.b16 %v2649
        %v3002 = vunpack.c.l.b16 %v2650
        %v3003 = vunpack.c.l.b16 %v2651
        %v3004 = vunpack.c.l.b16 %v2652
        %v3005 = vunpack.c.l.b16 %v2653
        %v3006 = vunpack.c.l.b16 %v2654
        %v3007 = vunpack.c.l.b16 %v2655
        %v3008 = vunpack.c.l.b16 %v2656
        %v3009 = vunpack.c.l.b16 %v2657
        %v3010 = vunpack.c.l.b16 %v2658
        %v3011 = vunpack.c.l.b16 %v2659
        %v3012 = vunpack.c.l.b16 %v2660
        %v3013 = vunpack.c.l.b16 %v2661
        %v3014 = vunpack.c.l.b16 %v2662
        %v3015 = vunpack.c.l.b16 %v2663
        %v3016 = vunpack.c.l.b16 %v2664
        %v3017 = vunpack.c.l.b16 %v2665
        %v3018 = vunpack.c.l.b16 %v2666
        %v3019 = vunpack.c.l.b16 %v2667
        %v3020 = vpack.c.b16 %v2973, %v2972
        %v3021 = vpack.c.b16 %v2975, %v2974
        %v3022 = vpack.c.b16 %v2977, %v2976
        %v3023 = vpack.c.b16 %v2979, %v2978
        %v3024 = vpack.c.b16 %v2981, %v2980
        %v3025 = vpack.c.b16 %v2983, %v2982
        %v3026 = vpack.c.b16 %v2985, %v2984
        %v3027 = vpack.c.b16 %v2987, %v2986
        %v3028 = vpack.c.b16 %v2989, %v2988
        %v3029 = vpack.c.b16 %v2991, %v2990
        %v3030 = vpack.c.b16 %v2993, %v2992
        %v3031 = vpack.c.b16 %v2995, %v2994
        %v3032 = vpack.c.b16 %v2997, %v2996
        %v3033 = vpack.c.b16 %v2999, %v2998
        %v3034 = vpack.c.b16 %v3001, %v3000
        %v3035 = vpack.c.b16 %v3003, %v3002
        %v3036 = vpack.c.b16 %v3005, %v3004
        %v3037 = vpack.c.b16 %v3007, %v3006
        %v3038 = vpack.c.b16 %v3009, %v3008
        %v3039 = vpack.c.b16 %v3011, %v3010
        %v3040 = vpack.c.b16 %v3013, %v3012
        %v3041 = vpack.c.b16 %v3015, %v3014
        %v3042 = vpack.c.b16 %v3017, %v3016
        %v3043 = vpack.c.b16 %v3019, %v3018
        %3068 = vmatpush.bf16.msra.mxu0 %v3027
        %3069 = vmatpush.bf16.msra.mxu0 %v3026
        %3070 = vmatpush.bf16.msra.mxu0 %v3025
        %3071 = vmatpush.bf16.msra.mxu0 %v3024
        %3072 = vmatpush.bf16.msra.mxu0 %v3023
        %3073 = vmatpush.bf16.msra.mxu0 %v3022
        %3074 = vmatpush.bf16.msra.mxu0 %v3021
        %3075 = vmatpush.bf16.msra.mxu0 %v3020
        %3076 = vmatmul.bf16.gmra.mxu0 %v2828
        %v3077 = vpop.f32.mrf.mxu0
        %v3078 = vadd.f32 0.0, %v3077
        %v3079 = vpop.f32.mrf.mxu0
        %v3080 = vadd.f32 0.0, %v3079
        %3081 = vmatmul.bf16.gmra.mxu0 %v2831
        %v3082 = vpop.f32.mrf.mxu0
        %v3083 = vadd.f32 0.0, %v3082
        %v3084 = vpop.f32.mrf.mxu0
        %v3085 = vadd.f32 0.0, %v3084
        %3086 = vmatmul.bf16.gmra.mxu0 %v2834
        %v3087 = vpop.f32.mrf.mxu0
        %v3088 = vadd.f32 0.0, %v3087
        %v3089 = vpop.f32.mrf.mxu0
        %v3090 = vadd.f32 0.0, %v3089
        %3091 = vmatmul.bf16.gmra.mxu0 %v2837
        %v3092 = vpop.f32.mrf.mxu0
        %v3093 = vadd.f32 0.0, %v3092
        %v3094 = vpop.f32.mrf.mxu0
        %v3095 = vadd.f32 0.0, %v3094
        %3096 = vmatmul.bf16.gmra.mxu0 %v2840
        %v3097 = vpop.f32.mrf.mxu0
        %v3098 = vadd.f32 0.0, %v3097
        %v3099 = vpop.f32.mrf.mxu0
        %v3100 = vadd.f32 0.0, %v3099
        %3101 = vmatmul.bf16.gmra.mxu0 %v2843
        %v3102 = vpop.f32.mrf.mxu0
        %v3103 = vadd.f32 0.0, %v3102
        %v3104 = vpop.f32.mrf.mxu0
        %v3105 = vadd.f32 0.0, %v3104
        %3106 = vmatmul.bf16.gmra.mxu0 %v2846
        %v3107 = vpop.f32.mrf.mxu0
        %v3108 = vadd.f32 0.0, %v3107
        %v3109 = vpop.f32.mrf.mxu0
        %v3110 = vadd.f32 0.0, %v3109
        %3111 = vmatmul.bf16.gmra.mxu0 %v2849
        %v3112 = vpop.f32.mrf.mxu0
        %v3113 = vadd.f32 0.0, %v3112
        %v3114 = vpop.f32.mrf.mxu0
        %v3115 = vadd.f32 0.0, %v3114
        %3116 = vmatmul.bf16.gmra.mxu0 %v2852
        %v3117 = vpop.f32.mrf.mxu0
        %v3118 = vadd.f32 0.0, %v3117
        %v3119 = vpop.f32.mrf.mxu0
        %v3120 = vadd.f32 0.0, %v3119
        %3121 = vmatmul.bf16.gmra.mxu0 %v2855
        %v3122 = vpop.f32.mrf.mxu0
        %v3123 = vadd.f32 0.0, %v3122
        %v3124 = vpop.f32.mrf.mxu0
        %v3125 = vadd.f32 0.0, %v3124
        %3126 = vmatmul.bf16.gmra.mxu0 %v2858
        %v3127 = vpop.f32.mrf.mxu0
        %v3128 = vadd.f32 0.0, %v3127
        %v3129 = vpop.f32.mrf.mxu0
        %v3130 = vadd.f32 0.0, %v3129
        %3131 = vmatmul.bf16.gmra.mxu0 %v2861
        %v3132 = vpop.f32.mrf.mxu0
        %v3133 = vadd.f32 0.0, %v3132
        %v3134 = vpop.f32.mrf.mxu0
        %v3135 = vadd.f32 0.0, %v3134
        %3136 = vmatmul.bf16.gmra.mxu0 %v2864
        %v3137 = vpop.f32.mrf.mxu0
        %v3138 = vadd.f32 0.0, %v3137
        %v3139 = vpop.f32.mrf.mxu0
        %v3140 = vadd.f32 0.0, %v3139
        %3141 = vmatmul.bf16.gmra.mxu0 %v2867
        %v3142 = vpop.f32.mrf.mxu0
        %v3143 = vadd.f32 0.0, %v3142
        %v3144 = vpop.f32.mrf.mxu0
        %v3145 = vadd.f32 0.0, %v3144
        %3146 = vmatmul.bf16.gmra.mxu0 %v2870
        %v3147 = vpop.f32.mrf.mxu0
        %v3148 = vadd.f32 0.0, %v3147
        %v3149 = vpop.f32.mrf.mxu0
        %v3150 = vadd.f32 0.0, %v3149
        %3151 = vmatmul.bf16.gmra.mxu0 %v2873
        %v3152 = vpop.f32.mrf.mxu0
        %v3153 = vpop.f32.mrf.mxu0
        %3154 = vdwg.mxu0
        %3155 = vmatpush.bf16.msra.mxu0 %v3035
        %3156 = vmatpush.bf16.msra.mxu0 %v3034
        %3157 = vmatpush.bf16.msra.mxu0 %v3033
        %3158 = vmatpush.bf16.msra.mxu0 %v3032
        %3159 = vmatpush.bf16.msra.mxu0 %v3031
        %3160 = vmatpush.bf16.msra.mxu0 %v3030
        %3161 = vmatpush.bf16.msra.mxu0 %v3029
        %3162 = vmatpush.bf16.msra.mxu0 %v3028
        %3163 = vmatmul.bf16.gmra.mxu0 %v2829
        %v3164 = vpop.f32.mrf.mxu0
        %v3165 = vadd.f32 %v3078, %v3164
        %v3166 = vpop.f32.mrf.mxu0
        %v3167 = vadd.f32 %v3080, %v3166
        %3168 = vmatmul.bf16.gmra.mxu0 %v2832
        %v3169 = vpop.f32.mrf.mxu0
        %v3170 = vadd.f32 %v3083, %v3169
        %v3171 = vpop.f32.mrf.mxu0
        %v3172 = vadd.f32 %v3085, %v3171
        %3173 = vmatmul.bf16.gmra.mxu0 %v2835
        %v3174 = vpop.f32.mrf.mxu0
        %v3175 = vadd.f32 %v3088, %v3174
        %v3176 = vpop.f32.mrf.mxu0
        %v3177 = vadd.f32 %v3090, %v3176
        %3178 = vmatmul.bf16.gmra.mxu0 %v2838
        %v3179 = vpop.f32.mrf.mxu0
        %v3180 = vadd.f32 %v3093, %v3179
        %v3181 = vpop.f32.mrf.mxu0
        %v3182 = vadd.f32 %v3095, %v3181
        %3183 = vmatmul.bf16.gmra.mxu0 %v2841
        %v3184 = vpop.f32.mrf.mxu0
        %v3185 = vadd.f32 %v3098, %v3184
        %v3186 = vpop.f32.mrf.mxu0
        %v3187 = vadd.f32 %v3100, %v3186
        %3188 = vmatmul.bf16.gmra.mxu0 %v2844
        %v3189 = vpop.f32.mrf.mxu0
        %v3190 = vadd.f32 %v3103, %v3189
        %v3191 = vpop.f32.mrf.mxu0
        %v3192 = vadd.f32 %v3105, %v3191
        %3193 = vmatmul.bf16.gmra.mxu0 %v2847
        %v3194 = vpop.f32.mrf.mxu0
        %v3195 = vadd.f32 %v3108, %v3194
        %v3196 = vpop.f32.mrf.mxu0
        %v3197 = vadd.f32 %v3110, %v3196
        %3198 = vmatmul.bf16.gmra.mxu0 %v2850
        %v3199 = vpop.f32.mrf.mxu0
        %v3200 = vadd.f32 %v3113, %v3199
        %v3201 = vpop.f32.mrf.mxu0
        %v3202 = vadd.f32 %v3115, %v3201
        %3203 = vmatmul.bf16.gmra.mxu0 %v2853
        %v3204 = vpop.f32.mrf.mxu0
        %v3205 = vadd.f32 %v3118, %v3204
        %v3206 = vpop.f32.mrf.mxu0
        %v3207 = vadd.f32 %v3120, %v3206
        %3208 = vmatmul.bf16.gmra.mxu0 %v2856
        %v3209 = vpop.f32.mrf.mxu0
        %v3210 = vadd.f32 %v3123, %v3209
        %v3211 = vpop.f32.mrf.mxu0
        %v3212 = vadd.f32 %v3125, %v3211
        %3213 = vmatmul.bf16.gmra.mxu0 %v2859
        %v3214 = vpop.f32.mrf.mxu0
        %v3215 = vadd.f32 %v3128, %v3214
        %v3216 = vpop.f32.mrf.mxu0
        %v3217 = vadd.f32 %v3130, %v3216
        %3218 = vmatmul.bf16.gmra.mxu0 %v2862
        %v3219 = vpop.f32.mrf.mxu0
        %v3220 = vadd.f32 %v3133, %v3219
        %v3221 = vpop.f32.mrf.mxu0
        %v3222 = vadd.f32 %v3135, %v3221
        %3223 = vmatmul.bf16.gmra.mxu0 %v2865
        %v3224 = vpop.f32.mrf.mxu0
        %v3225 = vadd.f32 %v3138, %v3224
        %v3226 = vpop.f32.mrf.mxu0
        %v3227 = vadd.f32 %v3140, %v3226
        %3228 = vmatmul.bf16.gmra.mxu0 %v2868
        %v3229 = vpop.f32.mrf.mxu0
        %v3230 = vadd.f32 %v3143, %v3229
        %v3231 = vpop.f32.mrf.mxu0
        %v3232 = vadd.f32 %v3145, %v3231
        %3233 = vmatmul.bf16.gmra.mxu0 %v2871
        %v3234 = vpop.f32.mrf.mxu0
        %v3235 = vadd.f32 %v3148, %v3234
        %v3236 = vpop.f32.mrf.mxu0
        %v3237 = vadd.f32 %v3150, %v3236
        %3238 = vmatmul.bf16.gmra.mxu0 %v2874
        %v3239 = vpop.f32.mrf.mxu0
        %v3240 = vpop.f32.mrf.mxu0
        %3241 = vdwg.mxu0
        %3242 = vmatpush.bf16.msra.mxu0 %v3043
        %3243 = vmatpush.bf16.msra.mxu0 %v3042
        %3244 = vmatpush.bf16.msra.mxu0 %v3041
        %3245 = vmatpush.bf16.msra.mxu0 %v3040
        %3246 = vmatpush.bf16.msra.mxu0 %v3039
        %3247 = vmatpush.bf16.msra.mxu0 %v3038
        %3248 = vmatpush.bf16.msra.mxu0 %v3037
        %3249 = vmatpush.bf16.msra.mxu0 %v3036
        %3250 = vmatmul.bf16.gmra.mxu0 %v2830
        %v3251 = vpop.f32.mrf.mxu0
        %v3252 = vadd.f32 %v3165, %v3251
        %v3253 = vpop.f32.mrf.mxu0
        %v3254 = vadd.f32 %v3167, %v3253
        %3255 = vmatmul.bf16.gmra.mxu0 %v2833
        %v3256 = vpop.f32.mrf.mxu0
        %v3257 = vadd.f32 %v3170, %v3256
        %v3258 = vpop.f32.mrf.mxu0
        %v3259 = vadd.f32 %v3172, %v3258
        %3260 = vmatmul.bf16.gmra.mxu0 %v2836
        %v3261 = vpop.f32.mrf.mxu0
        %v3262 = vadd.f32 %v3175, %v3261
        %v3263 = vpop.f32.mrf.mxu0
        %v3264 = vadd.f32 %v3177, %v3263
        %3265 = vmatmul.bf16.gmra.mxu0 %v2839
        %v3266 = vpop.f32.mrf.mxu0
        %v3267 = vadd.f32 %v3180, %v3266
        %v3268 = vpop.f32.mrf.mxu0
        %v3269 = vadd.f32 %v3182, %v3268
        %3270 = vmatmul.bf16.gmra.mxu0 %v2842
        %v3271 = vpop.f32.mrf.mxu0
        %v3272 = vadd.f32 %v3185, %v3271
        %v3273 = vpop.f32.mrf.mxu0
        %v3274 = vadd.f32 %v3187, %v3273
        %3275 = vmatmul.bf16.gmra.mxu0 %v2845
        %v3276 = vpop.f32.mrf.mxu0
        %v3277 = vadd.f32 %v3190, %v3276
        %v3278 = vpop.f32.mrf.mxu0
        %v3279 = vadd.f32 %v3192, %v3278
        %3280 = vmatmul.bf16.gmra.mxu0 %v2848
        %v3281 = vpop.f32.mrf.mxu0
        %v3282 = vadd.f32 %v3195, %v3281
        %v3283 = vpop.f32.mrf.mxu0
        %v3284 = vadd.f32 %v3197, %v3283
        %3285 = vmatmul.bf16.gmra.mxu0 %v2851
        %v3286 = vpop.f32.mrf.mxu0
        %v3287 = vadd.f32 %v3200, %v3286
        %v3288 = vpop.f32.mrf.mxu0
        %v3289 = vadd.f32 %v3202, %v3288
        %3290 = vmatmul.bf16.gmra.mxu0 %v2854
        %v3291 = vpop.f32.mrf.mxu0
        %v3292 = vadd.f32 %v3205, %v3291
        %v3293 = vpop.f32.mrf.mxu0
        %v3294 = vadd.f32 %v3207, %v3293
        %3295 = vmatmul.bf16.gmra.mxu0 %v2857
        %v3296 = vpop.f32.mrf.mxu0
        %v3297 = vadd.f32 %v3210, %v3296
        %v3298 = vpop.f32.mrf.mxu0
        %v3299 = vadd.f32 %v3212, %v3298
        %3300 = vmatmul.bf16.gmra.mxu0 %v2860
        %v3301 = vpop.f32.mrf.mxu0
        %v3302 = vadd.f32 %v3215, %v3301
        %v3303 = vpop.f32.mrf.mxu0
        %v3304 = vadd.f32 %v3217, %v3303
        %3305 = vmatmul.bf16.gmra.mxu0 %v2863
        %v3306 = vpop.f32.mrf.mxu0
        %v3307 = vadd.f32 %v3220, %v3306
        %v3308 = vpop.f32.mrf.mxu0
        %v3309 = vadd.f32 %v3222, %v3308
        %3310 = vmatmul.bf16.gmra.mxu0 %v2866
        %v3311 = vpop.f32.mrf.mxu0
        %v3312 = vadd.f32 %v3225, %v3311
        %v3313 = vpop.f32.mrf.mxu0
        %v3314 = vadd.f32 %v3227, %v3313
        %3315 = vmatmul.bf16.gmra.mxu0 %v2869
        %v3316 = vpop.f32.mrf.mxu0
        %v3317 = vadd.f32 %v3230, %v3316
        %v3318 = vpop.f32.mrf.mxu0
        %v3319 = vadd.f32 %v3232, %v3318
        %3320 = vmatmul.bf16.gmra.mxu0 %v2872
        %v3321 = vpop.f32.mrf.mxu0
        %v3322 = vadd.f32 %v3235, %v3321
        %v3323 = vpop.f32.mrf.mxu0
        %v3324 = vadd.f32 %v3237, %v3323
        %3325 = vmatmul.bf16.gmra.mxu0 %v2875
        %v3326 = vpop.f32.mrf.mxu0
        %v3327 = vpop.f32.mrf.mxu0
        %3328 = vdwg.mxu0
        %s3329 = scalar_lea.vmem [#allocation9], 192
        %v3330 = vld [vmem:[%s3329] sm:$0xf]
        %v3331 = vld [vmem:[%s3329 + $0x4] sm:$0xf]
        %v3332 = vld [vmem:[%s3329 + $0x8] sm:$0xf]
        %v3333 = vld [vmem:[%s3329 + $0xc] sm:$0xf]
        %v3334 = vld [vmem:[%s3329 + $0x10] sm:$0xf]
        %v3335 = vld [vmem:[%s3329 + $0x14] sm:$0xf]
        %v3336 = vld [vmem:[%s3329 + $0x18] sm:$0xf]
        %v3337 = vld [vmem:[%s3329 + $0x1c] sm:$0xf]
        %v3338 = vld [vmem:[%s3329 + $0x20] sm:$0xf]
        %v3339 = vld [vmem:[%s3329 + $0x24] sm:$0xf]
        %v3340 = vld [vmem:[%s3329 + $0x28] sm:$0xf]
        %v3341 = vld [vmem:[%s3329 + $0x2c] sm:$0xf]
        %v3342 = vld [vmem:[%s3329 + $0x30] sm:$0xf]
        %v3343 = vld [vmem:[%s3329 + $0x34] sm:$0xf]
        %v3344 = vld [vmem:[%s3329 + $0x38] sm:$0xf]
        %v3345 = vld [vmem:[%s3329 + $0x3c] sm:$0xf]
        %v3346 = vld [vmem:[%s3329 + $0x40] sm:$0xf]
        %v3347 = vld [vmem:[%s3329 + $0x44] sm:$0xf]
        %v3348 = vld [vmem:[%s3329 + $0x48] sm:$0xf]
        %v3349 = vld [vmem:[%s3329 + $0x4c] sm:$0xf]
        %v3350 = vld [vmem:[%s3329 + $0x50] sm:$0xf]
        %v3351 = vld [vmem:[%s3329 + $0x54] sm:$0xf]
        %v3352 = vld [vmem:[%s3329 + $0x58] sm:$0xf]
        %v3353 = vld [vmem:[%s3329 + $0x5c] sm:$0xf]
        %v3354 = vld [vmem:[%s3329 + $0x60] sm:$0xf]
        %v3355 = vld [vmem:[%s3329 + $0x64] sm:$0xf]
        %v3356 = vld [vmem:[%s3329 + $0x68] sm:$0xf]
        %v3357 = vld [vmem:[%s3329 + $0x6c] sm:$0xf]
        %v3358 = vld [vmem:[%s3329 + $0x70] sm:$0xf]
        %v3359 = vld [vmem:[%s3329 + $0x74] sm:$0xf]
        %v3360 = vld [vmem:[%s3329 + $0x78] sm:$0xf]
        %v3361 = vld [vmem:[%s3329 + $0x7c] sm:$0xf]
        %v3362 = vld [vmem:[%s3329 + $0x80] sm:$0xf]
        %v3363 = vld [vmem:[%s3329 + $0x84] sm:$0xf]
        %v3364 = vld [vmem:[%s3329 + $0x88] sm:$0xf]
        %v3365 = vld [vmem:[%s3329 + $0x8c] sm:$0xf]
        %v3366 = vld [vmem:[%s3329 + $0x90] sm:$0xf]
        %v3367 = vld [vmem:[%s3329 + $0x94] sm:$0xf]
        %v3368 = vld [vmem:[%s3329 + $0x98] sm:$0xf]
        %v3369 = vld [vmem:[%s3329 + $0x9c] sm:$0xf]
        %v3370 = vld [vmem:[%s3329 + $0xa0] sm:$0xf]
        %v3371 = vld [vmem:[%s3329 + $0xa4] sm:$0xf]
        %v3372 = vld [vmem:[%s3329 + $0xa8] sm:$0xf]
        %v3373 = vld [vmem:[%s3329 + $0xac] sm:$0xf]
        %v3374 = vld [vmem:[%s3329 + $0xb0] sm:$0xf]
        %v3375 = vld [vmem:[%s3329 + $0xb4] sm:$0xf]
        %v3376 = vld [vmem:[%s3329 + $0xb8] sm:$0xf]
        %v3377 = vld [vmem:[%s3329 + $0xbc] sm:$0xf]
        %s3378 = scalar_lea.vmem [#allocation9], 384
        %v3379 = vld [vmem:[%s3378] sm:$0xf]
        %v3380 = vld [vmem:[%s3378 + $0x4] sm:$0xf]
        %v3381 = vld [vmem:[%s3378 + $0x8] sm:$0xf]
        %v3382 = vld [vmem:[%s3378 + $0xc] sm:$0xf]
        %v3383 = vld [vmem:[%s3378 + $0x10] sm:$0xf]
        %v3384 = vld [vmem:[%s3378 + $0x14] sm:$0xf]
        %v3385 = vld [vmem:[%s3378 + $0x18] sm:$0xf]
        %v3386 = vld [vmem:[%s3378 + $0x1c] sm:$0xf]
        %v3387 = vld [vmem:[%s3378 + $0x20] sm:$0xf]
        %v3388 = vld [vmem:[%s3378 + $0x24] sm:$0xf]
        %v3389 = vld [vmem:[%s3378 + $0x28] sm:$0xf]
        %v3390 = vld [vmem:[%s3378 + $0x2c] sm:$0xf]
        %v3391 = vld [vmem:[%s3378 + $0x30] sm:$0xf]
        %v3392 = vld [vmem:[%s3378 + $0x34] sm:$0xf]
        %v3393 = vld [vmem:[%s3378 + $0x38] sm:$0xf]
        %v3394 = vld [vmem:[%s3378 + $0x3c] sm:$0xf]
        %v3395 = vld [vmem:[%s3378 + $0x40] sm:$0xf]
        %v3396 = vld [vmem:[%s3378 + $0x44] sm:$0xf]
        %v3397 = vld [vmem:[%s3378 + $0x48] sm:$0xf]
        %v3398 = vld [vmem:[%s3378 + $0x4c] sm:$0xf]
        %v3399 = vld [vmem:[%s3378 + $0x50] sm:$0xf]
        %v3400 = vld [vmem:[%s3378 + $0x54] sm:$0xf]
        %v3401 = vld [vmem:[%s3378 + $0x58] sm:$0xf]
        %v3402 = vld [vmem:[%s3378 + $0x5c] sm:$0xf]
        %v3403 = vld [vmem:[%s3378 + $0x60] sm:$0xf]
        %v3404 = vld [vmem:[%s3378 + $0x64] sm:$0xf]
        %v3405 = vld [vmem:[%s3378 + $0x68] sm:$0xf]
        %v3406 = vld [vmem:[%s3378 + $0x6c] sm:$0xf]
        %v3407 = vld [vmem:[%s3378 + $0x70] sm:$0xf]
        %v3408 = vld [vmem:[%s3378 + $0x74] sm:$0xf]
        %v3409 = vld [vmem:[%s3378 + $0x78] sm:$0xf]
        %v3410 = vld [vmem:[%s3378 + $0x7c] sm:$0xf]
        %v3411 = vld [vmem:[%s3378 + $0x80] sm:$0xf]
        %v3412 = vld [vmem:[%s3378 + $0x84] sm:$0xf]
        %v3413 = vld [vmem:[%s3378 + $0x88] sm:$0xf]
        %v3414 = vld [vmem:[%s3378 + $0x8c] sm:$0xf]
        %v3415 = vld [vmem:[%s3378 + $0x90] sm:$0xf]
        %v3416 = vld [vmem:[%s3378 + $0x94] sm:$0xf]
        %v3417 = vld [vmem:[%s3378 + $0x98] sm:$0xf]
        %v3418 = vld [vmem:[%s3378 + $0x9c] sm:$0xf]
        %v3419 = vld [vmem:[%s3378 + $0xa0] sm:$0xf]
        %v3420 = vld [vmem:[%s3378 + $0xa4] sm:$0xf]
        %v3421 = vld [vmem:[%s3378 + $0xa8] sm:$0xf]
        %v3422 = vld [vmem:[%s3378 + $0xac] sm:$0xf]
        %v3423 = vld [vmem:[%s3378 + $0xb0] sm:$0xf]
        %v3424 = vld [vmem:[%s3378 + $0xb4] sm:$0xf]
        %v3425 = vld [vmem:[%s3378 + $0xb8] sm:$0xf]
        %v3426 = vld [vmem:[%s3378 + $0xbc] sm:$0xf]
        %v3475 = vunpack.c.l.b16 %v3379
        %v3476 = vunpack.c.l.b16 %v3380
        %v3477 = vunpack.c.l.b16 %v3381
        %v3478 = vunpack.c.l.b16 %v3382
        %v3479 = vunpack.c.l.b16 %v3383
        %v3480 = vunpack.c.l.b16 %v3384
        %v3481 = vunpack.c.l.b16 %v3385
        %v3482 = vunpack.c.l.b16 %v3386
        %v3483 = vunpack.c.l.b16 %v3387
        %v3484 = vunpack.c.l.b16 %v3388
        %v3485 = vunpack.c.l.b16 %v3389
        %v3486 = vunpack.c.l.b16 %v3390
        %v3487 = vunpack.c.l.b16 %v3391
        %v3488 = vunpack.c.l.b16 %v3392
        %v3489 = vunpack.c.l.b16 %v3393
        %v3490 = vunpack.c.l.b16 %v3394
        %v3491 = vunpack.c.l.b16 %v3395
        %v3492 = vunpack.c.l.b16 %v3396
        %v3493 = vunpack.c.l.b16 %v3397
        %v3494 = vunpack.c.l.b16 %v3398
        %v3495 = vunpack.c.l.b16 %v3399
        %v3496 = vunpack.c.l.b16 %v3400
        %v3497 = vunpack.c.l.b16 %v3401
        %v3498 = vunpack.c.l.b16 %v3402
        %v3499 = vunpack.c.l.b16 %v3403
        %v3500 = vunpack.c.l.b16 %v3404
        %v3501 = vunpack.c.l.b16 %v3405
        %v3502 = vunpack.c.l.b16 %v3406
        %v3503 = vunpack.c.l.b16 %v3407
        %v3504 = vunpack.c.l.b16 %v3408
        %v3505 = vunpack.c.l.b16 %v3409
        %v3506 = vunpack.c.l.b16 %v3410
        %v3507 = vunpack.c.l.b16 %v3411
        %v3508 = vunpack.c.l.b16 %v3412
        %v3509 = vunpack.c.l.b16 %v3413
        %v3510 = vunpack.c.l.b16 %v3414
        %v3511 = vunpack.c.l.b16 %v3415
        %v3512 = vunpack.c.l.b16 %v3416
        %v3513 = vunpack.c.l.b16 %v3417
        %v3514 = vunpack.c.l.b16 %v3418
        %v3515 = vunpack.c.l.b16 %v3419
        %v3516 = vunpack.c.l.b16 %v3420
        %v3517 = vunpack.c.l.b16 %v3421
        %v3518 = vunpack.c.l.b16 %v3422
        %v3519 = vunpack.c.l.b16 %v3423
        %v3520 = vunpack.c.l.b16 %v3424
        %v3521 = vunpack.c.l.b16 %v3425
        %v3522 = vunpack.c.l.b16 %v3426
        %v3523 = vpack.c.b16 %v3476, %v3475
        %v3524 = vpack.c.b16 %v3478, %v3477
        %v3525 = vpack.c.b16 %v3480, %v3479
        %v3526 = vpack.c.b16 %v3482, %v3481
        %v3527 = vpack.c.b16 %v3484, %v3483
        %v3528 = vpack.c.b16 %v3486, %v3485
        %v3529 = vpack.c.b16 %v3488, %v3487
        %v3530 = vpack.c.b16 %v3490, %v3489
        %v3531 = vpack.c.b16 %v3492, %v3491
        %v3532 = vpack.c.b16 %v3494, %v3493
        %v3533 = vpack.c.b16 %v3496, %v3495
        %v3534 = vpack.c.b16 %v3498, %v3497
        %v3535 = vpack.c.b16 %v3500, %v3499
        %v3536 = vpack.c.b16 %v3502, %v3501
        %v3537 = vpack.c.b16 %v3504, %v3503
        %v3538 = vpack.c.b16 %v3506, %v3505
        %v3539 = vpack.c.b16 %v3508, %v3507
        %v3540 = vpack.c.b16 %v3510, %v3509
        %v3541 = vpack.c.b16 %v3512, %v3511
        %v3542 = vpack.c.b16 %v3514, %v3513
        %v3543 = vpack.c.b16 %v3516, %v3515
        %v3544 = vpack.c.b16 %v3518, %v3517
        %v3545 = vpack.c.b16 %v3520, %v3519
        %v3546 = vpack.c.b16 %v3522, %v3521
        %3571 = vmatpush.bf16.msra.mxu0 %v3530
        %3572 = vmatpush.bf16.msra.mxu0 %v3529
        %3573 = vmatpush.bf16.msra.mxu0 %v3528
        %3574 = vmatpush.bf16.msra.mxu0 %v3527
        %3575 = vmatpush.bf16.msra.mxu0 %v3526
        %3576 = vmatpush.bf16.msra.mxu0 %v3525
        %3577 = vmatpush.bf16.msra.mxu0 %v3524
        %3578 = vmatpush.bf16.msra.mxu0 %v3523
        %3579 = vmatmul.bf16.gmra.mxu0 %v2828
        %v3580 = vpop.f32.mrf.mxu0
        %v3581 = vpop.f32.mrf.mxu0
        %3582 = vmatmul.bf16.gmra.mxu0 %v2831
        %v3583 = vpop.f32.mrf.mxu0
        %v3584 = vadd.f32 0.0, %v3583
        %v3585 = vpop.f32.mrf.mxu0
        %v3586 = vadd.f32 0.0, %v3585
        %3587 = vmatmul.bf16.gmra.mxu0 %v2834
        %v3588 = vpop.f32.mrf.mxu0
        %v3589 = vadd.f32 0.0, %v3588
        %v3590 = vpop.f32.mrf.mxu0
        %v3591 = vadd.f32 0.0, %v3590
        %3592 = vmatmul.bf16.gmra.mxu0 %v2837
        %v3593 = vpop.f32.mrf.mxu0
        %v3594 = vadd.f32 0.0, %v3593
        %v3595 = vpop.f32.mrf.mxu0
        %v3596 = vadd.f32 0.0, %v3595
        %3597 = vmatmul.bf16.gmra.mxu0 %v2840
        %v3598 = vpop.f32.mrf.mxu0
        %v3599 = vadd.f32 0.0, %v3598
        %v3600 = vpop.f32.mrf.mxu0
        %v3601 = vadd.f32 0.0, %v3600
        %3602 = vmatmul.bf16.gmra.mxu0 %v2843
        %v3603 = vpop.f32.mrf.mxu0
        %v3604 = vadd.f32 0.0, %v3603
        %v3605 = vpop.f32.mrf.mxu0
        %v3606 = vadd.f32 0.0, %v3605
        %3607 = vmatmul.bf16.gmra.mxu0 %v2846
        %v3608 = vpop.f32.mrf.mxu0
        %v3609 = vadd.f32 0.0, %v3608
        %v3610 = vpop.f32.mrf.mxu0
        %v3611 = vadd.f32 0.0, %v3610
        %3612 = vmatmul.bf16.gmra.mxu0 %v2849
        %v3613 = vpop.f32.mrf.mxu0
        %v3614 = vadd.f32 0.0, %v3613
        %v3615 = vpop.f32.mrf.mxu0
        %v3616 = vadd.f32 0.0, %v3615
        %3617 = vmatmul.bf16.gmra.mxu0 %v2852
        %v3618 = vpop.f32.mrf.mxu0
        %v3619 = vadd.f32 0.0, %v3618
        %v3620 = vpop.f32.mrf.mxu0
        %v3621 = vadd.f32 0.0, %v3620
        %3622 = vmatmul.bf16.gmra.mxu0 %v2855
        %v3623 = vpop.f32.mrf.mxu0
        %v3624 = vadd.f32 0.0, %v3623
        %v3625 = vpop.f32.mrf.mxu0
        %v3626 = vadd.f32 0.0, %v3625
        %3627 = vmatmul.bf16.gmra.mxu0 %v2858
        %v3628 = vpop.f32.mrf.mxu0
        %v3629 = vadd.f32 0.0, %v3628
        %v3630 = vpop.f32.mrf.mxu0
        %v3631 = vadd.f32 0.0, %v3630
        %3632 = vmatmul.bf16.gmra.mxu0 %v2861
        %v3633 = vpop.f32.mrf.mxu0
        %v3634 = vadd.f32 0.0, %v3633
        %v3635 = vpop.f32.mrf.mxu0
        %v3636 = vadd.f32 0.0, %v3635
        %3637 = vmatmul.bf16.gmra.mxu0 %v2864
        %v3638 = vpop.f32.mrf.mxu0
        %v3639 = vadd.f32 0.0, %v3638
        %v3640 = vpop.f32.mrf.mxu0
        %v3641 = vadd.f32 0.0, %v3640
        %3642 = vmatmul.bf16.gmra.mxu0 %v2867
        %v3643 = vpop.f32.mrf.mxu0
        %v3644 = vadd.f32 0.0, %v3643
        %v3645 = vpop.f32.mrf.mxu0
        %v3646 = vadd.f32 0.0, %v3645
        %3647 = vmatmul.bf16.gmra.mxu0 %v2870
        %v3648 = vpop.f32.mrf.mxu0
        %v3649 = vadd.f32 0.0, %v3648
        %v3650 = vpop.f32.mrf.mxu0
        %v3651 = vadd.f32 0.0, %v3650
        %3652 = vmatmul.bf16.gmra.mxu0 %v2873
        %v3653 = vpop.f32.mrf.mxu0
        %v3654 = vadd.f32 0.0, %v3653
        %v3655 = vpop.f32.mrf.mxu0
        %v3656 = vadd.f32 0.0, %v3655
        %3657 = vdwg.mxu0
        %3658 = vmatpush.bf16.msra.mxu0 %v3538
        %3659 = vmatpush.bf16.msra.mxu0 %v3537
        %3660 = vmatpush.bf16.msra.mxu0 %v3536
        %3661 = vmatpush.bf16.msra.mxu0 %v3535
        %3662 = vmatpush.bf16.msra.mxu0 %v3534
        %3663 = vmatpush.bf16.msra.mxu0 %v3533
        %3664 = vmatpush.bf16.msra.mxu0 %v3532
        %3665 = vmatpush.bf16.msra.mxu0 %v3531
        %3666 = vmatmul.bf16.gmra.mxu0 %v2829
        %v3667 = vpop.f32.mrf.mxu0
        %v3668 = vpop.f32.mrf.mxu0
        %3669 = vmatmul.bf16.gmra.mxu0 %v2832
        %v3670 = vpop.f32.mrf.mxu0
        %v3671 = vadd.f32 %v3584, %v3670
        %v3672 = vpop.f32.mrf.mxu0
        %v3673 = vadd.f32 %v3586, %v3672
        %3674 = vmatmul.bf16.gmra.mxu0 %v2835
        %v3675 = vpop.f32.mrf.mxu0
        %v3676 = vadd.f32 %v3589, %v3675
        %v3677 = vpop.f32.mrf.mxu0
        %v3678 = vadd.f32 %v3591, %v3677
        %3679 = vmatmul.bf16.gmra.mxu0 %v2838
        %v3680 = vpop.f32.mrf.mxu0
        %v3681 = vadd.f32 %v3594, %v3680
        %v3682 = vpop.f32.mrf.mxu0
        %v3683 = vadd.f32 %v3596, %v3682
        %3684 = vmatmul.bf16.gmra.mxu0 %v2841
        %v3685 = vpop.f32.mrf.mxu0
        %v3686 = vadd.f32 %v3599, %v3685
        %v3687 = vpop.f32.mrf.mxu0
        %v3688 = vadd.f32 %v3601, %v3687
        %3689 = vmatmul.bf16.gmra.mxu0 %v2844
        %v3690 = vpop.f32.mrf.mxu0
        %v3691 = vadd.f32 %v3604, %v3690
        %v3692 = vpop.f32.mrf.mxu0
        %v3693 = vadd.f32 %v3606, %v3692
        %3694 = vmatmul.bf16.gmra.mxu0 %v2847
        %v3695 = vpop.f32.mrf.mxu0
        %v3696 = vadd.f32 %v3609, %v3695
        %v3697 = vpop.f32.mrf.mxu0
        %v3698 = vadd.f32 %v3611, %v3697
        %3699 = vmatmul.bf16.gmra.mxu0 %v2850
        %v3700 = vpop.f32.mrf.mxu0
        %v3701 = vadd.f32 %v3614, %v3700
        %v3702 = vpop.f32.mrf.mxu0
        %v3703 = vadd.f32 %v3616, %v3702
        %3704 = vmatmul.bf16.gmra.mxu0 %v2853
        %v3705 = vpop.f32.mrf.mxu0
        %v3706 = vadd.f32 %v3619, %v3705
        %v3707 = vpop.f32.mrf.mxu0
        %v3708 = vadd.f32 %v3621, %v3707
        %3709 = vmatmul.bf16.gmra.mxu0 %v2856
        %v3710 = vpop.f32.mrf.mxu0
        %v3711 = vadd.f32 %v3624, %v3710
        %v3712 = vpop.f32.mrf.mxu0
        %v3713 = vadd.f32 %v3626, %v3712
        %3714 = vmatmul.bf16.gmra.mxu0 %v2859
        %v3715 = vpop.f32.mrf.mxu0
        %v3716 = vadd.f32 %v3629, %v3715
        %v3717 = vpop.f32.mrf.mxu0
        %v3718 = vadd.f32 %v3631, %v3717
        %3719 = vmatmul.bf16.gmra.mxu0 %v2862
        %v3720 = vpop.f32.mrf.mxu0
        %v3721 = vadd.f32 %v3634, %v3720
        %v3722 = vpop.f32.mrf.mxu0
        %v3723 = vadd.f32 %v3636, %v3722
        %3724 = vmatmul.bf16.gmra.mxu0 %v2865
        %v3725 = vpop.f32.mrf.mxu0
        %v3726 = vadd.f32 %v3639, %v3725
        %v3727 = vpop.f32.mrf.mxu0
        %v3728 = vadd.f32 %v3641, %v3727
        %3729 = vmatmul.bf16.gmra.mxu0 %v2868
        %v3730 = vpop.f32.mrf.mxu0
        %v3731 = vadd.f32 %v3644, %v3730
        %v3732 = vpop.f32.mrf.mxu0
        %v3733 = vadd.f32 %v3646, %v3732
        %3734 = vmatmul.bf16.gmra.mxu0 %v2871
        %v3735 = vpop.f32.mrf.mxu0
        %v3736 = vadd.f32 %v3649, %v3735
        %v3737 = vpop.f32.mrf.mxu0
        %v3738 = vadd.f32 %v3651, %v3737
        %3739 = vmatmul.bf16.gmra.mxu0 %v2874
        %v3740 = vpop.f32.mrf.mxu0
        %v3741 = vadd.f32 %v3654, %v3740
        %v3742 = vpop.f32.mrf.mxu0
        %v3743 = vadd.f32 %v3656, %v3742
        %3744 = vdwg.mxu0
        %3745 = vmatpush.bf16.msra.mxu0 %v3546
        %3746 = vmatpush.bf16.msra.mxu0 %v3545
        %3747 = vmatpush.bf16.msra.mxu0 %v3544
        %3748 = vmatpush.bf16.msra.mxu0 %v3543
        %3749 = vmatpush.bf16.msra.mxu0 %v3542
        %3750 = vmatpush.bf16.msra.mxu0 %v3541
        %3751 = vmatpush.bf16.msra.mxu0 %v3540
        %3752 = vmatpush.bf16.msra.mxu0 %v3539
        %3753 = vmatmul.bf16.gmra.mxu0 %v2830
        %v3754 = vpop.f32.mrf.mxu0
        %v3755 = vpop.f32.mrf.mxu0
        %3756 = vmatmul.bf16.gmra.mxu0 %v2833
        %v3757 = vpop.f32.mrf.mxu0
        %v3758 = vadd.f32 %v3671, %v3757
        %v3759 = vpop.f32.mrf.mxu0
        %v3760 = vadd.f32 %v3673, %v3759
        %3761 = vmatmul.bf16.gmra.mxu0 %v2836
        %v3762 = vpop.f32.mrf.mxu0
        %v3763 = vadd.f32 %v3676, %v3762
        %v3764 = vpop.f32.mrf.mxu0
        %v3765 = vadd.f32 %v3678, %v3764
        %3766 = vmatmul.bf16.gmra.mxu0 %v2839
        %v3767 = vpop.f32.mrf.mxu0
        %v3768 = vadd.f32 %v3681, %v3767
        %v3769 = vpop.f32.mrf.mxu0
        %v3770 = vadd.f32 %v3683, %v3769
        %3771 = vmatmul.bf16.gmra.mxu0 %v2842
        %v3772 = vpop.f32.mrf.mxu0
        %v3773 = vadd.f32 %v3686, %v3772
        %v3774 = vpop.f32.mrf.mxu0
        %v3775 = vadd.f32 %v3688, %v3774
        %3776 = vmatmul.bf16.gmra.mxu0 %v2845
        %v3777 = vpop.f32.mrf.mxu0
        %v3778 = vadd.f32 %v3691, %v3777
        %v3779 = vpop.f32.mrf.mxu0
        %v3780 = vadd.f32 %v3693, %v3779
        %3781 = vmatmul.bf16.gmra.mxu0 %v2848
        %v3782 = vpop.f32.mrf.mxu0
        %v3783 = vadd.f32 %v3696, %v3782
        %v3784 = vpop.f32.mrf.mxu0
        %v3785 = vadd.f32 %v3698, %v3784
        %3786 = vmatmul.bf16.gmra.mxu0 %v2851
        %v3787 = vpop.f32.mrf.mxu0
        %v3788 = vadd.f32 %v3701, %v3787
        %v3789 = vpop.f32.mrf.mxu0
        %v3790 = vadd.f32 %v3703, %v3789
        %3791 = vmatmul.bf16.gmra.mxu0 %v2854
        %v3792 = vpop.f32.mrf.mxu0
        %v3793 = vadd.f32 %v3706, %v3792
        %v3794 = vpop.f32.mrf.mxu0
        %v3795 = vadd.f32 %v3708, %v3794
        %3796 = vmatmul.bf16.gmra.mxu0 %v2857
        %v3797 = vpop.f32.mrf.mxu0
        %v3798 = vadd.f32 %v3711, %v3797
        %v3799 = vpop.f32.mrf.mxu0
        %v3800 = vadd.f32 %v3713, %v3799
        %3801 = vmatmul.bf16.gmra.mxu0 %v2860
        %v3802 = vpop.f32.mrf.mxu0
        %v3803 = vadd.f32 %v3716, %v3802
        %v3804 = vpop.f32.mrf.mxu0
        %v3805 = vadd.f32 %v3718, %v3804
        %3806 = vmatmul.bf16.gmra.mxu0 %v2863
        %v3807 = vpop.f32.mrf.mxu0
        %v3808 = vadd.f32 %v3721, %v3807
        %v3809 = vpop.f32.mrf.mxu0
        %v3810 = vadd.f32 %v3723, %v3809
        %3811 = vmatmul.bf16.gmra.mxu0 %v2866
        %v3812 = vpop.f32.mrf.mxu0
        %v3813 = vadd.f32 %v3726, %v3812
        %v3814 = vpop.f32.mrf.mxu0
        %v3815 = vadd.f32 %v3728, %v3814
        %3816 = vmatmul.bf16.gmra.mxu0 %v2869
        %v3817 = vpop.f32.mrf.mxu0
        %v3818 = vadd.f32 %v3731, %v3817
        %v3819 = vpop.f32.mrf.mxu0
        %v3820 = vadd.f32 %v3733, %v3819
        %3821 = vmatmul.bf16.gmra.mxu0 %v2872
        %v3822 = vpop.f32.mrf.mxu0
        %v3823 = vadd.f32 %v3736, %v3822
        %v3824 = vpop.f32.mrf.mxu0
        %v3825 = vadd.f32 %v3738, %v3824
        %3826 = vmatmul.bf16.gmra.mxu0 %v2875
        %v3827 = vpop.f32.mrf.mxu0
        %v3828 = vadd.f32 %v3741, %v3827
        %v3829 = vpop.f32.mrf.mxu0
        %v3830 = vadd.f32 %v3743, %v3829
        %3831 = vdwg.mxu0
        %v3832 = vld [vmem:[%s6] sm:$0x1]
        %v3834 = vperm.slane %v3832, 0
        %v3884 = vunpack.c.l.b16 %v3330
        %v3885 = vunpack.c.l.b16 %v3331
        %v3886 = vunpack.c.l.b16 %v3332
        %v3887 = vunpack.c.l.b16 %v3333
        %v3888 = vunpack.c.l.b16 %v3334
        %v3889 = vunpack.c.l.b16 %v3335
        %v3890 = vunpack.c.l.b16 %v3336
        %v3891 = vunpack.c.l.b16 %v3337
        %v3892 = vunpack.c.l.b16 %v3338
        %v3893 = vunpack.c.l.b16 %v3339
        %v3894 = vunpack.c.l.b16 %v3340
        %v3895 = vunpack.c.l.b16 %v3341
        %v3896 = vunpack.c.l.b16 %v3342
        %v3897 = vunpack.c.l.b16 %v3343
        %v3898 = vunpack.c.l.b16 %v3344
        %v3899 = vunpack.c.l.b16 %v3345
        %v3900 = vunpack.c.l.b16 %v3346
        %v3901 = vunpack.c.l.b16 %v3347
        %v3902 = vunpack.c.l.b16 %v3348
        %v3903 = vunpack.c.l.b16 %v3349
        %v3904 = vunpack.c.l.b16 %v3350
        %v3905 = vunpack.c.l.b16 %v3351
        %v3906 = vunpack.c.l.b16 %v3352
        %v3907 = vunpack.c.l.b16 %v3353
        %v3908 = vunpack.c.l.b16 %v3354
        %v3909 = vunpack.c.l.b16 %v3355
        %v3910 = vunpack.c.l.b16 %v3356
        %v3911 = vunpack.c.l.b16 %v3357
        %v3912 = vunpack.c.l.b16 %v3358
        %v3913 = vunpack.c.l.b16 %v3359
        %v3914 = vunpack.c.l.b16 %v3360
        %v3915 = vunpack.c.l.b16 %v3361
        %v3916 = vunpack.c.l.b16 %v3362
        %v3917 = vunpack.c.l.b16 %v3363
        %v3918 = vunpack.c.l.b16 %v3364
        %v3919 = vunpack.c.l.b16 %v3365
        %v3920 = vunpack.c.l.b16 %v3366
        %v3921 = vunpack.c.l.b16 %v3367
        %v3922 = vunpack.c.l.b16 %v3368
        %v3923 = vunpack.c.l.b16 %v3369
        %v3924 = vunpack.c.l.b16 %v3370
        %v3925 = vunpack.c.l.b16 %v3371
        %v3926 = vunpack.c.l.b16 %v3372
        %v3927 = vunpack.c.l.b16 %v3373
        %v3928 = vunpack.c.l.b16 %v3374
        %v3929 = vunpack.c.l.b16 %v3375
        %v3930 = vunpack.c.l.b16 %v3376
        %v3931 = vunpack.c.l.b16 %v3377
        %v3932 = vpack.c.b16 %v3885, %v3884
        %v3933 = vpack.c.b16 %v3887, %v3886
        %v3934 = vpack.c.b16 %v3889, %v3888
        %v3935 = vpack.c.b16 %v3891, %v3890
        %v3936 = vpack.c.b16 %v3893, %v3892
        %v3937 = vpack.c.b16 %v3895, %v3894
        %v3938 = vpack.c.b16 %v3897, %v3896
        %v3939 = vpack.c.b16 %v3899, %v3898
        %v3940 = vpack.c.b16 %v3901, %v3900
        %v3941 = vpack.c.b16 %v3903, %v3902
        %v3942 = vpack.c.b16 %v3905, %v3904
        %v3943 = vpack.c.b16 %v3907, %v3906
        %v3944 = vpack.c.b16 %v3909, %v3908
        %v3945 = vpack.c.b16 %v3911, %v3910
        %v3946 = vpack.c.b16 %v3913, %v3912
        %v3947 = vpack.c.b16 %v3915, %v3914
        %v3948 = vpack.c.b16 %v3917, %v3916
        %v3949 = vpack.c.b16 %v3919, %v3918
        %v3950 = vpack.c.b16 %v3921, %v3920
        %v3951 = vpack.c.b16 %v3923, %v3922
        %v3952 = vpack.c.b16 %v3925, %v3924
        %v3953 = vpack.c.b16 %v3927, %v3926
        %v3954 = vpack.c.b16 %v3929, %v3928
        %v3955 = vpack.c.b16 %v3931, %v3930
        %3980 = vmatpush.bf16.msra.mxu0 %v3939
        %3981 = vmatpush.bf16.msra.mxu0 %v3938
        %3982 = vmatpush.bf16.msra.mxu0 %v3937
        %3983 = vmatpush.bf16.msra.mxu0 %v3936
        %3984 = vmatpush.bf16.msra.mxu0 %v3935
        %3985 = vmatpush.bf16.msra.mxu0 %v3934
        %3986 = vmatpush.bf16.msra.mxu0 %v3933
        %3987 = vmatpush.bf16.msra.mxu0 %v3932
        %3988 = vmatmul.bf16.gmra.mxu0 %v2828
        %v3989 = vpop.f32.mrf.mxu0
        %v3990 = vadd.f32 %v3834, %v3989
        %v3991 = vpop.f32.mrf.mxu0
        %v3992 = vadd.f32 %v3834, %v3991
        %3993 = vmatmul.bf16.gmra.mxu0 %v2831
        %v3994 = vpop.f32.mrf.mxu0
        %v3995 = vadd.f32 %v3834, %v3994
        %v3996 = vpop.f32.mrf.mxu0
        %v3997 = vadd.f32 %v3834, %v3996
        %3998 = vmatmul.bf16.gmra.mxu0 %v2834
        %v3999 = vpop.f32.mrf.mxu0
        %v4000 = vadd.f32 %v3834, %v3999
        %v4001 = vpop.f32.mrf.mxu0
        %v4002 = vadd.f32 %v3834, %v4001
        %4003 = vmatmul.bf16.gmra.mxu0 %v2837
        %v4004 = vpop.f32.mrf.mxu0
        %v4005 = vadd.f32 %v3834, %v4004
        %v4006 = vpop.f32.mrf.mxu0
        %v4007 = vadd.f32 %v3834, %v4006
        %4008 = vmatmul.bf16.gmra.mxu0 %v2840
        %v4009 = vpop.f32.mrf.mxu0
        %v4010 = vadd.f32 %v3834, %v4009
        %v4011 = vpop.f32.mrf.mxu0
        %v4012 = vadd.f32 %v3834, %v4011
        %4013 = vmatmul.bf16.gmra.mxu0 %v2843
        %v4014 = vpop.f32.mrf.mxu0
        %v4015 = vadd.f32 %v3834, %v4014
        %v4016 = vpop.f32.mrf.mxu0
        %v4017 = vadd.f32 %v3834, %v4016
        %4018 = vmatmul.bf16.gmra.mxu0 %v2846
        %v4019 = vpop.f32.mrf.mxu0
        %v4020 = vadd.f32 %v3834, %v4019
        %v4021 = vpop.f32.mrf.mxu0
        %v4022 = vadd.f32 %v3834, %v4021
        %4023 = vmatmul.bf16.gmra.mxu0 %v2849
        %v4024 = vpop.f32.mrf.mxu0
        %v4025 = vadd.f32 %v3834, %v4024
        %v4026 = vpop.f32.mrf.mxu0
        %v4027 = vadd.f32 %v3834, %v4026
        %4028 = vmatmul.bf16.gmra.mxu0 %v2852
        %v4029 = vpop.f32.mrf.mxu0
        %v4030 = vadd.f32 %v3834, %v4029
        %v4031 = vpop.f32.mrf.mxu0
        %v4032 = vadd.f32 %v3834, %v4031
        %4033 = vmatmul.bf16.gmra.mxu0 %v2855
        %v4034 = vpop.f32.mrf.mxu0
        %v4035 = vadd.f32 %v3834, %v4034
        %v4036 = vpop.f32.mrf.mxu0
        %v4037 = vadd.f32 %v3834, %v4036
        %4038 = vmatmul.bf16.gmra.mxu0 %v2858
        %v4039 = vpop.f32.mrf.mxu0
        %v4040 = vadd.f32 %v3834, %v4039
        %v4041 = vpop.f32.mrf.mxu0
        %v4042 = vadd.f32 %v3834, %v4041
        %4043 = vmatmul.bf16.gmra.mxu0 %v2861
        %v4044 = vpop.f32.mrf.mxu0
        %v4045 = vadd.f32 %v3834, %v4044
        %v4046 = vpop.f32.mrf.mxu0
        %v4047 = vadd.f32 %v3834, %v4046
        %4048 = vmatmul.bf16.gmra.mxu0 %v2864
        %v4049 = vpop.f32.mrf.mxu0
        %v4050 = vadd.f32 %v3834, %v4049
        %v4051 = vpop.f32.mrf.mxu0
        %v4052 = vadd.f32 %v3834, %v4051
        %4053 = vmatmul.bf16.gmra.mxu0 %v2867
        %v4054 = vpop.f32.mrf.mxu0
        %v4055 = vadd.f32 %v3834, %v4054
        %v4056 = vpop.f32.mrf.mxu0
        %v4057 = vadd.f32 %v3834, %v4056
        %4058 = vmatmul.bf16.gmra.mxu0 %v2870
        %v4059 = vpop.f32.mrf.mxu0
        %v4060 = vadd.f32 %v3834, %v4059
        %v4061 = vpop.f32.mrf.mxu0
        %v4062 = vadd.f32 %v3834, %v4061
        %4063 = vmatmul.bf16.gmra.mxu0 %v2873
        %v4064 = vpop.f32.mrf.mxu0
        %v4065 = vadd.f32 %v3834, %v4064
        %v4066 = vpop.f32.mrf.mxu0
        %v4067 = vadd.f32 %v3834, %v4066
        %4068 = vdwg.mxu0
        %4069 = vmatpush.bf16.msra.mxu0 %v3947
        %4070 = vmatpush.bf16.msra.mxu0 %v3946
        %4071 = vmatpush.bf16.msra.mxu0 %v3945
        %4072 = vmatpush.bf16.msra.mxu0 %v3944
        %4073 = vmatpush.bf16.msra.mxu0 %v3943
        %4074 = vmatpush.bf16.msra.mxu0 %v3942
        %4075 = vmatpush.bf16.msra.mxu0 %v3941
        %4076 = vmatpush.bf16.msra.mxu0 %v3940
        %4077 = vmatmul.bf16.gmra.mxu0 %v2829
        %v4078 = vpop.f32.mrf.mxu0
        %v4079 = vadd.f32 %v3990, %v4078
        %v4080 = vpop.f32.mrf.mxu0
        %v4081 = vadd.f32 %v3992, %v4080
        %4082 = vmatmul.bf16.gmra.mxu0 %v2832
        %v4083 = vpop.f32.mrf.mxu0
        %v4084 = vadd.f32 %v3995, %v4083
        %v4085 = vpop.f32.mrf.mxu0
        %v4086 = vadd.f32 %v3997, %v4085
        %4087 = vmatmul.bf16.gmra.mxu0 %v2835
        %v4088 = vpop.f32.mrf.mxu0
        %v4089 = vadd.f32 %v4000, %v4088
        %v4090 = vpop.f32.mrf.mxu0
        %v4091 = vadd.f32 %v4002, %v4090
        %4092 = vmatmul.bf16.gmra.mxu0 %v2838
        %v4093 = vpop.f32.mrf.mxu0
        %v4094 = vadd.f32 %v4005, %v4093
        %v4095 = vpop.f32.mrf.mxu0
        %v4096 = vadd.f32 %v4007, %v4095
        %4097 = vmatmul.bf16.gmra.mxu0 %v2841
        %v4098 = vpop.f32.mrf.mxu0
        %v4099 = vadd.f32 %v4010, %v4098
        %v4100 = vpop.f32.mrf.mxu0
        %v4101 = vadd.f32 %v4012, %v4100
        %4102 = vmatmul.bf16.gmra.mxu0 %v2844
        %v4103 = vpop.f32.mrf.mxu0
        %v4104 = vadd.f32 %v4015, %v4103
        %v4105 = vpop.f32.mrf.mxu0
        %v4106 = vadd.f32 %v4017, %v4105
        %4107 = vmatmul.bf16.gmra.mxu0 %v2847
        %v4108 = vpop.f32.mrf.mxu0
        %v4109 = vadd.f32 %v4020, %v4108
        %v4110 = vpop.f32.mrf.mxu0
        %v4111 = vadd.f32 %v4022, %v4110
        %4112 = vmatmul.bf16.gmra.mxu0 %v2850
        %v4113 = vpop.f32.mrf.mxu0
        %v4114 = vadd.f32 %v4025, %v4113
        %v4115 = vpop.f32.mrf.mxu0
        %v4116 = vadd.f32 %v4027, %v4115
        %4117 = vmatmul.bf16.gmra.mxu0 %v2853
        %v4118 = vpop.f32.mrf.mxu0
        %v4119 = vadd.f32 %v4030, %v4118
        %v4120 = vpop.f32.mrf.mxu0
        %v4121 = vadd.f32 %v4032, %v4120
        %4122 = vmatmul.bf16.gmra.mxu0 %v2856
        %v4123 = vpop.f32.mrf.mxu0
        %v4124 = vadd.f32 %v4035, %v4123
        %v4125 = vpop.f32.mrf.mxu0
        %v4126 = vadd.f32 %v4037, %v4125
        %4127 = vmatmul.bf16.gmra.mxu0 %v2859
        %v4128 = vpop.f32.mrf.mxu0
        %v4129 = vadd.f32 %v4040, %v4128
        %v4130 = vpop.f32.mrf.mxu0
        %v4131 = vadd.f32 %v4042, %v4130
        %4132 = vmatmul.bf16.gmra.mxu0 %v2862
        %v4133 = vpop.f32.mrf.mxu0
        %v4134 = vadd.f32 %v4045, %v4133
        %v4135 = vpop.f32.mrf.mxu0
        %v4136 = vadd.f32 %v4047, %v4135
        %4137 = vmatmul.bf16.gmra.mxu0 %v2865
        %v4138 = vpop.f32.mrf.mxu0
        %v4139 = vadd.f32 %v4050, %v4138
        %v4140 = vpop.f32.mrf.mxu0
        %v4141 = vadd.f32 %v4052, %v4140
        %4142 = vmatmul.bf16.gmra.mxu0 %v2868
        %v4143 = vpop.f32.mrf.mxu0
        %v4144 = vadd.f32 %v4055, %v4143
        %v4145 = vpop.f32.mrf.mxu0
        %v4146 = vadd.f32 %v4057, %v4145
        %4147 = vmatmul.bf16.gmra.mxu0 %v2871
        %v4148 = vpop.f32.mrf.mxu0
        %v4149 = vadd.f32 %v4060, %v4148
        %v4150 = vpop.f32.mrf.mxu0
        %v4151 = vadd.f32 %v4062, %v4150
        %4152 = vmatmul.bf16.gmra.mxu0 %v2874
        %v4153 = vpop.f32.mrf.mxu0
        %v4154 = vadd.f32 %v4065, %v4153
        %v4155 = vpop.f32.mrf.mxu0
        %v4156 = vadd.f32 %v4067, %v4155
        %4157 = vdwg.mxu0
        %4158 = vmatpush.bf16.msra.mxu0 %v3955
        %4159 = vmatpush.bf16.msra.mxu0 %v3954
        %4160 = vmatpush.bf16.msra.mxu0 %v3953
        %4161 = vmatpush.bf16.msra.mxu0 %v3952
        %4162 = vmatpush.bf16.msra.mxu0 %v3951
        %4163 = vmatpush.bf16.msra.mxu0 %v3950
        %4164 = vmatpush.bf16.msra.mxu0 %v3949
        %4165 = vmatpush.bf16.msra.mxu0 %v3948
        %4166 = vmatmul.bf16.gmra.mxu0 %v2830
        %v4167 = vpop.f32.mrf.mxu0
        %v4168 = vadd.f32 %v4079, %v4167
        %v4169 = vpop.f32.mrf.mxu0
        %v4170 = vadd.f32 %v4081, %v4169
        %4171 = vmatmul.bf16.gmra.mxu0 %v2833
        %v4172 = vpop.f32.mrf.mxu0
        %v4173 = vadd.f32 %v4084, %v4172
        %v4174 = vpop.f32.mrf.mxu0
        %v4175 = vadd.f32 %v4086, %v4174
        %4176 = vmatmul.bf16.gmra.mxu0 %v2836
        %v4177 = vpop.f32.mrf.mxu0
        %v4178 = vadd.f32 %v4089, %v4177
        %v4179 = vpop.f32.mrf.mxu0
        %v4180 = vadd.f32 %v4091, %v4179
        %4181 = vmatmul.bf16.gmra.mxu0 %v2839
        %v4182 = vpop.f32.mrf.mxu0
        %v4183 = vadd.f32 %v4094, %v4182
        %v4184 = vpop.f32.mrf.mxu0
        %v4185 = vadd.f32 %v4096, %v4184
        %4186 = vmatmul.bf16.gmra.mxu0 %v2842
        %v4187 = vpop.f32.mrf.mxu0
        %v4188 = vadd.f32 %v4099, %v4187
        %v4189 = vpop.f32.mrf.mxu0
        %v4190 = vadd.f32 %v4101, %v4189
        %4191 = vmatmul.bf16.gmra.mxu0 %v2845
        %v4192 = vpop.f32.mrf.mxu0
        %v4193 = vadd.f32 %v4104, %v4192
        %v4194 = vpop.f32.mrf.mxu0
        %v4195 = vadd.f32 %v4106, %v4194
        %4196 = vmatmul.bf16.gmra.mxu0 %v2848
        %v4197 = vpop.f32.mrf.mxu0
        %v4198 = vadd.f32 %v4109, %v4197
        %v4199 = vpop.f32.mrf.mxu0
        %v4200 = vadd.f32 %v4111, %v4199
        %4201 = vmatmul.bf16.gmra.mxu0 %v2851
        %v4202 = vpop.f32.mrf.mxu0
        %v4203 = vadd.f32 %v4114, %v4202
        %v4204 = vpop.f32.mrf.mxu0
        %v4205 = vadd.f32 %v4116, %v4204
        %4206 = vmatmul.bf16.gmra.mxu0 %v2854
        %v4207 = vpop.f32.mrf.mxu0
        %v4208 = vadd.f32 %v4119, %v4207
        %v4209 = vpop.f32.mrf.mxu0
        %v4210 = vadd.f32 %v4121, %v4209
        %4211 = vmatmul.bf16.gmra.mxu0 %v2857
        %v4212 = vpop.f32.mrf.mxu0
        %v4213 = vadd.f32 %v4124, %v4212
        %v4214 = vpop.f32.mrf.mxu0
        %v4215 = vadd.f32 %v4126, %v4214
        %4216 = vmatmul.bf16.gmra.mxu0 %v2860
        %v4217 = vpop.f32.mrf.mxu0
        %v4218 = vadd.f32 %v4129, %v4217
        %v4219 = vpop.f32.mrf.mxu0
        %v4220 = vadd.f32 %v4131, %v4219
        %4221 = vmatmul.bf16.gmra.mxu0 %v2863
        %v4222 = vpop.f32.mrf.mxu0
        %v4223 = vadd.f32 %v4134, %v4222
        %v4224 = vpop.f32.mrf.mxu0
        %v4225 = vadd.f32 %v4136, %v4224
        %4226 = vmatmul.bf16.gmra.mxu0 %v2866
        %v4227 = vpop.f32.mrf.mxu0
        %v4228 = vadd.f32 %v4139, %v4227
        %v4229 = vpop.f32.mrf.mxu0
        %v4230 = vadd.f32 %v4141, %v4229
        %4231 = vmatmul.bf16.gmra.mxu0 %v2869
        %v4232 = vpop.f32.mrf.mxu0
        %v4233 = vadd.f32 %v4144, %v4232
        %v4234 = vpop.f32.mrf.mxu0
        %v4235 = vadd.f32 %v4146, %v4234
        %4236 = vmatmul.bf16.gmra.mxu0 %v2872
        %v4237 = vpop.f32.mrf.mxu0
        %v4238 = vadd.f32 %v4149, %v4237
        %v4239 = vpop.f32.mrf.mxu0
        %v4240 = vadd.f32 %v4151, %v4239
        %4241 = vmatmul.bf16.gmra.mxu0 %v2875
        %v4242 = vpop.f32.mrf.mxu0
        %v4243 = vadd.f32 %v4154, %v4242
        %v4244 = vpop.f32.mrf.mxu0
        %v4245 = vadd.f32 %v4156, %v4244
        %4246 = vdwg.mxu0
        %v4247 = vadd.f32 %v4168, 0.0
        %v4248 = vadd.f32 %v4170, 0.0
        %v4249 = vadd.f32 %v4173, %v3252
        %v4250 = vadd.f32 %v4175, %v3254
        %v4251 = vadd.f32 %v4178, %v3257
        %v4252 = vadd.f32 %v4180, %v3259
        %v4253 = vadd.f32 %v4183, %v3262
        %v4254 = vadd.f32 %v4185, %v3264
        %v4255 = vadd.f32 %v4188, %v3267
        %v4256 = vadd.f32 %v4190, %v3269
        %v4257 = vadd.f32 %v4193, %v3272
        %v4258 = vadd.f32 %v4195, %v3274
        %v4259 = vadd.f32 %v4198, %v3277
        %v4260 = vadd.f32 %v4200, %v3279
        %v4261 = vadd.f32 %v4203, %v3282
        %v4262 = vadd.f32 %v4205, %v3284
        %v4263 = vadd.f32 %v4208, %v3287
        %v4264 = vadd.f32 %v4210, %v3289
        %v4265 = vadd.f32 %v4213, %v3292
        %v4266 = vadd.f32 %v4215, %v3294
        %v4267 = vadd.f32 %v4218, %v3297
        %v4268 = vadd.f32 %v4220, %v3299
        %v4269 = vadd.f32 %v4223, %v3302
        %v4270 = vadd.f32 %v4225, %v3304
        %v4271 = vadd.f32 %v4228, %v3307
        %v4272 = vadd.f32 %v4230, %v3309
        %v4273 = vadd.f32 %v4233, %v3312
        %v4274 = vadd.f32 %v4235, %v3314
        %v4275 = vadd.f32 %v4238, %v3317
        %v4276 = vadd.f32 %v4240, %v3319
        %v4277 = vadd.f32 %v4243, %v3322
        %v4278 = vadd.f32 %v4245, %v3324
        %v4279 = vadd.f32 %v4247, %v3758
        %v4280 = vadd.f32 %v4248, %v3760
        %v4281 = vadd.f32 %v4249, %v3763
        %v4282 = vadd.f32 %v4250, %v3765
        %v4283 = vadd.f32 %v4251, %v3768
        %v4284 = vadd.f32 %v4252, %v3770
        %v4285 = vadd.f32 %v4253, %v3773
        %v4286 = vadd.f32 %v4254, %v3775
        %v4287 = vadd.f32 %v4255, %v3778
        %v4288 = vadd.f32 %v4256, %v3780
        %v4289 = vadd.f32 %v4257, %v3783
        %v4290 = vadd.f32 %v4258, %v3785
        %v4291 = vadd.f32 %v4259, %v3788
        %v4292 = vadd.f32 %v4260, %v3790
        %v4293 = vadd.f32 %v4261, %v3793
        %v4294 = vadd.f32 %v4262, %v3795
        %v4295 = vadd.f32 %v4263, %v3798
        %v4296 = vadd.f32 %v4264, %v3800
        %v4297 = vadd.f32 %v4265, %v3803
        %v4298 = vadd.f32 %v4266, %v3805
        %v4299 = vadd.f32 %v4267, %v3808
        %v4300 = vadd.f32 %v4268, %v3810
        %v4301 = vadd.f32 %v4269, %v3813
        %v4302 = vadd.f32 %v4270, %v3815
        %v4303 = vadd.f32 %v4271, %v3818
        %v4304 = vadd.f32 %v4272, %v3820
        %v4305 = vadd.f32 %v4273, %v3823
        %v4306 = vadd.f32 %v4274, %v3825
        %v4307 = vadd.f32 %v4275, %v3828
        %v4308 = vadd.f32 %v4276, %v3830
        %v4309 = vadd.f32 %v4277, 0.0
        %v4310 = vadd.f32 %v4278, 0.0
        %v4312 = vperm.slane %v610, 0
        %v4314 = vadd.f32 %v4279, %v4312
        %v4315 = vadd.f32 %v4280, %v4312
        %v4316 = vadd.f32 %v4281, %v4312
        %v4317 = vadd.f32 %v4282, %v4312
        %v4318 = vadd.f32 %v4283, %v4312
        %v4319 = vadd.f32 %v4284, %v4312
        %v4320 = vadd.f32 %v4285, %v4312
        %v4321 = vadd.f32 %v4286, %v4312
        %v4322 = vadd.f32 %v4287, %v4312
        %v4323 = vadd.f32 %v4288, %v4312
        %v4324 = vadd.f32 %v4289, %v4312
        %v4325 = vadd.f32 %v4290, %v4312
        %v4326 = vadd.f32 %v4291, %v4312
        %v4327 = vadd.f32 %v4292, %v4312
        %v4328 = vadd.f32 %v4293, %v4312
        %v4329 = vadd.f32 %v4294, %v4312
        %v4330 = vadd.f32 %v4295, %v4312
        %v4331 = vadd.f32 %v4296, %v4312
        %v4332 = vadd.f32 %v4297, %v4312
        %v4333 = vadd.f32 %v4298, %v4312
        %v4334 = vadd.f32 %v4299, %v4312
        %v4335 = vadd.f32 %v4300, %v4312
        %v4336 = vadd.f32 %v4301, %v4312
        %v4337 = vadd.f32 %v4302, %v4312
        %v4338 = vadd.f32 %v4303, %v4312
        %v4339 = vadd.f32 %v4304, %v4312
        %v4340 = vadd.f32 %v4305, %v4312
        %v4341 = vadd.f32 %v4306, %v4312
        %v4342 = vadd.f32 %v4307, %v4312
        %v4343 = vadd.f32 %v4308, %v4312
        %v4344 = vadd.f32 %v4309, %v4312
        %v4345 = vadd.f32 %v4310, %v4312
        %v4346 = vadd.f32 %v4314, %v4315
        %v4347 = vadd.f32 %v4346, %v4316
        %v4348 = vadd.f32 %v4347, %v4317
        %v4349 = vadd.f32 %v4348, %v4318
        %v4350 = vadd.f32 %v4349, %v4319
        %v4351 = vadd.f32 %v4350, %v4320
        %v4352 = vadd.f32 %v4351, %v4321
        %v4353 = vadd.f32 %v4352, %v4322
        %v4354 = vadd.f32 %v4353, %v4323
        %v4355 = vadd.f32 %v4354, %v4324
        %v4356 = vadd.f32 %v4355, %v4325
        %v4357 = vadd.f32 %v4356, %v4326
        %v4358 = vadd.f32 %v4357, %v4327
        %v4359 = vadd.f32 %v4358, %v4328
        %v4360 = vadd.f32 %v4359, %v4329
        %v4361 = vadd.f32 %v4360, %v4330
        %v4362 = vadd.f32 %v4361, %v4331
        %v4363 = vadd.f32 %v4362, %v4332
        %v4364 = vadd.f32 %v4363, %v4333
        %v4365 = vadd.f32 %v4364, %v4334
        %v4366 = vadd.f32 %v4365, %v4335
        %v4367 = vadd.f32 %v4366, %v4336
        %v4368 = vadd.f32 %v4367, %v4337
        %v4369 = vadd.f32 %v4368, %v4338
        %v4370 = vadd.f32 %v4369, %v4339
        %v4371 = vadd.f32 %v4370, %v4340
        %v4372 = vadd.f32 %v4371, %v4341
        %v4373 = vadd.f32 %v4372, %v4342
        %v4374 = vadd.f32 %v4373, %v4343
        %v4375 = vadd.f32 %v4374, %v4344
        %v4376 = vadd.f32 %v4375, %v4345
        %v4377 = vrot.slane %v4376, 4
        %v4378 = vadd.f32 %v4376, %v4377
        %v4379 = vrot.slane %v4378, 2
        %v4380 = vadd.f32 %v4378, %v4379
        %v4381 = vrot.slane %v4380, 1
        %v4382 = vadd.f32 %v4380, %v4381
        %v4383 = vld [vmem:[#allocation11] sm:$0xff]
        %v4384 = vld [vmem:[#allocation11 + $0x8] sm:$0xff]
        %v4385 = vld [vmem:[#allocation11 + $0x10] sm:$0xff]
        %v4386 = vld [vmem:[#allocation11 + $0x18] sm:$0xff]
        %v4387 = vld [vmem:[#allocation11 + $0x20] sm:$0xff]
        %v4388 = vld [vmem:[#allocation11 + $0x28] sm:$0xff]
        %v4389 = vld [vmem:[#allocation11 + $0x30] sm:$0xff]
        %v4390 = vld [vmem:[#allocation11 + $0x38] sm:$0xff]
        %v4391 = vld [vmem:[#allocation11 + $0x40] sm:$0xff]
        %v4392 = vld [vmem:[#allocation11 + $0x48] sm:$0xff]
        %v4393 = vld [vmem:[#allocation11 + $0x50] sm:$0xff]
        %v4394 = vld [vmem:[#allocation11 + $0x58] sm:$0xff]
        %v4395 = vld [vmem:[#allocation11 + $0x60] sm:$0xff]
        %v4396 = vld [vmem:[#allocation11 + $0x68] sm:$0xff]
        %v4397 = vld [vmem:[#allocation11 + $0x70] sm:$0xff]
        %v4398 = vld [vmem:[#allocation11 + $0x78] sm:$0xff]
        %4399 = vmatpush.msra.mxu0 %v4398
        %4400 = vmatpush.msra.mxu0 %v4397
        %4401 = vmatpush.msra.mxu0 %v4396
        %4402 = vmatpush.msra.mxu0 %v4395
        %4403 = vmatpush.msra.mxu0 %v4394
        %4404 = vmatpush.msra.mxu0 %v4393
        %4405 = vmatpush.msra.mxu0 %v4392
        %4406 = vmatpush.msra.mxu0 %v4391
        %4407 = vmatpush.msra.mxu0 %v4390
        %4408 = vmatpush.msra.mxu0 %v4389
        %4409 = vmatpush.msra.mxu0 %v4388
        %4410 = vmatpush.msra.mxu0 %v4387
        %4411 = vmatpush.msra.mxu0 %v4386
        %4412 = vmatpush.msra.mxu0 %v4385
        %4413 = vmatpush.msra.mxu0 %v4384
        %4414 = vmatpush.msra.mxu0 %v4383
        %4415 = vmatmul.f32.gmra.mxu0 %v4382
        %v4416 = vpop.f32.mrf.mxu0
        %v4417 = vadd.f32 0.0, %v4416
        %4418 = vdwg.mxu0
        %v4419 = vperm.slane %v4417, 0
        %v4420 = vsub.f32 %v4314, %v4419
        %v4421 = vsub.f32 %v4315, %v4419
        %v4422 = vsub.f32 %v4316, %v4419
        %v4423 = vsub.f32 %v4317, %v4419
        %v4424 = vsub.f32 %v4318, %v4419
        %v4425 = vsub.f32 %v4319, %v4419
        %v4426 = vsub.f32 %v4320, %v4419
        %v4427 = vsub.f32 %v4321, %v4419
        %v4428 = vsub.f32 %v4322, %v4419
        %v4429 = vsub.f32 %v4323, %v4419
        %v4430 = vsub.f32 %v4324, %v4419
        %v4431 = vsub.f32 %v4325, %v4419
        %v4432 = vsub.f32 %v4326, %v4419
        %v4433 = vsub.f32 %v4327, %v4419
        %v4434 = vsub.f32 %v4328, %v4419
        %v4435 = vsub.f32 %v4329, %v4419
        %v4436 = vsub.f32 %v4330, %v4419
        %v4437 = vsub.f32 %v4331, %v4419
        %v4438 = vsub.f32 %v4332, %v4419
        %v4439 = vsub.f32 %v4333, %v4419
        %v4440 = vsub.f32 %v4334, %v4419
        %v4441 = vsub.f32 %v4335, %v4419
        %v4442 = vsub.f32 %v4336, %v4419
        %v4443 = vsub.f32 %v4337, %v4419
        %v4444 = vsub.f32 %v4338, %v4419
        %v4445 = vsub.f32 %v4339, %v4419
        %v4446 = vsub.f32 %v4340, %v4419
        %v4447 = vsub.f32 %v4341, %v4419
        %v4448 = vsub.f32 %v4342, %v4419
        %v4449 = vsub.f32 %v4343, %v4419
        %v4450 = vsub.f32 %v4344, %v4419
        %v4451 = vsub.f32 %v4345, %v4419
        %v4452 = vmul.f32 %v4420, %v4420
        %v4453 = vmul.f32 %v4421, %v4421
        %v4454 = vmul.f32 %v4422, %v4422
        %v4455 = vmul.f32 %v4423, %v4423
        %v4456 = vmul.f32 %v4424, %v4424
        %v4457 = vmul.f32 %v4425, %v4425
        %v4458 = vmul.f32 %v4426, %v4426
        %v4459 = vmul.f32 %v4427, %v4427
        %v4460 = vmul.f32 %v4428, %v4428
        %v4461 = vmul.f32 %v4429, %v4429
        %v4462 = vmul.f32 %v4430, %v4430
        %v4463 = vmul.f32 %v4431, %v4431
        %v4464 = vmul.f32 %v4432, %v4432
        %v4465 = vmul.f32 %v4433, %v4433
        %v4466 = vmul.f32 %v4434, %v4434
        %v4467 = vmul.f32 %v4435, %v4435
        %v4468 = vmul.f32 %v4436, %v4436
        %v4469 = vmul.f32 %v4437, %v4437
        %v4470 = vmul.f32 %v4438, %v4438
        %v4471 = vmul.f32 %v4439, %v4439
        %v4472 = vmul.f32 %v4440, %v4440
        %v4473 = vmul.f32 %v4441, %v4441
        %v4474 = vmul.f32 %v4442, %v4442
        %v4475 = vmul.f32 %v4443, %v4443
        %v4476 = vmul.f32 %v4444, %v4444
        %v4477 = vmul.f32 %v4445, %v4445
        %v4478 = vmul.f32 %v4446, %v4446
        %v4479 = vmul.f32 %v4447, %v4447
        %v4480 = vmul.f32 %v4448, %v4448
        %v4481 = vmul.f32 %v4449, %v4449
        %v4482 = vmul.f32 %v4450, %v4450
        %v4483 = vmul.f32 %v4451, %v4451
        %v4484 = vadd.f32 %v4452, %v4453
        %v4485 = vadd.f32 %v4484, %v4454
        %v4486 = vadd.f32 %v4485, %v4455
        %v4487 = vadd.f32 %v4486, %v4456
        %v4488 = vadd.f32 %v4487, %v4457
        %v4489 = vadd.f32 %v4488, %v4458
        %v4490 = vadd.f32 %v4489, %v4459
        %v4491 = vadd.f32 %v4490, %v4460
        %v4492 = vadd.f32 %v4491, %v4461
        %v4493 = vadd.f32 %v4492, %v4462
        %v4494 = vadd.f32 %v4493, %v4463
        %v4495 = vadd.f32 %v4494, %v4464
        %v4496 = vadd.f32 %v4495, %v4465
        %v4497 = vadd.f32 %v4496, %v4466
        %v4498 = vadd.f32 %v4497, %v4467
        %v4499 = vadd.f32 %v4498, %v4468
        %v4500 = vadd.f32 %v4499, %v4469
        %v4501 = vadd.f32 %v4500, %v4470
        %v4502 = vadd.f32 %v4501, %v4471
        %v4503 = vadd.f32 %v4502, %v4472
        %v4504 = vadd.f32 %v4503, %v4473
        %v4505 = vadd.f32 %v4504, %v4474
        %v4506 = vadd.f32 %v4505, %v4475
        %v4507 = vadd.f32 %v4506, %v4476
        %v4508 = vadd.f32 %v4507, %v4477
        %v4509 = vadd.f32 %v4508, %v4478
        %v4510 = vadd.f32 %v4509, %v4479
        %v4511 = vadd.f32 %v4510, %v4480
        %v4512 = vadd.f32 %v4511, %v4481
        %v4513 = vadd.f32 %v4512, %v4482
        %v4514 = vadd.f32 %v4513, %v4483
        %v4515 = vrot.slane %v4514, 4
        %v4516 = vadd.f32 %v4514, %v4515
        %v4517 = vrot.slane %v4516, 2
        %v4518 = vadd.f32 %v4516, %v4517
        %v4519 = vrot.slane %v4518, 1
        %v4520 = vadd.f32 %v4518, %v4519
        %4521 = vmatpush.msra.mxu0 %v4398
        %4522 = vmatpush.msra.mxu0 %v4397
        %4523 = vmatpush.msra.mxu0 %v4396
        %4524 = vmatpush.msra.mxu0 %v4395
        %4525 = vmatpush.msra.mxu0 %v4394
        %4526 = vmatpush.msra.mxu0 %v4393
        %4527 = vmatpush.msra.mxu0 %v4392
        %4528 = vmatpush.msra.mxu0 %v4391
        %4529 = vmatpush.msra.mxu0 %v4390
        %4530 = vmatpush.msra.mxu0 %v4389
        %4531 = vmatpush.msra.mxu0 %v4388
        %4532 = vmatpush.msra.mxu0 %v4387
        %4533 = vmatpush.msra.mxu0 %v4386
        %4534 = vmatpush.msra.mxu0 %v4385
        %4535 = vmatpush.msra.mxu0 %v4384
        %4536 = vmatpush.msra.mxu0 %v4383
        %4537 = vmatmul.f32.gmra.mxu0 %v4520
        %v4538 = vpop.f32.mrf.mxu0
        %v4539 = vadd.f32 1e-05, %v4538
        %4540 = vdwg.mxu0
        %v4541 = vrsqrt.pop %v4539
        %v4542 = vmul.f32 %v4541, %v4539
        %v4543 = vmul.f32 %v4542, %v4541
        %v4544 = vmul.f32 0.5, %v4543
        %v4545 = vsub.f32 1.5, %v4544
        %v4546 = vmul.f32 %v4541, %v4545
        %vm4547 = vweird.f32 %v4539
        %vm4548 = vweird.f32 %v4541
        %vm4549 = vmor %vm4547, %vm4548
        %v4550 = vsel %vm4549, %v4541, %v4546
        %v4551 = vperm.slane %v4550, 0
        %v4552 = vmul.f32 %v4420, %v4551
        %v4553 = vmul.f32 %v4421, %v4551
        %v4554 = vmul.f32 %v4422, %v4551
        %v4555 = vmul.f32 %v4423, %v4551
        %v4556 = vmul.f32 %v4424, %v4551
        %v4557 = vmul.f32 %v4425, %v4551
        %v4558 = vmul.f32 %v4426, %v4551
        %v4559 = vmul.f32 %v4427, %v4551
        %v4560 = vmul.f32 %v4428, %v4551
        %v4561 = vmul.f32 %v4429, %v4551
        %v4562 = vmul.f32 %v4430, %v4551
        %v4563 = vmul.f32 %v4431, %v4551
        %v4564 = vmul.f32 %v4432, %v4551
        %v4565 = vmul.f32 %v4433, %v4551
        %v4566 = vmul.f32 %v4434, %v4551
        %v4567 = vmul.f32 %v4435, %v4551
        %v4568 = vmul.f32 %v4436, %v4551
        %v4569 = vmul.f32 %v4437, %v4551
        %v4570 = vmul.f32 %v4438, %v4551
        %v4571 = vmul.f32 %v4439, %v4551
        %v4572 = vmul.f32 %v4440, %v4551
        %v4573 = vmul.f32 %v4441, %v4551
        %v4574 = vmul.f32 %v4442, %v4551
        %v4575 = vmul.f32 %v4443, %v4551
        %v4576 = vmul.f32 %v4444, %v4551
        %v4577 = vmul.f32 %v4445, %v4551
        %v4578 = vmul.f32 %v4446, %v4551
        %v4579 = vmul.f32 %v4447, %v4551
        %v4580 = vmul.f32 %v4448, %v4551
        %v4581 = vmul.f32 %v4449, %v4551
        %v4582 = vmul.f32 %v4450, %v4551
        %v4583 = vmul.f32 %v4451, %v4551
        %v4584 = vld [vmem:[%s7] sm:$0x1]
        %v4586 = vperm.slane %v4584, 0
        %v4588 = vmul.f32 %v4552, %v4586
        %v4589 = vmul.f32 %v4553, %v4586
        %v4590 = vmul.f32 %v4554, %v4586
        %v4591 = vmul.f32 %v4555, %v4586
        %v4592 = vmul.f32 %v4556, %v4586
        %v4593 = vmul.f32 %v4557, %v4586
        %v4594 = vmul.f32 %v4558, %v4586
        %v4595 = vmul.f32 %v4559, %v4586
        %v4596 = vmul.f32 %v4560, %v4586
        %v4597 = vmul.f32 %v4561, %v4586
        %v4598 = vmul.f32 %v4562, %v4586
        %v4599 = vmul.f32 %v4563, %v4586
        %v4600 = vmul.f32 %v4564, %v4586
        %v4601 = vmul.f32 %v4565, %v4586
        %v4602 = vmul.f32 %v4566, %v4586
        %v4603 = vmul.f32 %v4567, %v4586
        %v4604 = vmul.f32 %v4568, %v4586
        %v4605 = vmul.f32 %v4569, %v4586
        %v4606 = vmul.f32 %v4570, %v4586
        %v4607 = vmul.f32 %v4571, %v4586
        %v4608 = vmul.f32 %v4572, %v4586
        %v4609 = vmul.f32 %v4573, %v4586
        %v4610 = vmul.f32 %v4574, %v4586
        %v4611 = vmul.f32 %v4575, %v4586
        %v4612 = vmul.f32 %v4576, %v4586
        %v4613 = vmul.f32 %v4577, %v4586
        %v4614 = vmul.f32 %v4578, %v4586
        %v4615 = vmul.f32 %v4579, %v4586
        %v4616 = vmul.f32 %v4580, %v4586
        %v4617 = vmul.f32 %v4581, %v4586
        %v4618 = vmul.f32 %v4582, %v4586
        %v4619 = vmul.f32 %v4583, %v4586
        %v4620 = vld [vmem:[%s8] sm:$0x1]
        %v4622 = vperm.slane %v4620, 0
        %v4624 = vadd.f32 %v4588, %v4622
        %v4625 = vadd.f32 %v4589, %v4622
        %v4626 = vadd.f32 %v4590, %v4622
        %v4627 = vadd.f32 %v4591, %v4622
        %v4628 = vadd.f32 %v4592, %v4622
        %v4629 = vadd.f32 %v4593, %v4622
        %v4630 = vadd.f32 %v4594, %v4622
        %v4631 = vadd.f32 %v4595, %v4622
        %v4632 = vadd.f32 %v4596, %v4622
        %v4633 = vadd.f32 %v4597, %v4622
        %v4634 = vadd.f32 %v4598, %v4622
        %v4635 = vadd.f32 %v4599, %v4622
        %v4636 = vadd.f32 %v4600, %v4622
        %v4637 = vadd.f32 %v4601, %v4622
        %v4638 = vadd.f32 %v4602, %v4622
        %v4639 = vadd.f32 %v4603, %v4622
        %v4640 = vadd.f32 %v4604, %v4622
        %v4641 = vadd.f32 %v4605, %v4622
        %v4642 = vadd.f32 %v4606, %v4622
        %v4643 = vadd.f32 %v4607, %v4622
        %v4644 = vadd.f32 %v4608, %v4622
        %v4645 = vadd.f32 %v4609, %v4622
        %v4646 = vadd.f32 %v4610, %v4622
        %v4647 = vadd.f32 %v4611, %v4622
        %v4648 = vadd.f32 %v4612, %v4622
        %v4649 = vadd.f32 %v4613, %v4622
        %v4650 = vadd.f32 %v4614, %v4622
        %v4651 = vadd.f32 %v4615, %v4622
        %v4652 = vadd.f32 %v4616, %v4622
        %v4653 = vadd.f32 %v4617, %v4622
        %v4654 = vadd.f32 %v4618, %v4622
        %v4655 = vadd.f32 %v4619, %v4622
        %v4656 = vxor.u32 %v4624, 2147483648
        %v4657 = vxor.u32 %v4625, 2147483648
        %v4658 = vxor.u32 %v4626, 2147483648
        %v4659 = vxor.u32 %v4627, 2147483648
        %v4660 = vxor.u32 %v4628, 2147483648
        %v4661 = vxor.u32 %v4629, 2147483648
        %v4662 = vxor.u32 %v4630, 2147483648
        %v4663 = vxor.u32 %v4631, 2147483648
        %v4664 = vxor.u32 %v4632, 2147483648
        %v4665 = vxor.u32 %v4633, 2147483648
        %v4666 = vxor.u32 %v4634, 2147483648
        %v4667 = vxor.u32 %v4635, 2147483648
        %v4668 = vxor.u32 %v4636, 2147483648
        %v4669 = vxor.u32 %v4637, 2147483648
        %v4670 = vxor.u32 %v4638, 2147483648
        %v4671 = vxor.u32 %v4639, 2147483648
        %v4672 = vxor.u32 %v4640, 2147483648
        %v4673 = vxor.u32 %v4641, 2147483648
        %v4674 = vxor.u32 %v4642, 2147483648
        %v4675 = vxor.u32 %v4643, 2147483648
        %v4676 = vxor.u32 %v4644, 2147483648
        %v4677 = vxor.u32 %v4645, 2147483648
        %v4678 = vxor.u32 %v4646, 2147483648
        %v4679 = vxor.u32 %v4647, 2147483648
        %v4680 = vxor.u32 %v4648, 2147483648
        %v4681 = vxor.u32 %v4649, 2147483648
        %v4682 = vxor.u32 %v4650, 2147483648
        %v4683 = vxor.u32 %v4651, 2147483648
        %v4684 = vxor.u32 %v4652, 2147483648
        %v4685 = vxor.u32 %v4653, 2147483648
        %v4686 = vxor.u32 %v4654, 2147483648
        %v4687 = vxor.u32 %v4655, 2147483648
        %v4688 = vmul.f32 %v4656, 1.442695
        %v4689 = vpow.pop %v4688
        %v4690 = vmul.f32 %v4657, 1.442695
        %v4691 = vpow.pop %v4690
        %v4692 = vmul.f32 %v4658, 1.442695
        %v4693 = vpow.pop %v4692
        %v4694 = vmul.f32 %v4659, 1.442695
        %v4695 = vpow.pop %v4694
        %v4696 = vmul.f32 %v4660, 1.442695
        %v4697 = vpow.pop %v4696
        %v4698 = vmul.f32 %v4661, 1.442695
        %v4699 = vpow.pop %v4698
        %v4700 = vmul.f32 %v4662, 1.442695
        %v4701 = vpow.pop %v4700
        %v4702 = vmul.f32 %v4663, 1.442695
        %v4703 = vpow.pop %v4702
        %v4704 = vmul.f32 %v4664, 1.442695
        %v4705 = vpow.pop %v4704
        %v4706 = vmul.f32 %v4665, 1.442695
        %v4707 = vpow.pop %v4706
        %v4708 = vmul.f32 %v4666, 1.442695
        %v4709 = vpow.pop %v4708
        %v4710 = vmul.f32 %v4667, 1.442695
        %v4711 = vpow.pop %v4710
        %v4712 = vmul.f32 %v4668, 1.442695
        %v4713 = vpow.pop %v4712
        %v4714 = vmul.f32 %v4669, 1.442695
        %v4715 = vpow.pop %v4714
        %v4716 = vmul.f32 %v4670, 1.442695
        %v4717 = vpow.pop %v4716
        %v4718 = vmul.f32 %v4671, 1.442695
        %v4719 = vpow.pop %v4718
        %v4720 = vmul.f32 %v4672, 1.442695
        %v4721 = vpow.pop %v4720
        %v4722 = vmul.f32 %v4673, 1.442695
        %v4723 = vpow.pop %v4722
        %v4724 = vmul.f32 %v4674, 1.442695
        %v4725 = vpow.pop %v4724
        %v4726 = vmul.f32 %v4675, 1.442695
        %v4727 = vpow.pop %v4726
        %v4728 = vmul.f32 %v4676, 1.442695
        %v4729 = vpow.pop %v4728
        %v4730 = vmul.f32 %v4677, 1.442695
        %v4731 = vpow.pop %v4730
        %v4732 = vmul.f32 %v4678, 1.442695
        %v4733 = vpow.pop %v4732
        %v4734 = vmul.f32 %v4679, 1.442695
        %v4735 = vpow.pop %v4734
        %v4736 = vmul.f32 %v4680, 1.442695
        %v4737 = vpow.pop %v4736
        %v4738 = vmul.f32 %v4681, 1.442695
        %v4739 = vpow.pop %v4738
        %v4740 = vmul.f32 %v4682, 1.442695
        %v4741 = vpow.pop %v4740
        %v4742 = vmul.f32 %v4683, 1.442695
        %v4743 = vpow.pop %v4742
        %v4744 = vmul.f32 %v4684, 1.442695
        %v4745 = vpow.pop %v4744
        %v4746 = vmul.f32 %v4685, 1.442695
        %v4747 = vpow.pop %v4746
        %v4748 = vmul.f32 %v4686, 1.442695
        %v4749 = vpow.pop %v4748
        %v4750 = vmul.f32 %v4687, 1.442695
        %v4751 = vpow.pop %v4750
        %v4752 = vadd.f32 %v4689, 1.0
        %v4753 = vadd.f32 %v4691, 1.0
        %v4754 = vadd.f32 %v4693, 1.0
        %v4755 = vadd.f32 %v4695, 1.0
        %v4756 = vadd.f32 %v4697, 1.0
        %v4757 = vadd.f32 %v4699, 1.0
        %v4758 = vadd.f32 %v4701, 1.0
        %v4759 = vadd.f32 %v4703, 1.0
        %v4760 = vadd.f32 %v4705, 1.0
        %v4761 = vadd.f32 %v4707, 1.0
        %v4762 = vadd.f32 %v4709, 1.0
        %v4763 = vadd.f32 %v4711, 1.0
        %v4764 = vadd.f32 %v4713, 1.0
        %v4765 = vadd.f32 %v4715, 1.0
        %v4766 = vadd.f32 %v4717, 1.0
        %v4767 = vadd.f32 %v4719, 1.0
        %v4768 = vadd.f32 %v4721, 1.0
        %v4769 = vadd.f32 %v4723, 1.0
        %v4770 = vadd.f32 %v4725, 1.0
        %v4771 = vadd.f32 %v4727, 1.0
        %v4772 = vadd.f32 %v4729, 1.0
        %v4773 = vadd.f32 %v4731, 1.0
        %v4774 = vadd.f32 %v4733, 1.0
        %v4775 = vadd.f32 %v4735, 1.0
        %v4776 = vadd.f32 %v4737, 1.0
        %v4777 = vadd.f32 %v4739, 1.0
        %v4778 = vadd.f32 %v4741, 1.0
        %v4779 = vadd.f32 %v4743, 1.0
        %v4780 = vadd.f32 %v4745, 1.0
        %v4781 = vadd.f32 %v4747, 1.0
        %v4782 = vadd.f32 %v4749, 1.0
        %v4783 = vadd.f32 %v4751, 1.0
        %v4784 = vrcp.pop %v4752
        %v4785 = vmul.f32 %v4752, %v4784
        %v4786 = vsub.f32 1.0, %v4785
        %v4787 = vmul.f32 %v4784, %v4786
        %v4788 = vadd.f32 %v4784, %v4787
        %vm4789 = vweird.f32 %v4752
        %vm4790 = vweird.f32 %v4784
        %vm4791 = vmor %vm4789, %vm4790
        %v4792 = vsel %vm4791, %v4784, %v4788
        %v4793 = vand.u32 2147483647, %v4752
        %vm4794 = vcmp.eq.f32.partialorder %v4793, 8.507059e+37
        %v4795 = vand.u32 %v4752, 2147483648
        %v4796 = vor.u32 1.1754944e-38, %v4795
        %v4797 = vsel %vm4794, %v4796, %v4792
        %v4798 = vmul.f32 1.0, %v4797
        %v4799 = vrcp.pop %v4753
        %v4800 = vmul.f32 %v4753, %v4799
        %v4801 = vsub.f32 1.0, %v4800
        %v4802 = vmul.f32 %v4799, %v4801
        %v4803 = vadd.f32 %v4799, %v4802
        %vm4804 = vweird.f32 %v4753
        %vm4805 = vweird.f32 %v4799
        %vm4806 = vmor %vm4804, %vm4805
        %v4807 = vsel %vm4806, %v4799, %v4803
        %v4808 = vand.u32 2147483647, %v4753
        %vm4809 = vcmp.eq.f32.partialorder %v4808, 8.507059e+37
        %v4810 = vand.u32 %v4753, 2147483648
        %v4811 = vor.u32 1.1754944e-38, %v4810
        %v4812 = vsel %vm4809, %v4811, %v4807
        %v4813 = vmul.f32 1.0, %v4812
        %v4814 = vrcp.pop %v4754
        %v4815 = vmul.f32 %v4754, %v4814
        %v4816 = vsub.f32 1.0, %v4815
        %v4817 = vmul.f32 %v4814, %v4816
        %v4818 = vadd.f32 %v4814, %v4817
        %vm4819 = vweird.f32 %v4754
        %vm4820 = vweird.f32 %v4814
        %vm4821 = vmor %vm4819, %vm4820
        %v4822 = vsel %vm4821, %v4814, %v4818
        %v4823 = vand.u32 2147483647, %v4754
        %vm4824 = vcmp.eq.f32.partialorder %v4823, 8.507059e+37
        %v4825 = vand.u32 %v4754, 2147483648
        %v4826 = vor.u32 1.1754944e-38, %v4825
        %v4827 = vsel %vm4824, %v4826, %v4822
        %v4828 = vmul.f32 1.0, %v4827
        %v4829 = vrcp.pop %v4755
        %v4830 = vmul.f32 %v4755, %v4829
        %v4831 = vsub.f32 1.0, %v4830
        %v4832 = vmul.f32 %v4829, %v4831
        %v4833 = vadd.f32 %v4829, %v4832
        %vm4834 = vweird.f32 %v4755
        %vm4835 = vweird.f32 %v4829
        %vm4836 = vmor %vm4834, %vm4835
        %v4837 = vsel %vm4836, %v4829, %v4833
        %v4838 = vand.u32 2147483647, %v4755
        %vm4839 = vcmp.eq.f32.partialorder %v4838, 8.507059e+37
        %v4840 = vand.u32 %v4755, 2147483648
        %v4841 = vor.u32 1.1754944e-38, %v4840
        %v4842 = vsel %vm4839, %v4841, %v4837
        %v4843 = vmul.f32 1.0, %v4842
        %v4844 = vrcp.pop %v4756
        %v4845 = vmul.f32 %v4756, %v4844
        %v4846 = vsub.f32 1.0, %v4845
        %v4847 = vmul.f32 %v4844, %v4846
        %v4848 = vadd.f32 %v4844, %v4847
        %vm4849 = vweird.f32 %v4756
        %vm4850 = vweird.f32 %v4844
        %vm4851 = vmor %vm4849, %vm4850
        %v4852 = vsel %vm4851, %v4844, %v4848
        %v4853 = vand.u32 2147483647, %v4756
        %vm4854 = vcmp.eq.f32.partialorder %v4853, 8.507059e+37
        %v4855 = vand.u32 %v4756, 2147483648
        %v4856 = vor.u32 1.1754944e-38, %v4855
        %v4857 = vsel %vm4854, %v4856, %v4852
        %v4858 = vmul.f32 1.0, %v4857
        %v4859 = vrcp.pop %v4757
        %v4860 = vmul.f32 %v4757, %v4859
        %v4861 = vsub.f32 1.0, %v4860
        %v4862 = vmul.f32 %v4859, %v4861
        %v4863 = vadd.f32 %v4859, %v4862
        %vm4864 = vweird.f32 %v4757
        %vm4865 = vweird.f32 %v4859
        %vm4866 = vmor %vm4864, %vm4865
        %v4867 = vsel %vm4866, %v4859, %v4863
        %v4868 = vand.u32 2147483647, %v4757
        %vm4869 = vcmp.eq.f32.partialorder %v4868, 8.507059e+37
        %v4870 = vand.u32 %v4757, 2147483648
        %v4871 = vor.u32 1.1754944e-38, %v4870
        %v4872 = vsel %vm4869, %v4871, %v4867
        %v4873 = vmul.f32 1.0, %v4872
        %v4874 = vrcp.pop %v4758
        %v4875 = vmul.f32 %v4758, %v4874
        %v4876 = vsub.f32 1.0, %v4875
        %v4877 = vmul.f32 %v4874, %v4876
        %v4878 = vadd.f32 %v4874, %v4877
        %vm4879 = vweird.f32 %v4758
        %vm4880 = vweird.f32 %v4874
        %vm4881 = vmor %vm4879, %vm4880
        %v4882 = vsel %vm4881, %v4874, %v4878
        %v4883 = vand.u32 2147483647, %v4758
        %vm4884 = vcmp.eq.f32.partialorder %v4883, 8.507059e+37
        %v4885 = vand.u32 %v4758, 2147483648
        %v4886 = vor.u32 1.1754944e-38, %v4885
        %v4887 = vsel %vm4884, %v4886, %v4882
        %v4888 = vmul.f32 1.0, %v4887
        %v4889 = vrcp.pop %v4759
        %v4890 = vmul.f32 %v4759, %v4889
        %v4891 = vsub.f32 1.0, %v4890
        %v4892 = vmul.f32 %v4889, %v4891
        %v4893 = vadd.f32 %v4889, %v4892
        %vm4894 = vweird.f32 %v4759
        %vm4895 = vweird.f32 %v4889
        %vm4896 = vmor %vm4894, %vm4895
        %v4897 = vsel %vm4896, %v4889, %v4893
        %v4898 = vand.u32 2147483647, %v4759
        %vm4899 = vcmp.eq.f32.partialorder %v4898, 8.507059e+37
        %v4900 = vand.u32 %v4759, 2147483648
        %v4901 = vor.u32 1.1754944e-38, %v4900
        %v4902 = vsel %vm4899, %v4901, %v4897
        %v4903 = vmul.f32 1.0, %v4902
        %v4904 = vrcp.pop %v4760
        %v4905 = vmul.f32 %v4760, %v4904
        %v4906 = vsub.f32 1.0, %v4905
        %v4907 = vmul.f32 %v4904, %v4906
        %v4908 = vadd.f32 %v4904, %v4907
        %vm4909 = vweird.f32 %v4760
        %vm4910 = vweird.f32 %v4904
        %vm4911 = vmor %vm4909, %vm4910
        %v4912 = vsel %vm4911, %v4904, %v4908
        %v4913 = vand.u32 2147483647, %v4760
        %vm4914 = vcmp.eq.f32.partialorder %v4913, 8.507059e+37
        %v4915 = vand.u32 %v4760, 2147483648
        %v4916 = vor.u32 1.1754944e-38, %v4915
        %v4917 = vsel %vm4914, %v4916, %v4912
        %v4918 = vmul.f32 1.0, %v4917
        %v4919 = vrcp.pop %v4761
        %v4920 = vmul.f32 %v4761, %v4919
        %v4921 = vsub.f32 1.0, %v4920
        %v4922 = vmul.f32 %v4919, %v4921
        %v4923 = vadd.f32 %v4919, %v4922
        %vm4924 = vweird.f32 %v4761
        %vm4925 = vweird.f32 %v4919
        %vm4926 = vmor %vm4924, %vm4925
        %v4927 = vsel %vm4926, %v4919, %v4923
        %v4928 = vand.u32 2147483647, %v4761
        %vm4929 = vcmp.eq.f32.partialorder %v4928, 8.507059e+37
        %v4930 = vand.u32 %v4761, 2147483648
        %v4931 = vor.u32 1.1754944e-38, %v4930
        %v4932 = vsel %vm4929, %v4931, %v4927
        %v4933 = vmul.f32 1.0, %v4932
        %v4934 = vrcp.pop %v4762
        %v4935 = vmul.f32 %v4762, %v4934
        %v4936 = vsub.f32 1.0, %v4935
        %v4937 = vmul.f32 %v4934, %v4936
        %v4938 = vadd.f32 %v4934, %v4937
        %vm4939 = vweird.f32 %v4762
        %vm4940 = vweird.f32 %v4934
        %vm4941 = vmor %vm4939, %vm4940
        %v4942 = vsel %vm4941, %v4934, %v4938
        %v4943 = vand.u32 2147483647, %v4762
        %vm4944 = vcmp.eq.f32.partialorder %v4943, 8.507059e+37
        %v4945 = vand.u32 %v4762, 2147483648
        %v4946 = vor.u32 1.1754944e-38, %v4945
        %v4947 = vsel %vm4944, %v4946, %v4942
        %v4948 = vmul.f32 1.0, %v4947
        %v4949 = vrcp.pop %v4763
        %v4950 = vmul.f32 %v4763, %v4949
        %v4951 = vsub.f32 1.0, %v4950
        %v4952 = vmul.f32 %v4949, %v4951
        %v4953 = vadd.f32 %v4949, %v4952
        %vm4954 = vweird.f32 %v4763
        %vm4955 = vweird.f32 %v4949
        %vm4956 = vmor %vm4954, %vm4955
        %v4957 = vsel %vm4956, %v4949, %v4953
        %v4958 = vand.u32 2147483647, %v4763
        %vm4959 = vcmp.eq.f32.partialorder %v4958, 8.507059e+37
        %v4960 = vand.u32 %v4763, 2147483648
        %v4961 = vor.u32 1.1754944e-38, %v4960
        %v4962 = vsel %vm4959, %v4961, %v4957
        %v4963 = vmul.f32 1.0, %v4962
        %v4964 = vrcp.pop %v4764
        %v4965 = vmul.f32 %v4764, %v4964
        %v4966 = vsub.f32 1.0, %v4965
        %v4967 = vmul.f32 %v4964, %v4966
        %v4968 = vadd.f32 %v4964, %v4967
        %vm4969 = vweird.f32 %v4764
        %vm4970 = vweird.f32 %v4964
        %vm4971 = vmor %vm4969, %vm4970
        %v4972 = vsel %vm4971, %v4964, %v4968
        %v4973 = vand.u32 2147483647, %v4764
        %vm4974 = vcmp.eq.f32.partialorder %v4973, 8.507059e+37
        %v4975 = vand.u32 %v4764, 2147483648
        %v4976 = vor.u32 1.1754944e-38, %v4975
        %v4977 = vsel %vm4974, %v4976, %v4972
        %v4978 = vmul.f32 1.0, %v4977
        %v4979 = vrcp.pop %v4765
        %v4980 = vmul.f32 %v4765, %v4979
        %v4981 = vsub.f32 1.0, %v4980
        %v4982 = vmul.f32 %v4979, %v4981
        %v4983 = vadd.f32 %v4979, %v4982
        %vm4984 = vweird.f32 %v4765
        %vm4985 = vweird.f32 %v4979
        %vm4986 = vmor %vm4984, %vm4985
        %v4987 = vsel %vm4986, %v4979, %v4983
        %v4988 = vand.u32 2147483647, %v4765
        %vm4989 = vcmp.eq.f32.partialorder %v4988, 8.507059e+37
        %v4990 = vand.u32 %v4765, 2147483648
        %v4991 = vor.u32 1.1754944e-38, %v4990
        %v4992 = vsel %vm4989, %v4991, %v4987
        %v4993 = vmul.f32 1.0, %v4992
        %v4994 = vrcp.pop %v4766
        %v4995 = vmul.f32 %v4766, %v4994
        %v4996 = vsub.f32 1.0, %v4995
        %v4997 = vmul.f32 %v4994, %v4996
        %v4998 = vadd.f32 %v4994, %v4997
        %vm4999 = vweird.f32 %v4766
        %vm5000 = vweird.f32 %v4994
        %vm5001 = vmor %vm4999, %vm5000
        %v5002 = vsel %vm5001, %v4994, %v4998
        %v5003 = vand.u32 2147483647, %v4766
        %vm5004 = vcmp.eq.f32.partialorder %v5003, 8.507059e+37
        %v5005 = vand.u32 %v4766, 2147483648
        %v5006 = vor.u32 1.1754944e-38, %v5005
        %v5007 = vsel %vm5004, %v5006, %v5002
        %v5008 = vmul.f32 1.0, %v5007
        %v5009 = vrcp.pop %v4767
        %v5010 = vmul.f32 %v4767, %v5009
        %v5011 = vsub.f32 1.0, %v5010
        %v5012 = vmul.f32 %v5009, %v5011
        %v5013 = vadd.f32 %v5009, %v5012
        %vm5014 = vweird.f32 %v4767
        %vm5015 = vweird.f32 %v5009
        %vm5016 = vmor %vm5014, %vm5015
        %v5017 = vsel %vm5016, %v5009, %v5013
        %v5018 = vand.u32 2147483647, %v4767
        %vm5019 = vcmp.eq.f32.partialorder %v5018, 8.507059e+37
        %v5020 = vand.u32 %v4767, 2147483648
        %v5021 = vor.u32 1.1754944e-38, %v5020
        %v5022 = vsel %vm5019, %v5021, %v5017
        %v5023 = vmul.f32 1.0, %v5022
        %v5024 = vrcp.pop %v4768
        %v5025 = vmul.f32 %v4768, %v5024
        %v5026 = vsub.f32 1.0, %v5025
        %v5027 = vmul.f32 %v5024, %v5026
        %v5028 = vadd.f32 %v5024, %v5027
        %vm5029 = vweird.f32 %v4768
        %vm5030 = vweird.f32 %v5024
        %vm5031 = vmor %vm5029, %vm5030
        %v5032 = vsel %vm5031, %v5024, %v5028
        %v5033 = vand.u32 2147483647, %v4768
        %vm5034 = vcmp.eq.f32.partialorder %v5033, 8.507059e+37
        %v5035 = vand.u32 %v4768, 2147483648
        %v5036 = vor.u32 1.1754944e-38, %v5035
        %v5037 = vsel %vm5034, %v5036, %v5032
        %v5038 = vmul.f32 1.0, %v5037
        %v5039 = vrcp.pop %v4769
        %v5040 = vmul.f32 %v4769, %v5039
        %v5041 = vsub.f32 1.0, %v5040
        %v5042 = vmul.f32 %v5039, %v5041
        %v5043 = vadd.f32 %v5039, %v5042
        %vm5044 = vweird.f32 %v4769
        %vm5045 = vweird.f32 %v5039
        %vm5046 = vmor %vm5044, %vm5045
        %v5047 = vsel %vm5046, %v5039, %v5043
        %v5048 = vand.u32 2147483647, %v4769
        %vm5049 = vcmp.eq.f32.partialorder %v5048, 8.507059e+37
        %v5050 = vand.u32 %v4769, 2147483648
        %v5051 = vor.u32 1.1754944e-38, %v5050
        %v5052 = vsel %vm5049, %v5051, %v5047
        %v5053 = vmul.f32 1.0, %v5052
        %v5054 = vrcp.pop %v4770
        %v5055 = vmul.f32 %v4770, %v5054
        %v5056 = vsub.f32 1.0, %v5055
        %v5057 = vmul.f32 %v5054, %v5056
        %v5058 = vadd.f32 %v5054, %v5057
        %vm5059 = vweird.f32 %v4770
        %vm5060 = vweird.f32 %v5054
        %vm5061 = vmor %vm5059, %vm5060
        %v5062 = vsel %vm5061, %v5054, %v5058
        %v5063 = vand.u32 2147483647, %v4770
        %vm5064 = vcmp.eq.f32.partialorder %v5063, 8.507059e+37
        %v5065 = vand.u32 %v4770, 2147483648
        %v5066 = vor.u32 1.1754944e-38, %v5065
        %v5067 = vsel %vm5064, %v5066, %v5062
        %v5068 = vmul.f32 1.0, %v5067
        %v5069 = vrcp.pop %v4771
        %v5070 = vmul.f32 %v4771, %v5069
        %v5071 = vsub.f32 1.0, %v5070
        %v5072 = vmul.f32 %v5069, %v5071
        %v5073 = vadd.f32 %v5069, %v5072
        %vm5074 = vweird.f32 %v4771
        %vm5075 = vweird.f32 %v5069
        %vm5076 = vmor %vm5074, %vm5075
        %v5077 = vsel %vm5076, %v5069, %v5073
        %v5078 = vand.u32 2147483647, %v4771
        %vm5079 = vcmp.eq.f32.partialorder %v5078, 8.507059e+37
        %v5080 = vand.u32 %v4771, 2147483648
        %v5081 = vor.u32 1.1754944e-38, %v5080
        %v5082 = vsel %vm5079, %v5081, %v5077
        %v5083 = vmul.f32 1.0, %v5082
        %v5084 = vrcp.pop %v4772
        %v5085 = vmul.f32 %v4772, %v5084
        %v5086 = vsub.f32 1.0, %v5085
        %v5087 = vmul.f32 %v5084, %v5086
        %v5088 = vadd.f32 %v5084, %v5087
        %vm5089 = vweird.f32 %v4772
        %vm5090 = vweird.f32 %v5084
        %vm5091 = vmor %vm5089, %vm5090
        %v5092 = vsel %vm5091, %v5084, %v5088
        %v5093 = vand.u32 2147483647, %v4772
        %vm5094 = vcmp.eq.f32.partialorder %v5093, 8.507059e+37
        %v5095 = vand.u32 %v4772, 2147483648
        %v5096 = vor.u32 1.1754944e-38, %v5095
        %v5097 = vsel %vm5094, %v5096, %v5092
        %v5098 = vmul.f32 1.0, %v5097
        %v5099 = vrcp.pop %v4773
        %v5100 = vmul.f32 %v4773, %v5099
        %v5101 = vsub.f32 1.0, %v5100
        %v5102 = vmul.f32 %v5099, %v5101
        %v5103 = vadd.f32 %v5099, %v5102
        %vm5104 = vweird.f32 %v4773
        %vm5105 = vweird.f32 %v5099
        %vm5106 = vmor %vm5104, %vm5105
        %v5107 = vsel %vm5106, %v5099, %v5103
        %v5108 = vand.u32 2147483647, %v4773
        %vm5109 = vcmp.eq.f32.partialorder %v5108, 8.507059e+37
        %v5110 = vand.u32 %v4773, 2147483648
        %v5111 = vor.u32 1.1754944e-38, %v5110
        %v5112 = vsel %vm5109, %v5111, %v5107
        %v5113 = vmul.f32 1.0, %v5112
        %v5114 = vrcp.pop %v4774
        %v5115 = vmul.f32 %v4774, %v5114
        %v5116 = vsub.f32 1.0, %v5115
        %v5117 = vmul.f32 %v5114, %v5116
        %v5118 = vadd.f32 %v5114, %v5117
        %vm5119 = vweird.f32 %v4774
        %vm5120 = vweird.f32 %v5114
        %vm5121 = vmor %vm5119, %vm5120
        %v5122 = vsel %vm5121, %v5114, %v5118
        %v5123 = vand.u32 2147483647, %v4774
        %vm5124 = vcmp.eq.f32.partialorder %v5123, 8.507059e+37
        %v5125 = vand.u32 %v4774, 2147483648
        %v5126 = vor.u32 1.1754944e-38, %v5125
        %v5127 = vsel %vm5124, %v5126, %v5122
        %v5128 = vmul.f32 1.0, %v5127
        %v5129 = vrcp.pop %v4775
        %v5130 = vmul.f32 %v4775, %v5129
        %v5131 = vsub.f32 1.0, %v5130
        %v5132 = vmul.f32 %v5129, %v5131
        %v5133 = vadd.f32 %v5129, %v5132
        %vm5134 = vweird.f32 %v4775
        %vm5135 = vweird.f32 %v5129
        %vm5136 = vmor %vm5134, %vm5135
        %v5137 = vsel %vm5136, %v5129, %v5133
        %v5138 = vand.u32 2147483647, %v4775
        %vm5139 = vcmp.eq.f32.partialorder %v5138, 8.507059e+37
        %v5140 = vand.u32 %v4775, 2147483648
        %v5141 = vor.u32 1.1754944e-38, %v5140
        %v5142 = vsel %vm5139, %v5141, %v5137
        %v5143 = vmul.f32 1.0, %v5142
        %v5144 = vrcp.pop %v4776
        %v5145 = vmul.f32 %v4776, %v5144
        %v5146 = vsub.f32 1.0, %v5145
        %v5147 = vmul.f32 %v5144, %v5146
        %v5148 = vadd.f32 %v5144, %v5147
        %vm5149 = vweird.f32 %v4776
        %vm5150 = vweird.f32 %v5144
        %vm5151 = vmor %vm5149, %vm5150
        %v5152 = vsel %vm5151, %v5144, %v5148
        %v5153 = vand.u32 2147483647, %v4776
        %vm5154 = vcmp.eq.f32.partialorder %v5153, 8.507059e+37
        %v5155 = vand.u32 %v4776, 2147483648
        %v5156 = vor.u32 1.1754944e-38, %v5155
        %v5157 = vsel %vm5154, %v5156, %v5152
        %v5158 = vmul.f32 1.0, %v5157
        %v5159 = vrcp.pop %v4777
        %v5160 = vmul.f32 %v4777, %v5159
        %v5161 = vsub.f32 1.0, %v5160
        %v5162 = vmul.f32 %v5159, %v5161
        %v5163 = vadd.f32 %v5159, %v5162
        %vm5164 = vweird.f32 %v4777
        %vm5165 = vweird.f32 %v5159
        %vm5166 = vmor %vm5164, %vm5165
        %v5167 = vsel %vm5166, %v5159, %v5163
        %v5168 = vand.u32 2147483647, %v4777
        %vm5169 = vcmp.eq.f32.partialorder %v5168, 8.507059e+37
        %v5170 = vand.u32 %v4777, 2147483648
        %v5171 = vor.u32 1.1754944e-38, %v5170
        %v5172 = vsel %vm5169, %v5171, %v5167
        %v5173 = vmul.f32 1.0, %v5172
        %v5174 = vrcp.pop %v4778
        %v5175 = vmul.f32 %v4778, %v5174
        %v5176 = vsub.f32 1.0, %v5175
        %v5177 = vmul.f32 %v5174, %v5176
        %v5178 = vadd.f32 %v5174, %v5177
        %vm5179 = vweird.f32 %v4778
        %vm5180 = vweird.f32 %v5174
        %vm5181 = vmor %vm5179, %vm5180
        %v5182 = vsel %vm5181, %v5174, %v5178
        %v5183 = vand.u32 2147483647, %v4778
        %vm5184 = vcmp.eq.f32.partialorder %v5183, 8.507059e+37
        %v5185 = vand.u32 %v4778, 2147483648
        %v5186 = vor.u32 1.1754944e-38, %v5185
        %v5187 = vsel %vm5184, %v5186, %v5182
        %v5188 = vmul.f32 1.0, %v5187
        %v5189 = vrcp.pop %v4779
        %v5190 = vmul.f32 %v4779, %v5189
        %v5191 = vsub.f32 1.0, %v5190
        %v5192 = vmul.f32 %v5189, %v5191
        %v5193 = vadd.f32 %v5189, %v5192
        %vm5194 = vweird.f32 %v4779
        %vm5195 = vweird.f32 %v5189
        %vm5196 = vmor %vm5194, %vm5195
        %v5197 = vsel %vm5196, %v5189, %v5193
        %v5198 = vand.u32 2147483647, %v4779
        %vm5199 = vcmp.eq.f32.partialorder %v5198, 8.507059e+37
        %v5200 = vand.u32 %v4779, 2147483648
        %v5201 = vor.u32 1.1754944e-38, %v5200
        %v5202 = vsel %vm5199, %v5201, %v5197
        %v5203 = vmul.f32 1.0, %v5202
        %v5204 = vrcp.pop %v4780
        %v5205 = vmul.f32 %v4780, %v5204
        %v5206 = vsub.f32 1.0, %v5205
        %v5207 = vmul.f32 %v5204, %v5206
        %v5208 = vadd.f32 %v5204, %v5207
        %vm5209 = vweird.f32 %v4780
        %vm5210 = vweird.f32 %v5204
        %vm5211 = vmor %vm5209, %vm5210
        %v5212 = vsel %vm5211, %v5204, %v5208
        %v5213 = vand.u32 2147483647, %v4780
        %vm5214 = vcmp.eq.f32.partialorder %v5213, 8.507059e+37
        %v5215 = vand.u32 %v4780, 2147483648
        %v5216 = vor.u32 1.1754944e-38, %v5215
        %v5217 = vsel %vm5214, %v5216, %v5212
        %v5218 = vmul.f32 1.0, %v5217
        %v5219 = vrcp.pop %v4781
        %v5220 = vmul.f32 %v4781, %v5219
        %v5221 = vsub.f32 1.0, %v5220
        %v5222 = vmul.f32 %v5219, %v5221
        %v5223 = vadd.f32 %v5219, %v5222
        %vm5224 = vweird.f32 %v4781
        %vm5225 = vweird.f32 %v5219
        %vm5226 = vmor %vm5224, %vm5225
        %v5227 = vsel %vm5226, %v5219, %v5223
        %v5228 = vand.u32 2147483647, %v4781
        %vm5229 = vcmp.eq.f32.partialorder %v5228, 8.507059e+37
        %v5230 = vand.u32 %v4781, 2147483648
        %v5231 = vor.u32 1.1754944e-38, %v5230
        %v5232 = vsel %vm5229, %v5231, %v5227
        %v5233 = vmul.f32 1.0, %v5232
        %v5234 = vrcp.pop %v4782
        %v5235 = vmul.f32 %v4782, %v5234
        %v5236 = vsub.f32 1.0, %v5235
        %v5237 = vmul.f32 %v5234, %v5236
        %v5238 = vadd.f32 %v5234, %v5237
        %vm5239 = vweird.f32 %v4782
        %vm5240 = vweird.f32 %v5234
        %vm5241 = vmor %vm5239, %vm5240
        %v5242 = vsel %vm5241, %v5234, %v5238
        %v5243 = vand.u32 2147483647, %v4782
        %vm5244 = vcmp.eq.f32.partialorder %v5243, 8.507059e+37
        %v5245 = vand.u32 %v4782, 2147483648
        %v5246 = vor.u32 1.1754944e-38, %v5245
        %v5247 = vsel %vm5244, %v5246, %v5242
        %v5248 = vmul.f32 1.0, %v5247
        %v5249 = vrcp.pop %v4783
        %v5250 = vmul.f32 %v4783, %v5249
        %v5251 = vsub.f32 1.0, %v5250
        %v5252 = vmul.f32 %v5249, %v5251
        %v5253 = vadd.f32 %v5249, %v5252
        %vm5254 = vweird.f32 %v4783
        %vm5255 = vweird.f32 %v5249
        %vm5256 = vmor %vm5254, %vm5255
        %v5257 = vsel %vm5256, %v5249, %v5253
        %v5258 = vand.u32 2147483647, %v4783
        %vm5259 = vcmp.eq.f32.partialorder %v5258, 8.507059e+37
        %v5260 = vand.u32 %v4783, 2147483648
        %v5261 = vor.u32 1.1754944e-38, %v5260
        %v5262 = vsel %vm5259, %v5261, %v5257
        %v5263 = vmul.f32 1.0, %v5262
        %v5264 = vmul.f32 %v4624, %v4798
        %v5265 = vmul.f32 %v4625, %v4813
        %v5266 = vmul.f32 %v4626, %v4828
        %v5267 = vmul.f32 %v4627, %v4843
        %v5268 = vmul.f32 %v4628, %v4858
        %v5269 = vmul.f32 %v4629, %v4873
        %v5270 = vmul.f32 %v4630, %v4888
        %v5271 = vmul.f32 %v4631, %v4903
        %v5272 = vmul.f32 %v4632, %v4918
        %v5273 = vmul.f32 %v4633, %v4933
        %v5274 = vmul.f32 %v4634, %v4948
        %v5275 = vmul.f32 %v4635, %v4963
        %v5276 = vmul.f32 %v4636, %v4978
        %v5277 = vmul.f32 %v4637, %v4993
        %v5278 = vmul.f32 %v4638, %v5008
        %v5279 = vmul.f32 %v4639, %v5023
        %v5280 = vmul.f32 %v4640, %v5038
        %v5281 = vmul.f32 %v4641, %v5053
        %v5282 = vmul.f32 %v4642, %v5068
        %v5283 = vmul.f32 %v4643, %v5083
        %v5284 = vmul.f32 %v4644, %v5098
        %v5285 = vmul.f32 %v4645, %v5113
        %v5286 = vmul.f32 %v4646, %v5128
        %v5287 = vmul.f32 %v4647, %v5143
        %v5288 = vmul.f32 %v4648, %v5158
        %v5289 = vmul.f32 %v4649, %v5173
        %v5290 = vmul.f32 %v4650, %v5188
        %v5291 = vmul.f32 %v4651, %v5203
        %v5292 = vmul.f32 %v4652, %v5218
        %v5293 = vmul.f32 %v4653, %v5233
        %v5294 = vmul.f32 %v4654, %v5248
        %v5295 = vmul.f32 %v4655, %v5263
        %v5296 = vrot.slane %v5264, 7
        %v5297 = vrot.slane %v5265, 7
        %v5298 = vrot.slane %v5266, 7
        %v5299 = vrot.slane %v5267, 7
        %v5300 = vrot.slane %v5268, 7
        %v5301 = vrot.slane %v5269, 7
        %v5302 = vrot.slane %v5270, 7
        %v5303 = vrot.slane %v5271, 7
        %v5304 = vrot.slane %v5272, 7
        %v5305 = vrot.slane %v5273, 7
        %v5306 = vrot.slane %v5274, 7
        %v5307 = vrot.slane %v5275, 7
        %v5308 = vrot.slane %v5276, 7
        %v5309 = vrot.slane %v5277, 7
        %v5310 = vrot.slane %v5278, 7
        %v5311 = vrot.slane %v5279, 7
        %v5312 = vrot.slane %v5280, 7
        %v5313 = vrot.slane %v5281, 7
        %v5314 = vrot.slane %v5282, 7
        %v5315 = vrot.slane %v5283, 7
        %v5316 = vrot.slane %v5284, 7
        %v5317 = vrot.slane %v5285, 7
        %v5318 = vrot.slane %v5286, 7
        %v5319 = vrot.slane %v5287, 7
        %v5320 = vrot.slane %v5288, 7
        %v5321 = vrot.slane %v5289, 7
        %v5322 = vrot.slane %v5290, 7
        %v5323 = vrot.slane %v5291, 7
        %v5324 = vrot.slane %v5292, 7
        %v5325 = vrot.slane %v5293, 7
        %v5326 = vrot.slane %v5294, 7
        %v5327 = vrot.slane %v5295, 7
        %v5328 = vsel %vm2202, %v5326, %v5327
        %v5329 = vsel %vm2202, %v5325, %v5326
        %v5330 = vsel %vm2202, %v5324, %v5325
        %v5331 = vsel %vm2202, %v5323, %v5324
        %v5332 = vsel %vm2202, %v5322, %v5323
        %v5333 = vsel %vm2202, %v5321, %v5322
        %v5334 = vsel %vm2202, %v5320, %v5321
        %v5335 = vsel %vm2202, %v5319, %v5320
        %v5336 = vsel %vm2202, %v5318, %v5319
        %v5337 = vsel %vm2202, %v5317, %v5318
        %v5338 = vsel %vm2202, %v5316, %v5317
        %v5339 = vsel %vm2202, %v5315, %v5316
        %v5340 = vsel %vm2202, %v5314, %v5315
        %v5341 = vsel %vm2202, %v5313, %v5314
        %v5342 = vsel %vm2202, %v5312, %v5313
        %v5343 = vsel %vm2202, %v5311, %v5312
        %v5344 = vsel %vm2202, %v5310, %v5311
        %v5345 = vsel %vm2202, %v5309, %v5310
        %v5346 = vsel %vm2202, %v5308, %v5309
        %v5347 = vsel %vm2202, %v5307, %v5308
        %v5348 = vsel %vm2202, %v5306, %v5307
        %v5349 = vsel %vm2202, %v5305, %v5306
        %v5350 = vsel %vm2202, %v5304, %v5305
        %v5351 = vsel %vm2202, %v5303, %v5304
        %v5352 = vsel %vm2202, %v5302, %v5303
        %v5353 = vsel %vm2202, %v5301, %v5302
        %v5354 = vsel %vm2202, %v5300, %v5301
        %v5355 = vsel %vm2202, %v5299, %v5300
        %v5356 = vsel %vm2202, %v5298, %v5299
        %v5357 = vsel %vm2202, %v5297, %v5298
        %v5358 = vsel %vm2202, %v5296, %v5297
        %v5359 = vsel %vm2202, %v5327, %v5296
        %v5360 = vmul.f32 %v1092, %v5359
        %v5361 = vmul.f32 %v1093, %v5358
        %v5362 = vmul.f32 %v1094, %v5357
        %v5363 = vmul.f32 %v1095, %v5356
        %v5364 = vmul.f32 %v1096, %v5355
        %v5365 = vmul.f32 %v1097, %v5354
        %v5366 = vmul.f32 %v1098, %v5353
        %v5367 = vmul.f32 %v1099, %v5352
        %v5368 = vmul.f32 %v1100, %v5351
        %v5369 = vmul.f32 %v1101, %v5350
        %v5370 = vmul.f32 %v1102, %v5349
        %v5371 = vmul.f32 %v1103, %v5348
        %v5372 = vmul.f32 %v1104, %v5347
        %v5373 = vmul.f32 %v1105, %v5346
        %v5374 = vmul.f32 %v1106, %v5345
        %v5375 = vmul.f32 %v1107, %v5344
        %v5376 = vmul.f32 %v1108, %v5343
        %v5377 = vmul.f32 %v1109, %v5342
        %v5378 = vmul.f32 %v1110, %v5341
        %v5379 = vmul.f32 %v1111, %v5340
        %v5380 = vmul.f32 %v1112, %v5339
        %v5381 = vmul.f32 %v1113, %v5338
        %v5382 = vmul.f32 %v1114, %v5337
        %v5383 = vmul.f32 %v1115, %v5336
        %v5384 = vmul.f32 %v1116, %v5335
        %v5385 = vmul.f32 %v1117, %v5334
        %v5386 = vmul.f32 %v1118, %v5333
        %v5387 = vmul.f32 %v1119, %v5332
        %v5388 = vmul.f32 %v1120, %v5331
        %v5389 = vmul.f32 %v1121, %v5330
        %v5390 = vmul.f32 %v1122, %v5329
        %v5391 = vmul.f32 %v1123, %v5328
        %v5392 = vpack.c.bf16 %v5360, %v5360
        %v5393 = vpack.c.bf16 %v5361, %v5361
        %v5394 = vpack.c.bf16 %v5362, %v5362
        %v5395 = vpack.c.bf16 %v5363, %v5363
        %v5396 = vpack.c.bf16 %v5364, %v5364
        %v5397 = vpack.c.bf16 %v5365, %v5365
        %v5398 = vpack.c.bf16 %v5366, %v5366
        %v5399 = vpack.c.bf16 %v5367, %v5367
        %v5400 = vpack.c.bf16 %v5368, %v5368
        %v5401 = vpack.c.bf16 %v5369, %v5369
        %v5402 = vpack.c.bf16 %v5370, %v5370
        %v5403 = vpack.c.bf16 %v5371, %v5371
        %v5404 = vpack.c.bf16 %v5372, %v5372
        %v5405 = vpack.c.bf16 %v5373, %v5373
        %v5406 = vpack.c.bf16 %v5374, %v5374
        %v5407 = vpack.c.bf16 %v5375, %v5375
        %v5408 = vpack.c.bf16 %v5376, %v5376
        %v5409 = vpack.c.bf16 %v5377, %v5377
        %v5410 = vpack.c.bf16 %v5378, %v5378
        %v5411 = vpack.c.bf16 %v5379, %v5379
        %v5412 = vpack.c.bf16 %v5380, %v5380
        %v5413 = vpack.c.bf16 %v5381, %v5381
        %v5414 = vpack.c.bf16 %v5382, %v5382
        %v5415 = vpack.c.bf16 %v5383, %v5383
        %v5416 = vpack.c.bf16 %v5384, %v5384
        %v5417 = vpack.c.bf16 %v5385, %v5385
        %v5418 = vpack.c.bf16 %v5386, %v5386
        %v5419 = vpack.c.bf16 %v5387, %v5387
        %v5420 = vpack.c.bf16 %v5388, %v5388
        %v5421 = vpack.c.bf16 %v5389, %v5389
        %v5422 = vpack.c.bf16 %v5390, %v5390
        %v5423 = vpack.c.bf16 %v5391, %v5391
        %v5424 = vrot.slane %v5264, 1
        %v5425 = vrot.slane %v5265, 1
        %v5426 = vrot.slane %v5266, 1
        %v5427 = vrot.slane %v5267, 1
        %v5428 = vrot.slane %v5268, 1
        %v5429 = vrot.slane %v5269, 1
        %v5430 = vrot.slane %v5270, 1
        %v5431 = vrot.slane %v5271, 1
        %v5432 = vrot.slane %v5272, 1
        %v5433 = vrot.slane %v5273, 1
        %v5434 = vrot.slane %v5274, 1
        %v5435 = vrot.slane %v5275, 1
        %v5436 = vrot.slane %v5276, 1
        %v5437 = vrot.slane %v5277, 1
        %v5438 = vrot.slane %v5278, 1
        %v5439 = vrot.slane %v5279, 1
        %v5440 = vrot.slane %v5280, 1
        %v5441 = vrot.slane %v5281, 1
        %v5442 = vrot.slane %v5282, 1
        %v5443 = vrot.slane %v5283, 1
        %v5444 = vrot.slane %v5284, 1
        %v5445 = vrot.slane %v5285, 1
        %v5446 = vrot.slane %v5286, 1
        %v5447 = vrot.slane %v5287, 1
        %v5448 = vrot.slane %v5288, 1
        %v5449 = vrot.slane %v5289, 1
        %v5450 = vrot.slane %v5290, 1
        %v5451 = vrot.slane %v5291, 1
        %v5452 = vrot.slane %v5292, 1
        %v5453 = vrot.slane %v5293, 1
        %v5454 = vrot.slane %v5294, 1
        %v5455 = vrot.slane %v5295, 1
        %v5456 = vsel %vm2331, %v5454, %v5455
        %v5457 = vsel %vm2331, %v5453, %v5454
        %v5458 = vsel %vm2331, %v5452, %v5453
        %v5459 = vsel %vm2331, %v5451, %v5452
        %v5460 = vsel %vm2331, %v5450, %v5451
        %v5461 = vsel %vm2331, %v5449, %v5450
        %v5462 = vsel %vm2331, %v5448, %v5449
        %v5463 = vsel %vm2331, %v5447, %v5448
        %v5464 = vsel %vm2331, %v5446, %v5447
        %v5465 = vsel %vm2331, %v5445, %v5446
        %v5466 = vsel %vm2331, %v5444, %v5445
        %v5467 = vsel %vm2331, %v5443, %v5444
        %v5468 = vsel %vm2331, %v5442, %v5443
        %v5469 = vsel %vm2331, %v5441, %v5442
        %v5470 = vsel %vm2331, %v5440, %v5441
        %v5471 = vsel %vm2331, %v5439, %v5440
        %v5472 = vsel %vm2331, %v5438, %v5439
        %v5473 = vsel %vm2331, %v5437, %v5438
        %v5474 = vsel %vm2331, %v5436, %v5437
        %v5475 = vsel %vm2331, %v5435, %v5436
        %v5476 = vsel %vm2331, %v5434, %v5435
        %v5477 = vsel %vm2331, %v5433, %v5434
        %v5478 = vsel %vm2331, %v5432, %v5433
        %v5479 = vsel %vm2331, %v5431, %v5432
        %v5480 = vsel %vm2331, %v5430, %v5431
        %v5481 = vsel %vm2331, %v5429, %v5430
        %v5482 = vsel %vm2331, %v5428, %v5429
        %v5483 = vsel %vm2331, %v5427, %v5428
        %v5484 = vsel %vm2331, %v5426, %v5427
        %v5485 = vsel %vm2331, %v5425, %v5426
        %v5486 = vsel %vm2331, %v5424, %v5425
        %v5487 = vsel %vm2331, %v5455, %v5424
        %v5488 = vmul.f32 %v1188, %v5486
        %v5489 = vmul.f32 %v1189, %v5485
        %v5490 = vmul.f32 %v1190, %v5484
        %v5491 = vmul.f32 %v1191, %v5483
        %v5492 = vmul.f32 %v1192, %v5482
        %v5493 = vmul.f32 %v1193, %v5481
        %v5494 = vmul.f32 %v1194, %v5480
        %v5495 = vmul.f32 %v1195, %v5479
        %v5496 = vmul.f32 %v1196, %v5478
        %v5497 = vmul.f32 %v1197, %v5477
        %v5498 = vmul.f32 %v1198, %v5476
        %v5499 = vmul.f32 %v1199, %v5475
        %v5500 = vmul.f32 %v1200, %v5474
        %v5501 = vmul.f32 %v1201, %v5473
        %v5502 = vmul.f32 %v1202, %v5472
        %v5503 = vmul.f32 %v1203, %v5471
        %v5504 = vmul.f32 %v1204, %v5470
        %v5505 = vmul.f32 %v1205, %v5469
        %v5506 = vmul.f32 %v1206, %v5468
        %v5507 = vmul.f32 %v1207, %v5467
        %v5508 = vmul.f32 %v1208, %v5466
        %v5509 = vmul.f32 %v1209, %v5465
        %v5510 = vmul.f32 %v1210, %v5464
        %v5511 = vmul.f32 %v1211, %v5463
        %v5512 = vmul.f32 %v1212, %v5462
        %v5513 = vmul.f32 %v1213, %v5461
        %v5514 = vmul.f32 %v1214, %v5460
        %v5515 = vmul.f32 %v1215, %v5459
        %v5516 = vmul.f32 %v1216, %v5458
        %v5517 = vmul.f32 %v1217, %v5457
        %v5518 = vmul.f32 %v1218, %v5456
        %v5519 = vmul.f32 %v1219, %v5487
        %v5520 = vpack.c.bf16 %v5488, %v5488
        %v5521 = vpack.c.bf16 %v5489, %v5489
        %v5522 = vpack.c.bf16 %v5490, %v5490
        %v5523 = vpack.c.bf16 %v5491, %v5491
        %v5524 = vpack.c.bf16 %v5492, %v5492
        %v5525 = vpack.c.bf16 %v5493, %v5493
        %v5526 = vpack.c.bf16 %v5494, %v5494
        %v5527 = vpack.c.bf16 %v5495, %v5495
        %v5528 = vpack.c.bf16 %v5496, %v5496
        %v5529 = vpack.c.bf16 %v5497, %v5497
        %v5530 = vpack.c.bf16 %v5498, %v5498
        %v5531 = vpack.c.bf16 %v5499, %v5499
        %v5532 = vpack.c.bf16 %v5500, %v5500
        %v5533 = vpack.c.bf16 %v5501, %v5501
        %v5534 = vpack.c.bf16 %v5502, %v5502
        %v5535 = vpack.c.bf16 %v5503, %v5503
        %v5536 = vpack.c.bf16 %v5504, %v5504
        %v5537 = vpack.c.bf16 %v5505, %v5505
        %v5538 = vpack.c.bf16 %v5506, %v5506
        %v5539 = vpack.c.bf16 %v5507, %v5507
        %v5540 = vpack.c.bf16 %v5508, %v5508
        %v5541 = vpack.c.bf16 %v5509, %v5509
        %v5542 = vpack.c.bf16 %v5510, %v5510
        %v5543 = vpack.c.bf16 %v5511, %v5511
        %v5544 = vpack.c.bf16 %v5512, %v5512
        %v5545 = vpack.c.bf16 %v5513, %v5513
        %v5546 = vpack.c.bf16 %v5514, %v5514
        %v5547 = vpack.c.bf16 %v5515, %v5515
        %v5548 = vpack.c.bf16 %v5516, %v5516
        %v5549 = vpack.c.bf16 %v5517, %v5517
        %v5550 = vpack.c.bf16 %v5518, %v5518
        %v5551 = vpack.c.bf16 %v5519, %v5519
        %5552 = vst [vmem:[#allocation2] sm:$0xf] %v5392
        %5553 = vst [vmem:[#allocation2 + $0xc] sm:$0xf] %v5393
        %5554 = vst [vmem:[#allocation2 + $0x18] sm:$0xf] %v5394
        %5555 = vst [vmem:[#allocation2 + $0x24] sm:$0xf] %v5395
        %5556 = vst [vmem:[#allocation2 + $0x30] sm:$0xf] %v5396
        %5557 = vst [vmem:[#allocation2 + $0x3c] sm:$0xf] %v5397
        %5558 = vst [vmem:[#allocation2 + $0x48] sm:$0xf] %v5398
        %5559 = vst [vmem:[#allocation2 + $0x54] sm:$0xf] %v5399
        %5560 = vst [vmem:[#allocation2 + $0x60] sm:$0xf] %v5400
        %5561 = vst [vmem:[#allocation2 + $0x6c] sm:$0xf] %v5401
        %5562 = vst [vmem:[#allocation2 + $0x78] sm:$0xf] %v5402
        %5563 = vst [vmem:[#allocation2 + $0x84] sm:$0xf] %v5403
        %5564 = vst [vmem:[#allocation2 + $0x90] sm:$0xf] %v5404
        %5565 = vst [vmem:[#allocation2 + $0x9c] sm:$0xf] %v5405
        %5566 = vst [vmem:[#allocation2 + $0xa8] sm:$0xf] %v5406
        %5567 = vst [vmem:[#allocation2 + $0xb4] sm:$0xf] %v5407
        %5568 = vst [vmem:[#allocation2 + $0xc0] sm:$0xf] %v5408
        %5569 = vst [vmem:[#allocation2 + $0xcc] sm:$0xf] %v5409
        %5570 = vst [vmem:[#allocation2 + $0xd8] sm:$0xf] %v5410
        %5571 = vst [vmem:[#allocation2 + $0xe4] sm:$0xf] %v5411
        %5572 = vst [vmem:[#allocation2 + $0xf0] sm:$0xf] %v5412
        %5573 = vst [vmem:[#allocation2 + $0xfc] sm:$0xf] %v5413
        %5574 = vst [vmem:[#allocation2 + $0x108] sm:$0xf] %v5414
        %5575 = vst [vmem:[#allocation2 + $0x114] sm:$0xf] %v5415
        %5576 = vst [vmem:[#allocation2 + $0x120] sm:$0xf] %v5416
        %5577 = vst [vmem:[#allocation2 + $0x12c] sm:$0xf] %v5417
        %5578 = vst [vmem:[#allocation2 + $0x138] sm:$0xf] %v5418
        %5579 = vst [vmem:[#allocation2 + $0x144] sm:$0xf] %v5419
        %5580 = vst [vmem:[#allocation2 + $0x150] sm:$0xf] %v5420
        %5581 = vst [vmem:[#allocation2 + $0x15c] sm:$0xf] %v5421
        %5582 = vst [vmem:[#allocation2 + $0x168] sm:$0xf] %v5422
        %5583 = vst [vmem:[#allocation2 + $0x174] sm:$0xf] %v5423
        %v5584 = vpack.c.bf16 %v5264, %v5264
        %v5585 = vpack.c.bf16 %v5265, %v5265
        %v5586 = vpack.c.bf16 %v5266, %v5266
        %v5587 = vpack.c.bf16 %v5267, %v5267
        %v5588 = vpack.c.bf16 %v5268, %v5268
        %v5589 = vpack.c.bf16 %v5269, %v5269
        %v5590 = vpack.c.bf16 %v5270, %v5270
        %v5591 = vpack.c.bf16 %v5271, %v5271
        %v5592 = vpack.c.bf16 %v5272, %v5272
        %v5593 = vpack.c.bf16 %v5273, %v5273
        %v5594 = vpack.c.bf16 %v5274, %v5274
        %v5595 = vpack.c.bf16 %v5275, %v5275
        %v5596 = vpack.c.bf16 %v5276, %v5276
        %v5597 = vpack.c.bf16 %v5277, %v5277
        %v5598 = vpack.c.bf16 %v5278, %v5278
        %v5599 = vpack.c.bf16 %v5279, %v5279
        %v5600 = vpack.c.bf16 %v5280, %v5280
        %v5601 = vpack.c.bf16 %v5281, %v5281
        %v5602 = vpack.c.bf16 %v5282, %v5282
        %v5603 = vpack.c.bf16 %v5283, %v5283
        %v5604 = vpack.c.bf16 %v5284, %v5284
        %v5605 = vpack.c.bf16 %v5285, %v5285
        %v5606 = vpack.c.bf16 %v5286, %v5286
        %v5607 = vpack.c.bf16 %v5287, %v5287
        %v5608 = vpack.c.bf16 %v5288, %v5288
        %v5609 = vpack.c.bf16 %v5289, %v5289
        %v5610 = vpack.c.bf16 %v5290, %v5290
        %v5611 = vpack.c.bf16 %v5291, %v5291
        %v5612 = vpack.c.bf16 %v5292, %v5292
        %v5613 = vpack.c.bf16 %v5293, %v5293
        %v5614 = vpack.c.bf16 %v5294, %v5294
        %v5615 = vpack.c.bf16 %v5295, %v5295
        %5616 = vst [vmem:[#allocation2 + $0x4] sm:$0xf] %v5584
        %5617 = vst [vmem:[#allocation2 + $0x10] sm:$0xf] %v5585
        %5618 = vst [vmem:[#allocation2 + $0x1c] sm:$0xf] %v5586
        %5619 = vst [vmem:[#allocation2 + $0x28] sm:$0xf] %v5587
        %5620 = vst [vmem:[#allocation2 + $0x34] sm:$0xf] %v5588
        %5621 = vst [vmem:[#allocation2 + $0x40] sm:$0xf] %v5589
        %5622 = vst [vmem:[#allocation2 + $0x4c] sm:$0xf] %v5590
        %5623 = vst [vmem:[#allocation2 + $0x58] sm:$0xf] %v5591
        %5624 = vst [vmem:[#allocation2 + $0x64] sm:$0xf] %v5592
        %5625 = vst [vmem:[#allocation2 + $0x70] sm:$0xf] %v5593
        %5626 = vst [vmem:[#allocation2 + $0x7c] sm:$0xf] %v5594
        %5627 = vst [vmem:[#allocation2 + $0x88] sm:$0xf] %v5595
        %5628 = vst [vmem:[#allocation2 + $0x94] sm:$0xf] %v5596
        %5629 = vst [vmem:[#allocation2 + $0xa0] sm:$0xf] %v5597
        %5630 = vst [vmem:[#allocation2 + $0xac] sm:$0xf] %v5598
        %5631 = vst [vmem:[#allocation2 + $0xb8] sm:$0xf] %v5599
        %5632 = vst [vmem:[#allocation2 + $0xc4] sm:$0xf] %v5600
        %5633 = vst [vmem:[#allocation2 + $0xd0] sm:$0xf] %v5601
        %5634 = vst [vmem:[#allocation2 + $0xdc] sm:$0xf] %v5602
        %5635 = vst [vmem:[#allocation2 + $0xe8] sm:$0xf] %v5603
        %5636 = vst [vmem:[#allocation2 + $0xf4] sm:$0xf] %v5604
        %5637 = vst [vmem:[#allocation2 + $0x100] sm:$0xf] %v5605
        %5638 = vst [vmem:[#allocation2 + $0x10c] sm:$0xf] %v5606
        %5639 = vst [vmem:[#allocation2 + $0x118] sm:$0xf] %v5607
        %5640 = vst [vmem:[#allocation2 + $0x124] sm:$0xf] %v5608
        %5641 = vst [vmem:[#allocation2 + $0x130] sm:$0xf] %v5609
        %5642 = vst [vmem:[#allocation2 + $0x13c] sm:$0xf] %v5610
        %5643 = vst [vmem:[#allocation2 + $0x148] sm:$0xf] %v5611
        %5644 = vst [vmem:[#allocation2 + $0x154] sm:$0xf] %v5612
        %5645 = vst [vmem:[#allocation2 + $0x160] sm:$0xf] %v5613
        %5646 = vst [vmem:[#allocation2 + $0x16c] sm:$0xf] %v5614
        %5647 = vst [vmem:[#allocation2 + $0x178] sm:$0xf] %v5615
        %5648 = vst [vmem:[#allocation2 + $0x8] sm:$0xf] %v5520
        %5649 = vst [vmem:[#allocation2 + $0x14] sm:$0xf] %v5521
        %5650 = vst [vmem:[#allocation2 + $0x20] sm:$0xf] %v5522
        %5651 = vst [vmem:[#allocation2 + $0x2c] sm:$0xf] %v5523
        %5652 = vst [vmem:[#allocation2 + $0x38] sm:$0xf] %v5524
        %5653 = vst [vmem:[#allocation2 + $0x44] sm:$0xf] %v5525
        %5654 = vst [vmem:[#allocation2 + $0x50] sm:$0xf] %v5526
        %5655 = vst [vmem:[#allocation2 + $0x5c] sm:$0xf] %v5527
        %5656 = vst [vmem:[#allocation2 + $0x68] sm:$0xf] %v5528
        %5657 = vst [vmem:[#allocation2 + $0x74] sm:$0xf] %v5529
        %5658 = vst [vmem:[#allocation2 + $0x80] sm:$0xf] %v5530
        %5659 = vst [vmem:[#allocation2 + $0x8c] sm:$0xf] %v5531
        %5660 = vst [vmem:[#allocation2 + $0x98] sm:$0xf] %v5532
        %5661 = vst [vmem:[#allocation2 + $0xa4] sm:$0xf] %v5533
        %5662 = vst [vmem:[#allocation2 + $0xb0] sm:$0xf] %v5534
        %5663 = vst [vmem:[#allocation2 + $0xbc] sm:$0xf] %v5535
        %5664 = vst [vmem:[#allocation2 + $0xc8] sm:$0xf] %v5536
        %5665 = vst [vmem:[#allocation2 + $0xd4] sm:$0xf] %v5537
        %5666 = vst [vmem:[#allocation2 + $0xe0] sm:$0xf] %v5538
        %5667 = vst [vmem:[#allocation2 + $0xec] sm:$0xf] %v5539
        %5668 = vst [vmem:[#allocation2 + $0xf8] sm:$0xf] %v5540
        %5669 = vst [vmem:[#allocation2 + $0x104] sm:$0xf] %v5541
        %5670 = vst [vmem:[#allocation2 + $0x110] sm:$0xf] %v5542
        %5671 = vst [vmem:[#allocation2 + $0x11c] sm:$0xf] %v5543
        %5672 = vst [vmem:[#allocation2 + $0x128] sm:$0xf] %v5544
        %5673 = vst [vmem:[#allocation2 + $0x134] sm:$0xf] %v5545
        %5674 = vst [vmem:[#allocation2 + $0x140] sm:$0xf] %v5546
        %5675 = vst [vmem:[#allocation2 + $0x14c] sm:$0xf] %v5547
        %5676 = vst [vmem:[#allocation2 + $0x158] sm:$0xf] %v5548
        %5677 = vst [vmem:[#allocation2 + $0x164] sm:$0xf] %v5549
        %5678 = vst [vmem:[#allocation2 + $0x170] sm:$0xf] %v5550
        %5679 = vst [vmem:[#allocation2 + $0x17c] sm:$0xf] %v5551
        %v5680 = vld [vmem:[#allocation2] sm:$0xff]
        %v5681 = vld [vmem:[#allocation2 + $0x8] sm:$0xf]
        %v5682 = vld [vmem:[#allocation2 + $0xc] sm:$0xff]
        %v5683 = vld [vmem:[#allocation2 + $0x14] sm:$0xf]
        %v5684 = vld [vmem:[#allocation2 + $0x18] sm:$0xff]
        %v5685 = vld [vmem:[#allocation2 + $0x20] sm:$0xf]
        %v5686 = vld [vmem:[#allocation2 + $0x24] sm:$0xff]
        %v5687 = vld [vmem:[#allocation2 + $0x2c] sm:$0xf]
        %v5688 = vld [vmem:[#allocation2 + $0x30] sm:$0xff]
        %v5689 = vld [vmem:[#allocation2 + $0x38] sm:$0xf]
        %v5690 = vld [vmem:[#allocation2 + $0x3c] sm:$0xff]
        %v5691 = vld [vmem:[#allocation2 + $0x44] sm:$0xf]
        %v5692 = vld [vmem:[#allocation2 + $0x48] sm:$0xff]
        %v5693 = vld [vmem:[#allocation2 + $0x50] sm:$0xf]
        %v5694 = vld [vmem:[#allocation2 + $0x54] sm:$0xff]
        %v5695 = vld [vmem:[#allocation2 + $0x5c] sm:$0xf]
        %v5696 = vld [vmem:[#allocation2 + $0x60] sm:$0xff]
        %v5697 = vld [vmem:[#allocation2 + $0x68] sm:$0xf]
        %v5698 = vld [vmem:[#allocation2 + $0x6c] sm:$0xff]
        %v5699 = vld [vmem:[#allocation2 + $0x74] sm:$0xf]
        %v5700 = vld [vmem:[#allocation2 + $0x78] sm:$0xff]
        %v5701 = vld [vmem:[#allocation2 + $0x80] sm:$0xf]
        %v5702 = vld [vmem:[#allocation2 + $0x84] sm:$0xff]
        %v5703 = vld [vmem:[#allocation2 + $0x8c] sm:$0xf]
        %v5704 = vld [vmem:[#allocation2 + $0x90] sm:$0xff]
        %v5705 = vld [vmem:[#allocation2 + $0x98] sm:$0xf]
        %v5706 = vld [vmem:[#allocation2 + $0x9c] sm:$0xff]
        %v5707 = vld [vmem:[#allocation2 + $0xa4] sm:$0xf]
        %v5708 = vld [vmem:[#allocation2 + $0xa8] sm:$0xff]
        %v5709 = vld [vmem:[#allocation2 + $0xb0] sm:$0xf]
        %v5710 = vld [vmem:[#allocation2 + $0xb4] sm:$0xff]
        %v5711 = vld [vmem:[#allocation2 + $0xbc] sm:$0xf]
        %v5712 = vld [vmem:[#allocation2 + $0xc0] sm:$0xff]
        %v5713 = vld [vmem:[#allocation2 + $0xc8] sm:$0xf]
        %v5714 = vld [vmem:[#allocation2 + $0xcc] sm:$0xff]
        %v5715 = vld [vmem:[#allocation2 + $0xd4] sm:$0xf]
        %v5716 = vld [vmem:[#allocation2 + $0xd8] sm:$0xff]
        %v5717 = vld [vmem:[#allocation2 + $0xe0] sm:$0xf]
        %v5718 = vld [vmem:[#allocation2 + $0xe4] sm:$0xff]
        %v5719 = vld [vmem:[#allocation2 + $0xec] sm:$0xf]
        %v5720 = vld [vmem:[#allocation2 + $0xf0] sm:$0xff]
        %v5721 = vld [vmem:[#allocation2 + $0xf8] sm:$0xf]
        %v5722 = vld [vmem:[#allocation2 + $0xfc] sm:$0xff]
        %v5723 = vld [vmem:[#allocation2 + $0x104] sm:$0xf]
        %v5724 = vld [vmem:[#allocation2 + $0x108] sm:$0xff]
        %v5725 = vld [vmem:[#allocation2 + $0x110] sm:$0xf]
        %v5726 = vld [vmem:[#allocation2 + $0x114] sm:$0xff]
        %v5727 = vld [vmem:[#allocation2 + $0x11c] sm:$0xf]
        %v5728 = vld [vmem:[#allocation2 + $0x120] sm:$0xff]
        %v5729 = vld [vmem:[#allocation2 + $0x128] sm:$0xf]
        %v5730 = vld [vmem:[#allocation2 + $0x12c] sm:$0xff]
        %v5731 = vld [vmem:[#allocation2 + $0x134] sm:$0xf]
        %v5732 = vld [vmem:[#allocation2 + $0x138] sm:$0xff]
        %v5733 = vld [vmem:[#allocation2 + $0x140] sm:$0xf]
        %v5734 = vld [vmem:[#allocation2 + $0x144] sm:$0xff]
        %v5735 = vld [vmem:[#allocation2 + $0x14c] sm:$0xf]
        %v5736 = vld [vmem:[#allocation2 + $0x150] sm:$0xff]
        %v5737 = vld [vmem:[#allocation2 + $0x158] sm:$0xf]
        %v5738 = vld [vmem:[#allocation2 + $0x15c] sm:$0xff]
        %v5739 = vld [vmem:[#allocation2 + $0x164] sm:$0xf]
        %v5740 = vld [vmem:[#allocation2 + $0x168] sm:$0xff]
        %v5741 = vld [vmem:[#allocation2 + $0x170] sm:$0xf]
        %v5742 = vld [vmem:[#allocation2 + $0x174] sm:$0xff]
        %v5743 = vld [vmem:[#allocation2 + $0x17c] sm:$0xf]
        %v5744 = vld [vmem:[#allocation12] sm:$0xf]
        %v5745 = vld [vmem:[#allocation12 + $0x4] sm:$0xf]
        %v5746 = vld [vmem:[#allocation12 + $0x8] sm:$0xf]
        %v5747 = vld [vmem:[#allocation12 + $0xc] sm:$0xf]
        %v5748 = vld [vmem:[#allocation12 + $0x10] sm:$0xf]
        %v5749 = vld [vmem:[#allocation12 + $0x14] sm:$0xf]
        %v5750 = vld [vmem:[#allocation12 + $0x18] sm:$0xf]
        %v5751 = vld [vmem:[#allocation12 + $0x1c] sm:$0xf]
        %v5752 = vld [vmem:[#allocation12 + $0x20] sm:$0xf]
        %v5753 = vld [vmem:[#allocation12 + $0x24] sm:$0xf]
        %v5754 = vld [vmem:[#allocation12 + $0x28] sm:$0xf]
        %v5755 = vld [vmem:[#allocation12 + $0x2c] sm:$0xf]
        %v5756 = vld [vmem:[#allocation12 + $0x30] sm:$0xf]
        %v5757 = vld [vmem:[#allocation12 + $0x34] sm:$0xf]
        %v5758 = vld [vmem:[#allocation12 + $0x38] sm:$0xf]
        %v5759 = vld [vmem:[#allocation12 + $0x3c] sm:$0xf]
        %v5760 = vld [vmem:[#allocation12 + $0x40] sm:$0xf]
        %v5761 = vld [vmem:[#allocation12 + $0x44] sm:$0xf]
        %v5762 = vld [vmem:[#allocation12 + $0x48] sm:$0xf]
        %v5763 = vld [vmem:[#allocation12 + $0x4c] sm:$0xf]
        %v5764 = vld [vmem:[#allocation12 + $0x50] sm:$0xf]
        %v5765 = vld [vmem:[#allocation12 + $0x54] sm:$0xf]
        %v5766 = vld [vmem:[#allocation12 + $0x58] sm:$0xf]
        %v5767 = vld [vmem:[#allocation12 + $0x5c] sm:$0xf]
        %v5768 = vld [vmem:[#allocation12 + $0x60] sm:$0xf]
        %v5769 = vld [vmem:[#allocation12 + $0x64] sm:$0xf]
        %v5770 = vld [vmem:[#allocation12 + $0x68] sm:$0xf]
        %v5771 = vld [vmem:[#allocation12 + $0x6c] sm:$0xf]
        %v5772 = vld [vmem:[#allocation12 + $0x70] sm:$0xf]
        %v5773 = vld [vmem:[#allocation12 + $0x74] sm:$0xf]
        %v5774 = vld [vmem:[#allocation12 + $0x78] sm:$0xf]
        %v5775 = vld [vmem:[#allocation12 + $0x7c] sm:$0xf]
        %v5776 = vld [vmem:[#allocation12 + $0x80] sm:$0xf]
        %v5777 = vld [vmem:[#allocation12 + $0x84] sm:$0xf]
        %v5778 = vld [vmem:[#allocation12 + $0x88] sm:$0xf]
        %v5779 = vld [vmem:[#allocation12 + $0x8c] sm:$0xf]
        %v5780 = vld [vmem:[#allocation12 + $0x90] sm:$0xf]
        %v5781 = vld [vmem:[#allocation12 + $0x94] sm:$0xf]
        %v5782 = vld [vmem:[#allocation12 + $0x98] sm:$0xf]
        %v5783 = vld [vmem:[#allocation12 + $0x9c] sm:$0xf]
        %v5784 = vld [vmem:[#allocation12 + $0xa0] sm:$0xf]
        %v5785 = vld [vmem:[#allocation12 + $0xa4] sm:$0xf]
        %v5786 = vld [vmem:[#allocation12 + $0xa8] sm:$0xf]
        %v5787 = vld [vmem:[#allocation12 + $0xac] sm:$0xf]
        %v5788 = vld [vmem:[#allocation12 + $0xb0] sm:$0xf]
        %v5789 = vld [vmem:[#allocation12 + $0xb4] sm:$0xf]
        %v5790 = vld [vmem:[#allocation12 + $0xb8] sm:$0xf]
        %v5791 = vld [vmem:[#allocation12 + $0xbc] sm:$0xf]
        %v5856 = vunpack.c.l.b16 %v5680
        %v5857 = vunpack.c.h.b16 %v5680
        %v5858 = vunpack.c.l.b16 %v5681
        %v5859 = vunpack.c.l.b16 %v5682
        %v5860 = vunpack.c.h.b16 %v5682
        %v5861 = vunpack.c.l.b16 %v5683
        %v5862 = vunpack.c.l.b16 %v5684
        %v5863 = vunpack.c.h.b16 %v5684
        %v5864 = vunpack.c.l.b16 %v5685
        %v5865 = vunpack.c.l.b16 %v5686
        %v5866 = vunpack.c.h.b16 %v5686
        %v5867 = vunpack.c.l.b16 %v5687
        %v5868 = vunpack.c.l.b16 %v5688
        %v5869 = vunpack.c.h.b16 %v5688
        %v5870 = vunpack.c.l.b16 %v5689
        %v5871 = vunpack.c.l.b16 %v5690
        %v5872 = vunpack.c.h.b16 %v5690
        %v5873 = vunpack.c.l.b16 %v5691
        %v5874 = vunpack.c.l.b16 %v5692
        %v5875 = vunpack.c.h.b16 %v5692
        %v5876 = vunpack.c.l.b16 %v5693
        %v5877 = vunpack.c.l.b16 %v5694
        %v5878 = vunpack.c.h.b16 %v5694
        %v5879 = vunpack.c.l.b16 %v5695
        %v5880 = vunpack.c.l.b16 %v5696
        %v5881 = vunpack.c.h.b16 %v5696
        %v5882 = vunpack.c.l.b16 %v5697
        %v5883 = vunpack.c.l.b16 %v5698
        %v5884 = vunpack.c.h.b16 %v5698
        %v5885 = vunpack.c.l.b16 %v5699
        %v5886 = vunpack.c.l.b16 %v5700
        %v5887 = vunpack.c.h.b16 %v5700
        %v5888 = vunpack.c.l.b16 %v5701
        %v5889 = vunpack.c.l.b16 %v5702
        %v5890 = vunpack.c.h.b16 %v5702
        %v5891 = vunpack.c.l.b16 %v5703
        %v5892 = vunpack.c.l.b16 %v5704
        %v5893 = vunpack.c.h.b16 %v5704
        %v5894 = vunpack.c.l.b16 %v5705
        %v5895 = vunpack.c.l.b16 %v5706
        %v5896 = vunpack.c.h.b16 %v5706
        %v5897 = vunpack.c.l.b16 %v5707
        %v5898 = vunpack.c.l.b16 %v5708
        %v5899 = vunpack.c.h.b16 %v5708
        %v5900 = vunpack.c.l.b16 %v5709
        %v5901 = vunpack.c.l.b16 %v5710
        %v5902 = vunpack.c.h.b16 %v5710
        %v5903 = vunpack.c.l.b16 %v5711
        %v5904 = vunpack.c.l.b16 %v5712
        %v5905 = vunpack.c.h.b16 %v5712
        %v5906 = vunpack.c.l.b16 %v5713
        %v5907 = vunpack.c.l.b16 %v5714
        %v5908 = vunpack.c.h.b16 %v5714
        %v5909 = vunpack.c.l.b16 %v5715
        %v5910 = vunpack.c.l.b16 %v5716
        %v5911 = vunpack.c.h.b16 %v5716
        %v5912 = vunpack.c.l.b16 %v5717
        %v5913 = vunpack.c.l.b16 %v5718
        %v5914 = vunpack.c.h.b16 %v5718
        %v5915 = vunpack.c.l.b16 %v5719
        %v5916 = vunpack.c.l.b16 %v5720
        %v5917 = vunpack.c.h.b16 %v5720
        %v5918 = vunpack.c.l.b16 %v5721
        %v5919 = vunpack.c.l.b16 %v5722
        %v5920 = vunpack.c.h.b16 %v5722
        %v5921 = vunpack.c.l.b16 %v5723
        %v5922 = vunpack.c.l.b16 %v5724
        %v5923 = vunpack.c.h.b16 %v5724
        %v5924 = vunpack.c.l.b16 %v5725
        %v5925 = vunpack.c.l.b16 %v5726
        %v5926 = vunpack.c.h.b16 %v5726
        %v5927 = vunpack.c.l.b16 %v5727
        %v5928 = vunpack.c.l.b16 %v5728
        %v5929 = vunpack.c.h.b16 %v5728
        %v5930 = vunpack.c.l.b16 %v5729
        %v5931 = vunpack.c.l.b16 %v5730
        %v5932 = vunpack.c.h.b16 %v5730
        %v5933 = vunpack.c.l.b16 %v5731
        %v5934 = vunpack.c.l.b16 %v5732
        %v5935 = vunpack.c.h.b16 %v5732
        %v5936 = vunpack.c.l.b16 %v5733
        %v5937 = vunpack.c.l.b16 %v5734
        %v5938 = vunpack.c.h.b16 %v5734
        %v5939 = vunpack.c.l.b16 %v5735
        %v5940 = vunpack.c.l.b16 %v5736
        %v5941 = vunpack.c.h.b16 %v5736
        %v5942 = vunpack.c.l.b16 %v5737
        %v5943 = vunpack.c.l.b16 %v5738
        %v5944 = vunpack.c.h.b16 %v5738
        %v5945 = vunpack.c.l.b16 %v5739
        %v5946 = vunpack.c.l.b16 %v5740
        %v5947 = vunpack.c.h.b16 %v5740
        %v5948 = vunpack.c.l.b16 %v5741
        %v5949 = vunpack.c.l.b16 %v5742
        %v5950 = vunpack.c.h.b16 %v5742
        %v5951 = vunpack.c.l.b16 %v5743
        %v5952 = vpack.c.b16 %v5859, %v5856
        %v5953 = vpack.c.b16 %v5860, %v5857
        %v5954 = vpack.c.b16 %v5861, %v5858
        %v5955 = vpack.c.b16 %v5865, %v5862
        %v5956 = vpack.c.b16 %v5866, %v5863
        %v5957 = vpack.c.b16 %v5867, %v5864
        %v5958 = vpack.c.b16 %v5871, %v5868
        %v5959 = vpack.c.b16 %v5872, %v5869
        %v5960 = vpack.c.b16 %v5873, %v5870
        %v5961 = vpack.c.b16 %v5877, %v5874
        %v5962 = vpack.c.b16 %v5878, %v5875
        %v5963 = vpack.c.b16 %v5879, %v5876
        %v5964 = vpack.c.b16 %v5883, %v5880
        %v5965 = vpack.c.b16 %v5884, %v5881
        %v5966 = vpack.c.b16 %v5885, %v5882
        %v5967 = vpack.c.b16 %v5889, %v5886
        %v5968 = vpack.c.b16 %v5890, %v5887
        %v5969 = vpack.c.b16 %v5891, %v5888
        %v5970 = vpack.c.b16 %v5895, %v5892
        %v5971 = vpack.c.b16 %v5896, %v5893
        %v5972 = vpack.c.b16 %v5897, %v5894
        %v5973 = vpack.c.b16 %v5901, %v5898
        %v5974 = vpack.c.b16 %v5902, %v5899
        %v5975 = vpack.c.b16 %v5903, %v5900
        %v5976 = vpack.c.b16 %v5907, %v5904
        %v5977 = vpack.c.b16 %v5908, %v5905
        %v5978 = vpack.c.b16 %v5909, %v5906
        %v5979 = vpack.c.b16 %v5913, %v5910
        %v5980 = vpack.c.b16 %v5914, %v5911
        %v5981 = vpack.c.b16 %v5915, %v5912
        %v5982 = vpack.c.b16 %v5919, %v5916
        %v5983 = vpack.c.b16 %v5920, %v5917
        %v5984 = vpack.c.b16 %v5921, %v5918
        %v5985 = vpack.c.b16 %v5925, %v5922
        %v5986 = vpack.c.b16 %v5926, %v5923
        %v5987 = vpack.c.b16 %v5927, %v5924
        %v5988 = vpack.c.b16 %v5931, %v5928
        %v5989 = vpack.c.b16 %v5932, %v5929
        %v5990 = vpack.c.b16 %v5933, %v5930
        %v5991 = vpack.c.b16 %v5937, %v5934
        %v5992 = vpack.c.b16 %v5938, %v5935
        %v5993 = vpack.c.b16 %v5939, %v5936
        %v5994 = vpack.c.b16 %v5943, %v5940
        %v5995 = vpack.c.b16 %v5944, %v5941
        %v5996 = vpack.c.b16 %v5945, %v5942
        %v5997 = vpack.c.b16 %v5949, %v5946
        %v5998 = vpack.c.b16 %v5950, %v5947
        %v5999 = vpack.c.b16 %v5951, %v5948
        %v6096 = vunpack.c.l.b16 %v5744
        %v6097 = vunpack.c.l.b16 %v5745
        %v6098 = vunpack.c.l.b16 %v5746
        %v6099 = vunpack.c.l.b16 %v5747
        %v6100 = vunpack.c.l.b16 %v5748
        %v6101 = vunpack.c.l.b16 %v5749
        %v6102 = vunpack.c.l.b16 %v5750
        %v6103 = vunpack.c.l.b16 %v5751
        %v6104 = vunpack.c.l.b16 %v5752
        %v6105 = vunpack.c.l.b16 %v5753
        %v6106 = vunpack.c.l.b16 %v5754
        %v6107 = vunpack.c.l.b16 %v5755
        %v6108 = vunpack.c.l.b16 %v5756
        %v6109 = vunpack.c.l.b16 %v5757
        %v6110 = vunpack.c.l.b16 %v5758
        %v6111 = vunpack.c.l.b16 %v5759
        %v6112 = vunpack.c.l.b16 %v5760
        %v6113 = vunpack.c.l.b16 %v5761
        %v6114 = vunpack.c.l.b16 %v5762
        %v6115 = vunpack.c.l.b16 %v5763
        %v6116 = vunpack.c.l.b16 %v5764
        %v6117 = vunpack.c.l.b16 %v5765
        %v6118 = vunpack.c.l.b16 %v5766
        %v6119 = vunpack.c.l.b16 %v5767
        %v6120 = vunpack.c.l.b16 %v5768
        %v6121 = vunpack.c.l.b16 %v5769
        %v6122 = vunpack.c.l.b16 %v5770
        %v6123 = vunpack.c.l.b16 %v5771
        %v6124 = vunpack.c.l.b16 %v5772
        %v6125 = vunpack.c.l.b16 %v5773
        %v6126 = vunpack.c.l.b16 %v5774
        %v6127 = vunpack.c.l.b16 %v5775
        %v6128 = vunpack.c.l.b16 %v5776
        %v6129 = vunpack.c.l.b16 %v5777
        %v6130 = vunpack.c.l.b16 %v5778
        %v6131 = vunpack.c.l.b16 %v5779
        %v6132 = vunpack.c.l.b16 %v5780
        %v6133 = vunpack.c.l.b16 %v5781
        %v6134 = vunpack.c.l.b16 %v5782
        %v6135 = vunpack.c.l.b16 %v5783
        %v6136 = vunpack.c.l.b16 %v5784
        %v6137 = vunpack.c.l.b16 %v5785
        %v6138 = vunpack.c.l.b16 %v5786
        %v6139 = vunpack.c.l.b16 %v5787
        %v6140 = vunpack.c.l.b16 %v5788
        %v6141 = vunpack.c.l.b16 %v5789
        %v6142 = vunpack.c.l.b16 %v5790
        %v6143 = vunpack.c.l.b16 %v5791
        %v6144 = vpack.c.b16 %v6097, %v6096
        %v6145 = vpack.c.b16 %v6099, %v6098
        %v6146 = vpack.c.b16 %v6101, %v6100
        %v6147 = vpack.c.b16 %v6103, %v6102
        %v6148 = vpack.c.b16 %v6105, %v6104
        %v6149 = vpack.c.b16 %v6107, %v6106
        %v6150 = vpack.c.b16 %v6109, %v6108
        %v6151 = vpack.c.b16 %v6111, %v6110
        %v6152 = vpack.c.b16 %v6113, %v6112
        %v6153 = vpack.c.b16 %v6115, %v6114
        %v6154 = vpack.c.b16 %v6117, %v6116
        %v6155 = vpack.c.b16 %v6119, %v6118
        %v6156 = vpack.c.b16 %v6121, %v6120
        %v6157 = vpack.c.b16 %v6123, %v6122
        %v6158 = vpack.c.b16 %v6125, %v6124
        %v6159 = vpack.c.b16 %v6127, %v6126
        %v6160 = vpack.c.b16 %v6129, %v6128
        %v6161 = vpack.c.b16 %v6131, %v6130
        %v6162 = vpack.c.b16 %v6133, %v6132
        %v6163 = vpack.c.b16 %v6135, %v6134
        %v6164 = vpack.c.b16 %v6137, %v6136
        %v6165 = vpack.c.b16 %v6139, %v6138
        %v6166 = vpack.c.b16 %v6141, %v6140
        %v6167 = vpack.c.b16 %v6143, %v6142
        %6192 = vmatpush.bf16.msra.mxu0 %v6151
        %6193 = vmatpush.bf16.msra.mxu0 %v6150
        %6194 = vmatpush.bf16.msra.mxu0 %v6149
        %6195 = vmatpush.bf16.msra.mxu0 %v6148
        %6196 = vmatpush.bf16.msra.mxu0 %v6147
        %6197 = vmatpush.bf16.msra.mxu0 %v6146
        %6198 = vmatpush.bf16.msra.mxu0 %v6145
        %6199 = vmatpush.bf16.msra.mxu0 %v6144
        %6200 = vmatmul.bf16.gmra.mxu0 %v5952
        %v6201 = vpop.f32.mrf.mxu0
        %v6202 = vadd.f32 0.0, %v6201
        %v6203 = vpop.f32.mrf.mxu0
        %v6204 = vadd.f32 0.0, %v6203
        %6205 = vmatmul.bf16.gmra.mxu0 %v5955
        %v6206 = vpop.f32.mrf.mxu0
        %v6207 = vadd.f32 0.0, %v6206
        %v6208 = vpop.f32.mrf.mxu0
        %v6209 = vadd.f32 0.0, %v6208
        %6210 = vmatmul.bf16.gmra.mxu0 %v5958
        %v6211 = vpop.f32.mrf.mxu0
        %v6212 = vadd.f32 0.0, %v6211
        %v6213 = vpop.f32.mrf.mxu0
        %v6214 = vadd.f32 0.0, %v6213
        %6215 = vmatmul.bf16.gmra.mxu0 %v5961
        %v6216 = vpop.f32.mrf.mxu0
        %v6217 = vadd.f32 0.0, %v6216
        %v6218 = vpop.f32.mrf.mxu0
        %v6219 = vadd.f32 0.0, %v6218
        %6220 = vmatmul.bf16.gmra.mxu0 %v5964
        %v6221 = vpop.f32.mrf.mxu0
        %v6222 = vadd.f32 0.0, %v6221
        %v6223 = vpop.f32.mrf.mxu0
        %v6224 = vadd.f32 0.0, %v6223
        %6225 = vmatmul.bf16.gmra.mxu0 %v5967
        %v6226 = vpop.f32.mrf.mxu0
        %v6227 = vadd.f32 0.0, %v6226
        %v6228 = vpop.f32.mrf.mxu0
        %v6229 = vadd.f32 0.0, %v6228
        %6230 = vmatmul.bf16.gmra.mxu0 %v5970
        %v6231 = vpop.f32.mrf.mxu0
        %v6232 = vadd.f32 0.0, %v6231
        %v6233 = vpop.f32.mrf.mxu0
        %v6234 = vadd.f32 0.0, %v6233
        %6235 = vmatmul.bf16.gmra.mxu0 %v5973
        %v6236 = vpop.f32.mrf.mxu0
        %v6237 = vadd.f32 0.0, %v6236
        %v6238 = vpop.f32.mrf.mxu0
        %v6239 = vadd.f32 0.0, %v6238
        %6240 = vmatmul.bf16.gmra.mxu0 %v5976
        %v6241 = vpop.f32.mrf.mxu0
        %v6242 = vadd.f32 0.0, %v6241
        %v6243 = vpop.f32.mrf.mxu0
        %v6244 = vadd.f32 0.0, %v6243
        %6245 = vmatmul.bf16.gmra.mxu0 %v5979
        %v6246 = vpop.f32.mrf.mxu0
        %v6247 = vadd.f32 0.0, %v6246
        %v6248 = vpop.f32.mrf.mxu0
        %v6249 = vadd.f32 0.0, %v6248
        %6250 = vmatmul.bf16.gmra.mxu0 %v5982
        %v6251 = vpop.f32.mrf.mxu0
        %v6252 = vadd.f32 0.0, %v6251
        %v6253 = vpop.f32.mrf.mxu0
        %v6254 = vadd.f32 0.0, %v6253
        %6255 = vmatmul.bf16.gmra.mxu0 %v5985
        %v6256 = vpop.f32.mrf.mxu0
        %v6257 = vadd.f32 0.0, %v6256
        %v6258 = vpop.f32.mrf.mxu0
        %v6259 = vadd.f32 0.0, %v6258
        %6260 = vmatmul.bf16.gmra.mxu0 %v5988
        %v6261 = vpop.f32.mrf.mxu0
        %v6262 = vadd.f32 0.0, %v6261
        %v6263 = vpop.f32.mrf.mxu0
        %v6264 = vadd.f32 0.0, %v6263
        %6265 = vmatmul.bf16.gmra.mxu0 %v5991
        %v6266 = vpop.f32.mrf.mxu0
        %v6267 = vadd.f32 0.0, %v6266
        %v6268 = vpop.f32.mrf.mxu0
        %v6269 = vadd.f32 0.0, %v6268
        %6270 = vmatmul.bf16.gmra.mxu0 %v5994
        %v6271 = vpop.f32.mrf.mxu0
        %v6272 = vadd.f32 0.0, %v6271
        %v6273 = vpop.f32.mrf.mxu0
        %v6274 = vadd.f32 0.0, %v6273
        %6275 = vmatmul.bf16.gmra.mxu0 %v5997
        %v6276 = vpop.f32.mrf.mxu0
        %v6277 = vpop.f32.mrf.mxu0
        %6278 = vdwg.mxu0
        %6279 = vmatpush.bf16.msra.mxu0 %v6159
        %6280 = vmatpush.bf16.msra.mxu0 %v6158
        %6281 = vmatpush.bf16.msra.mxu0 %v6157
        %6282 = vmatpush.bf16.msra.mxu0 %v6156
        %6283 = vmatpush.bf16.msra.mxu0 %v6155
        %6284 = vmatpush.bf16.msra.mxu0 %v6154
        %6285 = vmatpush.bf16.msra.mxu0 %v6153
        %6286 = vmatpush.bf16.msra.mxu0 %v6152
        %6287 = vmatmul.bf16.gmra.mxu0 %v5953
        %v6288 = vpop.f32.mrf.mxu0
        %v6289 = vadd.f32 %v6202, %v6288
        %v6290 = vpop.f32.mrf.mxu0
        %v6291 = vadd.f32 %v6204, %v6290
        %6292 = vmatmul.bf16.gmra.mxu0 %v5956
        %v6293 = vpop.f32.mrf.mxu0
        %v6294 = vadd.f32 %v6207, %v6293
        %v6295 = vpop.f32.mrf.mxu0
        %v6296 = vadd.f32 %v6209, %v6295
        %6297 = vmatmul.bf16.gmra.mxu0 %v5959
        %v6298 = vpop.f32.mrf.mxu0
        %v6299 = vadd.f32 %v6212, %v6298
        %v6300 = vpop.f32.mrf.mxu0
        %v6301 = vadd.f32 %v6214, %v6300
        %6302 = vmatmul.bf16.gmra.mxu0 %v5962
        %v6303 = vpop.f32.mrf.mxu0
        %v6304 = vadd.f32 %v6217, %v6303
        %v6305 = vpop.f32.mrf.mxu0
        %v6306 = vadd.f32 %v6219, %v6305
        %6307 = vmatmul.bf16.gmra.mxu0 %v5965
        %v6308 = vpop.f32.mrf.mxu0
        %v6309 = vadd.f32 %v6222, %v6308
        %v6310 = vpop.f32.mrf.mxu0
        %v6311 = vadd.f32 %v6224, %v6310
        %6312 = vmatmul.bf16.gmra.mxu0 %v5968
        %v6313 = vpop.f32.mrf.mxu0
        %v6314 = vadd.f32 %v6227, %v6313
        %v6315 = vpop.f32.mrf.mxu0
        %v6316 = vadd.f32 %v6229, %v6315
        %6317 = vmatmul.bf16.gmra.mxu0 %v5971
        %v6318 = vpop.f32.mrf.mxu0
        %v6319 = vadd.f32 %v6232, %v6318
        %v6320 = vpop.f32.mrf.mxu0
        %v6321 = vadd.f32 %v6234, %v6320
        %6322 = vmatmul.bf16.gmra.mxu0 %v5974
        %v6323 = vpop.f32.mrf.mxu0
        %v6324 = vadd.f32 %v6237, %v6323
        %v6325 = vpop.f32.mrf.mxu0
        %v6326 = vadd.f32 %v6239, %v6325
        %6327 = vmatmul.bf16.gmra.mxu0 %v5977
        %v6328 = vpop.f32.mrf.mxu0
        %v6329 = vadd.f32 %v6242, %v6328
        %v6330 = vpop.f32.mrf.mxu0
        %v6331 = vadd.f32 %v6244, %v6330
        %6332 = vmatmul.bf16.gmra.mxu0 %v5980
        %v6333 = vpop.f32.mrf.mxu0
        %v6334 = vadd.f32 %v6247, %v6333
        %v6335 = vpop.f32.mrf.mxu0
        %v6336 = vadd.f32 %v6249, %v6335
        %6337 = vmatmul.bf16.gmra.mxu0 %v5983
        %v6338 = vpop.f32.mrf.mxu0
        %v6339 = vadd.f32 %v6252, %v6338
        %v6340 = vpop.f32.mrf.mxu0
        %v6341 = vadd.f32 %v6254, %v6340
        %6342 = vmatmul.bf16.gmra.mxu0 %v5986
        %v6343 = vpop.f32.mrf.mxu0
        %v6344 = vadd.f32 %v6257, %v6343
        %v6345 = vpop.f32.mrf.mxu0
        %v6346 = vadd.f32 %v6259, %v6345
        %6347 = vmatmul.bf16.gmra.mxu0 %v5989
        %v6348 = vpop.f32.mrf.mxu0
        %v6349 = vadd.f32 %v6262, %v6348
        %v6350 = vpop.f32.mrf.mxu0
        %v6351 = vadd.f32 %v6264, %v6350
        %6352 = vmatmul.bf16.gmra.mxu0 %v5992
        %v6353 = vpop.f32.mrf.mxu0
        %v6354 = vadd.f32 %v6267, %v6353
        %v6355 = vpop.f32.mrf.mxu0
        %v6356 = vadd.f32 %v6269, %v6355
        %6357 = vmatmul.bf16.gmra.mxu0 %v5995
        %v6358 = vpop.f32.mrf.mxu0
        %v6359 = vadd.f32 %v6272, %v6358
        %v6360 = vpop.f32.mrf.mxu0
        %v6361 = vadd.f32 %v6274, %v6360
        %6362 = vmatmul.bf16.gmra.mxu0 %v5998
        %v6363 = vpop.f32.mrf.mxu0
        %v6364 = vpop.f32.mrf.mxu0
        %6365 = vdwg.mxu0
        %6366 = vmatpush.bf16.msra.mxu0 %v6167
        %6367 = vmatpush.bf16.msra.mxu0 %v6166
        %6368 = vmatpush.bf16.msra.mxu0 %v6165
        %6369 = vmatpush.bf16.msra.mxu0 %v6164
        %6370 = vmatpush.bf16.msra.mxu0 %v6163
        %6371 = vmatpush.bf16.msra.mxu0 %v6162
        %6372 = vmatpush.bf16.msra.mxu0 %v6161
        %6373 = vmatpush.bf16.msra.mxu0 %v6160
        %6374 = vmatmul.bf16.gmra.mxu0 %v5954
        %v6375 = vpop.f32.mrf.mxu0
        %v6376 = vadd.f32 %v6289, %v6375
        %v6377 = vpop.f32.mrf.mxu0
        %v6378 = vadd.f32 %v6291, %v6377
        %6379 = vmatmul.bf16.gmra.mxu0 %v5957
        %v6380 = vpop.f32.mrf.mxu0
        %v6381 = vadd.f32 %v6294, %v6380
        %v6382 = vpop.f32.mrf.mxu0
        %v6383 = vadd.f32 %v6296, %v6382
        %6384 = vmatmul.bf16.gmra.mxu0 %v5960
        %v6385 = vpop.f32.mrf.mxu0
        %v6386 = vadd.f32 %v6299, %v6385
        %v6387 = vpop.f32.mrf.mxu0
        %v6388 = vadd.f32 %v6301, %v6387
        %6389 = vmatmul.bf16.gmra.mxu0 %v5963
        %v6390 = vpop.f32.mrf.mxu0
        %v6391 = vadd.f32 %v6304, %v6390
        %v6392 = vpop.f32.mrf.mxu0
        %v6393 = vadd.f32 %v6306, %v6392
        %6394 = vmatmul.bf16.gmra.mxu0 %v5966
        %v6395 = vpop.f32.mrf.mxu0
        %v6396 = vadd.f32 %v6309, %v6395
        %v6397 = vpop.f32.mrf.mxu0
        %v6398 = vadd.f32 %v6311, %v6397
        %6399 = vmatmul.bf16.gmra.mxu0 %v5969
        %v6400 = vpop.f32.mrf.mxu0
        %v6401 = vadd.f32 %v6314, %v6400
        %v6402 = vpop.f32.mrf.mxu0
        %v6403 = vadd.f32 %v6316, %v6402
        %6404 = vmatmul.bf16.gmra.mxu0 %v5972
        %v6405 = vpop.f32.mrf.mxu0
        %v6406 = vadd.f32 %v6319, %v6405
        %v6407 = vpop.f32.mrf.mxu0
        %v6408 = vadd.f32 %v6321, %v6407
        %6409 = vmatmul.bf16.gmra.mxu0 %v5975
        %v6410 = vpop.f32.mrf.mxu0
        %v6411 = vadd.f32 %v6324, %v6410
        %v6412 = vpop.f32.mrf.mxu0
        %v6413 = vadd.f32 %v6326, %v6412
        %6414 = vmatmul.bf16.gmra.mxu0 %v5978
        %v6415 = vpop.f32.mrf.mxu0
        %v6416 = vadd.f32 %v6329, %v6415
        %v6417 = vpop.f32.mrf.mxu0
        %v6418 = vadd.f32 %v6331, %v6417
        %6419 = vmatmul.bf16.gmra.mxu0 %v5981
        %v6420 = vpop.f32.mrf.mxu0
        %v6421 = vadd.f32 %v6334, %v6420
        %v6422 = vpop.f32.mrf.mxu0
        %v6423 = vadd.f32 %v6336, %v6422
        %6424 = vmatmul.bf16.gmra.mxu0 %v5984
        %v6425 = vpop.f32.mrf.mxu0
        %v6426 = vadd.f32 %v6339, %v6425
        %v6427 = vpop.f32.mrf.mxu0
        %v6428 = vadd.f32 %v6341, %v6427
        %6429 = vmatmul.bf16.gmra.mxu0 %v5987
        %v6430 = vpop.f32.mrf.mxu0
        %v6431 = vadd.f32 %v6344, %v6430
        %v6432 = vpop.f32.mrf.mxu0
        %v6433 = vadd.f32 %v6346, %v6432
        %6434 = vmatmul.bf16.gmra.mxu0 %v5990
        %v6435 = vpop.f32.mrf.mxu0
        %v6436 = vadd.f32 %v6349, %v6435
        %v6437 = vpop.f32.mrf.mxu0
        %v6438 = vadd.f32 %v6351, %v6437
        %6439 = vmatmul.bf16.gmra.mxu0 %v5993
        %v6440 = vpop.f32.mrf.mxu0
        %v6441 = vadd.f32 %v6354, %v6440
        %v6442 = vpop.f32.mrf.mxu0
        %v6443 = vadd.f32 %v6356, %v6442
        %6444 = vmatmul.bf16.gmra.mxu0 %v5996
        %v6445 = vpop.f32.mrf.mxu0
        %v6446 = vadd.f32 %v6359, %v6445
        %v6447 = vpop.f32.mrf.mxu0
        %v6448 = vadd.f32 %v6361, %v6447
        %6449 = vmatmul.bf16.gmra.mxu0 %v5999
        %v6450 = vpop.f32.mrf.mxu0
        %v6451 = vpop.f32.mrf.mxu0
        %6452 = vdwg.mxu0
        %s6453 = scalar_lea.vmem [#allocation12], 192
        %v6454 = vld [vmem:[%s6453] sm:$0xf]
        %v6455 = vld [vmem:[%s6453 + $0x4] sm:$0xf]
        %v6456 = vld [vmem:[%s6453 + $0x8] sm:$0xf]
        %v6457 = vld [vmem:[%s6453 + $0xc] sm:$0xf]
        %v6458 = vld [vmem:[%s6453 + $0x10] sm:$0xf]
        %v6459 = vld [vmem:[%s6453 + $0x14] sm:$0xf]
        %v6460 = vld [vmem:[%s6453 + $0x18] sm:$0xf]
        %v6461 = vld [vmem:[%s6453 + $0x1c] sm:$0xf]
        %v6462 = vld [vmem:[%s6453 + $0x20] sm:$0xf]
        %v6463 = vld [vmem:[%s6453 + $0x24] sm:$0xf]
        %v6464 = vld [vmem:[%s6453 + $0x28] sm:$0xf]
        %v6465 = vld [vmem:[%s6453 + $0x2c] sm:$0xf]
        %v6466 = vld [vmem:[%s6453 + $0x30] sm:$0xf]
        %v6467 = vld [vmem:[%s6453 + $0x34] sm:$0xf]
        %v6468 = vld [vmem:[%s6453 + $0x38] sm:$0xf]
        %v6469 = vld [vmem:[%s6453 + $0x3c] sm:$0xf]
        %v6470 = vld [vmem:[%s6453 + $0x40] sm:$0xf]
        %v6471 = vld [vmem:[%s6453 + $0x44] sm:$0xf]
        %v6472 = vld [vmem:[%s6453 + $0x48] sm:$0xf]
        %v6473 = vld [vmem:[%s6453 + $0x4c] sm:$0xf]
        %v6474 = vld [vmem:[%s6453 + $0x50] sm:$0xf]
        %v6475 = vld [vmem:[%s6453 + $0x54] sm:$0xf]
        %v6476 = vld [vmem:[%s6453 + $0x58] sm:$0xf]
        %v6477 = vld [vmem:[%s6453 + $0x5c] sm:$0xf]
        %v6478 = vld [vmem:[%s6453 + $0x60] sm:$0xf]
        %v6479 = vld [vmem:[%s6453 + $0x64] sm:$0xf]
        %v6480 = vld [vmem:[%s6453 + $0x68] sm:$0xf]
        %v6481 = vld [vmem:[%s6453 + $0x6c] sm:$0xf]
        %v6482 = vld [vmem:[%s6453 + $0x70] sm:$0xf]
        %v6483 = vld [vmem:[%s6453 + $0x74] sm:$0xf]
        %v6484 = vld [vmem:[%s6453 + $0x78] sm:$0xf]
        %v6485 = vld [vmem:[%s6453 + $0x7c] sm:$0xf]
        %v6486 = vld [vmem:[%s6453 + $0x80] sm:$0xf]
        %v6487 = vld [vmem:[%s6453 + $0x84] sm:$0xf]
        %v6488 = vld [vmem:[%s6453 + $0x88] sm:$0xf]
        %v6489 = vld [vmem:[%s6453 + $0x8c] sm:$0xf]
        %v6490 = vld [vmem:[%s6453 + $0x90] sm:$0xf]
        %v6491 = vld [vmem:[%s6453 + $0x94] sm:$0xf]
        %v6492 = vld [vmem:[%s6453 + $0x98] sm:$0xf]
        %v6493 = vld [vmem:[%s6453 + $0x9c] sm:$0xf]
        %v6494 = vld [vmem:[%s6453 + $0xa0] sm:$0xf]
        %v6495 = vld [vmem:[%s6453 + $0xa4] sm:$0xf]
        %v6496 = vld [vmem:[%s6453 + $0xa8] sm:$0xf]
        %v6497 = vld [vmem:[%s6453 + $0xac] sm:$0xf]
        %v6498 = vld [vmem:[%s6453 + $0xb0] sm:$0xf]
        %v6499 = vld [vmem:[%s6453 + $0xb4] sm:$0xf]
        %v6500 = vld [vmem:[%s6453 + $0xb8] sm:$0xf]
        %v6501 = vld [vmem:[%s6453 + $0xbc] sm:$0xf]
        %s6502 = scalar_lea.vmem [#allocation12], 384
        %v6503 = vld [vmem:[%s6502] sm:$0xf]
        %v6504 = vld [vmem:[%s6502 + $0x4] sm:$0xf]
        %v6505 = vld [vmem:[%s6502 + $0x8] sm:$0xf]
        %v6506 = vld [vmem:[%s6502 + $0xc] sm:$0xf]
        %v6507 = vld [vmem:[%s6502 + $0x10] sm:$0xf]
        %v6508 = vld [vmem:[%s6502 + $0x14] sm:$0xf]
        %v6509 = vld [vmem:[%s6502 + $0x18] sm:$0xf]
        %v6510 = vld [vmem:[%s6502 + $0x1c] sm:$0xf]
        %v6511 = vld [vmem:[%s6502 + $0x20] sm:$0xf]
        %v6512 = vld [vmem:[%s6502 + $0x24] sm:$0xf]
        %v6513 = vld [vmem:[%s6502 + $0x28] sm:$0xf]
        %v6514 = vld [vmem:[%s6502 + $0x2c] sm:$0xf]
        %v6515 = vld [vmem:[%s6502 + $0x30] sm:$0xf]
        %v6516 = vld [vmem:[%s6502 + $0x34] sm:$0xf]
        %v6517 = vld [vmem:[%s6502 + $0x38] sm:$0xf]
        %v6518 = vld [vmem:[%s6502 + $0x3c] sm:$0xf]
        %v6519 = vld [vmem:[%s6502 + $0x40] sm:$0xf]
        %v6520 = vld [vmem:[%s6502 + $0x44] sm:$0xf]
        %v6521 = vld [vmem:[%s6502 + $0x48] sm:$0xf]
        %v6522 = vld [vmem:[%s6502 + $0x4c] sm:$0xf]
        %v6523 = vld [vmem:[%s6502 + $0x50] sm:$0xf]
        %v6524 = vld [vmem:[%s6502 + $0x54] sm:$0xf]
        %v6525 = vld [vmem:[%s6502 + $0x58] sm:$0xf]
        %v6526 = vld [vmem:[%s6502 + $0x5c] sm:$0xf]
        %v6527 = vld [vmem:[%s6502 + $0x60] sm:$0xf]
        %v6528 = vld [vmem:[%s6502 + $0x64] sm:$0xf]
        %v6529 = vld [vmem:[%s6502 + $0x68] sm:$0xf]
        %v6530 = vld [vmem:[%s6502 + $0x6c] sm:$0xf]
        %v6531 = vld [vmem:[%s6502 + $0x70] sm:$0xf]
        %v6532 = vld [vmem:[%s6502 + $0x74] sm:$0xf]
        %v6533 = vld [vmem:[%s6502 + $0x78] sm:$0xf]
        %v6534 = vld [vmem:[%s6502 + $0x7c] sm:$0xf]
        %v6535 = vld [vmem:[%s6502 + $0x80] sm:$0xf]
        %v6536 = vld [vmem:[%s6502 + $0x84] sm:$0xf]
        %v6537 = vld [vmem:[%s6502 + $0x88] sm:$0xf]
        %v6538 = vld [vmem:[%s6502 + $0x8c] sm:$0xf]
        %v6539 = vld [vmem:[%s6502 + $0x90] sm:$0xf]
        %v6540 = vld [vmem:[%s6502 + $0x94] sm:$0xf]
        %v6541 = vld [vmem:[%s6502 + $0x98] sm:$0xf]
        %v6542 = vld [vmem:[%s6502 + $0x9c] sm:$0xf]
        %v6543 = vld [vmem:[%s6502 + $0xa0] sm:$0xf]
        %v6544 = vld [vmem:[%s6502 + $0xa4] sm:$0xf]
        %v6545 = vld [vmem:[%s6502 + $0xa8] sm:$0xf]
        %v6546 = vld [vmem:[%s6502 + $0xac] sm:$0xf]
        %v6547 = vld [vmem:[%s6502 + $0xb0] sm:$0xf]
        %v6548 = vld [vmem:[%s6502 + $0xb4] sm:$0xf]
        %v6549 = vld [vmem:[%s6502 + $0xb8] sm:$0xf]
        %v6550 = vld [vmem:[%s6502 + $0xbc] sm:$0xf]
        %v6599 = vunpack.c.l.b16 %v6503
        %v6600 = vunpack.c.l.b16 %v6504
        %v6601 = vunpack.c.l.b16 %v6505
        %v6602 = vunpack.c.l.b16 %v6506
        %v6603 = vunpack.c.l.b16 %v6507
        %v6604 = vunpack.c.l.b16 %v6508
        %v6605 = vunpack.c.l.b16 %v6509
        %v6606 = vunpack.c.l.b16 %v6510
        %v6607 = vunpack.c.l.b16 %v6511
        %v6608 = vunpack.c.l.b16 %v6512
        %v6609 = vunpack.c.l.b16 %v6513
        %v6610 = vunpack.c.l.b16 %v6514
        %v6611 = vunpack.c.l.b16 %v6515
        %v6612 = vunpack.c.l.b16 %v6516
        %v6613 = vunpack.c.l.b16 %v6517
        %v6614 = vunpack.c.l.b16 %v6518
        %v6615 = vunpack.c.l.b16 %v6519
        %v6616 = vunpack.c.l.b16 %v6520
        %v6617 = vunpack.c.l.b16 %v6521
        %v6618 = vunpack.c.l.b16 %v6522
        %v6619 = vunpack.c.l.b16 %v6523
        %v6620 = vunpack.c.l.b16 %v6524
        %v6621 = vunpack.c.l.b16 %v6525
        %v6622 = vunpack.c.l.b16 %v6526
        %v6623 = vunpack.c.l.b16 %v6527
        %v6624 = vunpack.c.l.b16 %v6528
        %v6625 = vunpack.c.l.b16 %v6529
        %v6626 = vunpack.c.l.b16 %v6530
        %v6627 = vunpack.c.l.b16 %v6531
        %v6628 = vunpack.c.l.b16 %v6532
        %v6629 = vunpack.c.l.b16 %v6533
        %v6630 = vunpack.c.l.b16 %v6534
        %v6631 = vunpack.c.l.b16 %v6535
        %v6632 = vunpack.c.l.b16 %v6536
        %v6633 = vunpack.c.l.b16 %v6537
        %v6634 = vunpack.c.l.b16 %v6538
        %v6635 = vunpack.c.l.b16 %v6539
        %v6636 = vunpack.c.l.b16 %v6540
        %v6637 = vunpack.c.l.b16 %v6541
        %v6638 = vunpack.c.l.b16 %v6542
        %v6639 = vunpack.c.l.b16 %v6543
        %v6640 = vunpack.c.l.b16 %v6544
        %v6641 = vunpack.c.l.b16 %v6545
        %v6642 = vunpack.c.l.b16 %v6546
        %v6643 = vunpack.c.l.b16 %v6547
        %v6644 = vunpack.c.l.b16 %v6548
        %v6645 = vunpack.c.l.b16 %v6549
        %v6646 = vunpack.c.l.b16 %v6550
        %v6647 = vpack.c.b16 %v6600, %v6599
        %v6648 = vpack.c.b16 %v6602, %v6601
        %v6649 = vpack.c.b16 %v6604, %v6603
        %v6650 = vpack.c.b16 %v6606, %v6605
        %v6651 = vpack.c.b16 %v6608, %v6607
        %v6652 = vpack.c.b16 %v6610, %v6609
        %v6653 = vpack.c.b16 %v6612, %v6611
        %v6654 = vpack.c.b16 %v6614, %v6613
        %v6655 = vpack.c.b16 %v6616, %v6615
        %v6656 = vpack.c.b16 %v6618, %v6617
        %v6657 = vpack.c.b16 %v6620, %v6619
        %v6658 = vpack.c.b16 %v6622, %v6621
        %v6659 = vpack.c.b16 %v6624, %v6623
        %v6660 = vpack.c.b16 %v6626, %v6625
        %v6661 = vpack.c.b16 %v6628, %v6627
        %v6662 = vpack.c.b16 %v6630, %v6629
        %v6663 = vpack.c.b16 %v6632, %v6631
        %v6664 = vpack.c.b16 %v6634, %v6633
        %v6665 = vpack.c.b16 %v6636, %v6635
        %v6666 = vpack.c.b16 %v6638, %v6637
        %v6667 = vpack.c.b16 %v6640, %v6639
        %v6668 = vpack.c.b16 %v6642, %v6641
        %v6669 = vpack.c.b16 %v6644, %v6643
        %v6670 = vpack.c.b16 %v6646, %v6645
        %6695 = vmatpush.bf16.msra.mxu0 %v6654
        %6696 = vmatpush.bf16.msra.mxu0 %v6653
        %6697 = vmatpush.bf16.msra.mxu0 %v6652
        %6698 = vmatpush.bf16.msra.mxu0 %v6651
        %6699 = vmatpush.bf16.msra.mxu0 %v6650
        %6700 = vmatpush.bf16.msra.mxu0 %v6649
        %6701 = vmatpush.bf16.msra.mxu0 %v6648
        %6702 = vmatpush.bf16.msra.mxu0 %v6647
        %6703 = vmatmul.bf16.gmra.mxu0 %v5952
        %v6704 = vpop.f32.mrf.mxu0
        %v6705 = vpop.f32.mrf.mxu0
        %6706 = vmatmul.bf16.gmra.mxu0 %v5955
        %v6707 = vpop.f32.mrf.mxu0
        %v6708 = vadd.f32 0.0, %v6707
        %v6709 = vpop.f32.mrf.mxu0
        %v6710 = vadd.f32 0.0, %v6709
        %6711 = vmatmul.bf16.gmra.mxu0 %v5958
        %v6712 = vpop.f32.mrf.mxu0
        %v6713 = vadd.f32 0.0, %v6712
        %v6714 = vpop.f32.mrf.mxu0
        %v6715 = vadd.f32 0.0, %v6714
        %6716 = vmatmul.bf16.gmra.mxu0 %v5961
        %v6717 = vpop.f32.mrf.mxu0
        %v6718 = vadd.f32 0.0, %v6717
        %v6719 = vpop.f32.mrf.mxu0
        %v6720 = vadd.f32 0.0, %v6719
        %6721 = vmatmul.bf16.gmra.mxu0 %v5964
        %v6722 = vpop.f32.mrf.mxu0
        %v6723 = vadd.f32 0.0, %v6722
        %v6724 = vpop.f32.mrf.mxu0
        %v6725 = vadd.f32 0.0, %v6724
        %6726 = vmatmul.bf16.gmra.mxu0 %v5967
        %v6727 = vpop.f32.mrf.mxu0
        %v6728 = vadd.f32 0.0, %v6727
        %v6729 = vpop.f32.mrf.mxu0
        %v6730 = vadd.f32 0.0, %v6729
        %6731 = vmatmul.bf16.gmra.mxu0 %v5970
        %v6732 = vpop.f32.mrf.mxu0
        %v6733 = vadd.f32 0.0, %v6732
        %v6734 = vpop.f32.mrf.mxu0
        %v6735 = vadd.f32 0.0, %v6734
        %6736 = vmatmul.bf16.gmra.mxu0 %v5973
        %v6737 = vpop.f32.mrf.mxu0
        %v6738 = vadd.f32 0.0, %v6737
        %v6739 = vpop.f32.mrf.mxu0
        %v6740 = vadd.f32 0.0, %v6739
        %6741 = vmatmul.bf16.gmra.mxu0 %v5976
        %v6742 = vpop.f32.mrf.mxu0
        %v6743 = vadd.f32 0.0, %v6742
        %v6744 = vpop.f32.mrf.mxu0
        %v6745 = vadd.f32 0.0, %v6744
        %6746 = vmatmul.bf16.gmra.mxu0 %v5979
        %v6747 = vpop.f32.mrf.mxu0
        %v6748 = vadd.f32 0.0, %v6747
        %v6749 = vpop.f32.mrf.mxu0
        %v6750 = vadd.f32 0.0, %v6749
        %6751 = vmatmul.bf16.gmra.mxu0 %v5982
        %v6752 = vpop.f32.mrf.mxu0
        %v6753 = vadd.f32 0.0, %v6752
        %v6754 = vpop.f32.mrf.mxu0
        %v6755 = vadd.f32 0.0, %v6754
        %6756 = vmatmul.bf16.gmra.mxu0 %v5985
        %v6757 = vpop.f32.mrf.mxu0
        %v6758 = vadd.f32 0.0, %v6757
        %v6759 = vpop.f32.mrf.mxu0
        %v6760 = vadd.f32 0.0, %v6759
        %6761 = vmatmul.bf16.gmra.mxu0 %v5988
        %v6762 = vpop.f32.mrf.mxu0
        %v6763 = vadd.f32 0.0, %v6762
        %v6764 = vpop.f32.mrf.mxu0
        %v6765 = vadd.f32 0.0, %v6764
        %6766 = vmatmul.bf16.gmra.mxu0 %v5991
        %v6767 = vpop.f32.mrf.mxu0
        %v6768 = vadd.f32 0.0, %v6767
        %v6769 = vpop.f32.mrf.mxu0
        %v6770 = vadd.f32 0.0, %v6769
        %6771 = vmatmul.bf16.gmra.mxu0 %v5994
        %v6772 = vpop.f32.mrf.mxu0
        %v6773 = vadd.f32 0.0, %v6772
        %v6774 = vpop.f32.mrf.mxu0
        %v6775 = vadd.f32 0.0, %v6774
        %6776 = vmatmul.bf16.gmra.mxu0 %v5997
        %v6777 = vpop.f32.mrf.mxu0
        %v6778 = vadd.f32 0.0, %v6777
        %v6779 = vpop.f32.mrf.mxu0
        %v6780 = vadd.f32 0.0, %v6779
        %6781 = vdwg.mxu0
        %6782 = vmatpush.bf16.msra.mxu0 %v6662
        %6783 = vmatpush.bf16.msra.mxu0 %v6661
        %6784 = vmatpush.bf16.msra.mxu0 %v6660
        %6785 = vmatpush.bf16.msra.mxu0 %v6659
        %6786 = vmatpush.bf16.msra.mxu0 %v6658
        %6787 = vmatpush.bf16.msra.mxu0 %v6657
        %6788 = vmatpush.bf16.msra.mxu0 %v6656
        %6789 = vmatpush.bf16.msra.mxu0 %v6655
        %6790 = vmatmul.bf16.gmra.mxu0 %v5953
        %v6791 = vpop.f32.mrf.mxu0
        %v6792 = vpop.f32.mrf.mxu0
        %6793 = vmatmul.bf16.gmra.mxu0 %v5956
        %v6794 = vpop.f32.mrf.mxu0
        %v6795 = vadd.f32 %v6708, %v6794
        %v6796 = vpop.f32.mrf.mxu0
        %v6797 = vadd.f32 %v6710, %v6796
        %6798 = vmatmul.bf16.gmra.mxu0 %v5959
        %v6799 = vpop.f32.mrf.mxu0
        %v6800 = vadd.f32 %v6713, %v6799
        %v6801 = vpop.f32.mrf.mxu0
        %v6802 = vadd.f32 %v6715, %v6801
        %6803 = vmatmul.bf16.gmra.mxu0 %v5962
        %v6804 = vpop.f32.mrf.mxu0
        %v6805 = vadd.f32 %v6718, %v6804
        %v6806 = vpop.f32.mrf.mxu0
        %v6807 = vadd.f32 %v6720, %v6806
        %6808 = vmatmul.bf16.gmra.mxu0 %v5965
        %v6809 = vpop.f32.mrf.mxu0
        %v6810 = vadd.f32 %v6723, %v6809
        %v6811 = vpop.f32.mrf.mxu0
        %v6812 = vadd.f32 %v6725, %v6811
        %6813 = vmatmul.bf16.gmra.mxu0 %v5968
        %v6814 = vpop.f32.mrf.mxu0
        %v6815 = vadd.f32 %v6728, %v6814
        %v6816 = vpop.f32.mrf.mxu0
        %v6817 = vadd.f32 %v6730, %v6816
        %6818 = vmatmul.bf16.gmra.mxu0 %v5971
        %v6819 = vpop.f32.mrf.mxu0
        %v6820 = vadd.f32 %v6733, %v6819
        %v6821 = vpop.f32.mrf.mxu0
        %v6822 = vadd.f32 %v6735, %v6821
        %6823 = vmatmul.bf16.gmra.mxu0 %v5974
        %v6824 = vpop.f32.mrf.mxu0
        %v6825 = vadd.f32 %v6738, %v6824
        %v6826 = vpop.f32.mrf.mxu0
        %v6827 = vadd.f32 %v6740, %v6826
        %6828 = vmatmul.bf16.gmra.mxu0 %v5977
        %v6829 = vpop.f32.mrf.mxu0
        %v6830 = vadd.f32 %v6743, %v6829
        %v6831 = vpop.f32.mrf.mxu0
        %v6832 = vadd.f32 %v6745, %v6831
        %6833 = vmatmul.bf16.gmra.mxu0 %v5980
        %v6834 = vpop.f32.mrf.mxu0
        %v6835 = vadd.f32 %v6748, %v6834
        %v6836 = vpop.f32.mrf.mxu0
        %v6837 = vadd.f32 %v6750, %v6836
        %6838 = vmatmul.bf16.gmra.mxu0 %v5983
        %v6839 = vpop.f32.mrf.mxu0
        %v6840 = vadd.f32 %v6753, %v6839
        %v6841 = vpop.f32.mrf.mxu0
        %v6842 = vadd.f32 %v6755, %v6841
        %6843 = vmatmul.bf16.gmra.mxu0 %v5986
        %v6844 = vpop.f32.mrf.mxu0
        %v6845 = vadd.f32 %v6758, %v6844
        %v6846 = vpop.f32.mrf.mxu0
        %v6847 = vadd.f32 %v6760, %v6846
        %6848 = vmatmul.bf16.gmra.mxu0 %v5989
        %v6849 = vpop.f32.mrf.mxu0
        %v6850 = vadd.f32 %v6763, %v6849
        %v6851 = vpop.f32.mrf.mxu0
        %v6852 = vadd.f32 %v6765, %v6851
        %6853 = vmatmul.bf16.gmra.mxu0 %v5992
        %v6854 = vpop.f32.mrf.mxu0
        %v6855 = vadd.f32 %v6768, %v6854
        %v6856 = vpop.f32.mrf.mxu0
        %v6857 = vadd.f32 %v6770, %v6856
        %6858 = vmatmul.bf16.gmra.mxu0 %v5995
        %v6859 = vpop.f32.mrf.mxu0
        %v6860 = vadd.f32 %v6773, %v6859
        %v6861 = vpop.f32.mrf.mxu0
        %v6862 = vadd.f32 %v6775, %v6861
        %6863 = vmatmul.bf16.gmra.mxu0 %v5998
        %v6864 = vpop.f32.mrf.mxu0
        %v6865 = vadd.f32 %v6778, %v6864
        %v6866 = vpop.f32.mrf.mxu0
        %v6867 = vadd.f32 %v6780, %v6866
        %6868 = vdwg.mxu0
        %6869 = vmatpush.bf16.msra.mxu0 %v6670
        %6870 = vmatpush.bf16.msra.mxu0 %v6669
        %6871 = vmatpush.bf16.msra.mxu0 %v6668
        %6872 = vmatpush.bf16.msra.mxu0 %v6667
        %6873 = vmatpush.bf16.msra.mxu0 %v6666
        %6874 = vmatpush.bf16.msra.mxu0 %v6665
        %6875 = vmatpush.bf16.msra.mxu0 %v6664
        %6876 = vmatpush.bf16.msra.mxu0 %v6663
        %6877 = vmatmul.bf16.gmra.mxu0 %v5954
        %v6878 = vpop.f32.mrf.mxu0
        %v6879 = vpop.f32.mrf.mxu0
        %6880 = vmatmul.bf16.gmra.mxu0 %v5957
        %v6881 = vpop.f32.mrf.mxu0
        %v6882 = vadd.f32 %v6795, %v6881
        %v6883 = vpop.f32.mrf.mxu0
        %v6884 = vadd.f32 %v6797, %v6883
        %6885 = vmatmul.bf16.gmra.mxu0 %v5960
        %v6886 = vpop.f32.mrf.mxu0
        %v6887 = vadd.f32 %v6800, %v6886
        %v6888 = vpop.f32.mrf.mxu0
        %v6889 = vadd.f32 %v6802, %v6888
        %6890 = vmatmul.bf16.gmra.mxu0 %v5963
        %v6891 = vpop.f32.mrf.mxu0
        %v6892 = vadd.f32 %v6805, %v6891
        %v6893 = vpop.f32.mrf.mxu0
        %v6894 = vadd.f32 %v6807, %v6893
        %6895 = vmatmul.bf16.gmra.mxu0 %v5966
        %v6896 = vpop.f32.mrf.mxu0
        %v6897 = vadd.f32 %v6810, %v6896
        %v6898 = vpop.f32.mrf.mxu0
        %v6899 = vadd.f32 %v6812, %v6898
        %6900 = vmatmul.bf16.gmra.mxu0 %v5969
        %v6901 = vpop.f32.mrf.mxu0
        %v6902 = vadd.f32 %v6815, %v6901
        %v6903 = vpop.f32.mrf.mxu0
        %v6904 = vadd.f32 %v6817, %v6903
        %6905 = vmatmul.bf16.gmra.mxu0 %v5972
        %v6906 = vpop.f32.mrf.mxu0
        %v6907 = vadd.f32 %v6820, %v6906
        %v6908 = vpop.f32.mrf.mxu0
        %v6909 = vadd.f32 %v6822, %v6908
        %6910 = vmatmul.bf16.gmra.mxu0 %v5975
        %v6911 = vpop.f32.mrf.mxu0
        %v6912 = vadd.f32 %v6825, %v6911
        %v6913 = vpop.f32.mrf.mxu0
        %v6914 = vadd.f32 %v6827, %v6913
        %6915 = vmatmul.bf16.gmra.mxu0 %v5978
        %v6916 = vpop.f32.mrf.mxu0
        %v6917 = vadd.f32 %v6830, %v6916
        %v6918 = vpop.f32.mrf.mxu0
        %v6919 = vadd.f32 %v6832, %v6918
        %6920 = vmatmul.bf16.gmra.mxu0 %v5981
        %v6921 = vpop.f32.mrf.mxu0
        %v6922 = vadd.f32 %v6835, %v6921
        %v6923 = vpop.f32.mrf.mxu0
        %v6924 = vadd.f32 %v6837, %v6923
        %6925 = vmatmul.bf16.gmra.mxu0 %v5984
        %v6926 = vpop.f32.mrf.mxu0
        %v6927 = vadd.f32 %v6840, %v6926
        %v6928 = vpop.f32.mrf.mxu0
        %v6929 = vadd.f32 %v6842, %v6928
        %6930 = vmatmul.bf16.gmra.mxu0 %v5987
        %v6931 = vpop.f32.mrf.mxu0
        %v6932 = vadd.f32 %v6845, %v6931
        %v6933 = vpop.f32.mrf.mxu0
        %v6934 = vadd.f32 %v6847, %v6933
        %6935 = vmatmul.bf16.gmra.mxu0 %v5990
        %v6936 = vpop.f32.mrf.mxu0
        %v6937 = vadd.f32 %v6850, %v6936
        %v6938 = vpop.f32.mrf.mxu0
        %v6939 = vadd.f32 %v6852, %v6938
        %6940 = vmatmul.bf16.gmra.mxu0 %v5993
        %v6941 = vpop.f32.mrf.mxu0
        %v6942 = vadd.f32 %v6855, %v6941
        %v6943 = vpop.f32.mrf.mxu0
        %v6944 = vadd.f32 %v6857, %v6943
        %6945 = vmatmul.bf16.gmra.mxu0 %v5996
        %v6946 = vpop.f32.mrf.mxu0
        %v6947 = vadd.f32 %v6860, %v6946
        %v6948 = vpop.f32.mrf.mxu0
        %v6949 = vadd.f32 %v6862, %v6948
        %6950 = vmatmul.bf16.gmra.mxu0 %v5999
        %v6951 = vpop.f32.mrf.mxu0
        %v6952 = vadd.f32 %v6865, %v6951
        %v6953 = vpop.f32.mrf.mxu0
        %v6954 = vadd.f32 %v6867, %v6953
        %6955 = vdwg.mxu0
        %v6956 = vld [vmem:[%s11] sm:$0x1]
        %v6958 = vperm.slane %v6956, 0
        %v7008 = vunpack.c.l.b16 %v6454
        %v7009 = vunpack.c.l.b16 %v6455
        %v7010 = vunpack.c.l.b16 %v6456
        %v7011 = vunpack.c.l.b16 %v6457
        %v7012 = vunpack.c.l.b16 %v6458
        %v7013 = vunpack.c.l.b16 %v6459
        %v7014 = vunpack.c.l.b16 %v6460
        %v7015 = vunpack.c.l.b16 %v6461
        %v7016 = vunpack.c.l.b16 %v6462
        %v7017 = vunpack.c.l.b16 %v6463
        %v7018 = vunpack.c.l.b16 %v6464
        %v7019 = vunpack.c.l.b16 %v6465
        %v7020 = vunpack.c.l.b16 %v6466
        %v7021 = vunpack.c.l.b16 %v6467
        %v7022 = vunpack.c.l.b16 %v6468
        %v7023 = vunpack.c.l.b16 %v6469
        %v7024 = vunpack.c.l.b16 %v6470
        %v7025 = vunpack.c.l.b16 %v6471
        %v7026 = vunpack.c.l.b16 %v6472
        %v7027 = vunpack.c.l.b16 %v6473
        %v7028 = vunpack.c.l.b16 %v6474
        %v7029 = vunpack.c.l.b16 %v6475
        %v7030 = vunpack.c.l.b16 %v6476
        %v7031 = vunpack.c.l.b16 %v6477
        %v7032 = vunpack.c.l.b16 %v6478
        %v7033 = vunpack.c.l.b16 %v6479
        %v7034 = vunpack.c.l.b16 %v6480
        %v7035 = vunpack.c.l.b16 %v6481
        %v7036 = vunpack.c.l.b16 %v6482
        %v7037 = vunpack.c.l.b16 %v6483
        %v7038 = vunpack.c.l.b16 %v6484
        %v7039 = vunpack.c.l.b16 %v6485
        %v7040 = vunpack.c.l.b16 %v6486
        %v7041 = vunpack.c.l.b16 %v6487
        %v7042 = vunpack.c.l.b16 %v6488
        %v7043 = vunpack.c.l.b16 %v6489
        %v7044 = vunpack.c.l.b16 %v6490
        %v7045 = vunpack.c.l.b16 %v6491
        %v7046 = vunpack.c.l.b16 %v6492
        %v7047 = vunpack.c.l.b16 %v6493
        %v7048 = vunpack.c.l.b16 %v6494
        %v7049 = vunpack.c.l.b16 %v6495
        %v7050 = vunpack.c.l.b16 %v6496
        %v7051 = vunpack.c.l.b16 %v6497
        %v7052 = vunpack.c.l.b16 %v6498
        %v7053 = vunpack.c.l.b16 %v6499
        %v7054 = vunpack.c.l.b16 %v6500
        %v7055 = vunpack.c.l.b16 %v6501
        %v7056 = vpack.c.b16 %v7009, %v7008
        %v7057 = vpack.c.b16 %v7011, %v7010
        %v7058 = vpack.c.b16 %v7013, %v7012
        %v7059 = vpack.c.b16 %v7015, %v7014
        %v7060 = vpack.c.b16 %v7017, %v7016
        %v7061 = vpack.c.b16 %v7019, %v7018
        %v7062 = vpack.c.b16 %v7021, %v7020
        %v7063 = vpack.c.b16 %v7023, %v7022
        %v7064 = vpack.c.b16 %v7025, %v7024
        %v7065 = vpack.c.b16 %v7027, %v7026
        %v7066 = vpack.c.b16 %v7029, %v7028
        %v7067 = vpack.c.b16 %v7031, %v7030
        %v7068 = vpack.c.b16 %v7033, %v7032
        %v7069 = vpack.c.b16 %v7035, %v7034
        %v7070 = vpack.c.b16 %v7037, %v7036
        %v7071 = vpack.c.b16 %v7039, %v7038
        %v7072 = vpack.c.b16 %v7041, %v7040
        %v7073 = vpack.c.b16 %v7043, %v7042
        %v7074 = vpack.c.b16 %v7045, %v7044
        %v7075 = vpack.c.b16 %v7047, %v7046
        %v7076 = vpack.c.b16 %v7049, %v7048
        %v7077 = vpack.c.b16 %v7051, %v7050
        %v7078 = vpack.c.b16 %v7053, %v7052
        %v7079 = vpack.c.b16 %v7055, %v7054
        %7104 = vmatpush.bf16.msra.mxu0 %v7063
        %7105 = vmatpush.bf16.msra.mxu0 %v7062
        %7106 = vmatpush.bf16.msra.mxu0 %v7061
        %7107 = vmatpush.bf16.msra.mxu0 %v7060
        %7108 = vmatpush.bf16.msra.mxu0 %v7059
        %7109 = vmatpush.bf16.msra.mxu0 %v7058
        %7110 = vmatpush.bf16.msra.mxu0 %v7057
        %7111 = vmatpush.bf16.msra.mxu0 %v7056
        %7112 = vmatmul.bf16.gmra.mxu0 %v5952
        %v7113 = vpop.f32.mrf.mxu0
        %v7114 = vadd.f32 %v6958, %v7113
        %v7115 = vpop.f32.mrf.mxu0
        %v7116 = vadd.f32 %v6958, %v7115
        %7117 = vmatmul.bf16.gmra.mxu0 %v5955
        %v7118 = vpop.f32.mrf.mxu0
        %v7119 = vadd.f32 %v6958, %v7118
        %v7120 = vpop.f32.mrf.mxu0
        %v7121 = vadd.f32 %v6958, %v7120
        %7122 = vmatmul.bf16.gmra.mxu0 %v5958
        %v7123 = vpop.f32.mrf.mxu0
        %v7124 = vadd.f32 %v6958, %v7123
        %v7125 = vpop.f32.mrf.mxu0
        %v7126 = vadd.f32 %v6958, %v7125
        %7127 = vmatmul.bf16.gmra.mxu0 %v5961
        %v7128 = vpop.f32.mrf.mxu0
        %v7129 = vadd.f32 %v6958, %v7128
        %v7130 = vpop.f32.mrf.mxu0
        %v7131 = vadd.f32 %v6958, %v7130
        %7132 = vmatmul.bf16.gmra.mxu0 %v5964
        %v7133 = vpop.f32.mrf.mxu0
        %v7134 = vadd.f32 %v6958, %v7133
        %v7135 = vpop.f32.mrf.mxu0
        %v7136 = vadd.f32 %v6958, %v7135
        %7137 = vmatmul.bf16.gmra.mxu0 %v5967
        %v7138 = vpop.f32.mrf.mxu0
        %v7139 = vadd.f32 %v6958, %v7138
        %v7140 = vpop.f32.mrf.mxu0
        %v7141 = vadd.f32 %v6958, %v7140
        %7142 = vmatmul.bf16.gmra.mxu0 %v5970
        %v7143 = vpop.f32.mrf.mxu0
        %v7144 = vadd.f32 %v6958, %v7143
        %v7145 = vpop.f32.mrf.mxu0
        %v7146 = vadd.f32 %v6958, %v7145
        %7147 = vmatmul.bf16.gmra.mxu0 %v5973
        %v7148 = vpop.f32.mrf.mxu0
        %v7149 = vadd.f32 %v6958, %v7148
        %v7150 = vpop.f32.mrf.mxu0
        %v7151 = vadd.f32 %v6958, %v7150
        %7152 = vmatmul.bf16.gmra.mxu0 %v5976
        %v7153 = vpop.f32.mrf.mxu0
        %v7154 = vadd.f32 %v6958, %v7153
        %v7155 = vpop.f32.mrf.mxu0
        %v7156 = vadd.f32 %v6958, %v7155
        %7157 = vmatmul.bf16.gmra.mxu0 %v5979
        %v7158 = vpop.f32.mrf.mxu0
        %v7159 = vadd.f32 %v6958, %v7158
        %v7160 = vpop.f32.mrf.mxu0
        %v7161 = vadd.f32 %v6958, %v7160
        %7162 = vmatmul.bf16.gmra.mxu0 %v5982
        %v7163 = vpop.f32.mrf.mxu0
        %v7164 = vadd.f32 %v6958, %v7163
        %v7165 = vpop.f32.mrf.mxu0
        %v7166 = vadd.f32 %v6958, %v7165
        %7167 = vmatmul.bf16.gmra.mxu0 %v5985
        %v7168 = vpop.f32.mrf.mxu0
        %v7169 = vadd.f32 %v6958, %v7168
        %v7170 = vpop.f32.mrf.mxu0
        %v7171 = vadd.f32 %v6958, %v7170
        %7172 = vmatmul.bf16.gmra.mxu0 %v5988
        %v7173 = vpop.f32.mrf.mxu0
        %v7174 = vadd.f32 %v6958, %v7173
        %v7175 = vpop.f32.mrf.mxu0
        %v7176 = vadd.f32 %v6958, %v7175
        %7177 = vmatmul.bf16.gmra.mxu0 %v5991
        %v7178 = vpop.f32.mrf.mxu0
        %v7179 = vadd.f32 %v6958, %v7178
        %v7180 = vpop.f32.mrf.mxu0
        %v7181 = vadd.f32 %v6958, %v7180
        %7182 = vmatmul.bf16.gmra.mxu0 %v5994
        %v7183 = vpop.f32.mrf.mxu0
        %v7184 = vadd.f32 %v6958, %v7183
        %v7185 = vpop.f32.mrf.mxu0
        %v7186 = vadd.f32 %v6958, %v7185
        %7187 = vmatmul.bf16.gmra.mxu0 %v5997
        %v7188 = vpop.f32.mrf.mxu0
        %v7189 = vadd.f32 %v6958, %v7188
        %v7190 = vpop.f32.mrf.mxu0
        %v7191 = vadd.f32 %v6958, %v7190
        %7192 = vdwg.mxu0
        %7193 = vmatpush.bf16.msra.mxu0 %v7071
        %7194 = vmatpush.bf16.msra.mxu0 %v7070
        %7195 = vmatpush.bf16.msra.mxu0 %v7069
        %7196 = vmatpush.bf16.msra.mxu0 %v7068
        %7197 = vmatpush.bf16.msra.mxu0 %v7067
        %7198 = vmatpush.bf16.msra.mxu0 %v7066
        %7199 = vmatpush.bf16.msra.mxu0 %v7065
        %7200 = vmatpush.bf16.msra.mxu0 %v7064
        %7201 = vmatmul.bf16.gmra.mxu0 %v5953
        %v7202 = vpop.f32.mrf.mxu0
        %v7203 = vadd.f32 %v7114, %v7202
        %v7204 = vpop.f32.mrf.mxu0
        %v7205 = vadd.f32 %v7116, %v7204
        %7206 = vmatmul.bf16.gmra.mxu0 %v5956
        %v7207 = vpop.f32.mrf.mxu0
        %v7208 = vadd.f32 %v7119, %v7207
        %v7209 = vpop.f32.mrf.mxu0
        %v7210 = vadd.f32 %v7121, %v7209
        %7211 = vmatmul.bf16.gmra.mxu0 %v5959
        %v7212 = vpop.f32.mrf.mxu0
        %v7213 = vadd.f32 %v7124, %v7212
        %v7214 = vpop.f32.mrf.mxu0
        %v7215 = vadd.f32 %v7126, %v7214
        %7216 = vmatmul.bf16.gmra.mxu0 %v5962
        %v7217 = vpop.f32.mrf.mxu0
        %v7218 = vadd.f32 %v7129, %v7217
        %v7219 = vpop.f32.mrf.mxu0
        %v7220 = vadd.f32 %v7131, %v7219
        %7221 = vmatmul.bf16.gmra.mxu0 %v5965
        %v7222 = vpop.f32.mrf.mxu0
        %v7223 = vadd.f32 %v7134, %v7222
        %v7224 = vpop.f32.mrf.mxu0
        %v7225 = vadd.f32 %v7136, %v7224
        %7226 = vmatmul.bf16.gmra.mxu0 %v5968
        %v7227 = vpop.f32.mrf.mxu0
        %v7228 = vadd.f32 %v7139, %v7227
        %v7229 = vpop.f32.mrf.mxu0
        %v7230 = vadd.f32 %v7141, %v7229
        %7231 = vmatmul.bf16.gmra.mxu0 %v5971
        %v7232 = vpop.f32.mrf.mxu0
        %v7233 = vadd.f32 %v7144, %v7232
        %v7234 = vpop.f32.mrf.mxu0
        %v7235 = vadd.f32 %v7146, %v7234
        %7236 = vmatmul.bf16.gmra.mxu0 %v5974
        %v7237 = vpop.f32.mrf.mxu0
        %v7238 = vadd.f32 %v7149, %v7237
        %v7239 = vpop.f32.mrf.mxu0
        %v7240 = vadd.f32 %v7151, %v7239
        %7241 = vmatmul.bf16.gmra.mxu0 %v5977
        %v7242 = vpop.f32.mrf.mxu0
        %v7243 = vadd.f32 %v7154, %v7242
        %v7244 = vpop.f32.mrf.mxu0
        %v7245 = vadd.f32 %v7156, %v7244
        %7246 = vmatmul.bf16.gmra.mxu0 %v5980
        %v7247 = vpop.f32.mrf.mxu0
        %v7248 = vadd.f32 %v7159, %v7247
        %v7249 = vpop.f32.mrf.mxu0
        %v7250 = vadd.f32 %v7161, %v7249
        %7251 = vmatmul.bf16.gmra.mxu0 %v5983
        %v7252 = vpop.f32.mrf.mxu0
        %v7253 = vadd.f32 %v7164, %v7252
        %v7254 = vpop.f32.mrf.mxu0
        %v7255 = vadd.f32 %v7166, %v7254
        %7256 = vmatmul.bf16.gmra.mxu0 %v5986
        %v7257 = vpop.f32.mrf.mxu0
        %v7258 = vadd.f32 %v7169, %v7257
        %v7259 = vpop.f32.mrf.mxu0
        %v7260 = vadd.f32 %v7171, %v7259
        %7261 = vmatmul.bf16.gmra.mxu0 %v5989
        %v7262 = vpop.f32.mrf.mxu0
        %v7263 = vadd.f32 %v7174, %v7262
        %v7264 = vpop.f32.mrf.mxu0
        %v7265 = vadd.f32 %v7176, %v7264
        %7266 = vmatmul.bf16.gmra.mxu0 %v5992
        %v7267 = vpop.f32.mrf.mxu0
        %v7268 = vadd.f32 %v7179, %v7267
        %v7269 = vpop.f32.mrf.mxu0
        %v7270 = vadd.f32 %v7181, %v7269
        %7271 = vmatmul.bf16.gmra.mxu0 %v5995
        %v7272 = vpop.f32.mrf.mxu0
        %v7273 = vadd.f32 %v7184, %v7272
        %v7274 = vpop.f32.mrf.mxu0
        %v7275 = vadd.f32 %v7186, %v7274
        %7276 = vmatmul.bf16.gmra.mxu0 %v5998
        %v7277 = vpop.f32.mrf.mxu0
        %v7278 = vadd.f32 %v7189, %v7277
        %v7279 = vpop.f32.mrf.mxu0
        %v7280 = vadd.f32 %v7191, %v7279
        %7281 = vdwg.mxu0
        %7282 = vmatpush.bf16.msra.mxu0 %v7079
        %7283 = vmatpush.bf16.msra.mxu0 %v7078
        %7284 = vmatpush.bf16.msra.mxu0 %v7077
        %7285 = vmatpush.bf16.msra.mxu0 %v7076
        %7286 = vmatpush.bf16.msra.mxu0 %v7075
        %7287 = vmatpush.bf16.msra.mxu0 %v7074
        %7288 = vmatpush.bf16.msra.mxu0 %v7073
        %7289 = vmatpush.bf16.msra.mxu0 %v7072
        %7290 = vmatmul.bf16.gmra.mxu0 %v5954
        %v7291 = vpop.f32.mrf.mxu0
        %v7292 = vadd.f32 %v7203, %v7291
        %v7293 = vpop.f32.mrf.mxu0
        %v7294 = vadd.f32 %v7205, %v7293
        %7295 = vmatmul.bf16.gmra.mxu0 %v5957
        %v7296 = vpop.f32.mrf.mxu0
        %v7297 = vadd.f32 %v7208, %v7296
        %v7298 = vpop.f32.mrf.mxu0
        %v7299 = vadd.f32 %v7210, %v7298
        %7300 = vmatmul.bf16.gmra.mxu0 %v5960
        %v7301 = vpop.f32.mrf.mxu0
        %v7302 = vadd.f32 %v7213, %v7301
        %v7303 = vpop.f32.mrf.mxu0
        %v7304 = vadd.f32 %v7215, %v7303
        %7305 = vmatmul.bf16.gmra.mxu0 %v5963
        %v7306 = vpop.f32.mrf.mxu0
        %v7307 = vadd.f32 %v7218, %v7306
        %v7308 = vpop.f32.mrf.mxu0
        %v7309 = vadd.f32 %v7220, %v7308
        %7310 = vmatmul.bf16.gmra.mxu0 %v5966
        %v7311 = vpop.f32.mrf.mxu0
        %v7312 = vadd.f32 %v7223, %v7311
        %v7313 = vpop.f32.mrf.mxu0
        %v7314 = vadd.f32 %v7225, %v7313
        %7315 = vmatmul.bf16.gmra.mxu0 %v5969
        %v7316 = vpop.f32.mrf.mxu0
        %v7317 = vadd.f32 %v7228, %v7316
        %v7318 = vpop.f32.mrf.mxu0
        %v7319 = vadd.f32 %v7230, %v7318
        %7320 = vmatmul.bf16.gmra.mxu0 %v5972
        %v7321 = vpop.f32.mrf.mxu0
        %v7322 = vadd.f32 %v7233, %v7321
        %v7323 = vpop.f32.mrf.mxu0
        %v7324 = vadd.f32 %v7235, %v7323
        %7325 = vmatmul.bf16.gmra.mxu0 %v5975
        %v7326 = vpop.f32.mrf.mxu0
        %v7327 = vadd.f32 %v7238, %v7326
        %v7328 = vpop.f32.mrf.mxu0
        %v7329 = vadd.f32 %v7240, %v7328
        %7330 = vmatmul.bf16.gmra.mxu0 %v5978
        %v7331 = vpop.f32.mrf.mxu0
        %v7332 = vadd.f32 %v7243, %v7331
        %v7333 = vpop.f32.mrf.mxu0
        %v7334 = vadd.f32 %v7245, %v7333
        %7335 = vmatmul.bf16.gmra.mxu0 %v5981
        %v7336 = vpop.f32.mrf.mxu0
        %v7337 = vadd.f32 %v7248, %v7336
        %v7338 = vpop.f32.mrf.mxu0
        %v7339 = vadd.f32 %v7250, %v7338
        %7340 = vmatmul.bf16.gmra.mxu0 %v5984
        %v7341 = vpop.f32.mrf.mxu0
        %v7342 = vadd.f32 %v7253, %v7341
        %v7343 = vpop.f32.mrf.mxu0
        %v7344 = vadd.f32 %v7255, %v7343
        %7345 = vmatmul.bf16.gmra.mxu0 %v5987
        %v7346 = vpop.f32.mrf.mxu0
        %v7347 = vadd.f32 %v7258, %v7346
        %v7348 = vpop.f32.mrf.mxu0
        %v7349 = vadd.f32 %v7260, %v7348
        %7350 = vmatmul.bf16.gmra.mxu0 %v5990
        %v7351 = vpop.f32.mrf.mxu0
        %v7352 = vadd.f32 %v7263, %v7351
        %v7353 = vpop.f32.mrf.mxu0
        %v7354 = vadd.f32 %v7265, %v7353
        %7355 = vmatmul.bf16.gmra.mxu0 %v5993
        %v7356 = vpop.f32.mrf.mxu0
        %v7357 = vadd.f32 %v7268, %v7356
        %v7358 = vpop.f32.mrf.mxu0
        %v7359 = vadd.f32 %v7270, %v7358
        %7360 = vmatmul.bf16.gmra.mxu0 %v5996
        %v7361 = vpop.f32.mrf.mxu0
        %v7362 = vadd.f32 %v7273, %v7361
        %v7363 = vpop.f32.mrf.mxu0
        %v7364 = vadd.f32 %v7275, %v7363
        %7365 = vmatmul.bf16.gmra.mxu0 %v5999
        %v7366 = vpop.f32.mrf.mxu0
        %v7367 = vadd.f32 %v7278, %v7366
        %v7368 = vpop.f32.mrf.mxu0
        %v7369 = vadd.f32 %v7280, %v7368
        %7370 = vdwg.mxu0
        %v7371 = vadd.f32 %v7292, 0.0
        %v7372 = vadd.f32 %v7294, 0.0
        %v7373 = vadd.f32 %v7297, %v6376
        %v7374 = vadd.f32 %v7299, %v6378
        %v7375 = vadd.f32 %v7302, %v6381
        %v7376 = vadd.f32 %v7304, %v6383
        %v7377 = vadd.f32 %v7307, %v6386
        %v7378 = vadd.f32 %v7309, %v6388
        %v7379 = vadd.f32 %v7312, %v6391
        %v7380 = vadd.f32 %v7314, %v6393
        %v7381 = vadd.f32 %v7317, %v6396
        %v7382 = vadd.f32 %v7319, %v6398
        %v7383 = vadd.f32 %v7322, %v6401
        %v7384 = vadd.f32 %v7324, %v6403
        %v7385 = vadd.f32 %v7327, %v6406
        %v7386 = vadd.f32 %v7329, %v6408
        %v7387 = vadd.f32 %v7332, %v6411
        %v7388 = vadd.f32 %v7334, %v6413
        %v7389 = vadd.f32 %v7337, %v6416
        %v7390 = vadd.f32 %v7339, %v6418
        %v7391 = vadd.f32 %v7342, %v6421
        %v7392 = vadd.f32 %v7344, %v6423
        %v7393 = vadd.f32 %v7347, %v6426
        %v7394 = vadd.f32 %v7349, %v6428
        %v7395 = vadd.f32 %v7352, %v6431
        %v7396 = vadd.f32 %v7354, %v6433
        %v7397 = vadd.f32 %v7357, %v6436
        %v7398 = vadd.f32 %v7359, %v6438
        %v7399 = vadd.f32 %v7362, %v6441
        %v7400 = vadd.f32 %v7364, %v6443
        %v7401 = vadd.f32 %v7367, %v6446
        %v7402 = vadd.f32 %v7369, %v6448
        %v7403 = vadd.f32 %v7371, %v6882
        %v7404 = vadd.f32 %v7372, %v6884
        %v7405 = vadd.f32 %v7373, %v6887
        %v7406 = vadd.f32 %v7374, %v6889
        %v7407 = vadd.f32 %v7375, %v6892
        %v7408 = vadd.f32 %v7376, %v6894
        %v7409 = vadd.f32 %v7377, %v6897
        %v7410 = vadd.f32 %v7378, %v6899
        %v7411 = vadd.f32 %v7379, %v6902
        %v7412 = vadd.f32 %v7380, %v6904
        %v7413 = vadd.f32 %v7381, %v6907
        %v7414 = vadd.f32 %v7382, %v6909
        %v7415 = vadd.f32 %v7383, %v6912
        %v7416 = vadd.f32 %v7384, %v6914
        %v7417 = vadd.f32 %v7385, %v6917
        %v7418 = vadd.f32 %v7386, %v6919
        %v7419 = vadd.f32 %v7387, %v6922
        %v7420 = vadd.f32 %v7388, %v6924
        %v7421 = vadd.f32 %v7389, %v6927
        %v7422 = vadd.f32 %v7390, %v6929
        %v7423 = vadd.f32 %v7391, %v6932
        %v7424 = vadd.f32 %v7392, %v6934
        %v7425 = vadd.f32 %v7393, %v6937
        %v7426 = vadd.f32 %v7394, %v6939
        %v7427 = vadd.f32 %v7395, %v6942
        %v7428 = vadd.f32 %v7396, %v6944
        %v7429 = vadd.f32 %v7397, %v6947
        %v7430 = vadd.f32 %v7398, %v6949
        %v7431 = vadd.f32 %v7399, %v6952
        %v7432 = vadd.f32 %v7400, %v6954
        %v7433 = vadd.f32 %v7401, 0.0
        %v7434 = vadd.f32 %v7402, 0.0
        %v7435 = vpack.c.bf16 %v579, %v578
        %v7436 = vpack.c.bf16 %v581, %v580
        %v7437 = vpack.c.bf16 %v583, %v582
        %v7438 = vpack.c.bf16 %v585, %v584
        %v7439 = vpack.c.bf16 %v587, %v586
        %v7440 = vpack.c.bf16 %v589, %v588
        %v7441 = vpack.c.bf16 %v591, %v590
        %v7442 = vpack.c.bf16 %v593, %v592
        %v7443 = vpack.c.bf16 %v595, %v594
        %v7444 = vpack.c.bf16 %v597, %v596
        %v7445 = vpack.c.bf16 %v599, %v598
        %v7446 = vpack.c.bf16 %v601, %v600
        %v7447 = vpack.c.bf16 %v603, %v602
        %v7448 = vpack.c.bf16 %v605, %v604
        %v7449 = vpack.c.bf16 %v607, %v606
        %v7450 = vpack.c.bf16 %v609, %v608
        %v7451 = vld [vmem:[#allocation14] sm:$0xf]
        %v7452 = vld [vmem:[#allocation14 + $0x4] sm:$0xf]
        %v7453 = vld [vmem:[#allocation14 + $0x8] sm:$0xf]
        %v7454 = vld [vmem:[#allocation14 + $0xc] sm:$0xf]
        %v7455 = vld [vmem:[#allocation14 + $0x10] sm:$0xf]
        %v7456 = vld [vmem:[#allocation14 + $0x14] sm:$0xf]
        %v7457 = vld [vmem:[#allocation14 + $0x18] sm:$0xf]
        %v7458 = vld [vmem:[#allocation14 + $0x1c] sm:$0xf]
        %v7459 = vld [vmem:[#allocation14 + $0x20] sm:$0xf]
        %v7460 = vld [vmem:[#allocation14 + $0x24] sm:$0xf]
        %v7461 = vld [vmem:[#allocation14 + $0x28] sm:$0xf]
        %v7462 = vld [vmem:[#allocation14 + $0x2c] sm:$0xf]
        %v7463 = vld [vmem:[#allocation14 + $0x30] sm:$0xf]
        %v7464 = vld [vmem:[#allocation14 + $0x34] sm:$0xf]
        %v7465 = vld [vmem:[#allocation14 + $0x38] sm:$0xf]
        %v7466 = vld [vmem:[#allocation14 + $0x3c] sm:$0xf]
        %v7483 = vunpack.c.l.b16 %v7451
        %v7484 = vunpack.c.l.b16 %v7452
        %v7485 = vunpack.c.l.b16 %v7453
        %v7486 = vunpack.c.l.b16 %v7454
        %v7487 = vunpack.c.l.b16 %v7455
        %v7488 = vunpack.c.l.b16 %v7456
        %v7489 = vunpack.c.l.b16 %v7457
        %v7490 = vunpack.c.l.b16 %v7458
        %v7491 = vunpack.c.l.b16 %v7459
        %v7492 = vunpack.c.l.b16 %v7460
        %v7493 = vunpack.c.l.b16 %v7461
        %v7494 = vunpack.c.l.b16 %v7462
        %v7495 = vunpack.c.l.b16 %v7463
        %v7496 = vunpack.c.l.b16 %v7464
        %v7497 = vunpack.c.l.b16 %v7465
        %v7498 = vunpack.c.l.b16 %v7466
        %v7499 = vpack.c.b16 %v7484, %v7483
        %v7500 = vpack.c.b16 %v7486, %v7485
        %v7501 = vpack.c.b16 %v7488, %v7487
        %v7502 = vpack.c.b16 %v7490, %v7489
        %v7503 = vpack.c.b16 %v7492, %v7491
        %v7504 = vpack.c.b16 %v7494, %v7493
        %v7505 = vpack.c.b16 %v7496, %v7495
        %v7506 = vpack.c.b16 %v7498, %v7497
        %7515 = vmatpush.bf16.msra.mxu0 %v7506
        %7516 = vmatpush.bf16.msra.mxu0 %v7505
        %7517 = vmatpush.bf16.msra.mxu0 %v7504
        %7518 = vmatpush.bf16.msra.mxu0 %v7503
        %7519 = vmatpush.bf16.msra.mxu0 %v7502
        %7520 = vmatpush.bf16.msra.mxu0 %v7501
        %7521 = vmatpush.bf16.msra.mxu0 %v7500
        %7522 = vmatpush.bf16.msra.mxu0 %v7499
        %7523 = vmatmul.bf16.gmra.mxu0 %v7435
        %v7524 = vpop.f32.mrf.mxu0
        %v7525 = vadd.f32 0.0, %v7524
        %v7526 = vpop.f32.mrf.mxu0
        %v7527 = vadd.f32 0.0, %v7526
        %7528 = vmatmul.bf16.gmra.mxu0 %v7436
        %v7529 = vpop.f32.mrf.mxu0
        %v7530 = vadd.f32 0.0, %v7529
        %v7531 = vpop.f32.mrf.mxu0
        %v7532 = vadd.f32 0.0, %v7531
        %7533 = vmatmul.bf16.gmra.mxu0 %v7437
        %v7534 = vpop.f32.mrf.mxu0
        %v7535 = vadd.f32 0.0, %v7534
        %v7536 = vpop.f32.mrf.mxu0
        %v7537 = vadd.f32 0.0, %v7536
        %7538 = vmatmul.bf16.gmra.mxu0 %v7438
        %v7539 = vpop.f32.mrf.mxu0
        %v7540 = vadd.f32 0.0, %v7539
        %v7541 = vpop.f32.mrf.mxu0
        %v7542 = vadd.f32 0.0, %v7541
        %7543 = vmatmul.bf16.gmra.mxu0 %v7439
        %v7544 = vpop.f32.mrf.mxu0
        %v7545 = vadd.f32 0.0, %v7544
        %v7546 = vpop.f32.mrf.mxu0
        %v7547 = vadd.f32 0.0, %v7546
        %7548 = vmatmul.bf16.gmra.mxu0 %v7440
        %v7549 = vpop.f32.mrf.mxu0
        %v7550 = vadd.f32 0.0, %v7549
        %v7551 = vpop.f32.mrf.mxu0
        %v7552 = vadd.f32 0.0, %v7551
        %7553 = vmatmul.bf16.gmra.mxu0 %v7441
        %v7554 = vpop.f32.mrf.mxu0
        %v7555 = vadd.f32 0.0, %v7554
        %v7556 = vpop.f32.mrf.mxu0
        %v7557 = vadd.f32 0.0, %v7556
        %7558 = vmatmul.bf16.gmra.mxu0 %v7442
        %v7559 = vpop.f32.mrf.mxu0
        %v7560 = vadd.f32 0.0, %v7559
        %v7561 = vpop.f32.mrf.mxu0
        %v7562 = vadd.f32 0.0, %v7561
        %7563 = vmatmul.bf16.gmra.mxu0 %v7443
        %v7564 = vpop.f32.mrf.mxu0
        %v7565 = vadd.f32 0.0, %v7564
        %v7566 = vpop.f32.mrf.mxu0
        %v7567 = vadd.f32 0.0, %v7566
        %7568 = vmatmul.bf16.gmra.mxu0 %v7444
        %v7569 = vpop.f32.mrf.mxu0
        %v7570 = vadd.f32 0.0, %v7569
        %v7571 = vpop.f32.mrf.mxu0
        %v7572 = vadd.f32 0.0, %v7571
        %7573 = vmatmul.bf16.gmra.mxu0 %v7445
        %v7574 = vpop.f32.mrf.mxu0
        %v7575 = vadd.f32 0.0, %v7574
        %v7576 = vpop.f32.mrf.mxu0
        %v7577 = vadd.f32 0.0, %v7576
        %7578 = vmatmul.bf16.gmra.mxu0 %v7446
        %v7579 = vpop.f32.mrf.mxu0
        %v7580 = vadd.f32 0.0, %v7579
        %v7581 = vpop.f32.mrf.mxu0
        %v7582 = vadd.f32 0.0, %v7581
        %7583 = vmatmul.bf16.gmra.mxu0 %v7447
        %v7584 = vpop.f32.mrf.mxu0
        %v7585 = vadd.f32 0.0, %v7584
        %v7586 = vpop.f32.mrf.mxu0
        %v7587 = vadd.f32 0.0, %v7586
        %7588 = vmatmul.bf16.gmra.mxu0 %v7448
        %v7589 = vpop.f32.mrf.mxu0
        %v7590 = vadd.f32 0.0, %v7589
        %v7591 = vpop.f32.mrf.mxu0
        %v7592 = vadd.f32 0.0, %v7591
        %7593 = vmatmul.bf16.gmra.mxu0 %v7449
        %v7594 = vpop.f32.mrf.mxu0
        %v7595 = vadd.f32 0.0, %v7594
        %v7596 = vpop.f32.mrf.mxu0
        %v7597 = vadd.f32 0.0, %v7596
        %7598 = vmatmul.bf16.gmra.mxu0 %v7450
        %v7599 = vpop.f32.mrf.mxu0
        %v7600 = vadd.f32 0.0, %v7599
        %v7601 = vpop.f32.mrf.mxu0
        %v7602 = vadd.f32 0.0, %v7601
        %7603 = vdwg.mxu0
        %v7604 = vadd.f32 %v7403, %v7525
        %v7605 = vadd.f32 %v7404, %v7527
        %v7606 = vadd.f32 %v7405, %v7530
        %v7607 = vadd.f32 %v7406, %v7532
        %v7608 = vadd.f32 %v7407, %v7535
        %v7609 = vadd.f32 %v7408, %v7537
        %v7610 = vadd.f32 %v7409, %v7540
        %v7611 = vadd.f32 %v7410, %v7542
        %v7612 = vadd.f32 %v7411, %v7545
        %v7613 = vadd.f32 %v7412, %v7547
        %v7614 = vadd.f32 %v7413, %v7550
        %v7615 = vadd.f32 %v7414, %v7552
        %v7616 = vadd.f32 %v7415, %v7555
        %v7617 = vadd.f32 %v7416, %v7557
        %v7618 = vadd.f32 %v7417, %v7560
        %v7619 = vadd.f32 %v7418, %v7562
        %v7620 = vadd.f32 %v7419, %v7565
        %v7621 = vadd.f32 %v7420, %v7567
        %v7622 = vadd.f32 %v7421, %v7570
        %v7623 = vadd.f32 %v7422, %v7572
        %v7624 = vadd.f32 %v7423, %v7575
        %v7625 = vadd.f32 %v7424, %v7577
        %v7626 = vadd.f32 %v7425, %v7580
        %v7627 = vadd.f32 %v7426, %v7582
        %v7628 = vadd.f32 %v7427, %v7585
        %v7629 = vadd.f32 %v7428, %v7587
        %v7630 = vadd.f32 %v7429, %v7590
        %v7631 = vadd.f32 %v7430, %v7592
        %v7632 = vadd.f32 %v7431, %v7595
        %v7633 = vadd.f32 %v7432, %v7597
        %v7634 = vadd.f32 %v7433, %v7600
        %v7635 = vadd.f32 %v7434, %v7602
        %7636 = vst [vmem:[%s577] sm:$0xff] %v7604
        %7637 = vst [vmem:[%s577 + $0x8] sm:$0xff] %v7605
        %7638 = vst [vmem:[%s577 + $0x10] sm:$0xff] %v7606
        %7639 = vst [vmem:[%s577 + $0x18] sm:$0xff] %v7607
        %7640 = vst [vmem:[%s577 + $0x20] sm:$0xff] %v7608
        %7641 = vst [vmem:[%s577 + $0x28] sm:$0xff] %v7609
        %7642 = vst [vmem:[%s577 + $0x30] sm:$0xff] %v7610
        %7643 = vst [vmem:[%s577 + $0x38] sm:$0xff] %v7611
        %7644 = vst [vmem:[%s577 + $0x40] sm:$0xff] %v7612
        %7645 = vst [vmem:[%s577 + $0x48] sm:$0xff] %v7613
        %7646 = vst [vmem:[%s577 + $0x50] sm:$0xff] %v7614
        %7647 = vst [vmem:[%s577 + $0x58] sm:$0xff] %v7615
        %7648 = vst [vmem:[%s577 + $0x60] sm:$0xff] %v7616
        %7649 = vst [vmem:[%s577 + $0x68] sm:$0xff] %v7617
        %7650 = vst [vmem:[%s577 + $0x70] sm:$0xff] %v7618
        %7651 = vst [vmem:[%s577 + $0x78] sm:$0xff] %v7619
        %7652 = vst [vmem:[%s577 + $0x80] sm:$0xff] %v7620
        %7653 = vst [vmem:[%s577 + $0x88] sm:$0xff] %v7621
        %7654 = vst [vmem:[%s577 + $0x90] sm:$0xff] %v7622
        %7655 = vst [vmem:[%s577 + $0x98] sm:$0xff] %v7623
        %7656 = vst [vmem:[%s577 + $0xa0] sm:$0xff] %v7624
        %7657 = vst [vmem:[%s577 + $0xa8] sm:$0xff] %v7625
        %7658 = vst [vmem:[%s577 + $0xb0] sm:$0xff] %v7626
        %7659 = vst [vmem:[%s577 + $0xb8] sm:$0xff] %v7627
        %7660 = vst [vmem:[%s577 + $0xc0] sm:$0xff] %v7628
        %7661 = vst [vmem:[%s577 + $0xc8] sm:$0xff] %v7629
        %7662 = vst [vmem:[%s577 + $0xd0] sm:$0xff] %v7630
        %7663 = vst [vmem:[%s577 + $0xd8] sm:$0xff] %v7631
        %7664 = vst [vmem:[%s577 + $0xe0] sm:$0xff] %v7632
        %7665 = vst [vmem:[%s577 + $0xe8] sm:$0xff] %v7633
        %7666 = vst [vmem:[%s577 + $0xf0] sm:$0xff] %v7634
        %7667 = vst [vmem:[%s577 + $0xf8] sm:$0xff] %v7635
        %s7668 = sand.u32 %s326, 1
        %s7669 = scalar_lea.sflag [#allocation5], %s7668
        %s7670 = sand.u32 %s326, 1
        %s7671 = smul.addr %s7670, 256
        %s7672 = scalar_lea.vmem [#allocation15], %s7671
        // Predicated region
        $region101: #{tpu_custom_call.1} parent=71 // pred_check
          %p7673 = pneg %p336
        $region102: #{tpu_custom_call.1} parent=71 // pred_check_branch
          %7675 = sbr.rel (%p7673) target = $region104
        $region103: #{tpu_custom_call.1} parent=71 // pred_region
          %7677 = vsyncadd %s7669, 0
          %s7678 = smul.addr %s35, 32
          %s7679 = smul.addr %s7678, 8
          %s7680 = scalar_lea.hbm %s13, %s7679
          %s7681 = sshll.u32 %s7672, 4
          %s7682 = int_to_ptr.vmem [resolvable:$true] %s7681
          %s7683 = sshll.u32 %s7680, 4
          %s7684 = int_to_ptr.hbm [resolvable:$true] %s7683
          %7689 = dma.vmem_to_hbm [thread:$0]  %s7682, 4096, %s7684, %s7669, 128, 128, 8
        $region104: #{tpu_custom_call.1} parent=71 // pred_fallthru
          _
      $region72: #{tpu_custom_call.1} parent=5 // pred_fallthru
        _
      %p7690 = scmp.le.s32.totalorder 2, %s30
      // Predicated region
      $region105: #{tpu_custom_call.1} parent=5 // pred_check
        %p7691 = pneg %p7690
      $region106: #{tpu_custom_call.1} parent=5 // pred_check_branch
        %7693 = sbr.rel (%p7691) target = $region108
      $region107: #{tpu_custom_call.1} parent=5 // pred_region
        %s7694 = ssub.s32 %s30, 2
        // Predicated region
        $region109: #{tpu_custom_call.1} parent=107 // pred_check
          %p7695 = pneg %p342
        $region110: #{tpu_custom_call.1} parent=107 // pred_check_branch
          %7697 = sbr.rel (%p7695) target = $region112
        $region111: #{tpu_custom_call.1} parent=107 // pred_region
          %s7698 = sand.u32 %s327, 1
          %s7699 = scalar_lea.sflag [#allocation5], %s7698
          %s7700 = sand.u32 %s327, 1
          %s7701 = smul.addr %s7700, 256
          %s7702 = scalar_lea.vmem [#allocation15], %s7701
          %7704 = dma.done %s7699, 4096
        $region112: #{tpu_custom_call.1} parent=107 // pred_fallthru
          _
      $region108: #{tpu_custom_call.1} parent=5 // pred_fallthru
        _
    $region6: #{tpu_custom_call.1} parent=1 // loop_footer
      %s34 = sadd.s32 1, %s30
    $region7: #{tpu_custom_call.1} parent=1 // loop_footer_branch
      %29 = sbr.rel target = $region3
    $region8: #{tpu_custom_call.1} parent=1 // loop_exit
      _
    %7705 = vsyncpa [#allocation4], 1
    %s7706 = scalar_lea.sflag [#allocation4], 1
    %7707 = vsyncpa %s7706, 1
    %7708 = vsyncpa [#allocation7], 1
    %s7709 = scalar_lea.sflag [#allocation7], 1
    %7710 = vsyncpa %s7709, 1
    %7711 = vsyncpa [#allocation10], 1
    %7712 = vsyncpa [#allocation13], 1
    %7713 = vsyncpa [#allocation5], 1
    %s7714 = scalar_lea.sflag [#allocation5], 1
    %7715 = vsyncpa %s7714, 1

</llo_original>
